<compile_context>
chip_gen: v6e
topology: v6e:2x2x1
jax: 0.10.0
libtpu: 0.0.40
codegen_flags: <defaults>
</compile_context>

<pallas_src>
import functools

import jax
import jax.numpy as jnp
import numpy as np
from jax.experimental import pallas as pl
from jax.experimental.pallas import tpu as pltpu

BN_EPS = 1e-5
CHANNELS = [3, 64, 128, 256, 512, 1024]
C_OUT = CHANNELS[-1]


def _round_up(x, m):
    return (x + m - 1) // m * m


def pointnetfeat_kernel(x_ref,
                        w1, b1, w2, b2, w3, b3, w4, b4, w5, b5,
                        o_ref):
    """Fused 5-layer pointwise MLP in channel-major (C, points) orientation.

    Layer 1 (Cin=3) runs on the VPU as 3 broadcast-FMAs in f32 (K=3 would waste
    the 256-deep MXU).  Layers 2-5 are bf16 x bf16 MXU matmuls with f32
    accumulation.  Biases (eval-BN folded) are added in f32.
    """
    x = x_ref[0]                                            # (3, tm) f32

    # --- Layer 1: K=3 contraction on the VPU (broadcast-FMA), f32 math. ---
    w1f = w1[...].astype(jnp.float32)                       # (64, 3)
    h = (b1[...]
         + w1f[:, 0:1] * x[0:1, :]
         + w1f[:, 1:2] * x[1:2, :]
         + w1f[:, 2:3] * x[2:3, :])                         # (64, tm) f32
    h = jnp.maximum(h, 0.0).astype(jnp.bfloat16)

    # --- Layers 2-5: MXU matmuls. ---
    def layer(w, b, hh, relu):
        acc = jnp.dot(w[...], hh, preferred_element_type=jnp.float32) + b[...]
        if relu:
            acc = jnp.maximum(acc, 0.0)
        return acc

    h = layer(w2, b2, h, True).astype(jnp.bfloat16)         # (128,  tm)
    h = layer(w3, b3, h, True).astype(jnp.bfloat16)         # (256,  tm)
    h = layer(w4, b4, h, True).astype(jnp.bfloat16)         # (512,  tm)
    h = layer(w5, b5, h, False)                             # (1024, tm), no ReLU
    o_ref[0] = h.astype(o_ref.dtype)


def fold_bn(w, b, gamma, beta, mean, var):
    """Fold eval-mode BatchNorm1d into the pointwise-conv weight/bias.

    w: (C_out, C_in); b/gamma/beta/mean/var: (C_out,).
    Returns bf16 weight (C_out, C_in) and f32 bias (C_out, 1).
    """
    scale = gamma / jnp.sqrt(var + BN_EPS)
    w_eff = (w * scale[:, None]).astype(jnp.bfloat16)
    b_eff = (scale * (b - mean) + beta).reshape(-1, 1).astype(jnp.float32)
    return w_eff, b_eff


def init_params(key):
    """Deterministic synthetic parameters (shapes from PointNetfeat.__init__)."""
    params = []
    for i in range(5):
        cin, cout = CHANNELS[i], CHANNELS[i + 1]
        key, kw, kb, kg, kbe, km, kv = jax.random.split(key, 7)
        w = jax.random.normal(kw, (cout, cin), jnp.float32) * (1.0 / np.sqrt(cin))
        b = jax.random.normal(kb, (cout,), jnp.float32) * 0.05
        gamma = 1.0 + 0.1 * jax.random.normal(kg, (cout,), jnp.float32)
        beta = 0.05 * jax.random.normal(kbe, (cout,), jnp.float32)
        mean = 0.1 * jax.random.normal(km, (cout,), jnp.float32)
        var = 1.0 + 0.1 * jnp.abs(jax.random.normal(kv, (cout,), jnp.float32))
        params.append((w, b, gamma, beta, mean, var))
    return params


@functools.partial(jax.jit, static_argnames=("tm", "out_dtype"))
def pointnetfeat_forward(x, flat_params, *, tm=1024, out_dtype=jnp.bfloat16):
    """x: (B, 3, N) f32 -> (B*N, 1024) out_dtype (PyTorch view(-1, 1024) semantics)."""
    B, C_in, N = x.shape
    assert C_in == CHANNELS[0]

    # Lane-dense tiles: tm is a multiple of 128; pad N up to a tile multiple.
    tm = max(128, (int(tm) // 128) * 128)
    tm = min(tm, _round_up(N, 128))
    N_pad = _round_up(N, tm)
    if N_pad != N:
        # Zero-pad extra point columns; pointwise conv keeps them isolated.
        x = jnp.pad(x, ((0, 0), (0, 0), (0, N_pad - N)))

    grid = (B, N_pad // tm)
    const_map = lambda b, p: (0, 0)

    in_specs = [pl.BlockSpec((1, C_in, tm), lambda b, p: (b, 0, p))]
    for prm in flat_params:
        in_specs.append(pl.BlockSpec(prm.shape, const_map))

    M = B * N_pad
    out_bytes = jnp.dtype(out_dtype).itemsize
    sum_cc = sum(ci * co for ci, co in zip(CHANNELS[:-1], CHANNELS[1:]))
    cost = pl.CostEstimate(
        flops=2 * M * sum_cc,
        transcendentals=0,
        bytes_accessed=(M * C_in * 4              # input (f32)
                        + 2 * sum_cc              # bf16 weights
                        + sum(CHANNELS[1:]) * 4   # f32 biases
                        + M * C_OUT * out_bytes)) # output (bf16 by default)

    y = pl.pallas_call(
        pointnetfeat_kernel,
        out_shape=jax.ShapeDtypeStruct((B, C_OUT, N_pad), out_dtype),
        grid=grid,
        in_specs=in_specs,
        out_specs=pl.BlockSpec((1, C_OUT, tm), lambda b, p: (b, 0, p)),
        compiler_params=pltpu.CompilerParams(
            dimension_semantics=("parallel", "parallel"),
            # 56 MiB: below v7x's 64 MiB physical VMEM, plenty for tm<=1024.
            vmem_limit_bytes=56 * 1024 * 1024),
        cost_estimate=cost,
    )(x, *flat_params)

    if N_pad != N:
        y = y[:, :, :N]

    # PyTorch: x.view(-1, 1024) on the channel-major (B, 1024, N) tensor.
    # Row-major reshape == torch .view — no transpose needed.
    return y.reshape(-1, C_OUT)


def reference_forward_f32(x, params):
    """Pure-f32 JAX reference of the PyTorch forward (trans=False, eval BN)."""
    h = x  # (B, 3, N)
    for i, (w, b, gamma, beta, mean, var) in enumerate(params):
        h = jnp.einsum("oc,bcn->bon", w, h) + b[None, :, None]
        h = (gamma[None, :, None] * (h - mean[None, :, None])
             / jnp.sqrt(var[None, :, None] + BN_EPS) + beta[None, :, None])
        if i < len(params) - 1:
            h = jnp.maximum(h, 0.0)
    return h.reshape(-1, C_OUT)


def reference_forward_kernel_path(x, flat_params, out_dtype=jnp.bfloat16):
    """Same math path as the kernel: folded BN, layer-1 f32 FMA with bf16
    weights, layers 2-5 bf16 matmuls with f32 accumulation, bf16 output."""
    w1, b1 = flat_params[0], flat_params[1]
    h = jnp.einsum("oc,bcn->bon", w1.astype(jnp.float32), x) + b1[None, :, :]
    h = jnp.maximum(h, 0.0)
    n_layers = len(flat_params) // 2
    for i in range(1, n_layers):
        w, b = flat_params[2 * i], flat_params[2 * i + 1]
        acc = jnp.einsum("oc,bcn->bon", w, h.astype(jnp.bfloat16),
                         preferred_element_type=jnp.float32)
        h = acc + b[None, :, :]
        if i < n_layers - 1:
            h = jnp.maximum(h, 0.0)
    return h.astype(out_dtype).reshape(-1, C_OUT)


if __name__ == "__main__":
    key = jax.random.PRNGKey(0)
    kx, kp = jax.random.split(key)

    params = init_params(kp)
    flat_params = []
    for p in params:
        w_eff, b_eff = fold_bn(*p)
        flat_params.extend([w_eff, b_eff])
    flat_params = tuple(flat_params)

    # Small demo shapes: batch=2, 3 input channels, 512 points.
    B, N = 2, 512
    x = jax.random.normal(kx, (B, 3, N), jnp.float32)

    out = pointnetfeat_forward(x, flat_params)
    out = jax.block_until_ready(out)
    assert out.shape == (B * N, C_OUT), out.shape
    assert out.dtype == jnp.bfloat16, out.dtype

    # Tight check vs. a reference following the kernel's exact math path.
    ref_kp = reference_forward_kernel_path(x, flat_params)
    np.testing.assert_allclose(np.asarray(out.astype(jnp.float32)),
                               np.asarray(ref_kp.astype(jnp.float32)),
                               rtol=2e-2, atol=2e-2)

    # Looser semantic check vs. pure-f32 PyTorch math (bf16 rounding tolerance).
    ref_f32 = reference_forward_f32(x, params)
    np.testing.assert_allclose(np.asarray(out.astype(jnp.float32)),
                               np.asarray(ref_f32), rtol=6e-2, atol=6e-2)

    # Padding path: N not a multiple of 128 (e.g. canonical num_points=2500-style).
    N2 = 320
    x2 = jax.random.normal(jax.random.PRNGKey(1), (B, 3, N2), jnp.float32)
    out2 = jax.block_until_ready(pointnetfeat_forward(x2, flat_params))
    assert out2.shape == (B * N2, C_OUT), out2.shape
    ref2 = reference_forward_kernel_path(x2, flat_params)
    np.testing.assert_allclose(np.asarray(out2.astype(jnp.float32)),
                               np.asarray(ref2.astype(jnp.float32)),
                               rtol=2e-2, atol=2e-2)

    print("KERNEL_OK")
</pallas_src>

<mosaic_0001>
module attributes {stable_mosaic.version = 11 : i64} {
  func.func @pointnetfeat_kernel(%arg0: i32, %arg1: i32, %arg2: memref<1x3x512xf32, #tpu.memory_space<vmem>>, %arg3: memref<64x3xbf16, #tpu.memory_space<vmem>>, %arg4: memref<64x1xf32, #tpu.memory_space<vmem>>, %arg5: memref<128x64xbf16, #tpu.memory_space<vmem>>, %arg6: memref<128x1xf32, #tpu.memory_space<vmem>>, %arg7: memref<256x128xbf16, #tpu.memory_space<vmem>>, %arg8: memref<256x1xf32, #tpu.memory_space<vmem>>, %arg9: memref<512x256xbf16, #tpu.memory_space<vmem>>, %arg10: memref<512x1xf32, #tpu.memory_space<vmem>>, %arg11: memref<1024x512xbf16, #tpu.memory_space<vmem>>, %arg12: memref<1024x1xf32, #tpu.memory_space<vmem>>, %arg13: memref<1x1024x512xbf16, #tpu.memory_space<vmem>>) attributes {dimension_semantics = [#tpu.dimension_semantics<parallel>, #tpu.dimension_semantics<parallel>], iteration_bounds = array<i64: 2, 1>, scalar_prefetch = 0 : i64, scratch_operands = 0 : i64, tpu.core_type = #tpu.core_type<tc>, window_params = [{transform_indices = @transform_0, window_bounds = array<i64: 1, 3, 512>}, {pipeline_mode = #tpu.pipeline_mode<synchronous>, transform_indices = @transform_1, window_bounds = array<i64: 64, 3>}, {pipeline_mode = #tpu.pipeline_mode<synchronous>, transform_indices = @transform_2, window_bounds = array<i64: 64, 1>}, {pipeline_mode = #tpu.pipeline_mode<synchronous>, transform_indices = @transform_3, window_bounds = array<i64: 128, 64>}, {pipeline_mode = #tpu.pipeline_mode<synchronous>, transform_indices = @transform_4, window_bounds = array<i64: 128, 1>}, {pipeline_mode = #tpu.pipeline_mode<synchronous>, transform_indices = @transform_5, window_bounds = array<i64: 256, 128>}, {pipeline_mode = #tpu.pipeline_mode<synchronous>, transform_indices = @transform_6, window_bounds = array<i64: 256, 1>}, {pipeline_mode = #tpu.pipeline_mode<synchronous>, transform_indices = @transform_7, window_bounds = array<i64: 512, 256>}, {pipeline_mode = #tpu.pipeline_mode<synchronous>, transform_indices = @transform_8, window_bounds = array<i64: 512, 1>}, {pipeline_mode = #tpu.pipeline_mode<synchronous>, transform_indices = @transform_9, window_bounds = array<i64: 1024, 512>}, {pipeline_mode = #tpu.pipeline_mode<synchronous>, transform_indices = @transform_10, window_bounds = array<i64: 1024, 1>}, {transform_indices = @transform_11, window_bounds = array<i64: 1, 1024, 512>}]} {
    %c0 = arith.constant 0 : index
    %c0_0 = arith.constant 0 : index
    %c0_1 = arith.constant 0 : index
    %0 = vector.load %arg2[%c0, %c0_0, %c0_1] : memref<1x3x512xf32, #tpu.memory_space<vmem>>, vector<1x3x512xf32>
    %1 = vector.shape_cast %0 : vector<1x3x512xf32> to vector<3x512xf32>
    %c0_2 = arith.constant 0 : index
    %c0_3 = arith.constant 0 : index
    %2 = vector.load %arg3[%c0_2, %c0_3] : memref<64x3xbf16, #tpu.memory_space<vmem>>, vector<64x3xbf16>
    %3 = arith.extf %2 : vector<64x3xbf16> to vector<64x3xf32>
    %c0_4 = arith.constant 0 : index
    %c0_5 = arith.constant 0 : index
    %4 = vector.load %arg4[%c0_4, %c0_5] : memref<64x1xf32, #tpu.memory_space<vmem>>, vector<64x1xf32>
    %5 = vector.extract_strided_slice %3 {offsets = [0, 0], sizes = [64, 1], strides = [1, 1]} : vector<64x3xf32> to vector<64x1xf32>
    %6 = vector.extract_strided_slice %1 {offsets = [0, 0], sizes = [1, 512], strides = [1, 1]} : vector<3x512xf32> to vector<1x512xf32>
    %7 = vector.broadcast %5 : vector<64x1xf32> to vector<64x512xf32>
    %8 = vector.broadcast %6 : vector<1x512xf32> to vector<64x512xf32>
    %9 = arith.mulf %7, %8 : vector<64x512xf32>
    %10 = vector.broadcast %4 : vector<64x1xf32> to vector<64x512xf32>
    %11 = arith.addf %10, %9 : vector<64x512xf32>
    %12 = vector.extract_strided_slice %3 {offsets = [0, 1], sizes = [64, 1], strides = [1, 1]} : vector<64x3xf32> to vector<64x1xf32>
    %13 = vector.extract_strided_slice %1 {offsets = [1, 0], sizes = [1, 512], strides = [1, 1]} : vector<3x512xf32> to vector<1x512xf32>
    %14 = vector.broadcast %12 : vector<64x1xf32> to vector<64x512xf32>
    %15 = vector.broadcast %13 : vector<1x512xf32> to vector<64x512xf32>
    %16 = arith.mulf %14, %15 : vector<64x512xf32>
    %17 = arith.addf %11, %16 : vector<64x512xf32>
    %18 = vector.extract_strided_slice %3 {offsets = [0, 2], sizes = [64, 1], strides = [1, 1]} : vector<64x3xf32> to vector<64x1xf32>
    %19 = vector.extract_strided_slice %1 {offsets = [2, 0], sizes = [1, 512], strides = [1, 1]} : vector<3x512xf32> to vector<1x512xf32>
    %20 = vector.broadcast %18 : vector<64x1xf32> to vector<64x512xf32>
    %21 = vector.broadcast %19 : vector<1x512xf32> to vector<64x512xf32>
    %22 = arith.mulf %20, %21 : vector<64x512xf32>
    %23 = arith.addf %17, %22 : vector<64x512xf32>
    %cst = arith.constant 0.000000e+00 : f32
    %24 = vector.broadcast %cst : f32 to vector<64x512xf32>
    %25 = arith.maximumf %23, %24 : vector<64x512xf32>
    %26 = arith.truncf %25 : vector<64x512xf32> to vector<64x512xbf16>
    %c0_6 = arith.constant 0 : index
    %c0_7 = arith.constant 0 : index
    %27 = vector.load %arg5[%c0_6, %c0_7] : memref<128x64xbf16, #tpu.memory_space<vmem>>, vector<128x64xbf16>
    %cst_8 = arith.constant dense<0.000000e+00> : vector<128x512xf32>
    %28 = tpu.matmul %27, %26, %cst_8 {dimension_numbers = #tpu.dot_dimension_numbers<[1], [0], [0], [1], [0, 0, 1, 1], [], []>} : vector<128x64xbf16>, vector<64x512xbf16>, vector<128x512xf32> -> vector<128x512xf32>
    %c0_9 = arith.constant 0 : index
    %c0_10 = arith.constant 0 : index
    %29 = vector.load %arg6[%c0_9, %c0_10] : memref<128x1xf32, #tpu.memory_space<vmem>>, vector<128x1xf32>
    %30 = vector.broadcast %29 : vector<128x1xf32> to vector<128x512xf32>
    %31 = arith.addf %28, %30 : vector<128x512xf32>
    %cst_11 = arith.constant 0.000000e+00 : f32
    %32 = vector.broadcast %cst_11 : f32 to vector<128x512xf32>
    %33 = arith.maximumf %31, %32 : vector<128x512xf32>
    %34 = arith.truncf %33 : vector<128x512xf32> to vector<128x512xbf16>
    %c0_12 = arith.constant 0 : index
    %c0_13 = arith.constant 0 : index
    %35 = vector.load %arg7[%c0_12, %c0_13] : memref<256x128xbf16, #tpu.memory_space<vmem>>, vector<256x128xbf16>
    %cst_14 = arith.constant dense<0.000000e+00> : vector<256x512xf32>
    %36 = tpu.matmul %35, %34, %cst_14 {dimension_numbers = #tpu.dot_dimension_numbers<[1], [0], [0], [1], [0, 0, 1, 1], [], []>} : vector<256x128xbf16>, vector<128x512xbf16>, vector<256x512xf32> -> vector<256x512xf32>
    %c0_15 = arith.constant 0 : index
    %c0_16 = arith.constant 0 : index
    %37 = vector.load %arg8[%c0_15, %c0_16] : memref<256x1xf32, #tpu.memory_space<vmem>>, vector<256x1xf32>
    %38 = vector.broadcast %37 : vector<256x1xf32> to vector<256x512xf32>
    %39 = arith.addf %36, %38 : vector<256x512xf32>
    %cst_17 = arith.constant 0.000000e+00 : f32
    %40 = vector.broadcast %cst_17 : f32 to vector<256x512xf32>
    %41 = arith.maximumf %39, %40 : vector<256x512xf32>
    %42 = arith.truncf %41 : vector<256x512xf32> to vector<256x512xbf16>
    %c0_18 = arith.constant 0 : index
    %c0_19 = arith.constant 0 : index
    %43 = vector.load %arg9[%c0_18, %c0_19] : memref<512x256xbf16, #tpu.memory_space<vmem>>, vector<512x256xbf16>
    %cst_20 = arith.constant dense<0.000000e+00> : vector<512x512xf32>
    %44 = tpu.matmul %43, %42, %cst_20 {dimension_numbers = #tpu.dot_dimension_numbers<[1], [0], [0], [1], [0, 0, 1, 1], [], []>} : vector<512x256xbf16>, vector<256x512xbf16>, vector<512x512xf32> -> vector<512x512xf32>
    %c0_21 = arith.constant 0 : index
    %c0_22 = arith.constant 0 : index
    %45 = vector.load %arg10[%c0_21, %c0_22] : memref<512x1xf32, #tpu.memory_space<vmem>>, vector<512x1xf32>
    %46 = vector.broadcast %45 : vector<512x1xf32> to vector<512x512xf32>
    %47 = arith.addf %44, %46 : vector<512x512xf32>
    %cst_23 = arith.constant 0.000000e+00 : f32
    %48 = vector.broadcast %cst_23 : f32 to vector<512x512xf32>
    %49 = arith.maximumf %47, %48 : vector<512x512xf32>
    %50 = arith.truncf %49 : vector<512x512xf32> to vector<512x512xbf16>
    %c0_24 = arith.constant 0 : index
    %c0_25 = arith.constant 0 : index
    %51 = vector.load %arg11[%c0_24, %c0_25] : memref<1024x512xbf16, #tpu.memory_space<vmem>>, vector<1024x512xbf16>
    %cst_26 = arith.constant dense<0.000000e+00> : vector<1024x512xf32>
    %52 = tpu.matmul %51, %50, %cst_26 {dimension_numbers = #tpu.dot_dimension_numbers<[1], [0], [0], [1], [0, 0, 1, 1], [], []>} : vector<1024x512xbf16>, vector<512x512xbf16>, vector<1024x512xf32> -> vector<1024x512xf32>
    %c0_27 = arith.constant 0 : index
    %c0_28 = arith.constant 0 : index
    %53 = vector.load %arg12[%c0_27, %c0_28] : memref<1024x1xf32, #tpu.memory_space<vmem>>, vector<1024x1xf32>
    %54 = vector.broadcast %53 : vector<1024x1xf32> to vector<1024x512xf32>
    %55 = arith.addf %52, %54 : vector<1024x512xf32>
    %56 = arith.truncf %55 : vector<1024x512xf32> to vector<1024x512xbf16>
    %c0_29 = arith.constant 0 : index
    %c0_30 = arith.constant 0 : index
    %c0_31 = arith.constant 0 : index
    %57 = vector.load %arg13[%c0_29, %c0_30, %c0_31] : memref<1x1024x512xbf16, #tpu.memory_space<vmem>>, vector<1x1024x512xbf16>
    %58 = vector.shape_cast %57 : vector<1x1024x512xbf16> to vector<1024x512xbf16>
    %59 = vector.shape_cast %56 : vector<1024x512xbf16> to vector<1x1024x512xbf16>
    tpu.vector_store %arg13[%c0_29, %c0_30, %c0_31], %59 {strides = array<i32>} : memref<1x1024x512xbf16, #tpu.memory_space<vmem>>, vector<1x1024x512xbf16>,
    return
  }
  func.func @transform_0(%arg0: i32, %arg1: i32) -> (i32, i32, i32) {
    %c0_i32 = arith.constant 0 : i32
    %c0_i32_0 = arith.constant 0 : i32
    return %arg0, %c0_i32, %arg1 : i32, i32, i32
  }
  func.func @transform_1(%arg0: i32, %arg1: i32) -> (i32, i32) {
    %c0_i32 = arith.constant 0 : i32
    %c0_i32_0 = arith.constant 0 : i32
    %c0_i32_1 = arith.constant 0 : i32
    return %c0_i32, %c0_i32_0 : i32, i32
  }
  func.func @transform_2(%arg0: i32, %arg1: i32) -> (i32, i32) {
    %c0_i32 = arith.constant 0 : i32
    %c0_i32_0 = arith.constant 0 : i32
    %c0_i32_1 = arith.constant 0 : i32
    return %c0_i32, %c0_i32_0 : i32, i32
  }
  func.func @transform_3(%arg0: i32, %arg1: i32) -> (i32, i32) {
    %c0_i32 = arith.constant 0 : i32
    %c0_i32_0 = arith.constant 0 : i32
    %c0_i32_1 = arith.constant 0 : i32
    return %c0_i32, %c0_i32_0 : i32, i32
  }
  func.func @transform_4(%arg0: i32, %arg1: i32) -> (i32, i32) {
    %c0_i32 = arith.constant 0 : i32
    %c0_i32_0 = arith.constant 0 : i32
    %c0_i32_1 = arith.constant 0 : i32
    return %c0_i32, %c0_i32_0 : i32, i32
  }
  func.func @transform_5(%arg0: i32, %arg1: i32) -> (i32, i32) {
    %c0_i32 = arith.constant 0 : i32
    %c0_i32_0 = arith.constant 0 : i32
    %c0_i32_1 = arith.constant 0 : i32
    return %c0_i32, %c0_i32_0 : i32, i32
  }
  func.func @transform_6(%arg0: i32, %arg1: i32) -> (i32, i32) {
    %c0_i32 = arith.constant 0 : i32
    %c0_i32_0 = arith.constant 0 : i32
    %c0_i32_1 = arith.constant 0 : i32
    return %c0_i32, %c0_i32_0 : i32, i32
  }
  func.func @transform_7(%arg0: i32, %arg1: i32) -> (i32, i32) {
    %c0_i32 = arith.constant 0 : i32
    %c0_i32_0 = arith.constant 0 : i32
    %c0_i32_1 = arith.constant 0 : i32
    return %c0_i32, %c0_i32_0 : i32, i32
  }
  func.func @transform_8(%arg0: i32, %arg1: i32) -> (i32, i32) {
    %c0_i32 = arith.constant 0 : i32
    %c0_i32_0 = arith.constant 0 : i32
    %c0_i32_1 = arith.constant 0 : i32
    return %c0_i32, %c0_i32_0 : i32, i32
  }
  func.func @transform_9(%arg0: i32, %arg1: i32) -> (i32, i32) {
    %c0_i32 = arith.constant 0 : i32
    %c0_i32_0 = arith.constant 0 : i32
    %c0_i32_1 = arith.constant 0 : i32
    return %c0_i32, %c0_i32_0 : i32, i32
  }
  func.func @transform_10(%arg0: i32, %arg1: i32) -> (i32, i32) {
    %c0_i32 = arith.constant 0 : i32
    %c0_i32_0 = arith.constant 0 : i32
    %c0_i32_1 = arith.constant 0 : i32
    return %c0_i32, %c0_i32_0 : i32, i32
  }
  func.func @transform_11(%arg0: i32, %arg1: i32) -> (i32, i32, i32) {
    %c0_i32 = arith.constant 0 : i32
    %c0_i32_0 = arith.constant 0 : i32
    return %arg0, %c0_i32, %arg1 : i32, i32, i32
  }
}

</mosaic_0001>

<llo_original>
// kernel: pointnetfeat_forward.1
$region0: #{pointnetfeat_forward.1}
  #allocation0 [shape = 'u32[]', space=smem, size = 0x4, offset = 0x4, fixed_abs, tag = 'smem constant byte address 0x4 - core index']
  #allocation1 [shape = 'u32[144,128]{1,0:T(1,128)}', space=vmem, size = 0x12000, scoped, tag = 'internal scratch']
  %s0 = inlined_call_operand.vmem [shape: f32[2,3,512], index: 0, kind: input, shape index: {}]
  %s1 = inlined_call_operand.vmem [shape: bf16[64,3], index: 1, kind: input, shape index: {}]
  %s2 = inlined_call_operand.vmem [shape: f32[64,1], index: 2, kind: input, shape index: {}]
  %s3 = inlined_call_operand.vmem [shape: bf16[128,64], index: 3, kind: input, shape index: {}]
  %s4 = inlined_call_operand.vmem [shape: f32[128,1], index: 4, kind: input, shape index: {}]
  %s5 = inlined_call_operand.hbm [shape: bf16[256,128], index: 5, kind: input, shape index: {}]
  %s6 = inlined_call_operand.vmem [shape: f32[256,1], index: 6, kind: input, shape index: {}]
  %s7 = inlined_call_operand.hbm [shape: bf16[512,256], index: 7, kind: input, shape index: {}]
  %s8 = inlined_call_operand.vmem [shape: f32[512,1], index: 8, kind: input, shape index: {}]
  %s9 = inlined_call_operand.hbm [shape: bf16[1024,512], index: 9, kind: input, shape index: {}]
  %s10 = inlined_call_operand.vmem [shape: f32[1024,1], index: 10, kind: input, shape index: {}]
  %s11 = inlined_call_operand.vmem [shape: bf16[2,1024,512], index: 11, kind: output, shape index: {}]
  %s12 = sld [smem:[#allocation0]]
  $region89: #{pointnetfeat_forward.1} parent=0
    _
  %s14 = ssub.s32 1, %s12
  %s15 = scalar_select 0, %s14, %s12
  $region1: #{pointnetfeat_forward.1} parent=0
    #allocation2 [shape = 'u8[65536]{0}', space=vmem, size = 0x10000, scoped, tag = 'input window, operand 5, single buffered']
    #allocation3 [shape = 's32[2]{0}', space=sflag, size = 0x8, scoped, tag = 'scoped memory for pointnetfeat_forward.1']
    #allocation4 [shape = 'u8[262144]{0}', space=vmem, size = 0x40000, scoped, tag = 'input window, operand 7, single buffered']
    #allocation5 [shape = 's32[1]{0}', space=sflag, size = 0x4, scoped, tag = 'scoped memory for pointnetfeat_forward.1']
    #allocation6 [shape = 'u8[1048576]{0}', space=vmem, size = 0x100000, scoped, tag = 'input window, operand 9, single buffered']
    %16 = vsyncpa [#allocation3], 0
    %17 = vsyncpa [#allocation5], 0
    loop: start=0, step=1, limit=4
    $region2: #{pointnetfeat_forward.1} parent=1 // loop_pre_header
      _
    $region3: #{pointnetfeat_forward.1} parent=1 // loop_header
      %s19 = sphi 0, %s23
      %p20 = scmp.ge.s32.totalorder %s19, 4
      %s26 = sphi 0, %s38
      %s27 = sphi 0, %s34
      %s28 = sphi 0, %s26
      %s29 = sphi 0, %s27
      %s30 = sphi 0, %s28
      %s31 = sphi 0, %s29
      %s43 = sphi 0, %s45
      %s46 = sphi 0, %s43
      %s47 = sphi 0, %s46
      %s63 = sphi 0, %s47
      %s67 = sphi 0, %s67
      %s69 = sphi 0, %s67
      %s70 = sphi 0, %s69
      %s84 = sphi 0, %s70
      %s88 = sphi 0, %s88
      %s90 = sphi 0, %s88
      %s91 = sphi 0, %s90
      %s105 = sphi 0, %s91
      %s109 = sphi 0, %s109
      %s111 = sphi 0, %s109
      %s112 = sphi 0, %s111
      %s126 = sphi 0, %s112
      %s130 = sphi 0, %s130
      %s132 = sphi 0, %s130
      %s133 = sphi 0, %s132
      %s147 = sphi 0, %s133
      %s151 = sphi 0, %s151
      %s153 = sphi 0, %s151
      %s154 = sphi 0, %s153
      %s168 = sphi 0, %s154
      %s172 = sphi 0, %s172
      %s174 = sphi 0, %s172
      %s175 = sphi 0, %s174
      %s189 = sphi 0, %s175
      %s193 = sphi 0, %s193
      %s195 = sphi 0, %s193
      %s196 = sphi 0, %s195
      %s210 = sphi 0, %s196
      %s214 = sphi 0, %s214
      %s216 = sphi 0, %s214
      %s217 = sphi 0, %s216
      %s231 = sphi 0, %s217
      %s235 = sphi 0, %s235
      %s237 = sphi 0, %s235
      %s238 = sphi 0, %s237
      %s252 = sphi 0, %s238
      %s256 = sphi 0, %s256
      %s258 = sphi 0, %s256
      %s259 = sphi 0, %s258
      %s273 = sphi 0, %s259
      %s281 = sphi 0, %s283
      %s284 = sphi 0, %s281
      %s285 = sphi 0, %s284
      %s301 = sphi 0, %s285
    $region4: #{pointnetfeat_forward.1} parent=1 // loop_header_branch
      %22 = sbr.rel (%p20) target = $region8
    $region5: #{pointnetfeat_forward.1} parent=1 // loop_body
      %s24 = ssub.s32 %s19, 1
      %s25 = ssub.s32 %s19, 2
      %s32 = sadd.s32 1, %s27
      %p33 = scmp.ge.s32.totalorder %s32, 1
      %s34 = scalar_select %p33, 0, %s32
      %s35 = sadd.s32 1, %s26
      %s36 = scalar_select %p33, %s35, %s26
      %p37 = scmp.ge.s32.totalorder %s36, 2
      %s38 = scalar_select %p37, 0, %s36
      %s39 = ssub.s32 %s26, %s38
      %s40 = ssub.s32 %s27, %s34
      %s41 = sor.u32 %s39, %s40
      %p42 = scmp.eq.s32.totalorder %s41, 0
      %s44 = sadd.s32 %s43, 1
      %s45 = scalar_select %p42, %s43, %s44
      %p48 = pneg %p42
      %p49 = scmp.eq.s32.totalorder %s19, 1
      %p50 = por %p48, %p49
      %p51 = scmp.ne.s32.totalorder %s43, %s46
      %p52 = scmp.eq.s32.totalorder %s19, 0
      %p53 = por %p51, %p52
      %p54 = scmp.ne.s32.totalorder %s43, %s46
      %p55 = scmp.eq.s32.totalorder %s24, 1
      %p56 = por %p54, %p55
      %p57 = scmp.ne.s32.totalorder %s46, %s47
      %p58 = scmp.eq.s32.totalorder %s24, 0
      %p59 = por %p57, %p58
      %p60 = scmp.ne.s32.totalorder %s46, %s47
      %p61 = scmp.eq.s32.totalorder %s25, 1
      %p62 = por %p60, %p61
      %p64 = scmp.ne.s32.totalorder %s47, %s63
      %p65 = scmp.eq.s32.totalorder %s25, 0
      %p66 = por %p64, %p65
      %s68 = sadd.s32 %s67, 1
      %p71 = scmp.eq.s32.totalorder %s19, 1
      %p72 = scmp.ne.s32.totalorder %s67, %s69
      %p73 = scmp.eq.s32.totalorder %s19, 0
      %p74 = por %p72, %p73
      %p75 = scmp.ne.s32.totalorder %s67, %s69
      %p76 = scmp.eq.s32.totalorder %s24, 1
      %p77 = por %p75, %p76
      %p78 = scmp.ne.s32.totalorder %s69, %s70
      %p79 = scmp.eq.s32.totalorder %s24, 0
      %p80 = por %p78, %p79
      %p81 = scmp.ne.s32.totalorder %s69, %s70
      %p82 = scmp.eq.s32.totalorder %s25, 1
      %p83 = por %p81, %p82
      %p85 = scmp.ne.s32.totalorder %s70, %s84
      %p86 = scmp.eq.s32.totalorder %s25, 0
      %p87 = por %p85, %p86
      %s89 = sadd.s32 %s88, 1
      %p92 = scmp.eq.s32.totalorder %s19, 1
      %p93 = scmp.ne.s32.totalorder %s88, %s90
      %p94 = scmp.eq.s32.totalorder %s19, 0
      %p95 = por %p93, %p94
      %p96 = scmp.ne.s32.totalorder %s88, %s90
      %p97 = scmp.eq.s32.totalorder %s24, 1
      %p98 = por %p96, %p97
      %p99 = scmp.ne.s32.totalorder %s90, %s91
      %p100 = scmp.eq.s32.totalorder %s24, 0
      %p101 = por %p99, %p100
      %p102 = scmp.ne.s32.totalorder %s90, %s91
      %p103 = scmp.eq.s32.totalorder %s25, 1
      %p104 = por %p102, %p103
      %p106 = scmp.ne.s32.totalorder %s91, %s105
      %p107 = scmp.eq.s32.totalorder %s25, 0
      %p108 = por %p106, %p107
      %s110 = sadd.s32 %s109, 1
      %p113 = scmp.eq.s32.totalorder %s19, 1
      %p114 = scmp.ne.s32.totalorder %s109, %s111
      %p115 = scmp.eq.s32.totalorder %s19, 0
      %p116 = por %p114, %p115
      %p117 = scmp.ne.s32.totalorder %s109, %s111
      %p118 = scmp.eq.s32.totalorder %s24, 1
      %p119 = por %p117, %p118
      %p120 = scmp.ne.s32.totalorder %s111, %s112
      %p121 = scmp.eq.s32.totalorder %s24, 0
      %p122 = por %p120, %p121
      %p123 = scmp.ne.s32.totalorder %s111, %s112
      %p124 = scmp.eq.s32.totalorder %s25, 1
      %p125 = por %p123, %p124
      %p127 = scmp.ne.s32.totalorder %s112, %s126
      %p128 = scmp.eq.s32.totalorder %s25, 0
      %p129 = por %p127, %p128
      %s131 = sadd.s32 %s130, 1
      %p134 = scmp.eq.s32.totalorder %s19, 1
      %p135 = scmp.ne.s32.totalorder %s130, %s132
      %p136 = scmp.eq.s32.totalorder %s19, 0
      %p137 = por %p135, %p136
      %p138 = scmp.ne.s32.totalorder %s130, %s132
      %p139 = scmp.eq.s32.totalorder %s24, 1
      %p140 = por %p138, %p139
      %p141 = scmp.ne.s32.totalorder %s132, %s133
      %p142 = scmp.eq.s32.totalorder %s24, 0
      %p143 = por %p141, %p142
      %p144 = scmp.ne.s32.totalorder %s132, %s133
      %p145 = scmp.eq.s32.totalorder %s25, 1
      %p146 = por %p144, %p145
      %p148 = scmp.ne.s32.totalorder %s133, %s147
      %p149 = scmp.eq.s32.totalorder %s25, 0
      %p150 = por %p148, %p149
      %s152 = sadd.s32 %s151, 1
      %p155 = scmp.eq.s32.totalorder %s19, 1
      %p156 = scmp.ne.s32.totalorder %s151, %s153
      %p157 = scmp.eq.s32.totalorder %s19, 0
      %p158 = por %p156, %p157
      %p159 = scmp.ne.s32.totalorder %s151, %s153
      %p160 = scmp.eq.s32.totalorder %s24, 1
      %p161 = por %p159, %p160
      %p162 = scmp.ne.s32.totalorder %s153, %s154
      %p163 = scmp.eq.s32.totalorder %s24, 0
      %p164 = por %p162, %p163
      %p165 = scmp.ne.s32.totalorder %s153, %s154
      %p166 = scmp.eq.s32.totalorder %s25, 1
      %p167 = por %p165, %p166
      %p169 = scmp.ne.s32.totalorder %s154, %s168
      %p170 = scmp.eq.s32.totalorder %s25, 0
      %p171 = por %p169, %p170
      %s173 = sadd.s32 %s172, 1
      %p176 = scmp.eq.s32.totalorder %s19, 1
      %p177 = scmp.ne.s32.totalorder %s172, %s174
      %p178 = scmp.eq.s32.totalorder %s19, 0
      %p179 = por %p177, %p178
      %p180 = scmp.ne.s32.totalorder %s172, %s174
      %p181 = scmp.eq.s32.totalorder %s24, 1
      %p182 = por %p180, %p181
      %p183 = scmp.ne.s32.totalorder %s174, %s175
      %p184 = scmp.eq.s32.totalorder %s24, 0
      %p185 = por %p183, %p184
      %p186 = scmp.ne.s32.totalorder %s174, %s175
      %p187 = scmp.eq.s32.totalorder %s25, 1
      %p188 = por %p186, %p187
      %p190 = scmp.ne.s32.totalorder %s175, %s189
      %p191 = scmp.eq.s32.totalorder %s25, 0
      %p192 = por %p190, %p191
      %s194 = sadd.s32 %s193, 1
      %p197 = scmp.eq.s32.totalorder %s19, 1
      %p198 = scmp.ne.s32.totalorder %s193, %s195
      %p199 = scmp.eq.s32.totalorder %s19, 0
      %p200 = por %p198, %p199
      %p201 = scmp.ne.s32.totalorder %s193, %s195
      %p202 = scmp.eq.s32.totalorder %s24, 1
      %p203 = por %p201, %p202
      %p204 = scmp.ne.s32.totalorder %s195, %s196
      %p205 = scmp.eq.s32.totalorder %s24, 0
      %p206 = por %p204, %p205
      %p207 = scmp.ne.s32.totalorder %s195, %s196
      %p208 = scmp.eq.s32.totalorder %s25, 1
      %p209 = por %p207, %p208
      %p211 = scmp.ne.s32.totalorder %s196, %s210
      %p212 = scmp.eq.s32.totalorder %s25, 0
      %p213 = por %p211, %p212
      %s215 = sadd.s32 %s214, 1
      %p218 = scmp.eq.s32.totalorder %s19, 1
      %p219 = scmp.ne.s32.totalorder %s214, %s216
      %p220 = scmp.eq.s32.totalorder %s19, 0
      %p221 = por %p219, %p220
      %p222 = scmp.ne.s32.totalorder %s214, %s216
      %p223 = scmp.eq.s32.totalorder %s24, 1
      %p224 = por %p222, %p223
      %p225 = scmp.ne.s32.totalorder %s216, %s217
      %p226 = scmp.eq.s32.totalorder %s24, 0
      %p227 = por %p225, %p226
      %p228 = scmp.ne.s32.totalorder %s216, %s217
      %p229 = scmp.eq.s32.totalorder %s25, 1
      %p230 = por %p228, %p229
      %p232 = scmp.ne.s32.totalorder %s217, %s231
      %p233 = scmp.eq.s32.totalorder %s25, 0
      %p234 = por %p232, %p233
      %s236 = sadd.s32 %s235, 1
      %p239 = scmp.eq.s32.totalorder %s19, 1
      %p240 = scmp.ne.s32.totalorder %s235, %s237
      %p241 = scmp.eq.s32.totalorder %s19, 0
      %p242 = por %p240, %p241
      %p243 = scmp.ne.s32.totalorder %s235, %s237
      %p244 = scmp.eq.s32.totalorder %s24, 1
      %p245 = por %p243, %p244
      %p246 = scmp.ne.s32.totalorder %s237, %s238
      %p247 = scmp.eq.s32.totalorder %s24, 0
      %p248 = por %p246, %p247
      %p249 = scmp.ne.s32.totalorder %s237, %s238
      %p250 = scmp.eq.s32.totalorder %s25, 1
      %p251 = por %p249, %p250
      %p253 = scmp.ne.s32.totalorder %s238, %s252
      %p254 = scmp.eq.s32.totalorder %s25, 0
      %p255 = por %p253, %p254
      %s257 = sadd.s32 %s256, 1
      %p260 = scmp.eq.s32.totalorder %s19, 1
      %p261 = scmp.ne.s32.totalorder %s256, %s258
      %p262 = scmp.eq.s32.totalorder %s19, 0
      %p263 = por %p261, %p262
      %p264 = scmp.ne.s32.totalorder %s256, %s258
      %p265 = scmp.eq.s32.totalorder %s24, 1
      %p266 = por %p264, %p265
      %p267 = scmp.ne.s32.totalorder %s258, %s259
      %p268 = scmp.eq.s32.totalorder %s24, 0
      %p269 = por %p267, %p268
      %p270 = scmp.ne.s32.totalorder %s258, %s259
      %p271 = scmp.eq.s32.totalorder %s25, 1
      %p272 = por %p270, %p271
      %p274 = scmp.ne.s32.totalorder %s259, %s273
      %p275 = scmp.eq.s32.totalorder %s25, 0
      %p276 = por %p274, %p275
      %s277 = ssub.s32 %s26, %s38
      %s278 = ssub.s32 %s27, %s34
      %s279 = sor.u32 %s277, %s278
      %p280 = scmp.eq.s32.totalorder %s279, 0
      %s282 = sadd.s32 %s281, 1
      %s283 = scalar_select %p280, %s281, %s282
      %p286 = pneg %p280
      %p287 = scmp.eq.s32.totalorder %s19, 1
      %p288 = por %p286, %p287
      %p289 = scmp.ne.s32.totalorder %s281, %s284
      %p290 = scmp.eq.s32.totalorder %s19, 0
      %p291 = por %p289, %p290
      %p292 = scmp.ne.s32.totalorder %s281, %s284
      %p293 = scmp.eq.s32.totalorder %s24, 1
      %p294 = por %p292, %p293
      %p295 = scmp.ne.s32.totalorder %s284, %s285
      %p296 = scmp.eq.s32.totalorder %s24, 0
      %p297 = por %p295, %p296
      %p298 = scmp.ne.s32.totalorder %s284, %s285
      %p299 = scmp.eq.s32.totalorder %s25, 1
      %p300 = por %p298, %p299
      %p302 = scmp.ne.s32.totalorder %s285, %s301
      %p303 = scmp.eq.s32.totalorder %s25, 0
      %p304 = por %p302, %p303
      %p305 = scmp.le.s32.totalorder 1, %s19
      %p306 = scmp.lt.s32.totalorder %s19, 3
      %p307 = pnand %p305, %p306
      %p308 = pneg %p307
      // Predicated region
      $region9: #{pointnetfeat_forward.1} parent=5 // pred_check
        _
      $region10: #{pointnetfeat_forward.1} parent=5 // pred_check_branch
        %310 = sbr.rel (%p307) target = $region12
      $region11: #{pointnetfeat_forward.1} parent=5 // pred_region
        %s311 = ssub.s32 %s19, 1
        // Predicated region
        $region13: #{pointnetfeat_forward.1} parent=11 // pred_check
          %p312 = pneg %p80
        $region14: #{pointnetfeat_forward.1} parent=11 // pred_check_branch
          %314 = sbr.rel (%p312) target = $region16
        $region15: #{pointnetfeat_forward.1} parent=11 // pred_region
          _
        $region16: #{pointnetfeat_forward.1} parent=11 // pred_fallthru
          _
        // Predicated region
        $region17: #{pointnetfeat_forward.1} parent=11 // pred_check
          %p315 = pneg %p101
        $region18: #{pointnetfeat_forward.1} parent=11 // pred_check_branch
          %317 = sbr.rel (%p315) target = $region20
        $region19: #{pointnetfeat_forward.1} parent=11 // pred_region
          _
        $region20: #{pointnetfeat_forward.1} parent=11 // pred_fallthru
          _
        // Predicated region
        $region21: #{pointnetfeat_forward.1} parent=11 // pred_check
          %p318 = pneg %p122
        $region22: #{pointnetfeat_forward.1} parent=11 // pred_check_branch
          %320 = sbr.rel (%p318) target = $region24
        $region23: #{pointnetfeat_forward.1} parent=11 // pred_region
          _
        $region24: #{pointnetfeat_forward.1} parent=11 // pred_fallthru
          _
        // Predicated region
        $region25: #{pointnetfeat_forward.1} parent=11 // pred_check
          %p321 = pneg %p143
        $region26: #{pointnetfeat_forward.1} parent=11 // pred_check_branch
          %323 = sbr.rel (%p321) target = $region28
        $region27: #{pointnetfeat_forward.1} parent=11 // pred_region
          _
        $region28: #{pointnetfeat_forward.1} parent=11 // pred_fallthru
          _
        // Predicated region
        $region29: #{pointnetfeat_forward.1} parent=11 // pred_check
          %p324 = pneg %p164
        $region30: #{pointnetfeat_forward.1} parent=11 // pred_check_branch
          %326 = sbr.rel (%p324) target = $region32
        $region31: #{pointnetfeat_forward.1} parent=11 // pred_region
          %s328 = ssub.s32 2048, 2048
          %329 = vsyncadd [#allocation3], %s328
          %s330 = sshll.u32 [#allocation2], 4
          %s331 = int_to_ptr.vmem [resolvable:$true] %s330
          %336 = dma.hbm_to_vmem [thread:$0]  %s5, 2048, %s331, [#allocation3], 64, 64, 4
        $region32: #{pointnetfeat_forward.1} parent=11 // pred_fallthru
          _
        // Predicated region
        $region33: #{pointnetfeat_forward.1} parent=11 // pred_check
          %p337 = pneg %p185
        $region34: #{pointnetfeat_forward.1} parent=11 // pred_check_branch
          %339 = sbr.rel (%p337) target = $region36
        $region35: #{pointnetfeat_forward.1} parent=11 // pred_region
          _
        $region36: #{pointnetfeat_forward.1} parent=11 // pred_fallthru
          _
        // Predicated region
        $region37: #{pointnetfeat_forward.1} parent=11 // pred_check
          %p340 = pneg %p206
        $region38: #{pointnetfeat_forward.1} parent=11 // pred_check_branch
          %342 = sbr.rel (%p340) target = $region40
        $region39: #{pointnetfeat_forward.1} parent=11 // pred_region
          %s344 = ssub.s32 8192, 8192
          %345 = vsyncadd [#allocation5], %s344
          %s346 = sshll.u32 [#allocation4], 4
          %s347 = int_to_ptr.vmem [resolvable:$true] %s346
          %352 = dma.hbm_to_vmem [thread:$0]  %s7, 8192, %s347, [#allocation5], 128, 128, 8
        $region40: #{pointnetfeat_forward.1} parent=11 // pred_fallthru
          _
        // Predicated region
        $region41: #{pointnetfeat_forward.1} parent=11 // pred_check
          %p353 = pneg %p227
        $region42: #{pointnetfeat_forward.1} parent=11 // pred_check_branch
          %355 = sbr.rel (%p353) target = $region44
        $region43: #{pointnetfeat_forward.1} parent=11 // pred_region
          _
        $region44: #{pointnetfeat_forward.1} parent=11 // pred_fallthru
          _
        // Predicated region
        $region45: #{pointnetfeat_forward.1} parent=11 // pred_check
          %p356 = pneg %p248
        $region46: #{pointnetfeat_forward.1} parent=11 // pred_check_branch
          %358 = sbr.rel (%p356) target = $region48
        $region47: #{pointnetfeat_forward.1} parent=11 // pred_region
          %s360 = ssub.s32 32768, 32768
          %361 = vsyncadd [#allocation5], %s360
          %s362 = sshll.u32 [#allocation6], 4
          %s363 = int_to_ptr.vmem [resolvable:$true] %s362
          %368 = dma.hbm_to_vmem [thread:$0]  %s9, 32768, %s363, [#allocation5], 256, 256, 16
        $region48: #{pointnetfeat_forward.1} parent=11 // pred_fallthru
          _
        // Predicated region
        $region49: #{pointnetfeat_forward.1} parent=11 // pred_check
          %p369 = pneg %p269
        $region50: #{pointnetfeat_forward.1} parent=11 // pred_check_branch
          %371 = sbr.rel (%p369) target = $region52
        $region51: #{pointnetfeat_forward.1} parent=11 // pred_region
          _
        $region52: #{pointnetfeat_forward.1} parent=11 // pred_fallthru
          _
      $region12: #{pointnetfeat_forward.1} parent=5 // pred_fallthru
        _
      %p372 = scmp.lt.s32.totalorder %s19, 2
      // Predicated region
      $region53: #{pointnetfeat_forward.1} parent=5 // pred_check
        %p373 = pneg %p372
      $region54: #{pointnetfeat_forward.1} parent=5 // pred_check_branch
        %375 = sbr.rel (%p373) target = $region56
      $region55: #{pointnetfeat_forward.1} parent=5 // pred_region
        // Predicated region
        $region57: #{pointnetfeat_forward.1} parent=55 // pred_check
          %p376 = pneg %p53
        $region58: #{pointnetfeat_forward.1} parent=55 // pred_check_branch
          %378 = sbr.rel (%p376) target = $region60
        $region59: #{pointnetfeat_forward.1} parent=55 // pred_region
          %s379 = smul.u32 4, %s27
          %p380 = scmp.lt.s32.totalorder %s26, 1
          %s381 = scalar_select %p380, %s26, 1
          %p382 = scmp.lt.s32.totalorder %s379, 3
          %s383 = scalar_select %p382, %s379, 3
          %s384 = smul.addr %s381, 4
          %s385 = sadd.s32 %s383, %s384
          %s386 = smul.addr %s385, 4
          %s387 = scalar_lea.vmem %s0, %s386
          %s388 = smul.u32 4, %s27
        $region60: #{pointnetfeat_forward.1} parent=55 // pred_fallthru
          _
      $region56: #{pointnetfeat_forward.1} parent=5 // pred_fallthru
        _
      %p389 = scmp.le.s32.totalorder 1, %s19
      %p390 = scmp.lt.s32.totalorder %s19, 3
      %p391 = pnand %p389, %p390
      %p392 = pneg %p391
      // Predicated region
      $region61: #{pointnetfeat_forward.1} parent=5 // pred_check
        _
      $region62: #{pointnetfeat_forward.1} parent=5 // pred_check_branch
        %394 = sbr.rel (%p391) target = $region64
      $region63: #{pointnetfeat_forward.1} parent=5 // pred_region
        %s395 = ssub.s32 %s19, 1
        // Predicated region
        $region65: #{pointnetfeat_forward.1} parent=63 // pred_check
          %p396 = pneg %p164
        $region66: #{pointnetfeat_forward.1} parent=63 // pred_check_branch
          %398 = sbr.rel (%p396) target = $region68
        $region67: #{pointnetfeat_forward.1} parent=63 // pred_region
          %399 = dma.done [#allocation3], 2048
        $region68: #{pointnetfeat_forward.1} parent=63 // pred_fallthru
          _
        // Predicated region
        $region69: #{pointnetfeat_forward.1} parent=63 // pred_check
          %p400 = pneg %p206
        $region70: #{pointnetfeat_forward.1} parent=63 // pred_check_branch
          %402 = sbr.rel (%p400) target = $region72
        $region71: #{pointnetfeat_forward.1} parent=63 // pred_region
          %403 = dma.done [#allocation5], 8192
        $region72: #{pointnetfeat_forward.1} parent=63 // pred_fallthru
          _
        // Predicated region
        $region73: #{pointnetfeat_forward.1} parent=63 // pred_check
          %p404 = pneg %p248
        $region74: #{pointnetfeat_forward.1} parent=63 // pred_check_branch
          %406 = sbr.rel (%p404) target = $region76
        $region75: #{pointnetfeat_forward.1} parent=63 // pred_region
          %407 = dma.done [#allocation5], 32768
        $region76: #{pointnetfeat_forward.1} parent=63 // pred_fallthru
          _
        %s408 = smul.u32 4, %s29
        %p409 = scmp.lt.s32.totalorder %s28, 1
        %s410 = scalar_select %p409, %s28, 1
        %p411 = scmp.lt.s32.totalorder %s408, 3
        %s412 = scalar_select %p411, %s408, 3
        %s413 = smul.addr %s410, 4
        %s414 = sadd.s32 %s412, %s413
        %s415 = smul.addr %s414, 4
        %s416 = scalar_lea.vmem %s0, %s415
        %p417 = pneg %p59
        %p418 = pneg %p56
        %p419 = pneg %p80
        %p420 = pneg %p77
        %p421 = pneg %p101
        %p422 = pneg %p98
        %p423 = pneg %p122
        %p424 = pneg %p119
        %p425 = pneg %p143
        %p426 = pneg %p140
        %p427 = pneg %p164
        %p428 = pneg %p161
        %p429 = pneg %p185
        %p430 = pneg %p182
        %p431 = pneg %p206
        %p432 = pneg %p203
        %p433 = pneg %p227
        %p434 = pneg %p224
        %p435 = pneg %p248
        %p436 = pneg %p245
        %p437 = pneg %p269
        %p438 = pneg %p266
        %p439 = pneg %p297
        %p440 = pneg %p294
        %s441 = smul.u32 4, %s29
        %p442 = scmp.lt.s32.totalorder %s28, 1
        %s443 = scalar_select %p442, %s28, 1
        %p444 = scmp.lt.s32.totalorder %s441, 3
        %s445 = scalar_select %p444, %s441, 3
        %s446 = smul.addr %s443, 512
        %s447 = sadd.s32 %s445, %s446
        %s448 = smul.addr %s447, 4
        %s449 = scalar_lea.vmem %s11, %s448
        %s450 = smul.u32 4, %s29
        %p451 = scmp.lt.s32.totalorder %s28, 1
        %s452 = scalar_select %p451, %s28, 1
        %p453 = scmp.lt.s32.totalorder %s450, 3
        %s454 = scalar_select %p453, %s450, 3
        %s455 = smul.addr %s452, 4
        %s456 = sadd.s32 %s454, %s455
        %s457 = smul.addr %s456, 4
        %s458 = scalar_lea.vmem %s0, %s457
        %s459 = smul.u32 4, %s29
        %s460 = smul.u32 4, %s29
        %p461 = scmp.lt.s32.totalorder %s28, 1
        %s462 = scalar_select %p461, %s28, 1
        %p463 = scmp.lt.s32.totalorder %s460, 3
        %s464 = scalar_select %p463, %s460, 3
        %s465 = smul.addr %s462, 512
        %s466 = sadd.s32 %s464, %s465
        %s467 = smul.addr %s466, 4
        %s468 = scalar_lea.vmem %s11, %s467
        %s469 = smul.u32 4, %s29
        %v471 = vld [vmem:[%s458] sm:$0x77]
        %v472 = vld [vmem:[%s458 + $0x8] sm:$0x77]
        %v473 = vld [vmem:[%s1] sm:$0xf]
        %v474 = vld [vmem:[%s1 + $0x4] sm:$0xf]
        %v475 = vld [vmem:[%s1 + $0x8] sm:$0xf]
        %v476 = vld [vmem:[%s1 + $0xc] sm:$0xf]
        %v477 = vld [vmem:[%s1 + $0x10] sm:$0xf]
        %v478 = vld [vmem:[%s1 + $0x14] sm:$0xf]
        %v479 = vld [vmem:[%s1 + $0x18] sm:$0xf]
        %v480 = vld [vmem:[%s1 + $0x1c] sm:$0xf]
        %v481 = vunpack.c.l.bf16 %v473
        %v482 = vunpack.c.l.bf16 %v474
        %v483 = vunpack.c.l.bf16 %v475
        %v484 = vunpack.c.l.bf16 %v476
        %v485 = vunpack.c.l.bf16 %v477
        %v486 = vunpack.c.l.bf16 %v478
        %v487 = vunpack.c.l.bf16 %v479
        %v488 = vunpack.c.l.bf16 %v480
        %v489 = vld [vmem:[%s2] sm:$0xff]
        %v490 = vld [vmem:[%s2 + $0x8] sm:$0xff]
        %v491 = vld [vmem:[%s2 + $0x10] sm:$0xff]
        %v492 = vld [vmem:[%s2 + $0x18] sm:$0xff]
        %v493 = vld [vmem:[%s2 + $0x20] sm:$0xff]
        %v494 = vld [vmem:[%s2 + $0x28] sm:$0xff]
        %v495 = vld [vmem:[%s2 + $0x30] sm:$0xff]
        %v496 = vld [vmem:[%s2 + $0x38] sm:$0xff]
        %498 = vset.pattern.permute.xlu0 0
        %499 = vperm.xlu0 %498, %v481
        %v500 = vpop.permute.xlu0 %499
        %503 = vset.pattern.permute.xlu0 0
        %504 = vperm.xlu0 %503, %v482
        %v505 = vpop.permute.xlu0 %504
        %508 = vset.pattern.permute.xlu0 0
        %509 = vperm.xlu0 %508, %v483
        %v510 = vpop.permute.xlu0 %509
        %513 = vset.pattern.permute.xlu0 0
        %514 = vperm.xlu0 %513, %v484
        %v515 = vpop.permute.xlu0 %514
        %518 = vset.pattern.permute.xlu0 0
        %519 = vperm.xlu0 %518, %v485
        %v520 = vpop.permute.xlu0 %519
        %523 = vset.pattern.permute.xlu0 0
        %524 = vperm.xlu0 %523, %v486
        %v525 = vpop.permute.xlu0 %524
        %528 = vset.pattern.permute.xlu0 0
        %529 = vperm.xlu0 %528, %v487
        %v530 = vpop.permute.xlu0 %529
        %533 = vset.pattern.permute.xlu0 0
        %534 = vperm.xlu0 %533, %v488
        %v535 = vpop.permute.xlu0 %534
        %v539 = vlaneseq
        %v540 = vshrl.u32 %v539, 7
        %v541 = vsub.s32 0, %v540
        %v542 = vrot.slane %v471, %v541
        %v543 = vlaneseq
        %v544 = vshrl.u32 %v543, 7
        %v545 = vsub.s32 4, %v544
        %v546 = vrot.slane %v471, %v545
        %v547 = vlaneseq
        %v548 = vshrl.u32 %v547, 7
        %v549 = vsub.s32 0, %v548
        %v550 = vrot.slane %v472, %v549
        %v551 = vlaneseq
        %v552 = vshrl.u32 %v551, 7
        %v553 = vsub.s32 4, %v552
        %v554 = vrot.slane %v472, %v553
        %v559 = vlaneseq
        %v560 = vshrl.u32 %v559, 7
        %v561 = vsub.s32 0, %v560
        %v562 = vrot.slane %v542, %v561
        %v563 = vlaneseq
        %v564 = vshrl.u32 %v563, 7
        %v565 = vsub.s32 0, %v564
        %v566 = vrot.slane %v546, %v565
        %v567 = vlaneseq
        %v568 = vshrl.u32 %v567, 7
        %v569 = vsub.s32 0, %v568
        %v570 = vrot.slane %v550, %v569
        %v571 = vlaneseq
        %v572 = vshrl.u32 %v571, 7
        %v573 = vsub.s32 0, %v572
        %v574 = vrot.slane %v554, %v573
        %v575 = vmul.f32 %v500, %v562
        %v576 = vmul.f32 %v500, %v566
        %v577 = vmul.f32 %v500, %v570
        %v578 = vmul.f32 %v500, %v574
        %v579 = vmul.f32 %v505, %v562
        %v580 = vmul.f32 %v505, %v566
        %v581 = vmul.f32 %v505, %v570
        %v582 = vmul.f32 %v505, %v574
        %v583 = vmul.f32 %v510, %v562
        %v584 = vmul.f32 %v510, %v566
        %v585 = vmul.f32 %v510, %v570
        %v586 = vmul.f32 %v510, %v574
        %v587 = vmul.f32 %v515, %v562
        %v588 = vmul.f32 %v515, %v566
        %v589 = vmul.f32 %v515, %v570
        %v590 = vmul.f32 %v515, %v574
        %v591 = vmul.f32 %v520, %v562
        %v592 = vmul.f32 %v520, %v566
        %v593 = vmul.f32 %v520, %v570
        %v594 = vmul.f32 %v520, %v574
        %v595 = vmul.f32 %v525, %v562
        %v596 = vmul.f32 %v525, %v566
        %v597 = vmul.f32 %v525, %v570
        %v598 = vmul.f32 %v525, %v574
        %v599 = vmul.f32 %v530, %v562
        %v600 = vmul.f32 %v530, %v566
        %v601 = vmul.f32 %v530, %v570
        %v602 = vmul.f32 %v530, %v574
        %v603 = vmul.f32 %v535, %v562
        %v604 = vmul.f32 %v535, %v566
        %v605 = vmul.f32 %v535, %v570
        %v606 = vmul.f32 %v535, %v574
        %608 = vset.pattern.permute.xlu0 0
        %609 = vperm.xlu0 %608, %v489
        %v610 = vpop.permute.xlu0 %609
        %613 = vset.pattern.permute.xlu0 0
        %614 = vperm.xlu0 %613, %v490
        %v615 = vpop.permute.xlu0 %614
        %618 = vset.pattern.permute.xlu0 0
        %619 = vperm.xlu0 %618, %v491
        %v620 = vpop.permute.xlu0 %619
        %623 = vset.pattern.permute.xlu0 0
        %624 = vperm.xlu0 %623, %v492
        %v625 = vpop.permute.xlu0 %624
        %628 = vset.pattern.permute.xlu0 0
        %629 = vperm.xlu0 %628, %v493
        %v630 = vpop.permute.xlu0 %629
        %633 = vset.pattern.permute.xlu0 0
        %634 = vperm.xlu0 %633, %v494
        %v635 = vpop.permute.xlu0 %634
        %638 = vset.pattern.permute.xlu0 0
        %639 = vperm.xlu0 %638, %v495
        %v640 = vpop.permute.xlu0 %639
        %643 = vset.pattern.permute.xlu0 0
        %644 = vperm.xlu0 %643, %v496
        %v645 = vpop.permute.xlu0 %644
        %v647 = vadd.f32 %v610, %v575
        %v648 = vadd.f32 %v610, %v576
        %v649 = vadd.f32 %v610, %v577
        %v650 = vadd.f32 %v610, %v578
        %v651 = vadd.f32 %v615, %v579
        %v652 = vadd.f32 %v615, %v580
        %v653 = vadd.f32 %v615, %v581
        %v654 = vadd.f32 %v615, %v582
        %v655 = vadd.f32 %v620, %v583
        %v656 = vadd.f32 %v620, %v584
        %v657 = vadd.f32 %v620, %v585
        %v658 = vadd.f32 %v620, %v586
        %v659 = vadd.f32 %v625, %v587
        %v660 = vadd.f32 %v625, %v588
        %v661 = vadd.f32 %v625, %v589
        %v662 = vadd.f32 %v625, %v590
        %v663 = vadd.f32 %v630, %v591
        %v664 = vadd.f32 %v630, %v592
        %v665 = vadd.f32 %v630, %v593
        %v666 = vadd.f32 %v630, %v594
        %v667 = vadd.f32 %v635, %v595
        %v668 = vadd.f32 %v635, %v596
        %v669 = vadd.f32 %v635, %v597
        %v670 = vadd.f32 %v635, %v598
        %v671 = vadd.f32 %v640, %v599
        %v672 = vadd.f32 %v640, %v600
        %v673 = vadd.f32 %v640, %v601
        %v674 = vadd.f32 %v640, %v602
        %v675 = vadd.f32 %v645, %v603
        %v676 = vadd.f32 %v645, %v604
        %v677 = vadd.f32 %v645, %v605
        %v678 = vadd.f32 %v645, %v606
        %679 = vset.pattern.permute.xlu0 1
        %680 = vperm.xlu0 %679, %v481
        %v681 = vpop.permute.xlu0 %680
        %683 = vset.pattern.permute.xlu0 1
        %684 = vperm.xlu0 %683, %v482
        %v685 = vpop.permute.xlu0 %684
        %687 = vset.pattern.permute.xlu0 1
        %688 = vperm.xlu0 %687, %v483
        %v689 = vpop.permute.xlu0 %688
        %691 = vset.pattern.permute.xlu0 1
        %692 = vperm.xlu0 %691, %v484
        %v693 = vpop.permute.xlu0 %692
        %695 = vset.pattern.permute.xlu0 1
        %696 = vperm.xlu0 %695, %v485
        %v697 = vpop.permute.xlu0 %696
        %699 = vset.pattern.permute.xlu0 1
        %700 = vperm.xlu0 %699, %v486
        %v701 = vpop.permute.xlu0 %700
        %703 = vset.pattern.permute.xlu0 1
        %704 = vperm.xlu0 %703, %v487
        %v705 = vpop.permute.xlu0 %704
        %707 = vset.pattern.permute.xlu0 1
        %708 = vperm.xlu0 %707, %v488
        %v709 = vpop.permute.xlu0 %708
        %v711 = vlaneseq
        %v712 = vshrl.u32 %v711, 7
        %v713 = vsub.s32 1, %v712
        %v714 = vrot.slane %v471, %v713
        %v715 = vlaneseq
        %v716 = vshrl.u32 %v715, 7
        %v717 = vsub.s32 5, %v716
        %v718 = vrot.slane %v471, %v717
        %v719 = vlaneseq
        %v720 = vshrl.u32 %v719, 7
        %v721 = vsub.s32 1, %v720
        %v722 = vrot.slane %v472, %v721
        %v723 = vlaneseq
        %v724 = vshrl.u32 %v723, 7
        %v725 = vsub.s32 5, %v724
        %v726 = vrot.slane %v472, %v725
        %v731 = vlaneseq
        %v732 = vshrl.u32 %v731, 7
        %v733 = vsub.s32 1, %v732
        %v734 = vrot.slane %v714, %v733
        %v735 = vlaneseq
        %v736 = vshrl.u32 %v735, 7
        %v737 = vsub.s32 1, %v736
        %v738 = vrot.slane %v718, %v737
        %v739 = vlaneseq
        %v740 = vshrl.u32 %v739, 7
        %v741 = vsub.s32 1, %v740
        %v742 = vrot.slane %v722, %v741
        %v743 = vlaneseq
        %v744 = vshrl.u32 %v743, 7
        %v745 = vsub.s32 1, %v744
        %v746 = vrot.slane %v726, %v745
        %v747 = vmul.f32 %v681, %v734
        %v748 = vmul.f32 %v681, %v738
        %v749 = vmul.f32 %v681, %v742
        %v750 = vmul.f32 %v681, %v746
        %v751 = vmul.f32 %v685, %v734
        %v752 = vmul.f32 %v685, %v738
        %v753 = vmul.f32 %v685, %v742
        %v754 = vmul.f32 %v685, %v746
        %v755 = vmul.f32 %v689, %v734
        %v756 = vmul.f32 %v689, %v738
        %v757 = vmul.f32 %v689, %v742
        %v758 = vmul.f32 %v689, %v746
        %v759 = vmul.f32 %v693, %v734
        %v760 = vmul.f32 %v693, %v738
        %v761 = vmul.f32 %v693, %v742
        %v762 = vmul.f32 %v693, %v746
        %v763 = vmul.f32 %v697, %v734
        %v764 = vmul.f32 %v697, %v738
        %v765 = vmul.f32 %v697, %v742
        %v766 = vmul.f32 %v697, %v746
        %v767 = vmul.f32 %v701, %v734
        %v768 = vmul.f32 %v701, %v738
        %v769 = vmul.f32 %v701, %v742
        %v770 = vmul.f32 %v701, %v746
        %v771 = vmul.f32 %v705, %v734
        %v772 = vmul.f32 %v705, %v738
        %v773 = vmul.f32 %v705, %v742
        %v774 = vmul.f32 %v705, %v746
        %v775 = vmul.f32 %v709, %v734
        %v776 = vmul.f32 %v709, %v738
        %v777 = vmul.f32 %v709, %v742
        %v778 = vmul.f32 %v709, %v746
        %v779 = vadd.f32 %v647, %v747
        %v780 = vadd.f32 %v648, %v748
        %v781 = vadd.f32 %v649, %v749
        %v782 = vadd.f32 %v650, %v750
        %v783 = vadd.f32 %v651, %v751
        %v784 = vadd.f32 %v652, %v752
        %v785 = vadd.f32 %v653, %v753
        %v786 = vadd.f32 %v654, %v754
        %v787 = vadd.f32 %v655, %v755
        %v788 = vadd.f32 %v656, %v756
        %v789 = vadd.f32 %v657, %v757
        %v790 = vadd.f32 %v658, %v758
        %v791 = vadd.f32 %v659, %v759
        %v792 = vadd.f32 %v660, %v760
        %v793 = vadd.f32 %v661, %v761
        %v794 = vadd.f32 %v662, %v762
        %v795 = vadd.f32 %v663, %v763
        %v796 = vadd.f32 %v664, %v764
        %v797 = vadd.f32 %v665, %v765
        %v798 = vadd.f32 %v666, %v766
        %v799 = vadd.f32 %v667, %v767
        %v800 = vadd.f32 %v668, %v768
        %v801 = vadd.f32 %v669, %v769
        %v802 = vadd.f32 %v670, %v770
        %v803 = vadd.f32 %v671, %v771
        %v804 = vadd.f32 %v672, %v772
        %v805 = vadd.f32 %v673, %v773
        %v806 = vadd.f32 %v674, %v774
        %v807 = vadd.f32 %v675, %v775
        %v808 = vadd.f32 %v676, %v776
        %v809 = vadd.f32 %v677, %v777
        %v810 = vadd.f32 %v678, %v778
        %811 = vset.pattern.permute.xlu0 2
        %812 = vperm.xlu0 %811, %v481
        %v813 = vpop.permute.xlu0 %812
        %815 = vset.pattern.permute.xlu0 2
        %816 = vperm.xlu0 %815, %v482
        %v817 = vpop.permute.xlu0 %816
        %819 = vset.pattern.permute.xlu0 2
        %820 = vperm.xlu0 %819, %v483
        %v821 = vpop.permute.xlu0 %820
        %823 = vset.pattern.permute.xlu0 2
        %824 = vperm.xlu0 %823, %v484
        %v825 = vpop.permute.xlu0 %824
        %827 = vset.pattern.permute.xlu0 2
        %828 = vperm.xlu0 %827, %v485
        %v829 = vpop.permute.xlu0 %828
        %831 = vset.pattern.permute.xlu0 2
        %832 = vperm.xlu0 %831, %v486
        %v833 = vpop.permute.xlu0 %832
        %835 = vset.pattern.permute.xlu0 2
        %836 = vperm.xlu0 %835, %v487
        %v837 = vpop.permute.xlu0 %836
        %839 = vset.pattern.permute.xlu0 2
        %840 = vperm.xlu0 %839, %v488
        %v841 = vpop.permute.xlu0 %840
        %v843 = vlaneseq
        %v844 = vshrl.u32 %v843, 7
        %v845 = vsub.s32 2, %v844
        %v846 = vrot.slane %v471, %v845
        %v847 = vlaneseq
        %v848 = vshrl.u32 %v847, 7
        %v849 = vsub.s32 6, %v848
        %v850 = vrot.slane %v471, %v849
        %v851 = vlaneseq
        %v852 = vshrl.u32 %v851, 7
        %v853 = vsub.s32 2, %v852
        %v854 = vrot.slane %v472, %v853
        %v855 = vlaneseq
        %v856 = vshrl.u32 %v855, 7
        %v857 = vsub.s32 6, %v856
        %v858 = vrot.slane %v472, %v857
        %v863 = vlaneseq
        %v864 = vshrl.u32 %v863, 7
        %v865 = vsub.s32 2, %v864
        %v866 = vrot.slane %v846, %v865
        %v867 = vlaneseq
        %v868 = vshrl.u32 %v867, 7
        %v869 = vsub.s32 2, %v868
        %v870 = vrot.slane %v850, %v869
        %v871 = vlaneseq
        %v872 = vshrl.u32 %v871, 7
        %v873 = vsub.s32 2, %v872
        %v874 = vrot.slane %v854, %v873
        %v875 = vlaneseq
        %v876 = vshrl.u32 %v875, 7
        %v877 = vsub.s32 2, %v876
        %v878 = vrot.slane %v858, %v877
        %v879 = vmul.f32 %v813, %v866
        %v880 = vmul.f32 %v813, %v870
        %v881 = vmul.f32 %v813, %v874
        %v882 = vmul.f32 %v813, %v878
        %v883 = vmul.f32 %v817, %v866
        %v884 = vmul.f32 %v817, %v870
        %v885 = vmul.f32 %v817, %v874
        %v886 = vmul.f32 %v817, %v878
        %v887 = vmul.f32 %v821, %v866
        %v888 = vmul.f32 %v821, %v870
        %v889 = vmul.f32 %v821, %v874
        %v890 = vmul.f32 %v821, %v878
        %v891 = vmul.f32 %v825, %v866
        %v892 = vmul.f32 %v825, %v870
        %v893 = vmul.f32 %v825, %v874
        %v894 = vmul.f32 %v825, %v878
        %v895 = vmul.f32 %v829, %v866
        %v896 = vmul.f32 %v829, %v870
        %v897 = vmul.f32 %v829, %v874
        %v898 = vmul.f32 %v829, %v878
        %v899 = vmul.f32 %v833, %v866
        %v900 = vmul.f32 %v833, %v870
        %v901 = vmul.f32 %v833, %v874
        %v902 = vmul.f32 %v833, %v878
        %v903 = vmul.f32 %v837, %v866
        %v904 = vmul.f32 %v837, %v870
        %v905 = vmul.f32 %v837, %v874
        %v906 = vmul.f32 %v837, %v878
        %v907 = vmul.f32 %v841, %v866
        %v908 = vmul.f32 %v841, %v870
        %v909 = vmul.f32 %v841, %v874
        %v910 = vmul.f32 %v841, %v878
        %v911 = vadd.f32 %v779, %v879
        %v912 = vadd.f32 %v780, %v880
        %v913 = vadd.f32 %v781, %v881
        %v914 = vadd.f32 %v782, %v882
        %v915 = vadd.f32 %v783, %v883
        %v916 = vadd.f32 %v784, %v884
        %v917 = vadd.f32 %v785, %v885
        %v918 = vadd.f32 %v786, %v886
        %v919 = vadd.f32 %v787, %v887
        %v920 = vadd.f32 %v788, %v888
        %v921 = vadd.f32 %v789, %v889
        %v922 = vadd.f32 %v790, %v890
        %v923 = vadd.f32 %v791, %v891
        %v924 = vadd.f32 %v792, %v892
        %v925 = vadd.f32 %v793, %v893
        %v926 = vadd.f32 %v794, %v894
        %v927 = vadd.f32 %v795, %v895
        %v928 = vadd.f32 %v796, %v896
        %v929 = vadd.f32 %v797, %v897
        %v930 = vadd.f32 %v798, %v898
        %v931 = vadd.f32 %v799, %v899
        %v932 = vadd.f32 %v800, %v900
        %v933 = vadd.f32 %v801, %v901
        %v934 = vadd.f32 %v802, %v902
        %v935 = vadd.f32 %v803, %v903
        %v936 = vadd.f32 %v804, %v904
        %v937 = vadd.f32 %v805, %v905
        %v938 = vadd.f32 %v806, %v906
        %v939 = vadd.f32 %v807, %v907
        %v940 = vadd.f32 %v808, %v908
        %v941 = vadd.f32 %v809, %v909
        %v942 = vadd.f32 %v810, %v910
        %v943 = vmax.f32 %v911, 0.0
        %v944 = vmax.f32 %v912, 0.0
        %v945 = vmax.f32 %v913, 0.0
        %v946 = vmax.f32 %v914, 0.0
        %v947 = vmax.f32 %v915, 0.0
        %v948 = vmax.f32 %v916, 0.0
        %v949 = vmax.f32 %v917, 0.0
        %v950 = vmax.f32 %v918, 0.0
        %v951 = vmax.f32 %v919, 0.0
        %v952 = vmax.f32 %v920, 0.0
        %v953 = vmax.f32 %v921, 0.0
        %v954 = vmax.f32 %v922, 0.0
        %v955 = vmax.f32 %v923, 0.0
        %v956 = vmax.f32 %v924, 0.0
        %v957 = vmax.f32 %v925, 0.0
        %v958 = vmax.f32 %v926, 0.0
        %v959 = vmax.f32 %v927, 0.0
        %v960 = vmax.f32 %v928, 0.0
        %v961 = vmax.f32 %v929, 0.0
        %v962 = vmax.f32 %v930, 0.0
        %v963 = vmax.f32 %v931, 0.0
        %v964 = vmax.f32 %v932, 0.0
        %v965 = vmax.f32 %v933, 0.0
        %v966 = vmax.f32 %v934, 0.0
        %v967 = vmax.f32 %v935, 0.0
        %v968 = vmax.f32 %v936, 0.0
        %v969 = vmax.f32 %v937, 0.0
        %v970 = vmax.f32 %v938, 0.0
        %v971 = vmax.f32 %v939, 0.0
        %v972 = vmax.f32 %v940, 0.0
        %v973 = vmax.f32 %v941, 0.0
        %v974 = vmax.f32 %v942, 0.0
        %v975 = vpack.c.bf16 %v947, %v943
        %v976 = vpack.c.bf16 %v948, %v944
        %v977 = vpack.c.bf16 %v949, %v945
        %v978 = vpack.c.bf16 %v950, %v946
        %v979 = vpack.c.bf16 %v955, %v951
        %v980 = vpack.c.bf16 %v956, %v952
        %v981 = vpack.c.bf16 %v957, %v953
        %v982 = vpack.c.bf16 %v958, %v954
        %v983 = vpack.c.bf16 %v963, %v959
        %v984 = vpack.c.bf16 %v964, %v960
        %v985 = vpack.c.bf16 %v965, %v961
        %v986 = vpack.c.bf16 %v966, %v962
        %v987 = vpack.c.bf16 %v971, %v967
        %v988 = vpack.c.bf16 %v972, %v968
        %v989 = vpack.c.bf16 %v973, %v969
        %v990 = vpack.c.bf16 %v974, %v970
        %v991 = vld [vmem:[%s3] sm:$0xf]
        %v992 = vld [vmem:[%s3 + $0x4] sm:$0xf]
        %v993 = vld [vmem:[%s3 + $0x8] sm:$0xf]
        %v994 = vld [vmem:[%s3 + $0xc] sm:$0xf]
        %v995 = vld [vmem:[%s3 + $0x10] sm:$0xf]
        %v996 = vld [vmem:[%s3 + $0x14] sm:$0xf]
        %v997 = vld [vmem:[%s3 + $0x18] sm:$0xf]
        %v998 = vld [vmem:[%s3 + $0x1c] sm:$0xf]
        %v999 = vld [vmem:[%s3 + $0x20] sm:$0xf]
        %v1000 = vld [vmem:[%s3 + $0x24] sm:$0xf]
        %v1001 = vld [vmem:[%s3 + $0x28] sm:$0xf]
        %v1002 = vld [vmem:[%s3 + $0x2c] sm:$0xf]
        %v1003 = vld [vmem:[%s3 + $0x30] sm:$0xf]
        %v1004 = vld [vmem:[%s3 + $0x34] sm:$0xf]
        %v1005 = vld [vmem:[%s3 + $0x38] sm:$0xf]
        %v1006 = vld [vmem:[%s3 + $0x3c] sm:$0xf]
        %v1007 = vld [vmem:[%s4] sm:$0xff]
        %v1008 = vld [vmem:[%s4 + $0x8] sm:$0xff]
        %v1009 = vld [vmem:[%s4 + $0x10] sm:$0xff]
        %v1010 = vld [vmem:[%s4 + $0x18] sm:$0xff]
        %v1011 = vld [vmem:[%s4 + $0x20] sm:$0xff]
        %v1012 = vld [vmem:[%s4 + $0x28] sm:$0xff]
        %v1013 = vld [vmem:[%s4 + $0x30] sm:$0xff]
        %v1014 = vld [vmem:[%s4 + $0x38] sm:$0xff]
        %v1015 = vld [vmem:[%s4 + $0x40] sm:$0xff]
        %v1016 = vld [vmem:[%s4 + $0x48] sm:$0xff]
        %v1017 = vld [vmem:[%s4 + $0x50] sm:$0xff]
        %v1018 = vld [vmem:[%s4 + $0x58] sm:$0xff]
        %v1019 = vld [vmem:[%s4 + $0x60] sm:$0xff]
        %v1020 = vld [vmem:[%s4 + $0x68] sm:$0xff]
        %v1021 = vld [vmem:[%s4 + $0x70] sm:$0xff]
        %v1022 = vld [vmem:[%s4 + $0x78] sm:$0xff]
        %1024 = vset.pattern.permute.xlu0 0
        %1025 = vperm.xlu0 %1024, %v1007
        %v1026 = vpop.permute.xlu0 %1025
        %1029 = vset.pattern.permute.xlu0 0
        %1030 = vperm.xlu0 %1029, %v1008
        %v1031 = vpop.permute.xlu0 %1030
        %1034 = vset.pattern.permute.xlu0 0
        %1035 = vperm.xlu0 %1034, %v1009
        %v1036 = vpop.permute.xlu0 %1035
        %1039 = vset.pattern.permute.xlu0 0
        %1040 = vperm.xlu0 %1039, %v1010
        %v1041 = vpop.permute.xlu0 %1040
        %1044 = vset.pattern.permute.xlu0 0
        %1045 = vperm.xlu0 %1044, %v1011
        %v1046 = vpop.permute.xlu0 %1045
        %1049 = vset.pattern.permute.xlu0 0
        %1050 = vperm.xlu0 %1049, %v1012
        %v1051 = vpop.permute.xlu0 %1050
        %1054 = vset.pattern.permute.xlu0 0
        %1055 = vperm.xlu0 %1054, %v1013
        %v1056 = vpop.permute.xlu0 %1055
        %1059 = vset.pattern.permute.xlu0 0
        %1060 = vperm.xlu0 %1059, %v1014
        %v1061 = vpop.permute.xlu0 %1060
        %1064 = vset.pattern.permute.xlu0 0
        %1065 = vperm.xlu0 %1064, %v1015
        %v1066 = vpop.permute.xlu0 %1065
        %1069 = vset.pattern.permute.xlu0 0
        %1070 = vperm.xlu0 %1069, %v1016
        %v1071 = vpop.permute.xlu0 %1070
        %1074 = vset.pattern.permute.xlu0 0
        %1075 = vperm.xlu0 %1074, %v1017
        %v1076 = vpop.permute.xlu0 %1075
        %1079 = vset.pattern.permute.xlu0 0
        %1080 = vperm.xlu0 %1079, %v1018
        %v1081 = vpop.permute.xlu0 %1080
        %1084 = vset.pattern.permute.xlu0 0
        %1085 = vperm.xlu0 %1084, %v1019
        %v1086 = vpop.permute.xlu0 %1085
        %1089 = vset.pattern.permute.xlu0 0
        %1090 = vperm.xlu0 %1089, %v1020
        %v1091 = vpop.permute.xlu0 %1090
        %1094 = vset.pattern.permute.xlu0 0
        %1095 = vperm.xlu0 %1094, %v1021
        %v1096 = vpop.permute.xlu0 %1095
        %1099 = vset.pattern.permute.xlu0 0
        %1100 = vperm.xlu0 %1099, %v1022
        %v1101 = vpop.permute.xlu0 %1100
        %v1119 = vunpack.c.l.b16 %v991
        %v1120 = vunpack.c.l.b16 %v992
        %v1121 = vunpack.c.l.b16 %v993
        %v1122 = vunpack.c.l.b16 %v994
        %v1123 = vunpack.c.l.b16 %v995
        %v1124 = vunpack.c.l.b16 %v996
        %v1125 = vunpack.c.l.b16 %v997
        %v1126 = vunpack.c.l.b16 %v998
        %v1127 = vunpack.c.l.b16 %v999
        %v1128 = vunpack.c.l.b16 %v1000
        %v1129 = vunpack.c.l.b16 %v1001
        %v1130 = vunpack.c.l.b16 %v1002
        %v1131 = vunpack.c.l.b16 %v1003
        %v1132 = vunpack.c.l.b16 %v1004
        %v1133 = vunpack.c.l.b16 %v1005
        %v1134 = vunpack.c.l.b16 %v1006
        %v1135 = vpack.c.b16 %v1120, %v1119
        %v1136 = vpack.c.b16 %v1122, %v1121
        %v1137 = vpack.c.b16 %v1124, %v1123
        %v1138 = vpack.c.b16 %v1126, %v1125
        %v1139 = vpack.c.b16 %v1128, %v1127
        %v1140 = vpack.c.b16 %v1130, %v1129
        %v1141 = vpack.c.b16 %v1132, %v1131
        %v1142 = vpack.c.b16 %v1134, %v1133
        %vm1143 = vcmask 523264
        %v1145 = vsel %vm1143, %v1135, 0
        %v1148 = vsel %vm1143, %v1136, 0
        %v1151 = vsel %vm1143, %v1137, 0
        %v1154 = vsel %vm1143, %v1138, 0
        %v1157 = vsel %vm1143, %v1139, 0
        %v1160 = vsel %vm1143, %v1140, 0
        %v1163 = vsel %vm1143, %v1141, 0
        %v1166 = vsel %vm1143, %v1142, 0
        %1168 = vmatprep.subr.bf16.mxu0 0
        %1169 = vmatpush1.bf16.msra.mxu0 0
        %1170 = vmatprep.subr.bf16.mxu0 0
        %1171 = vmatpush1.bf16.msra.mxu0 0
        %1172 = vmatprep.subr.bf16.mxu0 0
        %1173 = vmatpush1.bf16.msra.mxu0 0
        %1174 = vmatprep.subr.bf16.mxu0 0
        %1175 = vmatpush1.bf16.msra.mxu0 0
        %1176 = vmatprep.subr.bf16.mxu0 %v988
        %1177 = vmatpush1.bf16.msra.mxu0 %v987
        %1178 = vmatprep.subr.bf16.mxu0 %v984
        %1179 = vmatpush1.bf16.msra.mxu0 %v983
        %1180 = vmatprep.subr.bf16.mxu0 %v980
        %1181 = vmatpush1.bf16.msra.mxu0 %v979
        %1182 = vmatprep.subr.bf16.mxu0 %v976
        %1183 = vmatpush1.bf16.msra.mxu0 %v975
        %1184 = vmatprep.subr.bf16.mxu0 0
        %1185 = vmatpush2.bf16.msra.mxu0 0
        %1186 = vmatprep.subr.bf16.mxu0 0
        %1187 = vmatpush2.bf16.msra.mxu0 0
        %1188 = vmatprep.subr.bf16.mxu0 0
        %1189 = vmatpush2.bf16.msra.mxu0 0
        %1190 = vmatprep.subr.bf16.mxu0 0
        %1191 = vmatpush2.bf16.msra.mxu0 0
        %1192 = vmatprep.subr.bf16.mxu0 0
        %1193 = vmatpush2.bf16.msra.mxu0 0
        %1194 = vmatprep.subr.bf16.mxu0 0
        %1195 = vmatpush2.bf16.msra.mxu0 0
        %1196 = vmatprep.subr.bf16.mxu0 0
        %1197 = vmatpush2.bf16.msra.mxu0 0
        %1198 = vmatprep.subr.bf16.mxu0 0
        %1199 = vmatpush2.bf16.msra.mxu0 0
        %1200 = vmatprep.mubr.bf16.mxu0 0
        %1201 = vmatmul.mubr.bf16.gmra.mxu0 %v1145
        %v1202 = vpop.f32.mrf.mxu0
        %v1203 = vadd.f32 %v1026, %v1202
        %v1204 = vpop.f32.mrf.mxu0
        %v1205 = vadd.f32 %v1026, %v1204
        %v1206 = vpop.f32.mrf.mxu0
        %v1207 = vadd.f32 %v1031, %v1206
        %v1208 = vpop.f32.mrf.mxu0
        %v1209 = vadd.f32 %v1031, %v1208
        %1210 = vmatprep.mubr.bf16.mxu0 0
        %1211 = vmatmul.mubr.bf16.gmra.mxu0 %v1148
        %v1212 = vpop.f32.mrf.mxu0
        %v1213 = vadd.f32 %v1036, %v1212
        %v1214 = vpop.f32.mrf.mxu0
        %v1215 = vadd.f32 %v1036, %v1214
        %v1216 = vpop.f32.mrf.mxu0
        %v1217 = vadd.f32 %v1041, %v1216
        %v1218 = vpop.f32.mrf.mxu0
        %v1219 = vadd.f32 %v1041, %v1218
        %1220 = vmatprep.mubr.bf16.mxu0 0
        %1221 = vmatmul.mubr.bf16.gmra.mxu0 %v1151
        %v1222 = vpop.f32.mrf.mxu0
        %v1223 = vadd.f32 %v1046, %v1222
        %v1224 = vpop.f32.mrf.mxu0
        %v1225 = vadd.f32 %v1046, %v1224
        %v1226 = vpop.f32.mrf.mxu0
        %v1227 = vadd.f32 %v1051, %v1226
        %v1228 = vpop.f32.mrf.mxu0
        %v1229 = vadd.f32 %v1051, %v1228
        %1230 = vmatprep.mubr.bf16.mxu0 0
        %1231 = vmatmul.mubr.bf16.gmra.mxu0 %v1154
        %v1232 = vpop.f32.mrf.mxu0
        %v1233 = vadd.f32 %v1056, %v1232
        %v1234 = vpop.f32.mrf.mxu0
        %v1235 = vadd.f32 %v1056, %v1234
        %v1236 = vpop.f32.mrf.mxu0
        %v1237 = vadd.f32 %v1061, %v1236
        %v1238 = vpop.f32.mrf.mxu0
        %v1239 = vadd.f32 %v1061, %v1238
        %1240 = vmatprep.mubr.bf16.mxu0 0
        %1241 = vmatmul.mubr.bf16.gmra.mxu0 %v1157
        %v1242 = vpop.f32.mrf.mxu0
        %v1243 = vadd.f32 %v1066, %v1242
        %v1244 = vpop.f32.mrf.mxu0
        %v1245 = vadd.f32 %v1066, %v1244
        %v1246 = vpop.f32.mrf.mxu0
        %v1247 = vadd.f32 %v1071, %v1246
        %v1248 = vpop.f32.mrf.mxu0
        %v1249 = vadd.f32 %v1071, %v1248
        %1250 = vmatprep.mubr.bf16.mxu0 0
        %1251 = vmatmul.mubr.bf16.gmra.mxu0 %v1160
        %v1252 = vpop.f32.mrf.mxu0
        %v1253 = vadd.f32 %v1076, %v1252
        %v1254 = vpop.f32.mrf.mxu0
        %v1255 = vadd.f32 %v1076, %v1254
        %v1256 = vpop.f32.mrf.mxu0
        %v1257 = vadd.f32 %v1081, %v1256
        %v1258 = vpop.f32.mrf.mxu0
        %v1259 = vadd.f32 %v1081, %v1258
        %1260 = vmatprep.mubr.bf16.mxu0 0
        %1261 = vmatmul.mubr.bf16.gmra.mxu0 %v1163
        %v1262 = vpop.f32.mrf.mxu0
        %v1263 = vadd.f32 %v1086, %v1262
        %v1264 = vpop.f32.mrf.mxu0
        %v1265 = vadd.f32 %v1086, %v1264
        %v1266 = vpop.f32.mrf.mxu0
        %v1267 = vadd.f32 %v1091, %v1266
        %v1268 = vpop.f32.mrf.mxu0
        %v1269 = vadd.f32 %v1091, %v1268
        %1270 = vmatprep.mubr.bf16.mxu0 0
        %1271 = vmatmul.mubr.bf16.gmra.mxu0 %v1166
        %v1272 = vpop.f32.mrf.mxu0
        %v1273 = vadd.f32 %v1096, %v1272
        %v1274 = vpop.f32.mrf.mxu0
        %v1275 = vadd.f32 %v1096, %v1274
        %v1276 = vpop.f32.mrf.mxu0
        %v1277 = vadd.f32 %v1101, %v1276
        %v1278 = vpop.f32.mrf.mxu0
        %v1279 = vadd.f32 %v1101, %v1278
        %1280 = vdwg.mxu0
        %1281 = vmatprep.subr.bf16.mxu0 0
        %1282 = vmatpush1.bf16.msra.mxu0 0
        %1283 = vmatprep.subr.bf16.mxu0 0
        %1284 = vmatpush1.bf16.msra.mxu0 0
        %1285 = vmatprep.subr.bf16.mxu0 0
        %1286 = vmatpush1.bf16.msra.mxu0 0
        %1287 = vmatprep.subr.bf16.mxu0 0
        %1288 = vmatpush1.bf16.msra.mxu0 0
        %1289 = vmatprep.subr.bf16.mxu0 %v990
        %1290 = vmatpush1.bf16.msra.mxu0 %v989
        %1291 = vmatprep.subr.bf16.mxu0 %v986
        %1292 = vmatpush1.bf16.msra.mxu0 %v985
        %1293 = vmatprep.subr.bf16.mxu0 %v982
        %1294 = vmatpush1.bf16.msra.mxu0 %v981
        %1295 = vmatprep.subr.bf16.mxu0 %v978
        %1296 = vmatpush1.bf16.msra.mxu0 %v977
        %1297 = vmatprep.subr.bf16.mxu0 0
        %1298 = vmatpush2.bf16.msra.mxu0 0
        %1299 = vmatprep.subr.bf16.mxu0 0
        %1300 = vmatpush2.bf16.msra.mxu0 0
        %1301 = vmatprep.subr.bf16.mxu0 0
        %1302 = vmatpush2.bf16.msra.mxu0 0
        %1303 = vmatprep.subr.bf16.mxu0 0
        %1304 = vmatpush2.bf16.msra.mxu0 0
        %1305 = vmatprep.subr.bf16.mxu0 0
        %1306 = vmatpush2.bf16.msra.mxu0 0
        %1307 = vmatprep.subr.bf16.mxu0 0
        %1308 = vmatpush2.bf16.msra.mxu0 0
        %1309 = vmatprep.subr.bf16.mxu0 0
        %1310 = vmatpush2.bf16.msra.mxu0 0
        %1311 = vmatprep.subr.bf16.mxu0 0
        %1312 = vmatpush2.bf16.msra.mxu0 0
        %1313 = vmatprep.mubr.bf16.mxu0 0
        %1314 = vmatmul.mubr.bf16.gmra.mxu0 %v1145
        %v1315 = vpop.f32.mrf.mxu0
        %v1316 = vadd.f32 %v1026, %v1315
        %v1317 = vpop.f32.mrf.mxu0
        %v1318 = vadd.f32 %v1026, %v1317
        %v1319 = vpop.f32.mrf.mxu0
        %v1320 = vadd.f32 %v1031, %v1319
        %v1321 = vpop.f32.mrf.mxu0
        %v1322 = vadd.f32 %v1031, %v1321
        %1323 = vmatprep.mubr.bf16.mxu0 0
        %1324 = vmatmul.mubr.bf16.gmra.mxu0 %v1148
        %v1325 = vpop.f32.mrf.mxu0
        %v1326 = vadd.f32 %v1036, %v1325
        %v1327 = vpop.f32.mrf.mxu0
        %v1328 = vadd.f32 %v1036, %v1327
        %v1329 = vpop.f32.mrf.mxu0
        %v1330 = vadd.f32 %v1041, %v1329
        %v1331 = vpop.f32.mrf.mxu0
        %v1332 = vadd.f32 %v1041, %v1331
        %1333 = vmatprep.mubr.bf16.mxu0 0
        %1334 = vmatmul.mubr.bf16.gmra.mxu0 %v1151
        %v1335 = vpop.f32.mrf.mxu0
        %v1336 = vadd.f32 %v1046, %v1335
        %v1337 = vpop.f32.mrf.mxu0
        %v1338 = vadd.f32 %v1046, %v1337
        %v1339 = vpop.f32.mrf.mxu0
        %v1340 = vadd.f32 %v1051, %v1339
        %v1341 = vpop.f32.mrf.mxu0
        %v1342 = vadd.f32 %v1051, %v1341
        %1343 = vmatprep.mubr.bf16.mxu0 0
        %1344 = vmatmul.mubr.bf16.gmra.mxu0 %v1154
        %v1345 = vpop.f32.mrf.mxu0
        %v1346 = vadd.f32 %v1056, %v1345
        %v1347 = vpop.f32.mrf.mxu0
        %v1348 = vadd.f32 %v1056, %v1347
        %v1349 = vpop.f32.mrf.mxu0
        %v1350 = vadd.f32 %v1061, %v1349
        %v1351 = vpop.f32.mrf.mxu0
        %v1352 = vadd.f32 %v1061, %v1351
        %1353 = vmatprep.mubr.bf16.mxu0 0
        %1354 = vmatmul.mubr.bf16.gmra.mxu0 %v1157
        %v1355 = vpop.f32.mrf.mxu0
        %v1356 = vadd.f32 %v1066, %v1355
        %v1357 = vpop.f32.mrf.mxu0
        %v1358 = vadd.f32 %v1066, %v1357
        %v1359 = vpop.f32.mrf.mxu0
        %v1360 = vadd.f32 %v1071, %v1359
        %v1361 = vpop.f32.mrf.mxu0
        %v1362 = vadd.f32 %v1071, %v1361
        %1363 = vmatprep.mubr.bf16.mxu0 0
        %1364 = vmatmul.mubr.bf16.gmra.mxu0 %v1160
        %v1365 = vpop.f32.mrf.mxu0
        %v1366 = vadd.f32 %v1076, %v1365
        %v1367 = vpop.f32.mrf.mxu0
        %v1368 = vadd.f32 %v1076, %v1367
        %v1369 = vpop.f32.mrf.mxu0
        %v1370 = vadd.f32 %v1081, %v1369
        %v1371 = vpop.f32.mrf.mxu0
        %v1372 = vadd.f32 %v1081, %v1371
        %1373 = vmatprep.mubr.bf16.mxu0 0
        %1374 = vmatmul.mubr.bf16.gmra.mxu0 %v1163
        %v1375 = vpop.f32.mrf.mxu0
        %v1376 = vadd.f32 %v1086, %v1375
        %v1377 = vpop.f32.mrf.mxu0
        %v1378 = vadd.f32 %v1086, %v1377
        %v1379 = vpop.f32.mrf.mxu0
        %v1380 = vadd.f32 %v1091, %v1379
        %v1381 = vpop.f32.mrf.mxu0
        %v1382 = vadd.f32 %v1091, %v1381
        %1383 = vmatprep.mubr.bf16.mxu0 0
        %1384 = vmatmul.mubr.bf16.gmra.mxu0 %v1166
        %v1385 = vpop.f32.mrf.mxu0
        %v1386 = vadd.f32 %v1096, %v1385
        %v1387 = vpop.f32.mrf.mxu0
        %v1388 = vadd.f32 %v1096, %v1387
        %v1389 = vpop.f32.mrf.mxu0
        %v1390 = vadd.f32 %v1101, %v1389
        %v1391 = vpop.f32.mrf.mxu0
        %v1392 = vadd.f32 %v1101, %v1391
        %1393 = vdwg.mxu0
        %v1394 = vmax.f32 %v1203, 0.0
        %v1395 = vmax.f32 %v1205, 0.0
        %v1396 = vmax.f32 %v1316, 0.0
        %v1397 = vmax.f32 %v1318, 0.0
        %v1398 = vmax.f32 %v1207, 0.0
        %v1399 = vmax.f32 %v1209, 0.0
        %v1400 = vmax.f32 %v1320, 0.0
        %v1401 = vmax.f32 %v1322, 0.0
        %v1402 = vmax.f32 %v1213, 0.0
        %v1403 = vmax.f32 %v1215, 0.0
        %v1404 = vmax.f32 %v1326, 0.0
        %v1405 = vmax.f32 %v1328, 0.0
        %v1406 = vmax.f32 %v1217, 0.0
        %v1407 = vmax.f32 %v1219, 0.0
        %v1408 = vmax.f32 %v1330, 0.0
        %v1409 = vmax.f32 %v1332, 0.0
        %v1410 = vmax.f32 %v1223, 0.0
        %v1411 = vmax.f32 %v1225, 0.0
        %v1412 = vmax.f32 %v1336, 0.0
        %v1413 = vmax.f32 %v1338, 0.0
        %v1414 = vmax.f32 %v1227, 0.0
        %v1415 = vmax.f32 %v1229, 0.0
        %v1416 = vmax.f32 %v1340, 0.0
        %v1417 = vmax.f32 %v1342, 0.0
        %v1418 = vmax.f32 %v1233, 0.0
        %v1419 = vmax.f32 %v1235, 0.0
        %v1420 = vmax.f32 %v1346, 0.0
        %v1421 = vmax.f32 %v1348, 0.0
        %v1422 = vmax.f32 %v1237, 0.0
        %v1423 = vmax.f32 %v1239, 0.0
        %v1424 = vmax.f32 %v1350, 0.0
        %v1425 = vmax.f32 %v1352, 0.0
        %v1426 = vmax.f32 %v1243, 0.0
        %v1427 = vmax.f32 %v1245, 0.0
        %v1428 = vmax.f32 %v1356, 0.0
        %v1429 = vmax.f32 %v1358, 0.0
        %v1430 = vmax.f32 %v1247, 0.0
        %v1431 = vmax.f32 %v1249, 0.0
        %v1432 = vmax.f32 %v1360, 0.0
        %v1433 = vmax.f32 %v1362, 0.0
        %v1434 = vmax.f32 %v1253, 0.0
        %v1435 = vmax.f32 %v1255, 0.0
        %v1436 = vmax.f32 %v1366, 0.0
        %v1437 = vmax.f32 %v1368, 0.0
        %v1438 = vmax.f32 %v1257, 0.0
        %v1439 = vmax.f32 %v1259, 0.0
        %v1440 = vmax.f32 %v1370, 0.0
        %v1441 = vmax.f32 %v1372, 0.0
        %v1442 = vmax.f32 %v1263, 0.0
        %v1443 = vmax.f32 %v1265, 0.0
        %v1444 = vmax.f32 %v1376, 0.0
        %v1445 = vmax.f32 %v1378, 0.0
        %v1446 = vmax.f32 %v1267, 0.0
        %v1447 = vmax.f32 %v1269, 0.0
        %v1448 = vmax.f32 %v1380, 0.0
        %v1449 = vmax.f32 %v1382, 0.0
        %v1450 = vmax.f32 %v1273, 0.0
        %v1451 = vmax.f32 %v1275, 0.0
        %v1452 = vmax.f32 %v1386, 0.0
        %v1453 = vmax.f32 %v1388, 0.0
        %v1454 = vmax.f32 %v1277, 0.0
        %v1455 = vmax.f32 %v1279, 0.0
        %v1456 = vmax.f32 %v1390, 0.0
        %v1457 = vmax.f32 %v1392, 0.0
        %v1458 = vpack.c.bf16 %v1398, %v1394
        %v1459 = vpack.c.bf16 %v1399, %v1395
        %v1460 = vpack.c.bf16 %v1400, %v1396
        %v1461 = vpack.c.bf16 %v1401, %v1397
        %v1462 = vpack.c.bf16 %v1406, %v1402
        %v1463 = vpack.c.bf16 %v1407, %v1403
        %v1464 = vpack.c.bf16 %v1408, %v1404
        %v1465 = vpack.c.bf16 %v1409, %v1405
        %v1466 = vpack.c.bf16 %v1414, %v1410
        %v1467 = vpack.c.bf16 %v1415, %v1411
        %v1468 = vpack.c.bf16 %v1416, %v1412
        %v1469 = vpack.c.bf16 %v1417, %v1413
        %v1470 = vpack.c.bf16 %v1422, %v1418
        %v1471 = vpack.c.bf16 %v1423, %v1419
        %v1472 = vpack.c.bf16 %v1424, %v1420
        %v1473 = vpack.c.bf16 %v1425, %v1421
        %v1474 = vpack.c.bf16 %v1430, %v1426
        %v1475 = vpack.c.bf16 %v1431, %v1427
        %v1476 = vpack.c.bf16 %v1432, %v1428
        %v1477 = vpack.c.bf16 %v1433, %v1429
        %v1478 = vpack.c.bf16 %v1438, %v1434
        %v1479 = vpack.c.bf16 %v1439, %v1435
        %v1480 = vpack.c.bf16 %v1440, %v1436
        %v1481 = vpack.c.bf16 %v1441, %v1437
        %v1482 = vpack.c.bf16 %v1446, %v1442
        %v1483 = vpack.c.bf16 %v1447, %v1443
        %v1484 = vpack.c.bf16 %v1448, %v1444
        %v1485 = vpack.c.bf16 %v1449, %v1445
        %v1486 = vpack.c.bf16 %v1454, %v1450
        %v1487 = vpack.c.bf16 %v1455, %v1451
        %v1488 = vpack.c.bf16 %v1456, %v1452
        %v1489 = vpack.c.bf16 %v1457, %v1453
        %v1490 = vld [vmem:[#allocation2] sm:$0xf]
        %v1491 = vld [vmem:[#allocation2 + $0x4] sm:$0xf]
        %v1492 = vld [vmem:[#allocation2 + $0x8] sm:$0xf]
        %v1493 = vld [vmem:[#allocation2 + $0xc] sm:$0xf]
        %v1494 = vld [vmem:[#allocation2 + $0x10] sm:$0xf]
        %v1495 = vld [vmem:[#allocation2 + $0x14] sm:$0xf]
        %v1496 = vld [vmem:[#allocation2 + $0x18] sm:$0xf]
        %v1497 = vld [vmem:[#allocation2 + $0x1c] sm:$0xf]
        %v1498 = vld [vmem:[#allocation2 + $0x20] sm:$0xf]
        %v1499 = vld [vmem:[#allocation2 + $0x24] sm:$0xf]
        %v1500 = vld [vmem:[#allocation2 + $0x28] sm:$0xf]
        %v1501 = vld [vmem:[#allocation2 + $0x2c] sm:$0xf]
        %v1502 = vld [vmem:[#allocation2 + $0x30] sm:$0xf]
        %v1503 = vld [vmem:[#allocation2 + $0x34] sm:$0xf]
        %v1504 = vld [vmem:[#allocation2 + $0x38] sm:$0xf]
        %v1505 = vld [vmem:[#allocation2 + $0x3c] sm:$0xf]
        %v1506 = vld [vmem:[#allocation2 + $0x40] sm:$0xf]
        %v1507 = vld [vmem:[#allocation2 + $0x44] sm:$0xf]
        %v1508 = vld [vmem:[#allocation2 + $0x48] sm:$0xf]
        %v1509 = vld [vmem:[#allocation2 + $0x4c] sm:$0xf]
        %v1510 = vld [vmem:[#allocation2 + $0x50] sm:$0xf]
        %v1511 = vld [vmem:[#allocation2 + $0x54] sm:$0xf]
        %v1512 = vld [vmem:[#allocation2 + $0x58] sm:$0xf]
        %v1513 = vld [vmem:[#allocation2 + $0x5c] sm:$0xf]
        %v1514 = vld [vmem:[#allocation2 + $0x60] sm:$0xf]
        %v1515 = vld [vmem:[#allocation2 + $0x64] sm:$0xf]
        %v1516 = vld [vmem:[#allocation2 + $0x68] sm:$0xf]
        %v1517 = vld [vmem:[#allocation2 + $0x6c] sm:$0xf]
        %v1518 = vld [vmem:[#allocation2 + $0x70] sm:$0xf]
        %v1519 = vld [vmem:[#allocation2 + $0x74] sm:$0xf]
        %v1520 = vld [vmem:[#allocation2 + $0x78] sm:$0xf]
        %v1521 = vld [vmem:[#allocation2 + $0x7c] sm:$0xf]
        %v1522 = vld [vmem:[%s6] sm:$0xff]
        %v1523 = vld [vmem:[%s6 + $0x8] sm:$0xff]
        %v1524 = vld [vmem:[%s6 + $0x10] sm:$0xff]
        %v1525 = vld [vmem:[%s6 + $0x18] sm:$0xff]
        %v1526 = vld [vmem:[%s6 + $0x20] sm:$0xff]
        %v1527 = vld [vmem:[%s6 + $0x28] sm:$0xff]
        %v1528 = vld [vmem:[%s6 + $0x30] sm:$0xff]
        %v1529 = vld [vmem:[%s6 + $0x38] sm:$0xff]
        %v1530 = vld [vmem:[%s6 + $0x40] sm:$0xff]
        %v1531 = vld [vmem:[%s6 + $0x48] sm:$0xff]
        %v1532 = vld [vmem:[%s6 + $0x50] sm:$0xff]
        %v1533 = vld [vmem:[%s6 + $0x58] sm:$0xff]
        %v1534 = vld [vmem:[%s6 + $0x60] sm:$0xff]
        %v1535 = vld [vmem:[%s6 + $0x68] sm:$0xff]
        %v1536 = vld [vmem:[%s6 + $0x70] sm:$0xff]
        %v1537 = vld [vmem:[%s6 + $0x78] sm:$0xff]
        %v1538 = vld [vmem:[%s6 + $0x80] sm:$0xff]
        %v1539 = vld [vmem:[%s6 + $0x88] sm:$0xff]
        %v1540 = vld [vmem:[%s6 + $0x90] sm:$0xff]
        %v1541 = vld [vmem:[%s6 + $0x98] sm:$0xff]
        %v1542 = vld [vmem:[%s6 + $0xa0] sm:$0xff]
        %v1543 = vld [vmem:[%s6 + $0xa8] sm:$0xff]
        %v1544 = vld [vmem:[%s6 + $0xb0] sm:$0xff]
        %v1545 = vld [vmem:[%s6 + $0xb8] sm:$0xff]
        %v1546 = vld [vmem:[%s6 + $0xc0] sm:$0xff]
        %v1547 = vld [vmem:[%s6 + $0xc8] sm:$0xff]
        %v1548 = vld [vmem:[%s6 + $0xd0] sm:$0xff]
        %v1549 = vld [vmem:[%s6 + $0xd8] sm:$0xff]
        %v1550 = vld [vmem:[%s6 + $0xe0] sm:$0xff]
        %v1551 = vld [vmem:[%s6 + $0xe8] sm:$0xff]
        %v1552 = vld [vmem:[%s6 + $0xf0] sm:$0xff]
        %v1553 = vld [vmem:[%s6 + $0xf8] sm:$0xff]
        %1555 = vset.pattern.permute.xlu0 0
        %1556 = vperm.xlu0 %1555, %v1522
        %v1557 = vpop.permute.xlu0 %1556
        %1560 = vset.pattern.permute.xlu0 0
        %1561 = vperm.xlu0 %1560, %v1523
        %v1562 = vpop.permute.xlu0 %1561
        %1565 = vset.pattern.permute.xlu0 0
        %1566 = vperm.xlu0 %1565, %v1524
        %v1567 = vpop.permute.xlu0 %1566
        %1570 = vset.pattern.permute.xlu0 0
        %1571 = vperm.xlu0 %1570, %v1525
        %v1572 = vpop.permute.xlu0 %1571
        %1575 = vset.pattern.permute.xlu0 0
        %1576 = vperm.xlu0 %1575, %v1526
        %v1577 = vpop.permute.xlu0 %1576
        %1580 = vset.pattern.permute.xlu0 0
        %1581 = vperm.xlu0 %1580, %v1527
        %v1582 = vpop.permute.xlu0 %1581
        %1585 = vset.pattern.permute.xlu0 0
        %1586 = vperm.xlu0 %1585, %v1528
        %v1587 = vpop.permute.xlu0 %1586
        %1590 = vset.pattern.permute.xlu0 0
        %1591 = vperm.xlu0 %1590, %v1529
        %v1592 = vpop.permute.xlu0 %1591
        %1595 = vset.pattern.permute.xlu0 0
        %1596 = vperm.xlu0 %1595, %v1530
        %v1597 = vpop.permute.xlu0 %1596
        %1600 = vset.pattern.permute.xlu0 0
        %1601 = vperm.xlu0 %1600, %v1531
        %v1602 = vpop.permute.xlu0 %1601
        %1605 = vset.pattern.permute.xlu0 0
        %1606 = vperm.xlu0 %1605, %v1532
        %v1607 = vpop.permute.xlu0 %1606
        %1610 = vset.pattern.permute.xlu0 0
        %1611 = vperm.xlu0 %1610, %v1533
        %v1612 = vpop.permute.xlu0 %1611
        %1615 = vset.pattern.permute.xlu0 0
        %1616 = vperm.xlu0 %1615, %v1534
        %v1617 = vpop.permute.xlu0 %1616
        %1620 = vset.pattern.permute.xlu0 0
        %1621 = vperm.xlu0 %1620, %v1535
        %v1622 = vpop.permute.xlu0 %1621
        %1625 = vset.pattern.permute.xlu0 0
        %1626 = vperm.xlu0 %1625, %v1536
        %v1627 = vpop.permute.xlu0 %1626
        %1630 = vset.pattern.permute.xlu0 0
        %1631 = vperm.xlu0 %1630, %v1537
        %v1632 = vpop.permute.xlu0 %1631
        %1635 = vset.pattern.permute.xlu0 0
        %1636 = vperm.xlu0 %1635, %v1538
        %v1637 = vpop.permute.xlu0 %1636
        %1640 = vset.pattern.permute.xlu0 0
        %1641 = vperm.xlu0 %1640, %v1539
        %v1642 = vpop.permute.xlu0 %1641
        %1645 = vset.pattern.permute.xlu0 0
        %1646 = vperm.xlu0 %1645, %v1540
        %v1647 = vpop.permute.xlu0 %1646
        %1650 = vset.pattern.permute.xlu0 0
        %1651 = vperm.xlu0 %1650, %v1541
        %v1652 = vpop.permute.xlu0 %1651
        %1655 = vset.pattern.permute.xlu0 0
        %1656 = vperm.xlu0 %1655, %v1542
        %v1657 = vpop.permute.xlu0 %1656
        %1660 = vset.pattern.permute.xlu0 0
        %1661 = vperm.xlu0 %1660, %v1543
        %v1662 = vpop.permute.xlu0 %1661
        %1665 = vset.pattern.permute.xlu0 0
        %1666 = vperm.xlu0 %1665, %v1544
        %v1667 = vpop.permute.xlu0 %1666
        %1670 = vset.pattern.permute.xlu0 0
        %1671 = vperm.xlu0 %1670, %v1545
        %v1672 = vpop.permute.xlu0 %1671
        %1675 = vset.pattern.permute.xlu0 0
        %1676 = vperm.xlu0 %1675, %v1546
        %v1677 = vpop.permute.xlu0 %1676
        %1680 = vset.pattern.permute.xlu0 0
        %1681 = vperm.xlu0 %1680, %v1547
        %v1682 = vpop.permute.xlu0 %1681
        %1685 = vset.pattern.permute.xlu0 0
        %1686 = vperm.xlu0 %1685, %v1548
        %v1687 = vpop.permute.xlu0 %1686
        %1690 = vset.pattern.permute.xlu0 0
        %1691 = vperm.xlu0 %1690, %v1549
        %v1692 = vpop.permute.xlu0 %1691
        %1695 = vset.pattern.permute.xlu0 0
        %1696 = vperm.xlu0 %1695, %v1550
        %v1697 = vpop.permute.xlu0 %1696
        %1700 = vset.pattern.permute.xlu0 0
        %1701 = vperm.xlu0 %1700, %v1551
        %v1702 = vpop.permute.xlu0 %1701
        %1705 = vset.pattern.permute.xlu0 0
        %1706 = vperm.xlu0 %1705, %v1552
        %v1707 = vpop.permute.xlu0 %1706
        %1710 = vset.pattern.permute.xlu0 0
        %1711 = vperm.xlu0 %1710, %v1553
        %v1712 = vpop.permute.xlu0 %1711
        %v1746 = vunpack.c.l.b16 %v1490
        %v1747 = vunpack.c.l.b16 %v1491
        %v1748 = vunpack.c.l.b16 %v1492
        %v1749 = vunpack.c.l.b16 %v1493
        %v1750 = vunpack.c.l.b16 %v1494
        %v1751 = vunpack.c.l.b16 %v1495
        %v1752 = vunpack.c.l.b16 %v1496
        %v1753 = vunpack.c.l.b16 %v1497
        %v1754 = vunpack.c.l.b16 %v1498
        %v1755 = vunpack.c.l.b16 %v1499
        %v1756 = vunpack.c.l.b16 %v1500
        %v1757 = vunpack.c.l.b16 %v1501
        %v1758 = vunpack.c.l.b16 %v1502
        %v1759 = vunpack.c.l.b16 %v1503
        %v1760 = vunpack.c.l.b16 %v1504
        %v1761 = vunpack.c.l.b16 %v1505
        %v1762 = vunpack.c.l.b16 %v1506
        %v1763 = vunpack.c.l.b16 %v1507
        %v1764 = vunpack.c.l.b16 %v1508
        %v1765 = vunpack.c.l.b16 %v1509
        %v1766 = vunpack.c.l.b16 %v1510
        %v1767 = vunpack.c.l.b16 %v1511
        %v1768 = vunpack.c.l.b16 %v1512
        %v1769 = vunpack.c.l.b16 %v1513
        %v1770 = vunpack.c.l.b16 %v1514
        %v1771 = vunpack.c.l.b16 %v1515
        %v1772 = vunpack.c.l.b16 %v1516
        %v1773 = vunpack.c.l.b16 %v1517
        %v1774 = vunpack.c.l.b16 %v1518
        %v1775 = vunpack.c.l.b16 %v1519
        %v1776 = vunpack.c.l.b16 %v1520
        %v1777 = vunpack.c.l.b16 %v1521
        %v1778 = vpack.c.b16 %v1747, %v1746
        %v1779 = vpack.c.b16 %v1749, %v1748
        %v1780 = vpack.c.b16 %v1751, %v1750
        %v1781 = vpack.c.b16 %v1753, %v1752
        %v1782 = vpack.c.b16 %v1755, %v1754
        %v1783 = vpack.c.b16 %v1757, %v1756
        %v1784 = vpack.c.b16 %v1759, %v1758
        %v1785 = vpack.c.b16 %v1761, %v1760
        %v1786 = vpack.c.b16 %v1763, %v1762
        %v1787 = vpack.c.b16 %v1765, %v1764
        %v1788 = vpack.c.b16 %v1767, %v1766
        %v1789 = vpack.c.b16 %v1769, %v1768
        %v1790 = vpack.c.b16 %v1771, %v1770
        %v1791 = vpack.c.b16 %v1773, %v1772
        %v1792 = vpack.c.b16 %v1775, %v1774
        %v1793 = vpack.c.b16 %v1777, %v1776
        %1810 = vmatprep.subr.bf16.mxu0 %v1487
        %1811 = vmatpush1.bf16.msra.mxu0 %v1486
        %1812 = vmatprep.subr.bf16.mxu0 %v1483
        %1813 = vmatpush1.bf16.msra.mxu0 %v1482
        %1814 = vmatprep.subr.bf16.mxu0 %v1479
        %1815 = vmatpush1.bf16.msra.mxu0 %v1478
        %1816 = vmatprep.subr.bf16.mxu0 %v1475
        %1817 = vmatpush1.bf16.msra.mxu0 %v1474
        %1818 = vmatprep.subr.bf16.mxu0 %v1471
        %1819 = vmatpush1.bf16.msra.mxu0 %v1470
        %1820 = vmatprep.subr.bf16.mxu0 %v1467
        %1821 = vmatpush1.bf16.msra.mxu0 %v1466
        %1822 = vmatprep.subr.bf16.mxu0 %v1463
        %1823 = vmatpush1.bf16.msra.mxu0 %v1462
        %1824 = vmatprep.subr.bf16.mxu0 %v1459
        %1825 = vmatpush1.bf16.msra.mxu0 %v1458
        %1826 = vmatprep.subr.bf16.mxu0 0
        %1827 = vmatpush2.bf16.msra.mxu0 0
        %1828 = vmatprep.subr.bf16.mxu0 0
        %1829 = vmatpush2.bf16.msra.mxu0 0
        %1830 = vmatprep.subr.bf16.mxu0 0
        %1831 = vmatpush2.bf16.msra.mxu0 0
        %1832 = vmatprep.subr.bf16.mxu0 0
        %1833 = vmatpush2.bf16.msra.mxu0 0
        %1834 = vmatprep.subr.bf16.mxu0 0
        %1835 = vmatpush2.bf16.msra.mxu0 0
        %1836 = vmatprep.subr.bf16.mxu0 0
        %1837 = vmatpush2.bf16.msra.mxu0 0
        %1838 = vmatprep.subr.bf16.mxu0 0
        %1839 = vmatpush2.bf16.msra.mxu0 0
        %1840 = vmatprep.subr.bf16.mxu0 0
        %1841 = vmatpush2.bf16.msra.mxu0 0
        %1842 = vmatprep.mubr.bf16.mxu0 0
        %1843 = vmatmul.mubr.bf16.gmra.mxu0 %v1778
        %v1844 = vpop.f32.mrf.mxu0
        %v1845 = vadd.f32 %v1557, %v1844
        %v1846 = vpop.f32.mrf.mxu0
        %v1847 = vadd.f32 %v1557, %v1846
        %v1848 = vpop.f32.mrf.mxu0
        %v1849 = vadd.f32 %v1562, %v1848
        %v1850 = vpop.f32.mrf.mxu0
        %v1851 = vadd.f32 %v1562, %v1850
        %1852 = vmatprep.mubr.bf16.mxu0 0
        %1853 = vmatmul.mubr.bf16.gmra.mxu0 %v1779
        %v1854 = vpop.f32.mrf.mxu0
        %v1855 = vadd.f32 %v1567, %v1854
        %v1856 = vpop.f32.mrf.mxu0
        %v1857 = vadd.f32 %v1567, %v1856
        %v1858 = vpop.f32.mrf.mxu0
        %v1859 = vadd.f32 %v1572, %v1858
        %v1860 = vpop.f32.mrf.mxu0
        %v1861 = vadd.f32 %v1572, %v1860
        %1862 = vmatprep.mubr.bf16.mxu0 0
        %1863 = vmatmul.mubr.bf16.gmra.mxu0 %v1780
        %v1864 = vpop.f32.mrf.mxu0
        %v1865 = vadd.f32 %v1577, %v1864
        %v1866 = vpop.f32.mrf.mxu0
        %v1867 = vadd.f32 %v1577, %v1866
        %v1868 = vpop.f32.mrf.mxu0
        %v1869 = vadd.f32 %v1582, %v1868
        %v1870 = vpop.f32.mrf.mxu0
        %v1871 = vadd.f32 %v1582, %v1870
        %1872 = vmatprep.mubr.bf16.mxu0 0
        %1873 = vmatmul.mubr.bf16.gmra.mxu0 %v1781
        %v1874 = vpop.f32.mrf.mxu0
        %v1875 = vadd.f32 %v1587, %v1874
        %v1876 = vpop.f32.mrf.mxu0
        %v1877 = vadd.f32 %v1587, %v1876
        %v1878 = vpop.f32.mrf.mxu0
        %v1879 = vadd.f32 %v1592, %v1878
        %v1880 = vpop.f32.mrf.mxu0
        %v1881 = vadd.f32 %v1592, %v1880
        %1882 = vmatprep.mubr.bf16.mxu0 0
        %1883 = vmatmul.mubr.bf16.gmra.mxu0 %v1782
        %v1884 = vpop.f32.mrf.mxu0
        %v1885 = vadd.f32 %v1597, %v1884
        %v1886 = vpop.f32.mrf.mxu0
        %v1887 = vadd.f32 %v1597, %v1886
        %v1888 = vpop.f32.mrf.mxu0
        %v1889 = vadd.f32 %v1602, %v1888
        %v1890 = vpop.f32.mrf.mxu0
        %v1891 = vadd.f32 %v1602, %v1890
        %1892 = vmatprep.mubr.bf16.mxu0 0
        %1893 = vmatmul.mubr.bf16.gmra.mxu0 %v1783
        %v1894 = vpop.f32.mrf.mxu0
        %v1895 = vadd.f32 %v1607, %v1894
        %v1896 = vpop.f32.mrf.mxu0
        %v1897 = vadd.f32 %v1607, %v1896
        %v1898 = vpop.f32.mrf.mxu0
        %v1899 = vadd.f32 %v1612, %v1898
        %v1900 = vpop.f32.mrf.mxu0
        %v1901 = vadd.f32 %v1612, %v1900
        %1902 = vmatprep.mubr.bf16.mxu0 0
        %1903 = vmatmul.mubr.bf16.gmra.mxu0 %v1784
        %v1904 = vpop.f32.mrf.mxu0
        %v1905 = vadd.f32 %v1617, %v1904
        %v1906 = vpop.f32.mrf.mxu0
        %v1907 = vadd.f32 %v1617, %v1906
        %v1908 = vpop.f32.mrf.mxu0
        %v1909 = vadd.f32 %v1622, %v1908
        %v1910 = vpop.f32.mrf.mxu0
        %v1911 = vadd.f32 %v1622, %v1910
        %1912 = vmatprep.mubr.bf16.mxu0 0
        %1913 = vmatmul.mubr.bf16.gmra.mxu0 %v1785
        %v1914 = vpop.f32.mrf.mxu0
        %v1915 = vadd.f32 %v1627, %v1914
        %v1916 = vpop.f32.mrf.mxu0
        %v1917 = vadd.f32 %v1627, %v1916
        %v1918 = vpop.f32.mrf.mxu0
        %v1919 = vadd.f32 %v1632, %v1918
        %v1920 = vpop.f32.mrf.mxu0
        %v1921 = vadd.f32 %v1632, %v1920
        %1922 = vmatprep.mubr.bf16.mxu0 0
        %1923 = vmatmul.mubr.bf16.gmra.mxu0 %v1786
        %v1924 = vpop.f32.mrf.mxu0
        %v1925 = vadd.f32 %v1637, %v1924
        %v1926 = vpop.f32.mrf.mxu0
        %v1927 = vadd.f32 %v1637, %v1926
        %v1928 = vpop.f32.mrf.mxu0
        %v1929 = vadd.f32 %v1642, %v1928
        %v1930 = vpop.f32.mrf.mxu0
        %v1931 = vadd.f32 %v1642, %v1930
        %1932 = vmatprep.mubr.bf16.mxu0 0
        %1933 = vmatmul.mubr.bf16.gmra.mxu0 %v1787
        %v1934 = vpop.f32.mrf.mxu0
        %v1935 = vadd.f32 %v1647, %v1934
        %v1936 = vpop.f32.mrf.mxu0
        %v1937 = vadd.f32 %v1647, %v1936
        %v1938 = vpop.f32.mrf.mxu0
        %v1939 = vadd.f32 %v1652, %v1938
        %v1940 = vpop.f32.mrf.mxu0
        %v1941 = vadd.f32 %v1652, %v1940
        %1942 = vmatprep.mubr.bf16.mxu0 0
        %1943 = vmatmul.mubr.bf16.gmra.mxu0 %v1788
        %v1944 = vpop.f32.mrf.mxu0
        %v1945 = vadd.f32 %v1657, %v1944
        %v1946 = vpop.f32.mrf.mxu0
        %v1947 = vadd.f32 %v1657, %v1946
        %v1948 = vpop.f32.mrf.mxu0
        %v1949 = vadd.f32 %v1662, %v1948
        %v1950 = vpop.f32.mrf.mxu0
        %v1951 = vadd.f32 %v1662, %v1950
        %1952 = vmatprep.mubr.bf16.mxu0 0
        %1953 = vmatmul.mubr.bf16.gmra.mxu0 %v1789
        %v1954 = vpop.f32.mrf.mxu0
        %v1955 = vadd.f32 %v1667, %v1954
        %v1956 = vpop.f32.mrf.mxu0
        %v1957 = vadd.f32 %v1667, %v1956
        %v1958 = vpop.f32.mrf.mxu0
        %v1959 = vadd.f32 %v1672, %v1958
        %v1960 = vpop.f32.mrf.mxu0
        %v1961 = vadd.f32 %v1672, %v1960
        %1962 = vmatprep.mubr.bf16.mxu0 0
        %1963 = vmatmul.mubr.bf16.gmra.mxu0 %v1790
        %v1964 = vpop.f32.mrf.mxu0
        %v1965 = vadd.f32 %v1677, %v1964
        %v1966 = vpop.f32.mrf.mxu0
        %v1967 = vadd.f32 %v1677, %v1966
        %v1968 = vpop.f32.mrf.mxu0
        %v1969 = vadd.f32 %v1682, %v1968
        %v1970 = vpop.f32.mrf.mxu0
        %v1971 = vadd.f32 %v1682, %v1970
        %1972 = vmatprep.mubr.bf16.mxu0 0
        %1973 = vmatmul.mubr.bf16.gmra.mxu0 %v1791
        %v1974 = vpop.f32.mrf.mxu0
        %v1975 = vadd.f32 %v1687, %v1974
        %v1976 = vpop.f32.mrf.mxu0
        %v1977 = vadd.f32 %v1687, %v1976
        %v1978 = vpop.f32.mrf.mxu0
        %v1979 = vadd.f32 %v1692, %v1978
        %v1980 = vpop.f32.mrf.mxu0
        %v1981 = vadd.f32 %v1692, %v1980
        %1982 = vmatprep.mubr.bf16.mxu0 0
        %1983 = vmatmul.mubr.bf16.gmra.mxu0 %v1792
        %v1984 = vpop.f32.mrf.mxu0
        %v1985 = vadd.f32 %v1697, %v1984
        %v1986 = vpop.f32.mrf.mxu0
        %v1987 = vadd.f32 %v1697, %v1986
        %v1988 = vpop.f32.mrf.mxu0
        %v1989 = vadd.f32 %v1702, %v1988
        %v1990 = vpop.f32.mrf.mxu0
        %v1991 = vadd.f32 %v1702, %v1990
        %1992 = vmatprep.mubr.bf16.mxu0 0
        %1993 = vmatmul.mubr.bf16.gmra.mxu0 %v1793
        %v1994 = vpop.f32.mrf.mxu0
        %v1995 = vadd.f32 %v1707, %v1994
        %v1996 = vpop.f32.mrf.mxu0
        %v1997 = vadd.f32 %v1707, %v1996
        %v1998 = vpop.f32.mrf.mxu0
        %v1999 = vadd.f32 %v1712, %v1998
        %v2000 = vpop.f32.mrf.mxu0
        %v2001 = vadd.f32 %v1712, %v2000
        %2002 = vdwg.mxu0
        %2003 = vmatprep.subr.bf16.mxu0 %v1489
        %2004 = vmatpush1.bf16.msra.mxu0 %v1488
        %2005 = vmatprep.subr.bf16.mxu0 %v1485
        %2006 = vmatpush1.bf16.msra.mxu0 %v1484
        %2007 = vmatprep.subr.bf16.mxu0 %v1481
        %2008 = vmatpush1.bf16.msra.mxu0 %v1480
        %2009 = vmatprep.subr.bf16.mxu0 %v1477
        %2010 = vmatpush1.bf16.msra.mxu0 %v1476
        %2011 = vmatprep.subr.bf16.mxu0 %v1473
        %2012 = vmatpush1.bf16.msra.mxu0 %v1472
        %2013 = vmatprep.subr.bf16.mxu0 %v1469
        %2014 = vmatpush1.bf16.msra.mxu0 %v1468
        %2015 = vmatprep.subr.bf16.mxu0 %v1465
        %2016 = vmatpush1.bf16.msra.mxu0 %v1464
        %2017 = vmatprep.subr.bf16.mxu0 %v1461
        %2018 = vmatpush1.bf16.msra.mxu0 %v1460
        %2019 = vmatprep.subr.bf16.mxu0 0
        %2020 = vmatpush2.bf16.msra.mxu0 0
        %2021 = vmatprep.subr.bf16.mxu0 0
        %2022 = vmatpush2.bf16.msra.mxu0 0
        %2023 = vmatprep.subr.bf16.mxu0 0
        %2024 = vmatpush2.bf16.msra.mxu0 0
        %2025 = vmatprep.subr.bf16.mxu0 0
        %2026 = vmatpush2.bf16.msra.mxu0 0
        %2027 = vmatprep.subr.bf16.mxu0 0
        %2028 = vmatpush2.bf16.msra.mxu0 0
        %2029 = vmatprep.subr.bf16.mxu0 0
        %2030 = vmatpush2.bf16.msra.mxu0 0
        %2031 = vmatprep.subr.bf16.mxu0 0
        %2032 = vmatpush2.bf16.msra.mxu0 0
        %2033 = vmatprep.subr.bf16.mxu0 0
        %2034 = vmatpush2.bf16.msra.mxu0 0
        %2035 = vmatprep.mubr.bf16.mxu0 0
        %2036 = vmatmul.mubr.bf16.gmra.mxu0 %v1778
        %v2037 = vpop.f32.mrf.mxu0
        %v2038 = vadd.f32 %v1557, %v2037
        %v2039 = vpop.f32.mrf.mxu0
        %v2040 = vadd.f32 %v1557, %v2039
        %v2041 = vpop.f32.mrf.mxu0
        %v2042 = vadd.f32 %v1562, %v2041
        %v2043 = vpop.f32.mrf.mxu0
        %v2044 = vadd.f32 %v1562, %v2043
        %2045 = vmatprep.mubr.bf16.mxu0 0
        %2046 = vmatmul.mubr.bf16.gmra.mxu0 %v1779
        %v2047 = vpop.f32.mrf.mxu0
        %v2048 = vadd.f32 %v1567, %v2047
        %v2049 = vpop.f32.mrf.mxu0
        %v2050 = vadd.f32 %v1567, %v2049
        %v2051 = vpop.f32.mrf.mxu0
        %v2052 = vadd.f32 %v1572, %v2051
        %v2053 = vpop.f32.mrf.mxu0
        %v2054 = vadd.f32 %v1572, %v2053
        %2055 = vmatprep.mubr.bf16.mxu0 0
        %2056 = vmatmul.mubr.bf16.gmra.mxu0 %v1780
        %v2057 = vpop.f32.mrf.mxu0
        %v2058 = vadd.f32 %v1577, %v2057
        %v2059 = vpop.f32.mrf.mxu0
        %v2060 = vadd.f32 %v1577, %v2059
        %v2061 = vpop.f32.mrf.mxu0
        %v2062 = vadd.f32 %v1582, %v2061
        %v2063 = vpop.f32.mrf.mxu0
        %v2064 = vadd.f32 %v1582, %v2063
        %2065 = vmatprep.mubr.bf16.mxu0 0
        %2066 = vmatmul.mubr.bf16.gmra.mxu0 %v1781
        %v2067 = vpop.f32.mrf.mxu0
        %v2068 = vadd.f32 %v1587, %v2067
        %v2069 = vpop.f32.mrf.mxu0
        %v2070 = vadd.f32 %v1587, %v2069
        %v2071 = vpop.f32.mrf.mxu0
        %v2072 = vadd.f32 %v1592, %v2071
        %v2073 = vpop.f32.mrf.mxu0
        %v2074 = vadd.f32 %v1592, %v2073
        %2075 = vmatprep.mubr.bf16.mxu0 0
        %2076 = vmatmul.mubr.bf16.gmra.mxu0 %v1782
        %v2077 = vpop.f32.mrf.mxu0
        %v2078 = vadd.f32 %v1597, %v2077
        %v2079 = vpop.f32.mrf.mxu0
        %v2080 = vadd.f32 %v1597, %v2079
        %v2081 = vpop.f32.mrf.mxu0
        %v2082 = vadd.f32 %v1602, %v2081
        %v2083 = vpop.f32.mrf.mxu0
        %v2084 = vadd.f32 %v1602, %v2083
        %2085 = vmatprep.mubr.bf16.mxu0 0
        %2086 = vmatmul.mubr.bf16.gmra.mxu0 %v1783
        %v2087 = vpop.f32.mrf.mxu0
        %v2088 = vadd.f32 %v1607, %v2087
        %v2089 = vpop.f32.mrf.mxu0
        %v2090 = vadd.f32 %v1607, %v2089
        %v2091 = vpop.f32.mrf.mxu0
        %v2092 = vadd.f32 %v1612, %v2091
        %v2093 = vpop.f32.mrf.mxu0
        %v2094 = vadd.f32 %v1612, %v2093
        %2095 = vmatprep.mubr.bf16.mxu0 0
        %2096 = vmatmul.mubr.bf16.gmra.mxu0 %v1784
        %v2097 = vpop.f32.mrf.mxu0
        %v2098 = vadd.f32 %v1617, %v2097
        %v2099 = vpop.f32.mrf.mxu0
        %v2100 = vadd.f32 %v1617, %v2099
        %v2101 = vpop.f32.mrf.mxu0
        %v2102 = vadd.f32 %v1622, %v2101
        %v2103 = vpop.f32.mrf.mxu0
        %v2104 = vadd.f32 %v1622, %v2103
        %2105 = vmatprep.mubr.bf16.mxu0 0
        %2106 = vmatmul.mubr.bf16.gmra.mxu0 %v1785
        %v2107 = vpop.f32.mrf.mxu0
        %v2108 = vadd.f32 %v1627, %v2107
        %v2109 = vpop.f32.mrf.mxu0
        %v2110 = vadd.f32 %v1627, %v2109
        %v2111 = vpop.f32.mrf.mxu0
        %v2112 = vadd.f32 %v1632, %v2111
        %v2113 = vpop.f32.mrf.mxu0
        %v2114 = vadd.f32 %v1632, %v2113
        %2115 = vmatprep.mubr.bf16.mxu0 0
        %2116 = vmatmul.mubr.bf16.gmra.mxu0 %v1786
        %v2117 = vpop.f32.mrf.mxu0
        %v2118 = vadd.f32 %v1637, %v2117
        %v2119 = vpop.f32.mrf.mxu0
        %v2120 = vadd.f32 %v1637, %v2119
        %v2121 = vpop.f32.mrf.mxu0
        %v2122 = vadd.f32 %v1642, %v2121
        %v2123 = vpop.f32.mrf.mxu0
        %v2124 = vadd.f32 %v1642, %v2123
        %2125 = vmatprep.mubr.bf16.mxu0 0
        %2126 = vmatmul.mubr.bf16.gmra.mxu0 %v1787
        %v2127 = vpop.f32.mrf.mxu0
        %v2128 = vadd.f32 %v1647, %v2127
        %v2129 = vpop.f32.mrf.mxu0
        %v2130 = vadd.f32 %v1647, %v2129
        %v2131 = vpop.f32.mrf.mxu0
        %v2132 = vadd.f32 %v1652, %v2131
        %v2133 = vpop.f32.mrf.mxu0
        %v2134 = vadd.f32 %v1652, %v2133
        %2135 = vmatprep.mubr.bf16.mxu0 0
        %2136 = vmatmul.mubr.bf16.gmra.mxu0 %v1788
        %v2137 = vpop.f32.mrf.mxu0
        %v2138 = vadd.f32 %v1657, %v2137
        %v2139 = vpop.f32.mrf.mxu0
        %v2140 = vadd.f32 %v1657, %v2139
        %v2141 = vpop.f32.mrf.mxu0
        %v2142 = vadd.f32 %v1662, %v2141
        %v2143 = vpop.f32.mrf.mxu0
        %v2144 = vadd.f32 %v1662, %v2143
        %2145 = vmatprep.mubr.bf16.mxu0 0
        %2146 = vmatmul.mubr.bf16.gmra.mxu0 %v1789
        %v2147 = vpop.f32.mrf.mxu0
        %v2148 = vadd.f32 %v1667, %v2147
        %v2149 = vpop.f32.mrf.mxu0
        %v2150 = vadd.f32 %v1667, %v2149
        %v2151 = vpop.f32.mrf.mxu0
        %v2152 = vadd.f32 %v1672, %v2151
        %v2153 = vpop.f32.mrf.mxu0
        %v2154 = vadd.f32 %v1672, %v2153
        %2155 = vmatprep.mubr.bf16.mxu0 0
        %2156 = vmatmul.mubr.bf16.gmra.mxu0 %v1790
        %v2157 = vpop.f32.mrf.mxu0
        %v2158 = vadd.f32 %v1677, %v2157
        %v2159 = vpop.f32.mrf.mxu0
        %v2160 = vadd.f32 %v1677, %v2159
        %v2161 = vpop.f32.mrf.mxu0
        %v2162 = vadd.f32 %v1682, %v2161
        %v2163 = vpop.f32.mrf.mxu0
        %v2164 = vadd.f32 %v1682, %v2163
        %2165 = vmatprep.mubr.bf16.mxu0 0
        %2166 = vmatmul.mubr.bf16.gmra.mxu0 %v1791
        %v2167 = vpop.f32.mrf.mxu0
        %v2168 = vadd.f32 %v1687, %v2167
        %v2169 = vpop.f32.mrf.mxu0
        %v2170 = vadd.f32 %v1687, %v2169
        %v2171 = vpop.f32.mrf.mxu0
        %v2172 = vadd.f32 %v1692, %v2171
        %v2173 = vpop.f32.mrf.mxu0
        %v2174 = vadd.f32 %v1692, %v2173
        %2175 = vmatprep.mubr.bf16.mxu0 0
        %2176 = vmatmul.mubr.bf16.gmra.mxu0 %v1792
        %v2177 = vpop.f32.mrf.mxu0
        %v2178 = vadd.f32 %v1697, %v2177
        %v2179 = vpop.f32.mrf.mxu0
        %v2180 = vadd.f32 %v1697, %v2179
        %v2181 = vpop.f32.mrf.mxu0
        %v2182 = vadd.f32 %v1702, %v2181
        %v2183 = vpop.f32.mrf.mxu0
        %v2184 = vadd.f32 %v1702, %v2183
        %2185 = vmatprep.mubr.bf16.mxu0 0
        %2186 = vmatmul.mubr.bf16.gmra.mxu0 %v1793
        %v2187 = vpop.f32.mrf.mxu0
        %v2188 = vadd.f32 %v1707, %v2187
        %v2189 = vpop.f32.mrf.mxu0
        %v2190 = vadd.f32 %v1707, %v2189
        %v2191 = vpop.f32.mrf.mxu0
        %v2192 = vadd.f32 %v1712, %v2191
        %v2193 = vpop.f32.mrf.mxu0
        %v2194 = vadd.f32 %v1712, %v2193
        %2195 = vdwg.mxu0
        %v2196 = vmax.f32 %v1845, 0.0
        %v2197 = vmax.f32 %v1847, 0.0
        %v2198 = vmax.f32 %v2038, 0.0
        %v2199 = vmax.f32 %v2040, 0.0
        %v2200 = vmax.f32 %v1849, 0.0
        %v2201 = vmax.f32 %v1851, 0.0
        %v2202 = vmax.f32 %v2042, 0.0
        %v2203 = vmax.f32 %v2044, 0.0
        %v2204 = vmax.f32 %v1855, 0.0
        %v2205 = vmax.f32 %v1857, 0.0
        %v2206 = vmax.f32 %v2048, 0.0
        %v2207 = vmax.f32 %v2050, 0.0
        %v2208 = vmax.f32 %v1859, 0.0
        %v2209 = vmax.f32 %v1861, 0.0
        %v2210 = vmax.f32 %v2052, 0.0
        %v2211 = vmax.f32 %v2054, 0.0
        %v2212 = vmax.f32 %v1865, 0.0
        %v2213 = vmax.f32 %v1867, 0.0
        %v2214 = vmax.f32 %v2058, 0.0
        %v2215 = vmax.f32 %v2060, 0.0
        %v2216 = vmax.f32 %v1869, 0.0
        %v2217 = vmax.f32 %v1871, 0.0
        %v2218 = vmax.f32 %v2062, 0.0
        %v2219 = vmax.f32 %v2064, 0.0
        %v2220 = vmax.f32 %v1875, 0.0
        %v2221 = vmax.f32 %v1877, 0.0
        %v2222 = vmax.f32 %v2068, 0.0
        %v2223 = vmax.f32 %v2070, 0.0
        %v2224 = vmax.f32 %v1879, 0.0
        %v2225 = vmax.f32 %v1881, 0.0
        %v2226 = vmax.f32 %v2072, 0.0
        %v2227 = vmax.f32 %v2074, 0.0
        %v2228 = vmax.f32 %v1885, 0.0
        %v2229 = vmax.f32 %v1887, 0.0
        %v2230 = vmax.f32 %v2078, 0.0
        %v2231 = vmax.f32 %v2080, 0.0
        %v2232 = vmax.f32 %v1889, 0.0
        %v2233 = vmax.f32 %v1891, 0.0
        %v2234 = vmax.f32 %v2082, 0.0
        %v2235 = vmax.f32 %v2084, 0.0
        %v2236 = vmax.f32 %v1895, 0.0
        %v2237 = vmax.f32 %v1897, 0.0
        %v2238 = vmax.f32 %v2088, 0.0
        %v2239 = vmax.f32 %v2090, 0.0
        %v2240 = vmax.f32 %v1899, 0.0
        %v2241 = vmax.f32 %v1901, 0.0
        %v2242 = vmax.f32 %v2092, 0.0
        %v2243 = vmax.f32 %v2094, 0.0
        %v2244 = vmax.f32 %v1905, 0.0
        %v2245 = vmax.f32 %v1907, 0.0
        %v2246 = vmax.f32 %v2098, 0.0
        %v2247 = vmax.f32 %v2100, 0.0
        %v2248 = vmax.f32 %v1909, 0.0
        %v2249 = vmax.f32 %v1911, 0.0
        %v2250 = vmax.f32 %v2102, 0.0
        %v2251 = vmax.f32 %v2104, 0.0
        %v2252 = vmax.f32 %v1915, 0.0
        %v2253 = vmax.f32 %v1917, 0.0
        %v2254 = vmax.f32 %v2108, 0.0
        %v2255 = vmax.f32 %v2110, 0.0
        %v2256 = vmax.f32 %v1919, 0.0
        %v2257 = vmax.f32 %v1921, 0.0
        %v2258 = vmax.f32 %v2112, 0.0
        %v2259 = vmax.f32 %v2114, 0.0
        %v2260 = vmax.f32 %v1925, 0.0
        %v2261 = vmax.f32 %v1927, 0.0
        %v2262 = vmax.f32 %v2118, 0.0
        %v2263 = vmax.f32 %v2120, 0.0
        %v2264 = vmax.f32 %v1929, 0.0
        %v2265 = vmax.f32 %v1931, 0.0
        %v2266 = vmax.f32 %v2122, 0.0
        %v2267 = vmax.f32 %v2124, 0.0
        %v2268 = vmax.f32 %v1935, 0.0
        %v2269 = vmax.f32 %v1937, 0.0
        %v2270 = vmax.f32 %v2128, 0.0
        %v2271 = vmax.f32 %v2130, 0.0
        %v2272 = vmax.f32 %v1939, 0.0
        %v2273 = vmax.f32 %v1941, 0.0
        %v2274 = vmax.f32 %v2132, 0.0
        %v2275 = vmax.f32 %v2134, 0.0
        %v2276 = vmax.f32 %v1945, 0.0
        %v2277 = vmax.f32 %v1947, 0.0
        %v2278 = vmax.f32 %v2138, 0.0
        %v2279 = vmax.f32 %v2140, 0.0
        %v2280 = vmax.f32 %v1949, 0.0
        %v2281 = vmax.f32 %v1951, 0.0
        %v2282 = vmax.f32 %v2142, 0.0
        %v2283 = vmax.f32 %v2144, 0.0
        %v2284 = vmax.f32 %v1955, 0.0
        %v2285 = vmax.f32 %v1957, 0.0
        %v2286 = vmax.f32 %v2148, 0.0
        %v2287 = vmax.f32 %v2150, 0.0
        %v2288 = vmax.f32 %v1959, 0.0
        %v2289 = vmax.f32 %v1961, 0.0
        %v2290 = vmax.f32 %v2152, 0.0
        %v2291 = vmax.f32 %v2154, 0.0
        %v2292 = vmax.f32 %v1965, 0.0
        %v2293 = vmax.f32 %v1967, 0.0
        %v2294 = vmax.f32 %v2158, 0.0
        %v2295 = vmax.f32 %v2160, 0.0
        %v2296 = vmax.f32 %v1969, 0.0
        %v2297 = vmax.f32 %v1971, 0.0
        %v2298 = vmax.f32 %v2162, 0.0
        %v2299 = vmax.f32 %v2164, 0.0
        %v2300 = vmax.f32 %v1975, 0.0
        %v2301 = vmax.f32 %v1977, 0.0
        %v2302 = vmax.f32 %v2168, 0.0
        %v2303 = vmax.f32 %v2170, 0.0
        %v2304 = vmax.f32 %v1979, 0.0
        %v2305 = vmax.f32 %v1981, 0.0
        %v2306 = vmax.f32 %v2172, 0.0
        %v2307 = vmax.f32 %v2174, 0.0
        %v2308 = vmax.f32 %v1985, 0.0
        %v2309 = vmax.f32 %v1987, 0.0
        %v2310 = vmax.f32 %v2178, 0.0
        %v2311 = vmax.f32 %v2180, 0.0
        %v2312 = vmax.f32 %v1989, 0.0
        %v2313 = vmax.f32 %v1991, 0.0
        %v2314 = vmax.f32 %v2182, 0.0
        %v2315 = vmax.f32 %v2184, 0.0
        %v2316 = vmax.f32 %v1995, 0.0
        %v2317 = vmax.f32 %v1997, 0.0
        %v2318 = vmax.f32 %v2188, 0.0
        %v2319 = vmax.f32 %v2190, 0.0
        %v2320 = vmax.f32 %v1999, 0.0
        %v2321 = vmax.f32 %v2001, 0.0
        %v2322 = vmax.f32 %v2192, 0.0
        %v2323 = vmax.f32 %v2194, 0.0
        %v2324 = vpack.c.bf16 %v2200, %v2196
        %v2325 = vpack.c.bf16 %v2201, %v2197
        %v2326 = vpack.c.bf16 %v2202, %v2198
        %v2327 = vpack.c.bf16 %v2203, %v2199
        %v2328 = vpack.c.bf16 %v2208, %v2204
        %v2329 = vpack.c.bf16 %v2209, %v2205
        %v2330 = vpack.c.bf16 %v2210, %v2206
        %v2331 = vpack.c.bf16 %v2211, %v2207
        %v2332 = vpack.c.bf16 %v2216, %v2212
        %v2333 = vpack.c.bf16 %v2217, %v2213
        %v2334 = vpack.c.bf16 %v2218, %v2214
        %v2335 = vpack.c.bf16 %v2219, %v2215
        %v2336 = vpack.c.bf16 %v2224, %v2220
        %v2337 = vpack.c.bf16 %v2225, %v2221
        %v2338 = vpack.c.bf16 %v2226, %v2222
        %v2339 = vpack.c.bf16 %v2227, %v2223
        %v2340 = vpack.c.bf16 %v2232, %v2228
        %v2341 = vpack.c.bf16 %v2233, %v2229
        %v2342 = vpack.c.bf16 %v2234, %v2230
        %v2343 = vpack.c.bf16 %v2235, %v2231
        %v2344 = vpack.c.bf16 %v2240, %v2236
        %v2345 = vpack.c.bf16 %v2241, %v2237
        %v2346 = vpack.c.bf16 %v2242, %v2238
        %v2347 = vpack.c.bf16 %v2243, %v2239
        %v2348 = vpack.c.bf16 %v2248, %v2244
        %v2349 = vpack.c.bf16 %v2249, %v2245
        %v2350 = vpack.c.bf16 %v2250, %v2246
        %v2351 = vpack.c.bf16 %v2251, %v2247
        %v2352 = vpack.c.bf16 %v2256, %v2252
        %v2353 = vpack.c.bf16 %v2257, %v2253
        %v2354 = vpack.c.bf16 %v2258, %v2254
        %v2355 = vpack.c.bf16 %v2259, %v2255
        %v2356 = vpack.c.bf16 %v2264, %v2260
        %v2357 = vpack.c.bf16 %v2265, %v2261
        %v2358 = vpack.c.bf16 %v2266, %v2262
        %v2359 = vpack.c.bf16 %v2267, %v2263
        %v2360 = vpack.c.bf16 %v2272, %v2268
        %v2361 = vpack.c.bf16 %v2273, %v2269
        %v2362 = vpack.c.bf16 %v2274, %v2270
        %v2363 = vpack.c.bf16 %v2275, %v2271
        %v2364 = vpack.c.bf16 %v2280, %v2276
        %v2365 = vpack.c.bf16 %v2281, %v2277
        %v2366 = vpack.c.bf16 %v2282, %v2278
        %v2367 = vpack.c.bf16 %v2283, %v2279
        %v2368 = vpack.c.bf16 %v2288, %v2284
        %v2369 = vpack.c.bf16 %v2289, %v2285
        %v2370 = vpack.c.bf16 %v2290, %v2286
        %v2371 = vpack.c.bf16 %v2291, %v2287
        %v2372 = vpack.c.bf16 %v2296, %v2292
        %v2373 = vpack.c.bf16 %v2297, %v2293
        %v2374 = vpack.c.bf16 %v2298, %v2294
        %v2375 = vpack.c.bf16 %v2299, %v2295
        %v2376 = vpack.c.bf16 %v2304, %v2300
        %v2377 = vpack.c.bf16 %v2305, %v2301
        %v2378 = vpack.c.bf16 %v2306, %v2302
        %v2379 = vpack.c.bf16 %v2307, %v2303
        %v2380 = vpack.c.bf16 %v2312, %v2308
        %v2381 = vpack.c.bf16 %v2313, %v2309
        %v2382 = vpack.c.bf16 %v2314, %v2310
        %v2383 = vpack.c.bf16 %v2315, %v2311
        %v2384 = vpack.c.bf16 %v2320, %v2316
        %v2385 = vpack.c.bf16 %v2321, %v2317
        %v2386 = vpack.c.bf16 %v2322, %v2318
        %v2387 = vpack.c.bf16 %v2323, %v2319
        %v2388 = vld [vmem:[#allocation4] sm:$0xff]
        %v2389 = vld [vmem:[#allocation4 + $0x8] sm:$0xff]
        %v2390 = vld [vmem:[#allocation4 + $0x10] sm:$0xff]
        %v2391 = vld [vmem:[#allocation4 + $0x18] sm:$0xff]
        %v2392 = vld [vmem:[#allocation4 + $0x20] sm:$0xff]
        %v2393 = vld [vmem:[#allocation4 + $0x28] sm:$0xff]
        %v2394 = vld [vmem:[#allocation4 + $0x30] sm:$0xff]
        %v2395 = vld [vmem:[#allocation4 + $0x38] sm:$0xff]
        %v2396 = vld [vmem:[#allocation4 + $0x40] sm:$0xff]
        %v2397 = vld [vmem:[#allocation4 + $0x48] sm:$0xff]
        %v2398 = vld [vmem:[#allocation4 + $0x50] sm:$0xff]
        %v2399 = vld [vmem:[#allocation4 + $0x58] sm:$0xff]
        %v2400 = vld [vmem:[#allocation4 + $0x60] sm:$0xff]
        %v2401 = vld [vmem:[#allocation4 + $0x68] sm:$0xff]
        %v2402 = vld [vmem:[#allocation4 + $0x70] sm:$0xff]
        %v2403 = vld [vmem:[#allocation4 + $0x78] sm:$0xff]
        %v2404 = vld [vmem:[#allocation4 + $0x80] sm:$0xff]
        %v2405 = vld [vmem:[#allocation4 + $0x88] sm:$0xff]
        %v2406 = vld [vmem:[#allocation4 + $0x90] sm:$0xff]
        %v2407 = vld [vmem:[#allocation4 + $0x98] sm:$0xff]
        %v2408 = vld [vmem:[#allocation4 + $0xa0] sm:$0xff]
        %v2409 = vld [vmem:[#allocation4 + $0xa8] sm:$0xff]
        %v2410 = vld [vmem:[#allocation4 + $0xb0] sm:$0xff]
        %v2411 = vld [vmem:[#allocation4 + $0xb8] sm:$0xff]
        %v2412 = vld [vmem:[#allocation4 + $0xc0] sm:$0xff]
        %v2413 = vld [vmem:[#allocation4 + $0xc8] sm:$0xff]
        %v2414 = vld [vmem:[#allocation4 + $0xd0] sm:$0xff]
        %v2415 = vld [vmem:[#allocation4 + $0xd8] sm:$0xff]
        %v2416 = vld [vmem:[#allocation4 + $0xe0] sm:$0xff]
        %v2417 = vld [vmem:[#allocation4 + $0xe8] sm:$0xff]
        %v2418 = vld [vmem:[#allocation4 + $0xf0] sm:$0xff]
        %v2419 = vld [vmem:[#allocation4 + $0xf8] sm:$0xff]
        %v2420 = vld [vmem:[#allocation4 + $0x100] sm:$0xff]
        %v2421 = vld [vmem:[#allocation4 + $0x108] sm:$0xff]
        %v2422 = vld [vmem:[#allocation4 + $0x110] sm:$0xff]
        %v2423 = vld [vmem:[#allocation4 + $0x118] sm:$0xff]
        %v2424 = vld [vmem:[#allocation4 + $0x120] sm:$0xff]
        %v2425 = vld [vmem:[#allocation4 + $0x128] sm:$0xff]
        %v2426 = vld [vmem:[#allocation4 + $0x130] sm:$0xff]
        %v2427 = vld [vmem:[#allocation4 + $0x138] sm:$0xff]
        %v2428 = vld [vmem:[#allocation4 + $0x140] sm:$0xff]
        %v2429 = vld [vmem:[#allocation4 + $0x148] sm:$0xff]
        %v2430 = vld [vmem:[#allocation4 + $0x150] sm:$0xff]
        %v2431 = vld [vmem:[#allocation4 + $0x158] sm:$0xff]
        %v2432 = vld [vmem:[#allocation4 + $0x160] sm:$0xff]
        %v2433 = vld [vmem:[#allocation4 + $0x168] sm:$0xff]
        %v2434 = vld [vmem:[#allocation4 + $0x170] sm:$0xff]
        %v2435 = vld [vmem:[#allocation4 + $0x178] sm:$0xff]
        %v2436 = vld [vmem:[#allocation4 + $0x180] sm:$0xff]
        %v2437 = vld [vmem:[#allocation4 + $0x188] sm:$0xff]
        %v2438 = vld [vmem:[#allocation4 + $0x190] sm:$0xff]
        %v2439 = vld [vmem:[#allocation4 + $0x198] sm:$0xff]
        %v2440 = vld [vmem:[#allocation4 + $0x1a0] sm:$0xff]
        %v2441 = vld [vmem:[#allocation4 + $0x1a8] sm:$0xff]
        %v2442 = vld [vmem:[#allocation4 + $0x1b0] sm:$0xff]
        %v2443 = vld [vmem:[#allocation4 + $0x1b8] sm:$0xff]
        %v2444 = vld [vmem:[#allocation4 + $0x1c0] sm:$0xff]
        %v2445 = vld [vmem:[#allocation4 + $0x1c8] sm:$0xff]
        %v2446 = vld [vmem:[#allocation4 + $0x1d0] sm:$0xff]
        %v2447 = vld [vmem:[#allocation4 + $0x1d8] sm:$0xff]
        %v2448 = vld [vmem:[#allocation4 + $0x1e0] sm:$0xff]
        %v2449 = vld [vmem:[#allocation4 + $0x1e8] sm:$0xff]
        %v2450 = vld [vmem:[#allocation4 + $0x1f0] sm:$0xff]
        %v2451 = vld [vmem:[#allocation4 + $0x1f8] sm:$0xff]
        %v2452 = vld [vmem:[%s8] sm:$0xff]
        %v2453 = vld [vmem:[%s8 + $0x8] sm:$0xff]
        %v2454 = vld [vmem:[%s8 + $0x10] sm:$0xff]
        %v2455 = vld [vmem:[%s8 + $0x18] sm:$0xff]
        %v2456 = vld [vmem:[%s8 + $0x20] sm:$0xff]
        %v2457 = vld [vmem:[%s8 + $0x28] sm:$0xff]
        %v2458 = vld [vmem:[%s8 + $0x30] sm:$0xff]
        %v2459 = vld [vmem:[%s8 + $0x38] sm:$0xff]
        %v2460 = vld [vmem:[%s8 + $0x40] sm:$0xff]
        %v2461 = vld [vmem:[%s8 + $0x48] sm:$0xff]
        %v2462 = vld [vmem:[%s8 + $0x50] sm:$0xff]
        %v2463 = vld [vmem:[%s8 + $0x58] sm:$0xff]
        %v2464 = vld [vmem:[%s8 + $0x60] sm:$0xff]
        %v2465 = vld [vmem:[%s8 + $0x68] sm:$0xff]
        %v2466 = vld [vmem:[%s8 + $0x70] sm:$0xff]
        %v2467 = vld [vmem:[%s8 + $0x78] sm:$0xff]
        %v2468 = vld [vmem:[%s8 + $0x80] sm:$0xff]
        %v2469 = vld [vmem:[%s8 + $0x88] sm:$0xff]
        %v2470 = vld [vmem:[%s8 + $0x90] sm:$0xff]
        %v2471 = vld [vmem:[%s8 + $0x98] sm:$0xff]
        %v2472 = vld [vmem:[%s8 + $0xa0] sm:$0xff]
        %v2473 = vld [vmem:[%s8 + $0xa8] sm:$0xff]
        %v2474 = vld [vmem:[%s8 + $0xb0] sm:$0xff]
        %v2475 = vld [vmem:[%s8 + $0xb8] sm:$0xff]
        %v2476 = vld [vmem:[%s8 + $0xc0] sm:$0xff]
        %v2477 = vld [vmem:[%s8 + $0xc8] sm:$0xff]
        %v2478 = vld [vmem:[%s8 + $0xd0] sm:$0xff]
        %v2479 = vld [vmem:[%s8 + $0xd8] sm:$0xff]
        %v2480 = vld [vmem:[%s8 + $0xe0] sm:$0xff]
        %v2481 = vld [vmem:[%s8 + $0xe8] sm:$0xff]
        %v2482 = vld [vmem:[%s8 + $0xf0] sm:$0xff]
        %v2483 = vld [vmem:[%s8 + $0xf8] sm:$0xff]
        %v2484 = vld [vmem:[%s8 + $0x100] sm:$0xff]
        %v2485 = vld [vmem:[%s8 + $0x108] sm:$0xff]
        %v2486 = vld [vmem:[%s8 + $0x110] sm:$0xff]
        %v2487 = vld [vmem:[%s8 + $0x118] sm:$0xff]
        %v2488 = vld [vmem:[%s8 + $0x120] sm:$0xff]
        %v2489 = vld [vmem:[%s8 + $0x128] sm:$0xff]
        %v2490 = vld [vmem:[%s8 + $0x130] sm:$0xff]
        %v2491 = vld [vmem:[%s8 + $0x138] sm:$0xff]
        %v2492 = vld [vmem:[%s8 + $0x140] sm:$0xff]
        %v2493 = vld [vmem:[%s8 + $0x148] sm:$0xff]
        %v2494 = vld [vmem:[%s8 + $0x150] sm:$0xff]
        %v2495 = vld [vmem:[%s8 + $0x158] sm:$0xff]
        %v2496 = vld [vmem:[%s8 + $0x160] sm:$0xff]
        %v2497 = vld [vmem:[%s8 + $0x168] sm:$0xff]
        %v2498 = vld [vmem:[%s8 + $0x170] sm:$0xff]
        %v2499 = vld [vmem:[%s8 + $0x178] sm:$0xff]
        %v2500 = vld [vmem:[%s8 + $0x180] sm:$0xff]
        %v2501 = vld [vmem:[%s8 + $0x188] sm:$0xff]
        %v2502 = vld [vmem:[%s8 + $0x190] sm:$0xff]
        %v2503 = vld [vmem:[%s8 + $0x198] sm:$0xff]
        %v2504 = vld [vmem:[%s8 + $0x1a0] sm:$0xff]
        %v2505 = vld [vmem:[%s8 + $0x1a8] sm:$0xff]
        %v2506 = vld [vmem:[%s8 + $0x1b0] sm:$0xff]
        %v2507 = vld [vmem:[%s8 + $0x1b8] sm:$0xff]
        %v2508 = vld [vmem:[%s8 + $0x1c0] sm:$0xff]
        %v2509 = vld [vmem:[%s8 + $0x1c8] sm:$0xff]
        %v2510 = vld [vmem:[%s8 + $0x1d0] sm:$0xff]
        %v2511 = vld [vmem:[%s8 + $0x1d8] sm:$0xff]
        %v2512 = vld [vmem:[%s8 + $0x1e0] sm:$0xff]
        %v2513 = vld [vmem:[%s8 + $0x1e8] sm:$0xff]
        %v2514 = vld [vmem:[%s8 + $0x1f0] sm:$0xff]
        %v2515 = vld [vmem:[%s8 + $0x1f8] sm:$0xff]
        %2517 = vset.pattern.permute.xlu0 0
        %2518 = vperm.xlu0 %2517, %v2452
        %v2519 = vpop.permute.xlu0 %2518
        %2522 = vset.pattern.permute.xlu0 0
        %2523 = vperm.xlu0 %2522, %v2453
        %v2524 = vpop.permute.xlu0 %2523
        %2527 = vset.pattern.permute.xlu0 0
        %2528 = vperm.xlu0 %2527, %v2454
        %v2529 = vpop.permute.xlu0 %2528
        %2532 = vset.pattern.permute.xlu0 0
        %2533 = vperm.xlu0 %2532, %v2455
        %v2534 = vpop.permute.xlu0 %2533
        %2537 = vset.pattern.permute.xlu0 0
        %2538 = vperm.xlu0 %2537, %v2456
        %v2539 = vpop.permute.xlu0 %2538
        %2542 = vset.pattern.permute.xlu0 0
        %2543 = vperm.xlu0 %2542, %v2457
        %v2544 = vpop.permute.xlu0 %2543
        %2547 = vset.pattern.permute.xlu0 0
        %2548 = vperm.xlu0 %2547, %v2458
        %v2549 = vpop.permute.xlu0 %2548
        %2552 = vset.pattern.permute.xlu0 0
        %2553 = vperm.xlu0 %2552, %v2459
        %v2554 = vpop.permute.xlu0 %2553
        %2557 = vset.pattern.permute.xlu0 0
        %2558 = vperm.xlu0 %2557, %v2460
        %v2559 = vpop.permute.xlu0 %2558
        %2562 = vset.pattern.permute.xlu0 0
        %2563 = vperm.xlu0 %2562, %v2461
        %v2564 = vpop.permute.xlu0 %2563
        %2567 = vset.pattern.permute.xlu0 0
        %2568 = vperm.xlu0 %2567, %v2462
        %v2569 = vpop.permute.xlu0 %2568
        %2572 = vset.pattern.permute.xlu0 0
        %2573 = vperm.xlu0 %2572, %v2463
        %v2574 = vpop.permute.xlu0 %2573
        %2577 = vset.pattern.permute.xlu0 0
        %2578 = vperm.xlu0 %2577, %v2464
        %v2579 = vpop.permute.xlu0 %2578
        %2582 = vset.pattern.permute.xlu0 0
        %2583 = vperm.xlu0 %2582, %v2465
        %v2584 = vpop.permute.xlu0 %2583
        %2587 = vset.pattern.permute.xlu0 0
        %2588 = vperm.xlu0 %2587, %v2466
        %v2589 = vpop.permute.xlu0 %2588
        %2592 = vset.pattern.permute.xlu0 0
        %2593 = vperm.xlu0 %2592, %v2467
        %v2594 = vpop.permute.xlu0 %2593
        %2597 = vset.pattern.permute.xlu0 0
        %2598 = vperm.xlu0 %2597, %v2468
        %v2599 = vpop.permute.xlu0 %2598
        %2602 = vset.pattern.permute.xlu0 0
        %2603 = vperm.xlu0 %2602, %v2469
        %v2604 = vpop.permute.xlu0 %2603
        %2607 = vset.pattern.permute.xlu0 0
        %2608 = vperm.xlu0 %2607, %v2470
        %v2609 = vpop.permute.xlu0 %2608
        %2612 = vset.pattern.permute.xlu0 0
        %2613 = vperm.xlu0 %2612, %v2471
        %v2614 = vpop.permute.xlu0 %2613
        %2617 = vset.pattern.permute.xlu0 0
        %2618 = vperm.xlu0 %2617, %v2472
        %v2619 = vpop.permute.xlu0 %2618
        %2622 = vset.pattern.permute.xlu0 0
        %2623 = vperm.xlu0 %2622, %v2473
        %v2624 = vpop.permute.xlu0 %2623
        %2627 = vset.pattern.permute.xlu0 0
        %2628 = vperm.xlu0 %2627, %v2474
        %v2629 = vpop.permute.xlu0 %2628
        %2632 = vset.pattern.permute.xlu0 0
        %2633 = vperm.xlu0 %2632, %v2475
        %v2634 = vpop.permute.xlu0 %2633
        %2637 = vset.pattern.permute.xlu0 0
        %2638 = vperm.xlu0 %2637, %v2476
        %v2639 = vpop.permute.xlu0 %2638
        %2642 = vset.pattern.permute.xlu0 0
        %2643 = vperm.xlu0 %2642, %v2477
        %v2644 = vpop.permute.xlu0 %2643
        %2647 = vset.pattern.permute.xlu0 0
        %2648 = vperm.xlu0 %2647, %v2478
        %v2649 = vpop.permute.xlu0 %2648
        %2652 = vset.pattern.permute.xlu0 0
        %2653 = vperm.xlu0 %2652, %v2479
        %v2654 = vpop.permute.xlu0 %2653
        %2657 = vset.pattern.permute.xlu0 0
        %2658 = vperm.xlu0 %2657, %v2480
        %v2659 = vpop.permute.xlu0 %2658
        %2662 = vset.pattern.permute.xlu0 0
        %2663 = vperm.xlu0 %2662, %v2481
        %v2664 = vpop.permute.xlu0 %2663
        %2667 = vset.pattern.permute.xlu0 0
        %2668 = vperm.xlu0 %2667, %v2482
        %v2669 = vpop.permute.xlu0 %2668
        %2672 = vset.pattern.permute.xlu0 0
        %2673 = vperm.xlu0 %2672, %v2483
        %v2674 = vpop.permute.xlu0 %2673
        %2677 = vset.pattern.permute.xlu0 0
        %2678 = vperm.xlu0 %2677, %v2484
        %v2679 = vpop.permute.xlu0 %2678
        %2682 = vset.pattern.permute.xlu0 0
        %2683 = vperm.xlu0 %2682, %v2485
        %v2684 = vpop.permute.xlu0 %2683
        %2687 = vset.pattern.permute.xlu0 0
        %2688 = vperm.xlu0 %2687, %v2486
        %v2689 = vpop.permute.xlu0 %2688
        %2692 = vset.pattern.permute.xlu0 0
        %2693 = vperm.xlu0 %2692, %v2487
        %v2694 = vpop.permute.xlu0 %2693
        %2697 = vset.pattern.permute.xlu0 0
        %2698 = vperm.xlu0 %2697, %v2488
        %v2699 = vpop.permute.xlu0 %2698
        %2702 = vset.pattern.permute.xlu0 0
        %2703 = vperm.xlu0 %2702, %v2489
        %v2704 = vpop.permute.xlu0 %2703
        %2707 = vset.pattern.permute.xlu0 0
        %2708 = vperm.xlu0 %2707, %v2490
        %v2709 = vpop.permute.xlu0 %2708
        %2712 = vset.pattern.permute.xlu0 0
        %2713 = vperm.xlu0 %2712, %v2491
        %v2714 = vpop.permute.xlu0 %2713
        %2717 = vset.pattern.permute.xlu0 0
        %2718 = vperm.xlu0 %2717, %v2492
        %v2719 = vpop.permute.xlu0 %2718
        %2722 = vset.pattern.permute.xlu0 0
        %2723 = vperm.xlu0 %2722, %v2493
        %v2724 = vpop.permute.xlu0 %2723
        %2727 = vset.pattern.permute.xlu0 0
        %2728 = vperm.xlu0 %2727, %v2494
        %v2729 = vpop.permute.xlu0 %2728
        %2732 = vset.pattern.permute.xlu0 0
        %2733 = vperm.xlu0 %2732, %v2495
        %v2734 = vpop.permute.xlu0 %2733
        %2737 = vset.pattern.permute.xlu0 0
        %2738 = vperm.xlu0 %2737, %v2496
        %v2739 = vpop.permute.xlu0 %2738
        %2742 = vset.pattern.permute.xlu0 0
        %2743 = vperm.xlu0 %2742, %v2497
        %v2744 = vpop.permute.xlu0 %2743
        %2747 = vset.pattern.permute.xlu0 0
        %2748 = vperm.xlu0 %2747, %v2498
        %v2749 = vpop.permute.xlu0 %2748
        %2752 = vset.pattern.permute.xlu0 0
        %2753 = vperm.xlu0 %2752, %v2499
        %v2754 = vpop.permute.xlu0 %2753
        %2757 = vset.pattern.permute.xlu0 0
        %2758 = vperm.xlu0 %2757, %v2500
        %v2759 = vpop.permute.xlu0 %2758
        %2762 = vset.pattern.permute.xlu0 0
        %2763 = vperm.xlu0 %2762, %v2501
        %v2764 = vpop.permute.xlu0 %2763
        %2767 = vset.pattern.permute.xlu0 0
        %2768 = vperm.xlu0 %2767, %v2502
        %v2769 = vpop.permute.xlu0 %2768
        %2772 = vset.pattern.permute.xlu0 0
        %2773 = vperm.xlu0 %2772, %v2503
        %v2774 = vpop.permute.xlu0 %2773
        %2777 = vset.pattern.permute.xlu0 0
        %2778 = vperm.xlu0 %2777, %v2504
        %v2779 = vpop.permute.xlu0 %2778
        %2782 = vset.pattern.permute.xlu0 0
        %2783 = vperm.xlu0 %2782, %v2505
        %v2784 = vpop.permute.xlu0 %2783
        %2787 = vset.pattern.permute.xlu0 0
        %2788 = vperm.xlu0 %2787, %v2506
        %v2789 = vpop.permute.xlu0 %2788
        %2792 = vset.pattern.permute.xlu0 0
        %2793 = vperm.xlu0 %2792, %v2507
        %v2794 = vpop.permute.xlu0 %2793
        %2797 = vset.pattern.permute.xlu0 0
        %2798 = vperm.xlu0 %2797, %v2508
        %v2799 = vpop.permute.xlu0 %2798
        %2802 = vset.pattern.permute.xlu0 0
        %2803 = vperm.xlu0 %2802, %v2509
        %v2804 = vpop.permute.xlu0 %2803
        %2807 = vset.pattern.permute.xlu0 0
        %2808 = vperm.xlu0 %2807, %v2510
        %v2809 = vpop.permute.xlu0 %2808
        %2812 = vset.pattern.permute.xlu0 0
        %2813 = vperm.xlu0 %2812, %v2511
        %v2814 = vpop.permute.xlu0 %2813
        %2817 = vset.pattern.permute.xlu0 0
        %2818 = vperm.xlu0 %2817, %v2512
        %v2819 = vpop.permute.xlu0 %2818
        %2822 = vset.pattern.permute.xlu0 0
        %2823 = vperm.xlu0 %2822, %v2513
        %v2824 = vpop.permute.xlu0 %2823
        %2827 = vset.pattern.permute.xlu0 0
        %2828 = vperm.xlu0 %2827, %v2514
        %v2829 = vpop.permute.xlu0 %2828
        %2832 = vset.pattern.permute.xlu0 0
        %2833 = vperm.xlu0 %2832, %v2515
        %v2834 = vpop.permute.xlu0 %2833
        %v2900 = vunpack.c.l.b16 %v2388
        %v2901 = vunpack.c.h.b16 %v2388
        %v2902 = vunpack.c.l.b16 %v2389
        %v2903 = vunpack.c.h.b16 %v2389
        %v2904 = vunpack.c.l.b16 %v2390
        %v2905 = vunpack.c.h.b16 %v2390
        %v2906 = vunpack.c.l.b16 %v2391
        %v2907 = vunpack.c.h.b16 %v2391
        %v2908 = vunpack.c.l.b16 %v2392
        %v2909 = vunpack.c.h.b16 %v2392
        %v2910 = vunpack.c.l.b16 %v2393
        %v2911 = vunpack.c.h.b16 %v2393
        %v2912 = vunpack.c.l.b16 %v2394
        %v2913 = vunpack.c.h.b16 %v2394
        %v2914 = vunpack.c.l.b16 %v2395
        %v2915 = vunpack.c.h.b16 %v2395
        %v2916 = vunpack.c.l.b16 %v2396
        %v2917 = vunpack.c.h.b16 %v2396
        %v2918 = vunpack.c.l.b16 %v2397
        %v2919 = vunpack.c.h.b16 %v2397
        %v2920 = vunpack.c.l.b16 %v2398
        %v2921 = vunpack.c.h.b16 %v2398
        %v2922 = vunpack.c.l.b16 %v2399
        %v2923 = vunpack.c.h.b16 %v2399
        %v2924 = vunpack.c.l.b16 %v2400
        %v2925 = vunpack.c.h.b16 %v2400
        %v2926 = vunpack.c.l.b16 %v2401
        %v2927 = vunpack.c.h.b16 %v2401
        %v2928 = vunpack.c.l.b16 %v2402
        %v2929 = vunpack.c.h.b16 %v2402
        %v2930 = vunpack.c.l.b16 %v2403
        %v2931 = vunpack.c.h.b16 %v2403
        %v2932 = vunpack.c.l.b16 %v2404
        %v2933 = vunpack.c.h.b16 %v2404
        %v2934 = vunpack.c.l.b16 %v2405
        %v2935 = vunpack.c.h.b16 %v2405
        %v2936 = vunpack.c.l.b16 %v2406
        %v2937 = vunpack.c.h.b16 %v2406
        %v2938 = vunpack.c.l.b16 %v2407
        %v2939 = vunpack.c.h.b16 %v2407
        %v2940 = vunpack.c.l.b16 %v2408
        %v2941 = vunpack.c.h.b16 %v2408
        %v2942 = vunpack.c.l.b16 %v2409
        %v2943 = vunpack.c.h.b16 %v2409
        %v2944 = vunpack.c.l.b16 %v2410
        %v2945 = vunpack.c.h.b16 %v2410
        %v2946 = vunpack.c.l.b16 %v2411
        %v2947 = vunpack.c.h.b16 %v2411
        %v2948 = vunpack.c.l.b16 %v2412
        %v2949 = vunpack.c.h.b16 %v2412
        %v2950 = vunpack.c.l.b16 %v2413
        %v2951 = vunpack.c.h.b16 %v2413
        %v2952 = vunpack.c.l.b16 %v2414
        %v2953 = vunpack.c.h.b16 %v2414
        %v2954 = vunpack.c.l.b16 %v2415
        %v2955 = vunpack.c.h.b16 %v2415
        %v2956 = vunpack.c.l.b16 %v2416
        %v2957 = vunpack.c.h.b16 %v2416
        %v2958 = vunpack.c.l.b16 %v2417
        %v2959 = vunpack.c.h.b16 %v2417
        %v2960 = vunpack.c.l.b16 %v2418
        %v2961 = vunpack.c.h.b16 %v2418
        %v2962 = vunpack.c.l.b16 %v2419
        %v2963 = vunpack.c.h.b16 %v2419
        %v2964 = vunpack.c.l.b16 %v2420
        %v2965 = vunpack.c.h.b16 %v2420
        %v2966 = vunpack.c.l.b16 %v2421
        %v2967 = vunpack.c.h.b16 %v2421
        %v2968 = vunpack.c.l.b16 %v2422
        %v2969 = vunpack.c.h.b16 %v2422
        %v2970 = vunpack.c.l.b16 %v2423
        %v2971 = vunpack.c.h.b16 %v2423
        %v2972 = vunpack.c.l.b16 %v2424
        %v2973 = vunpack.c.h.b16 %v2424
        %v2974 = vunpack.c.l.b16 %v2425
        %v2975 = vunpack.c.h.b16 %v2425
        %v2976 = vunpack.c.l.b16 %v2426
        %v2977 = vunpack.c.h.b16 %v2426
        %v2978 = vunpack.c.l.b16 %v2427
        %v2979 = vunpack.c.h.b16 %v2427
        %v2980 = vunpack.c.l.b16 %v2428
        %v2981 = vunpack.c.h.b16 %v2428
        %v2982 = vunpack.c.l.b16 %v2429
        %v2983 = vunpack.c.h.b16 %v2429
        %v2984 = vunpack.c.l.b16 %v2430
        %v2985 = vunpack.c.h.b16 %v2430
        %v2986 = vunpack.c.l.b16 %v2431
        %v2987 = vunpack.c.h.b16 %v2431
        %v2988 = vunpack.c.l.b16 %v2432
        %v2989 = vunpack.c.h.b16 %v2432
        %v2990 = vunpack.c.l.b16 %v2433
        %v2991 = vunpack.c.h.b16 %v2433
        %v2992 = vunpack.c.l.b16 %v2434
        %v2993 = vunpack.c.h.b16 %v2434
        %v2994 = vunpack.c.l.b16 %v2435
        %v2995 = vunpack.c.h.b16 %v2435
        %v2996 = vunpack.c.l.b16 %v2436
        %v2997 = vunpack.c.h.b16 %v2436
        %v2998 = vunpack.c.l.b16 %v2437
        %v2999 = vunpack.c.h.b16 %v2437
        %v3000 = vunpack.c.l.b16 %v2438
        %v3001 = vunpack.c.h.b16 %v2438
        %v3002 = vunpack.c.l.b16 %v2439
        %v3003 = vunpack.c.h.b16 %v2439
        %v3004 = vunpack.c.l.b16 %v2440
        %v3005 = vunpack.c.h.b16 %v2440
        %v3006 = vunpack.c.l.b16 %v2441
        %v3007 = vunpack.c.h.b16 %v2441
        %v3008 = vunpack.c.l.b16 %v2442
        %v3009 = vunpack.c.h.b16 %v2442
        %v3010 = vunpack.c.l.b16 %v2443
        %v3011 = vunpack.c.h.b16 %v2443
        %v3012 = vunpack.c.l.b16 %v2444
        %v3013 = vunpack.c.h.b16 %v2444
        %v3014 = vunpack.c.l.b16 %v2445
        %v3015 = vunpack.c.h.b16 %v2445
        %v3016 = vunpack.c.l.b16 %v2446
        %v3017 = vunpack.c.h.b16 %v2446
        %v3018 = vunpack.c.l.b16 %v2447
        %v3019 = vunpack.c.h.b16 %v2447
        %v3020 = vunpack.c.l.b16 %v2448
        %v3021 = vunpack.c.h.b16 %v2448
        %v3022 = vunpack.c.l.b16 %v2449
        %v3023 = vunpack.c.h.b16 %v2449
        %v3024 = vunpack.c.l.b16 %v2450
        %v3025 = vunpack.c.h.b16 %v2450
        %v3026 = vunpack.c.l.b16 %v2451
        %v3027 = vunpack.c.h.b16 %v2451
        %v3028 = vpack.c.b16 %v2902, %v2900
        %v3029 = vpack.c.b16 %v2903, %v2901
        %v3030 = vpack.c.b16 %v2906, %v2904
        %v3031 = vpack.c.b16 %v2907, %v2905
        %v3032 = vpack.c.b16 %v2910, %v2908
        %v3033 = vpack.c.b16 %v2911, %v2909
        %v3034 = vpack.c.b16 %v2914, %v2912
        %v3035 = vpack.c.b16 %v2915, %v2913
        %v3036 = vpack.c.b16 %v2918, %v2916
        %v3037 = vpack.c.b16 %v2919, %v2917
        %v3038 = vpack.c.b16 %v2922, %v2920
        %v3039 = vpack.c.b16 %v2923, %v2921
        %v3040 = vpack.c.b16 %v2926, %v2924
        %v3041 = vpack.c.b16 %v2927, %v2925
        %v3042 = vpack.c.b16 %v2930, %v2928
        %v3043 = vpack.c.b16 %v2931, %v2929
        %v3044 = vpack.c.b16 %v2934, %v2932
        %v3045 = vpack.c.b16 %v2935, %v2933
        %v3046 = vpack.c.b16 %v2938, %v2936
        %v3047 = vpack.c.b16 %v2939, %v2937
        %v3048 = vpack.c.b16 %v2942, %v2940
        %v3049 = vpack.c.b16 %v2943, %v2941
        %v3050 = vpack.c.b16 %v2946, %v2944
        %v3051 = vpack.c.b16 %v2947, %v2945
        %v3052 = vpack.c.b16 %v2950, %v2948
        %v3053 = vpack.c.b16 %v2951, %v2949
        %v3054 = vpack.c.b16 %v2954, %v2952
        %v3055 = vpack.c.b16 %v2955, %v2953
        %v3056 = vpack.c.b16 %v2958, %v2956
        %v3057 = vpack.c.b16 %v2959, %v2957
        %v3058 = vpack.c.b16 %v2962, %v2960
        %v3059 = vpack.c.b16 %v2963, %v2961
        %v3060 = vpack.c.b16 %v2966, %v2964
        %v3061 = vpack.c.b16 %v2967, %v2965
        %v3062 = vpack.c.b16 %v2970, %v2968
        %v3063 = vpack.c.b16 %v2971, %v2969
        %v3064 = vpack.c.b16 %v2974, %v2972
        %v3065 = vpack.c.b16 %v2975, %v2973
        %v3066 = vpack.c.b16 %v2978, %v2976
        %v3067 = vpack.c.b16 %v2979, %v2977
        %v3068 = vpack.c.b16 %v2982, %v2980
        %v3069 = vpack.c.b16 %v2983, %v2981
        %v3070 = vpack.c.b16 %v2986, %v2984
        %v3071 = vpack.c.b16 %v2987, %v2985
        %v3072 = vpack.c.b16 %v2990, %v2988
        %v3073 = vpack.c.b16 %v2991, %v2989
        %v3074 = vpack.c.b16 %v2994, %v2992
        %v3075 = vpack.c.b16 %v2995, %v2993
        %v3076 = vpack.c.b16 %v2998, %v2996
        %v3077 = vpack.c.b16 %v2999, %v2997
        %v3078 = vpack.c.b16 %v3002, %v3000
        %v3079 = vpack.c.b16 %v3003, %v3001
        %v3080 = vpack.c.b16 %v3006, %v3004
        %v3081 = vpack.c.b16 %v3007, %v3005
        %v3082 = vpack.c.b16 %v3010, %v3008
        %v3083 = vpack.c.b16 %v3011, %v3009
        %v3084 = vpack.c.b16 %v3014, %v3012
        %v3085 = vpack.c.b16 %v3015, %v3013
        %v3086 = vpack.c.b16 %v3018, %v3016
        %v3087 = vpack.c.b16 %v3019, %v3017
        %v3088 = vpack.c.b16 %v3022, %v3020
        %v3089 = vpack.c.b16 %v3023, %v3021
        %v3090 = vpack.c.b16 %v3026, %v3024
        %v3091 = vpack.c.b16 %v3027, %v3025
        %3156 = vmatprep.subr.bf16.mxu0 %v2353
        %3157 = vmatpush1.bf16.msra.mxu0 %v2352
        %3158 = vmatprep.subr.bf16.mxu0 %v2349
        %3159 = vmatpush1.bf16.msra.mxu0 %v2348
        %3160 = vmatprep.subr.bf16.mxu0 %v2345
        %3161 = vmatpush1.bf16.msra.mxu0 %v2344
        %3162 = vmatprep.subr.bf16.mxu0 %v2341
        %3163 = vmatpush1.bf16.msra.mxu0 %v2340
        %3164 = vmatprep.subr.bf16.mxu0 %v2337
        %3165 = vmatpush1.bf16.msra.mxu0 %v2336
        %3166 = vmatprep.subr.bf16.mxu0 %v2333
        %3167 = vmatpush1.bf16.msra.mxu0 %v2332
        %3168 = vmatprep.subr.bf16.mxu0 %v2329
        %3169 = vmatpush1.bf16.msra.mxu0 %v2328
        %3170 = vmatprep.subr.bf16.mxu0 %v2325
        %3171 = vmatpush1.bf16.msra.mxu0 %v2324
        %3172 = vmatprep.subr.bf16.mxu0 %v2385
        %3173 = vmatpush2.bf16.msra.mxu0 %v2384
        %3174 = vmatprep.subr.bf16.mxu0 %v2381
        %3175 = vmatpush2.bf16.msra.mxu0 %v2380
        %3176 = vmatprep.subr.bf16.mxu0 %v2377
        %3177 = vmatpush2.bf16.msra.mxu0 %v2376
        %3178 = vmatprep.subr.bf16.mxu0 %v2373
        %3179 = vmatpush2.bf16.msra.mxu0 %v2372
        %3180 = vmatprep.subr.bf16.mxu0 %v2369
        %3181 = vmatpush2.bf16.msra.mxu0 %v2368
        %3182 = vmatprep.subr.bf16.mxu0 %v2365
        %3183 = vmatpush2.bf16.msra.mxu0 %v2364
        %3184 = vmatprep.subr.bf16.mxu0 %v2361
        %3185 = vmatpush2.bf16.msra.mxu0 %v2360
        %3186 = vmatprep.subr.bf16.mxu0 %v2357
        %3187 = vmatpush2.bf16.msra.mxu0 %v2356
        %3188 = vmatprep.mubr.bf16.mxu0 %v3029
        %3189 = vmatmul.mubr.bf16.gmra.mxu0 %v3028
        %v3190 = vpop.f32.mrf.mxu0
        %v3191 = vadd.f32 %v2519, %v3190
        %v3192 = vpop.f32.mrf.mxu0
        %v3193 = vadd.f32 %v2519, %v3192
        %v3194 = vpop.f32.mrf.mxu0
        %v3195 = vadd.f32 %v2524, %v3194
        %v3196 = vpop.f32.mrf.mxu0
        %v3197 = vadd.f32 %v2524, %v3196
        %3198 = vmatprep.mubr.bf16.mxu0 %v3031
        %3199 = vmatmul.mubr.bf16.gmra.mxu0 %v3030
        %v3200 = vpop.f32.mrf.mxu0
        %v3201 = vadd.f32 %v2529, %v3200
        %v3202 = vpop.f32.mrf.mxu0
        %v3203 = vadd.f32 %v2529, %v3202
        %v3204 = vpop.f32.mrf.mxu0
        %v3205 = vadd.f32 %v2534, %v3204
        %v3206 = vpop.f32.mrf.mxu0
        %v3207 = vadd.f32 %v2534, %v3206
        %3208 = vmatprep.mubr.bf16.mxu0 %v3033
        %3209 = vmatmul.mubr.bf16.gmra.mxu0 %v3032
        %v3210 = vpop.f32.mrf.mxu0
        %v3211 = vadd.f32 %v2539, %v3210
        %v3212 = vpop.f32.mrf.mxu0
        %v3213 = vadd.f32 %v2539, %v3212
        %v3214 = vpop.f32.mrf.mxu0
        %v3215 = vadd.f32 %v2544, %v3214
        %v3216 = vpop.f32.mrf.mxu0
        %v3217 = vadd.f32 %v2544, %v3216
        %3218 = vmatprep.mubr.bf16.mxu0 %v3035
        %3219 = vmatmul.mubr.bf16.gmra.mxu0 %v3034
        %v3220 = vpop.f32.mrf.mxu0
        %v3221 = vadd.f32 %v2549, %v3220
        %v3222 = vpop.f32.mrf.mxu0
        %v3223 = vadd.f32 %v2549, %v3222
        %v3224 = vpop.f32.mrf.mxu0
        %v3225 = vadd.f32 %v2554, %v3224
        %v3226 = vpop.f32.mrf.mxu0
        %v3227 = vadd.f32 %v2554, %v3226
        %3228 = vmatprep.mubr.bf16.mxu0 %v3037
        %3229 = vmatmul.mubr.bf16.gmra.mxu0 %v3036
        %v3230 = vpop.f32.mrf.mxu0
        %v3231 = vadd.f32 %v2559, %v3230
        %v3232 = vpop.f32.mrf.mxu0
        %v3233 = vadd.f32 %v2559, %v3232
        %v3234 = vpop.f32.mrf.mxu0
        %v3235 = vadd.f32 %v2564, %v3234
        %v3236 = vpop.f32.mrf.mxu0
        %v3237 = vadd.f32 %v2564, %v3236
        %3238 = vmatprep.mubr.bf16.mxu0 %v3039
        %3239 = vmatmul.mubr.bf16.gmra.mxu0 %v3038
        %v3240 = vpop.f32.mrf.mxu0
        %v3241 = vadd.f32 %v2569, %v3240
        %v3242 = vpop.f32.mrf.mxu0
        %v3243 = vadd.f32 %v2569, %v3242
        %v3244 = vpop.f32.mrf.mxu0
        %v3245 = vadd.f32 %v2574, %v3244
        %v3246 = vpop.f32.mrf.mxu0
        %v3247 = vadd.f32 %v2574, %v3246
        %3248 = vmatprep.mubr.bf16.mxu0 %v3041
        %3249 = vmatmul.mubr.bf16.gmra.mxu0 %v3040
        %v3250 = vpop.f32.mrf.mxu0
        %v3251 = vadd.f32 %v2579, %v3250
        %v3252 = vpop.f32.mrf.mxu0
        %v3253 = vadd.f32 %v2579, %v3252
        %v3254 = vpop.f32.mrf.mxu0
        %v3255 = vadd.f32 %v2584, %v3254
        %v3256 = vpop.f32.mrf.mxu0
        %v3257 = vadd.f32 %v2584, %v3256
        %3258 = vmatprep.mubr.bf16.mxu0 %v3043
        %3259 = vmatmul.mubr.bf16.gmra.mxu0 %v3042
        %v3260 = vpop.f32.mrf.mxu0
        %v3261 = vadd.f32 %v2589, %v3260
        %v3262 = vpop.f32.mrf.mxu0
        %v3263 = vadd.f32 %v2589, %v3262
        %v3264 = vpop.f32.mrf.mxu0
        %v3265 = vadd.f32 %v2594, %v3264
        %v3266 = vpop.f32.mrf.mxu0
        %v3267 = vadd.f32 %v2594, %v3266
        %3268 = vmatprep.mubr.bf16.mxu0 %v3045
        %3269 = vmatmul.mubr.bf16.gmra.mxu0 %v3044
        %v3270 = vpop.f32.mrf.mxu0
        %v3271 = vadd.f32 %v2599, %v3270
        %v3272 = vpop.f32.mrf.mxu0
        %v3273 = vadd.f32 %v2599, %v3272
        %v3274 = vpop.f32.mrf.mxu0
        %v3275 = vadd.f32 %v2604, %v3274
        %v3276 = vpop.f32.mrf.mxu0
        %v3277 = vadd.f32 %v2604, %v3276
        %3278 = vmatprep.mubr.bf16.mxu0 %v3047
        %3279 = vmatmul.mubr.bf16.gmra.mxu0 %v3046
        %v3280 = vpop.f32.mrf.mxu0
        %v3281 = vadd.f32 %v2609, %v3280
        %v3282 = vpop.f32.mrf.mxu0
        %v3283 = vadd.f32 %v2609, %v3282
        %v3284 = vpop.f32.mrf.mxu0
        %v3285 = vadd.f32 %v2614, %v3284
        %v3286 = vpop.f32.mrf.mxu0
        %v3287 = vadd.f32 %v2614, %v3286
        %3288 = vmatprep.mubr.bf16.mxu0 %v3049
        %3289 = vmatmul.mubr.bf16.gmra.mxu0 %v3048
        %v3290 = vpop.f32.mrf.mxu0
        %v3291 = vadd.f32 %v2619, %v3290
        %v3292 = vpop.f32.mrf.mxu0
        %v3293 = vadd.f32 %v2619, %v3292
        %v3294 = vpop.f32.mrf.mxu0
        %v3295 = vadd.f32 %v2624, %v3294
        %v3296 = vpop.f32.mrf.mxu0
        %v3297 = vadd.f32 %v2624, %v3296
        %3298 = vmatprep.mubr.bf16.mxu0 %v3051
        %3299 = vmatmul.mubr.bf16.gmra.mxu0 %v3050
        %v3300 = vpop.f32.mrf.mxu0
        %v3301 = vadd.f32 %v2629, %v3300
        %v3302 = vpop.f32.mrf.mxu0
        %v3303 = vadd.f32 %v2629, %v3302
        %v3304 = vpop.f32.mrf.mxu0
        %v3305 = vadd.f32 %v2634, %v3304
        %v3306 = vpop.f32.mrf.mxu0
        %v3307 = vadd.f32 %v2634, %v3306
        %3308 = vmatprep.mubr.bf16.mxu0 %v3053
        %3309 = vmatmul.mubr.bf16.gmra.mxu0 %v3052
        %v3310 = vpop.f32.mrf.mxu0
        %v3311 = vadd.f32 %v2639, %v3310
        %v3312 = vpop.f32.mrf.mxu0
        %v3313 = vadd.f32 %v2639, %v3312
        %v3314 = vpop.f32.mrf.mxu0
        %v3315 = vadd.f32 %v2644, %v3314
        %v3316 = vpop.f32.mrf.mxu0
        %v3317 = vadd.f32 %v2644, %v3316
        %3318 = vmatprep.mubr.bf16.mxu0 %v3055
        %3319 = vmatmul.mubr.bf16.gmra.mxu0 %v3054
        %v3320 = vpop.f32.mrf.mxu0
        %v3321 = vadd.f32 %v2649, %v3320
        %v3322 = vpop.f32.mrf.mxu0
        %v3323 = vadd.f32 %v2649, %v3322
        %v3324 = vpop.f32.mrf.mxu0
        %v3325 = vadd.f32 %v2654, %v3324
        %v3326 = vpop.f32.mrf.mxu0
        %v3327 = vadd.f32 %v2654, %v3326
        %3328 = vmatprep.mubr.bf16.mxu0 %v3057
        %3329 = vmatmul.mubr.bf16.gmra.mxu0 %v3056
        %v3330 = vpop.f32.mrf.mxu0
        %v3331 = vadd.f32 %v2659, %v3330
        %v3332 = vpop.f32.mrf.mxu0
        %v3333 = vadd.f32 %v2659, %v3332
        %v3334 = vpop.f32.mrf.mxu0
        %v3335 = vadd.f32 %v2664, %v3334
        %v3336 = vpop.f32.mrf.mxu0
        %v3337 = vadd.f32 %v2664, %v3336
        %3338 = vmatprep.mubr.bf16.mxu0 %v3059
        %3339 = vmatmul.mubr.bf16.gmra.mxu0 %v3058
        %v3340 = vpop.f32.mrf.mxu0
        %v3341 = vadd.f32 %v2669, %v3340
        %v3342 = vpop.f32.mrf.mxu0
        %v3343 = vadd.f32 %v2669, %v3342
        %v3344 = vpop.f32.mrf.mxu0
        %v3345 = vadd.f32 %v2674, %v3344
        %v3346 = vpop.f32.mrf.mxu0
        %v3347 = vadd.f32 %v2674, %v3346
        %3348 = vmatprep.mubr.bf16.mxu0 %v3061
        %3349 = vmatmul.mubr.bf16.gmra.mxu0 %v3060
        %v3350 = vpop.f32.mrf.mxu0
        %v3351 = vadd.f32 %v2679, %v3350
        %v3352 = vpop.f32.mrf.mxu0
        %v3353 = vadd.f32 %v2679, %v3352
        %v3354 = vpop.f32.mrf.mxu0
        %v3355 = vadd.f32 %v2684, %v3354
        %v3356 = vpop.f32.mrf.mxu0
        %v3357 = vadd.f32 %v2684, %v3356
        %3358 = vmatprep.mubr.bf16.mxu0 %v3063
        %3359 = vmatmul.mubr.bf16.gmra.mxu0 %v3062
        %v3360 = vpop.f32.mrf.mxu0
        %v3361 = vadd.f32 %v2689, %v3360
        %v3362 = vpop.f32.mrf.mxu0
        %v3363 = vadd.f32 %v2689, %v3362
        %v3364 = vpop.f32.mrf.mxu0
        %v3365 = vadd.f32 %v2694, %v3364
        %v3366 = vpop.f32.mrf.mxu0
        %v3367 = vadd.f32 %v2694, %v3366
        %3368 = vmatprep.mubr.bf16.mxu0 %v3065
        %3369 = vmatmul.mubr.bf16.gmra.mxu0 %v3064
        %v3370 = vpop.f32.mrf.mxu0
        %v3371 = vadd.f32 %v2699, %v3370
        %v3372 = vpop.f32.mrf.mxu0
        %v3373 = vadd.f32 %v2699, %v3372
        %v3374 = vpop.f32.mrf.mxu0
        %v3375 = vadd.f32 %v2704, %v3374
        %v3376 = vpop.f32.mrf.mxu0
        %v3377 = vadd.f32 %v2704, %v3376
        %3378 = vmatprep.mubr.bf16.mxu0 %v3067
        %3379 = vmatmul.mubr.bf16.gmra.mxu0 %v3066
        %v3380 = vpop.f32.mrf.mxu0
        %v3381 = vadd.f32 %v2709, %v3380
        %v3382 = vpop.f32.mrf.mxu0
        %v3383 = vadd.f32 %v2709, %v3382
        %v3384 = vpop.f32.mrf.mxu0
        %v3385 = vadd.f32 %v2714, %v3384
        %v3386 = vpop.f32.mrf.mxu0
        %v3387 = vadd.f32 %v2714, %v3386
        %3388 = vmatprep.mubr.bf16.mxu0 %v3069
        %3389 = vmatmul.mubr.bf16.gmra.mxu0 %v3068
        %v3390 = vpop.f32.mrf.mxu0
        %v3391 = vadd.f32 %v2719, %v3390
        %v3392 = vpop.f32.mrf.mxu0
        %v3393 = vadd.f32 %v2719, %v3392
        %v3394 = vpop.f32.mrf.mxu0
        %v3395 = vadd.f32 %v2724, %v3394
        %v3396 = vpop.f32.mrf.mxu0
        %v3397 = vadd.f32 %v2724, %v3396
        %3398 = vmatprep.mubr.bf16.mxu0 %v3071
        %3399 = vmatmul.mubr.bf16.gmra.mxu0 %v3070
        %v3400 = vpop.f32.mrf.mxu0
        %v3401 = vadd.f32 %v2729, %v3400
        %v3402 = vpop.f32.mrf.mxu0
        %v3403 = vadd.f32 %v2729, %v3402
        %v3404 = vpop.f32.mrf.mxu0
        %v3405 = vadd.f32 %v2734, %v3404
        %v3406 = vpop.f32.mrf.mxu0
        %v3407 = vadd.f32 %v2734, %v3406
        %3408 = vmatprep.mubr.bf16.mxu0 %v3073
        %3409 = vmatmul.mubr.bf16.gmra.mxu0 %v3072
        %v3410 = vpop.f32.mrf.mxu0
        %v3411 = vadd.f32 %v2739, %v3410
        %v3412 = vpop.f32.mrf.mxu0
        %v3413 = vadd.f32 %v2739, %v3412
        %v3414 = vpop.f32.mrf.mxu0
        %v3415 = vadd.f32 %v2744, %v3414
        %v3416 = vpop.f32.mrf.mxu0
        %v3417 = vadd.f32 %v2744, %v3416
        %3418 = vmatprep.mubr.bf16.mxu0 %v3075
        %3419 = vmatmul.mubr.bf16.gmra.mxu0 %v3074
        %v3420 = vpop.f32.mrf.mxu0
        %v3421 = vadd.f32 %v2749, %v3420
        %v3422 = vpop.f32.mrf.mxu0
        %v3423 = vadd.f32 %v2749, %v3422
        %v3424 = vpop.f32.mrf.mxu0
        %v3425 = vadd.f32 %v2754, %v3424
        %v3426 = vpop.f32.mrf.mxu0
        %v3427 = vadd.f32 %v2754, %v3426
        %3428 = vmatprep.mubr.bf16.mxu0 %v3077
        %3429 = vmatmul.mubr.bf16.gmra.mxu0 %v3076
        %v3430 = vpop.f32.mrf.mxu0
        %v3431 = vadd.f32 %v2759, %v3430
        %v3432 = vpop.f32.mrf.mxu0
        %v3433 = vadd.f32 %v2759, %v3432
        %v3434 = vpop.f32.mrf.mxu0
        %v3435 = vadd.f32 %v2764, %v3434
        %v3436 = vpop.f32.mrf.mxu0
        %v3437 = vadd.f32 %v2764, %v3436
        %3438 = vmatprep.mubr.bf16.mxu0 %v3079
        %3439 = vmatmul.mubr.bf16.gmra.mxu0 %v3078
        %v3440 = vpop.f32.mrf.mxu0
        %v3441 = vadd.f32 %v2769, %v3440
        %v3442 = vpop.f32.mrf.mxu0
        %v3443 = vadd.f32 %v2769, %v3442
        %v3444 = vpop.f32.mrf.mxu0
        %v3445 = vadd.f32 %v2774, %v3444
        %v3446 = vpop.f32.mrf.mxu0
        %v3447 = vadd.f32 %v2774, %v3446
        %3448 = vmatprep.mubr.bf16.mxu0 %v3081
        %3449 = vmatmul.mubr.bf16.gmra.mxu0 %v3080
        %v3450 = vpop.f32.mrf.mxu0
        %v3451 = vadd.f32 %v2779, %v3450
        %v3452 = vpop.f32.mrf.mxu0
        %v3453 = vadd.f32 %v2779, %v3452
        %v3454 = vpop.f32.mrf.mxu0
        %v3455 = vadd.f32 %v2784, %v3454
        %v3456 = vpop.f32.mrf.mxu0
        %v3457 = vadd.f32 %v2784, %v3456
        %3458 = vmatprep.mubr.bf16.mxu0 %v3083
        %3459 = vmatmul.mubr.bf16.gmra.mxu0 %v3082
        %v3460 = vpop.f32.mrf.mxu0
        %v3461 = vadd.f32 %v2789, %v3460
        %v3462 = vpop.f32.mrf.mxu0
        %v3463 = vadd.f32 %v2789, %v3462
        %v3464 = vpop.f32.mrf.mxu0
        %v3465 = vadd.f32 %v2794, %v3464
        %v3466 = vpop.f32.mrf.mxu0
        %v3467 = vadd.f32 %v2794, %v3466
        %3468 = vmatprep.mubr.bf16.mxu0 %v3085
        %3469 = vmatmul.mubr.bf16.gmra.mxu0 %v3084
        %v3470 = vpop.f32.mrf.mxu0
        %v3471 = vadd.f32 %v2799, %v3470
        %v3472 = vpop.f32.mrf.mxu0
        %v3473 = vadd.f32 %v2799, %v3472
        %v3474 = vpop.f32.mrf.mxu0
        %v3475 = vadd.f32 %v2804, %v3474
        %v3476 = vpop.f32.mrf.mxu0
        %v3477 = vadd.f32 %v2804, %v3476
        %3478 = vmatprep.mubr.bf16.mxu0 %v3087
        %3479 = vmatmul.mubr.bf16.gmra.mxu0 %v3086
        %v3480 = vpop.f32.mrf.mxu0
        %v3481 = vadd.f32 %v2809, %v3480
        %v3482 = vpop.f32.mrf.mxu0
        %v3483 = vadd.f32 %v2809, %v3482
        %v3484 = vpop.f32.mrf.mxu0
        %v3485 = vadd.f32 %v2814, %v3484
        %v3486 = vpop.f32.mrf.mxu0
        %v3487 = vadd.f32 %v2814, %v3486
        %3488 = vmatprep.mubr.bf16.mxu0 %v3089
        %3489 = vmatmul.mubr.bf16.gmra.mxu0 %v3088
        %v3490 = vpop.f32.mrf.mxu0
        %v3491 = vadd.f32 %v2819, %v3490
        %v3492 = vpop.f32.mrf.mxu0
        %v3493 = vadd.f32 %v2819, %v3492
        %v3494 = vpop.f32.mrf.mxu0
        %v3495 = vadd.f32 %v2824, %v3494
        %v3496 = vpop.f32.mrf.mxu0
        %v3497 = vadd.f32 %v2824, %v3496
        %3498 = vmatprep.mubr.bf16.mxu0 %v3091
        %3499 = vmatmul.mubr.bf16.gmra.mxu0 %v3090
        %v3500 = vpop.f32.mrf.mxu0
        %v3501 = vadd.f32 %v2829, %v3500
        %v3502 = vpop.f32.mrf.mxu0
        %v3503 = vadd.f32 %v2829, %v3502
        %v3504 = vpop.f32.mrf.mxu0
        %v3505 = vadd.f32 %v2834, %v3504
        %v3506 = vpop.f32.mrf.mxu0
        %v3507 = vadd.f32 %v2834, %v3506
        %3508 = vdwg.mxu0
        %3509 = vmatprep.subr.bf16.mxu0 %v2355
        %3510 = vmatpush1.bf16.msra.mxu0 %v2354
        %3511 = vmatprep.subr.bf16.mxu0 %v2351
        %3512 = vmatpush1.bf16.msra.mxu0 %v2350
        %3513 = vmatprep.subr.bf16.mxu0 %v2347
        %3514 = vmatpush1.bf16.msra.mxu0 %v2346
        %3515 = vmatprep.subr.bf16.mxu0 %v2343
        %3516 = vmatpush1.bf16.msra.mxu0 %v2342
        %3517 = vmatprep.subr.bf16.mxu0 %v2339
        %3518 = vmatpush1.bf16.msra.mxu0 %v2338
        %3519 = vmatprep.subr.bf16.mxu0 %v2335
        %3520 = vmatpush1.bf16.msra.mxu0 %v2334
        %3521 = vmatprep.subr.bf16.mxu0 %v2331
        %3522 = vmatpush1.bf16.msra.mxu0 %v2330
        %3523 = vmatprep.subr.bf16.mxu0 %v2327
        %3524 = vmatpush1.bf16.msra.mxu0 %v2326
        %3525 = vmatprep.subr.bf16.mxu0 %v2387
        %3526 = vmatpush2.bf16.msra.mxu0 %v2386
        %3527 = vmatprep.subr.bf16.mxu0 %v2383
        %3528 = vmatpush2.bf16.msra.mxu0 %v2382
        %3529 = vmatprep.subr.bf16.mxu0 %v2379
        %3530 = vmatpush2.bf16.msra.mxu0 %v2378
        %3531 = vmatprep.subr.bf16.mxu0 %v2375
        %3532 = vmatpush2.bf16.msra.mxu0 %v2374
        %3533 = vmatprep.subr.bf16.mxu0 %v2371
        %3534 = vmatpush2.bf16.msra.mxu0 %v2370
        %3535 = vmatprep.subr.bf16.mxu0 %v2367
        %3536 = vmatpush2.bf16.msra.mxu0 %v2366
        %3537 = vmatprep.subr.bf16.mxu0 %v2363
        %3538 = vmatpush2.bf16.msra.mxu0 %v2362
        %3539 = vmatprep.subr.bf16.mxu0 %v2359
        %3540 = vmatpush2.bf16.msra.mxu0 %v2358
        %3541 = vmatprep.mubr.bf16.mxu0 %v3029
        %3542 = vmatmul.mubr.bf16.gmra.mxu0 %v3028
        %v3543 = vpop.f32.mrf.mxu0
        %v3544 = vadd.f32 %v2519, %v3543
        %v3545 = vpop.f32.mrf.mxu0
        %v3546 = vadd.f32 %v2519, %v3545
        %v3547 = vpop.f32.mrf.mxu0
        %v3548 = vadd.f32 %v2524, %v3547
        %v3549 = vpop.f32.mrf.mxu0
        %v3550 = vadd.f32 %v2524, %v3549
        %3551 = vmatprep.mubr.bf16.mxu0 %v3031
        %3552 = vmatmul.mubr.bf16.gmra.mxu0 %v3030
        %v3553 = vpop.f32.mrf.mxu0
        %v3554 = vadd.f32 %v2529, %v3553
        %v3555 = vpop.f32.mrf.mxu0
        %v3556 = vadd.f32 %v2529, %v3555
        %v3557 = vpop.f32.mrf.mxu0
        %v3558 = vadd.f32 %v2534, %v3557
        %v3559 = vpop.f32.mrf.mxu0
        %v3560 = vadd.f32 %v2534, %v3559
        %3561 = vmatprep.mubr.bf16.mxu0 %v3033
        %3562 = vmatmul.mubr.bf16.gmra.mxu0 %v3032
        %v3563 = vpop.f32.mrf.mxu0
        %v3564 = vadd.f32 %v2539, %v3563
        %v3565 = vpop.f32.mrf.mxu0
        %v3566 = vadd.f32 %v2539, %v3565
        %v3567 = vpop.f32.mrf.mxu0
        %v3568 = vadd.f32 %v2544, %v3567
        %v3569 = vpop.f32.mrf.mxu0
        %v3570 = vadd.f32 %v2544, %v3569
        %3571 = vmatprep.mubr.bf16.mxu0 %v3035
        %3572 = vmatmul.mubr.bf16.gmra.mxu0 %v3034
        %v3573 = vpop.f32.mrf.mxu0
        %v3574 = vadd.f32 %v2549, %v3573
        %v3575 = vpop.f32.mrf.mxu0
        %v3576 = vadd.f32 %v2549, %v3575
        %v3577 = vpop.f32.mrf.mxu0
        %v3578 = vadd.f32 %v2554, %v3577
        %v3579 = vpop.f32.mrf.mxu0
        %v3580 = vadd.f32 %v2554, %v3579
        %3581 = vmatprep.mubr.bf16.mxu0 %v3037
        %3582 = vmatmul.mubr.bf16.gmra.mxu0 %v3036
        %v3583 = vpop.f32.mrf.mxu0
        %v3584 = vadd.f32 %v2559, %v3583
        %v3585 = vpop.f32.mrf.mxu0
        %v3586 = vadd.f32 %v2559, %v3585
        %v3587 = vpop.f32.mrf.mxu0
        %v3588 = vadd.f32 %v2564, %v3587
        %v3589 = vpop.f32.mrf.mxu0
        %v3590 = vadd.f32 %v2564, %v3589
        %3591 = vmatprep.mubr.bf16.mxu0 %v3039
        %3592 = vmatmul.mubr.bf16.gmra.mxu0 %v3038
        %v3593 = vpop.f32.mrf.mxu0
        %v3594 = vadd.f32 %v2569, %v3593
        %v3595 = vpop.f32.mrf.mxu0
        %v3596 = vadd.f32 %v2569, %v3595
        %v3597 = vpop.f32.mrf.mxu0
        %v3598 = vadd.f32 %v2574, %v3597
        %v3599 = vpop.f32.mrf.mxu0
        %v3600 = vadd.f32 %v2574, %v3599
        %3601 = vmatprep.mubr.bf16.mxu0 %v3041
        %3602 = vmatmul.mubr.bf16.gmra.mxu0 %v3040
        %v3603 = vpop.f32.mrf.mxu0
        %v3604 = vadd.f32 %v2579, %v3603
        %v3605 = vpop.f32.mrf.mxu0
        %v3606 = vadd.f32 %v2579, %v3605
        %v3607 = vpop.f32.mrf.mxu0
        %v3608 = vadd.f32 %v2584, %v3607
        %v3609 = vpop.f32.mrf.mxu0
        %v3610 = vadd.f32 %v2584, %v3609
        %3611 = vmatprep.mubr.bf16.mxu0 %v3043
        %3612 = vmatmul.mubr.bf16.gmra.mxu0 %v3042
        %v3613 = vpop.f32.mrf.mxu0
        %v3614 = vadd.f32 %v2589, %v3613
        %v3615 = vpop.f32.mrf.mxu0
        %v3616 = vadd.f32 %v2589, %v3615
        %v3617 = vpop.f32.mrf.mxu0
        %v3618 = vadd.f32 %v2594, %v3617
        %v3619 = vpop.f32.mrf.mxu0
        %v3620 = vadd.f32 %v2594, %v3619
        %3621 = vmatprep.mubr.bf16.mxu0 %v3045
        %3622 = vmatmul.mubr.bf16.gmra.mxu0 %v3044
        %v3623 = vpop.f32.mrf.mxu0
        %v3624 = vadd.f32 %v2599, %v3623
        %v3625 = vpop.f32.mrf.mxu0
        %v3626 = vadd.f32 %v2599, %v3625
        %v3627 = vpop.f32.mrf.mxu0
        %v3628 = vadd.f32 %v2604, %v3627
        %v3629 = vpop.f32.mrf.mxu0
        %v3630 = vadd.f32 %v2604, %v3629
        %3631 = vmatprep.mubr.bf16.mxu0 %v3047
        %3632 = vmatmul.mubr.bf16.gmra.mxu0 %v3046
        %v3633 = vpop.f32.mrf.mxu0
        %v3634 = vadd.f32 %v2609, %v3633
        %v3635 = vpop.f32.mrf.mxu0
        %v3636 = vadd.f32 %v2609, %v3635
        %v3637 = vpop.f32.mrf.mxu0
        %v3638 = vadd.f32 %v2614, %v3637
        %v3639 = vpop.f32.mrf.mxu0
        %v3640 = vadd.f32 %v2614, %v3639
        %3641 = vmatprep.mubr.bf16.mxu0 %v3049
        %3642 = vmatmul.mubr.bf16.gmra.mxu0 %v3048
        %v3643 = vpop.f32.mrf.mxu0
        %v3644 = vadd.f32 %v2619, %v3643
        %v3645 = vpop.f32.mrf.mxu0
        %v3646 = vadd.f32 %v2619, %v3645
        %v3647 = vpop.f32.mrf.mxu0
        %v3648 = vadd.f32 %v2624, %v3647
        %v3649 = vpop.f32.mrf.mxu0
        %v3650 = vadd.f32 %v2624, %v3649
        %3651 = vmatprep.mubr.bf16.mxu0 %v3051
        %3652 = vmatmul.mubr.bf16.gmra.mxu0 %v3050
        %v3653 = vpop.f32.mrf.mxu0
        %v3654 = vadd.f32 %v2629, %v3653
        %v3655 = vpop.f32.mrf.mxu0
        %v3656 = vadd.f32 %v2629, %v3655
        %v3657 = vpop.f32.mrf.mxu0
        %v3658 = vadd.f32 %v2634, %v3657
        %v3659 = vpop.f32.mrf.mxu0
        %v3660 = vadd.f32 %v2634, %v3659
        %3661 = vmatprep.mubr.bf16.mxu0 %v3053
        %3662 = vmatmul.mubr.bf16.gmra.mxu0 %v3052
        %v3663 = vpop.f32.mrf.mxu0
        %v3664 = vadd.f32 %v2639, %v3663
        %v3665 = vpop.f32.mrf.mxu0
        %v3666 = vadd.f32 %v2639, %v3665
        %v3667 = vpop.f32.mrf.mxu0
        %v3668 = vadd.f32 %v2644, %v3667
        %v3669 = vpop.f32.mrf.mxu0
        %v3670 = vadd.f32 %v2644, %v3669
        %3671 = vmatprep.mubr.bf16.mxu0 %v3055
        %3672 = vmatmul.mubr.bf16.gmra.mxu0 %v3054
        %v3673 = vpop.f32.mrf.mxu0
        %v3674 = vadd.f32 %v2649, %v3673
        %v3675 = vpop.f32.mrf.mxu0
        %v3676 = vadd.f32 %v2649, %v3675
        %v3677 = vpop.f32.mrf.mxu0
        %v3678 = vadd.f32 %v2654, %v3677
        %v3679 = vpop.f32.mrf.mxu0
        %v3680 = vadd.f32 %v2654, %v3679
        %3681 = vmatprep.mubr.bf16.mxu0 %v3057
        %3682 = vmatmul.mubr.bf16.gmra.mxu0 %v3056
        %v3683 = vpop.f32.mrf.mxu0
        %v3684 = vadd.f32 %v2659, %v3683
        %v3685 = vpop.f32.mrf.mxu0
        %v3686 = vadd.f32 %v2659, %v3685
        %v3687 = vpop.f32.mrf.mxu0
        %v3688 = vadd.f32 %v2664, %v3687
        %v3689 = vpop.f32.mrf.mxu0
        %v3690 = vadd.f32 %v2664, %v3689
        %3691 = vmatprep.mubr.bf16.mxu0 %v3059
        %3692 = vmatmul.mubr.bf16.gmra.mxu0 %v3058
        %v3693 = vpop.f32.mrf.mxu0
        %v3694 = vadd.f32 %v2669, %v3693
        %v3695 = vpop.f32.mrf.mxu0
        %v3696 = vadd.f32 %v2669, %v3695
        %v3697 = vpop.f32.mrf.mxu0
        %v3698 = vadd.f32 %v2674, %v3697
        %v3699 = vpop.f32.mrf.mxu0
        %v3700 = vadd.f32 %v2674, %v3699
        %3701 = vmatprep.mubr.bf16.mxu0 %v3061
        %3702 = vmatmul.mubr.bf16.gmra.mxu0 %v3060
        %v3703 = vpop.f32.mrf.mxu0
        %v3704 = vadd.f32 %v2679, %v3703
        %v3705 = vpop.f32.mrf.mxu0
        %v3706 = vadd.f32 %v2679, %v3705
        %v3707 = vpop.f32.mrf.mxu0
        %v3708 = vadd.f32 %v2684, %v3707
        %v3709 = vpop.f32.mrf.mxu0
        %v3710 = vadd.f32 %v2684, %v3709
        %3711 = vmatprep.mubr.bf16.mxu0 %v3063
        %3712 = vmatmul.mubr.bf16.gmra.mxu0 %v3062
        %v3713 = vpop.f32.mrf.mxu0
        %v3714 = vadd.f32 %v2689, %v3713
        %v3715 = vpop.f32.mrf.mxu0
        %v3716 = vadd.f32 %v2689, %v3715
        %v3717 = vpop.f32.mrf.mxu0
        %v3718 = vadd.f32 %v2694, %v3717
        %v3719 = vpop.f32.mrf.mxu0
        %v3720 = vadd.f32 %v2694, %v3719
        %3721 = vmatprep.mubr.bf16.mxu0 %v3065
        %3722 = vmatmul.mubr.bf16.gmra.mxu0 %v3064
        %v3723 = vpop.f32.mrf.mxu0
        %v3724 = vadd.f32 %v2699, %v3723
        %v3725 = vpop.f32.mrf.mxu0
        %v3726 = vadd.f32 %v2699, %v3725
        %v3727 = vpop.f32.mrf.mxu0
        %v3728 = vadd.f32 %v2704, %v3727
        %v3729 = vpop.f32.mrf.mxu0
        %v3730 = vadd.f32 %v2704, %v3729
        %3731 = vmatprep.mubr.bf16.mxu0 %v3067
        %3732 = vmatmul.mubr.bf16.gmra.mxu0 %v3066
        %v3733 = vpop.f32.mrf.mxu0
        %v3734 = vadd.f32 %v2709, %v3733
        %v3735 = vpop.f32.mrf.mxu0
        %v3736 = vadd.f32 %v2709, %v3735
        %v3737 = vpop.f32.mrf.mxu0
        %v3738 = vadd.f32 %v2714, %v3737
        %v3739 = vpop.f32.mrf.mxu0
        %v3740 = vadd.f32 %v2714, %v3739
        %3741 = vmatprep.mubr.bf16.mxu0 %v3069
        %3742 = vmatmul.mubr.bf16.gmra.mxu0 %v3068
        %v3743 = vpop.f32.mrf.mxu0
        %v3744 = vadd.f32 %v2719, %v3743
        %v3745 = vpop.f32.mrf.mxu0
        %v3746 = vadd.f32 %v2719, %v3745
        %v3747 = vpop.f32.mrf.mxu0
        %v3748 = vadd.f32 %v2724, %v3747
        %v3749 = vpop.f32.mrf.mxu0
        %v3750 = vadd.f32 %v2724, %v3749
        %3751 = vmatprep.mubr.bf16.mxu0 %v3071
        %3752 = vmatmul.mubr.bf16.gmra.mxu0 %v3070
        %v3753 = vpop.f32.mrf.mxu0
        %v3754 = vadd.f32 %v2729, %v3753
        %v3755 = vpop.f32.mrf.mxu0
        %v3756 = vadd.f32 %v2729, %v3755
        %v3757 = vpop.f32.mrf.mxu0
        %v3758 = vadd.f32 %v2734, %v3757
        %v3759 = vpop.f32.mrf.mxu0
        %v3760 = vadd.f32 %v2734, %v3759
        %3761 = vmatprep.mubr.bf16.mxu0 %v3073
        %3762 = vmatmul.mubr.bf16.gmra.mxu0 %v3072
        %v3763 = vpop.f32.mrf.mxu0
        %v3764 = vadd.f32 %v2739, %v3763
        %v3765 = vpop.f32.mrf.mxu0
        %v3766 = vadd.f32 %v2739, %v3765
        %v3767 = vpop.f32.mrf.mxu0
        %v3768 = vadd.f32 %v2744, %v3767
        %v3769 = vpop.f32.mrf.mxu0
        %v3770 = vadd.f32 %v2744, %v3769
        %3771 = vmatprep.mubr.bf16.mxu0 %v3075
        %3772 = vmatmul.mubr.bf16.gmra.mxu0 %v3074
        %v3773 = vpop.f32.mrf.mxu0
        %v3774 = vadd.f32 %v2749, %v3773
        %v3775 = vpop.f32.mrf.mxu0
        %v3776 = vadd.f32 %v2749, %v3775
        %v3777 = vpop.f32.mrf.mxu0
        %v3778 = vadd.f32 %v2754, %v3777
        %v3779 = vpop.f32.mrf.mxu0
        %v3780 = vadd.f32 %v2754, %v3779
        %3781 = vmatprep.mubr.bf16.mxu0 %v3077
        %3782 = vmatmul.mubr.bf16.gmra.mxu0 %v3076
        %v3783 = vpop.f32.mrf.mxu0
        %v3784 = vadd.f32 %v2759, %v3783
        %v3785 = vpop.f32.mrf.mxu0
        %v3786 = vadd.f32 %v2759, %v3785
        %v3787 = vpop.f32.mrf.mxu0
        %v3788 = vadd.f32 %v2764, %v3787
        %v3789 = vpop.f32.mrf.mxu0
        %v3790 = vadd.f32 %v2764, %v3789
        %3791 = vmatprep.mubr.bf16.mxu0 %v3079
        %3792 = vmatmul.mubr.bf16.gmra.mxu0 %v3078
        %v3793 = vpop.f32.mrf.mxu0
        %v3794 = vadd.f32 %v2769, %v3793
        %v3795 = vpop.f32.mrf.mxu0
        %v3796 = vadd.f32 %v2769, %v3795
        %v3797 = vpop.f32.mrf.mxu0
        %v3798 = vadd.f32 %v2774, %v3797
        %v3799 = vpop.f32.mrf.mxu0
        %v3800 = vadd.f32 %v2774, %v3799
        %3801 = vmatprep.mubr.bf16.mxu0 %v3081
        %3802 = vmatmul.mubr.bf16.gmra.mxu0 %v3080
        %v3803 = vpop.f32.mrf.mxu0
        %v3804 = vadd.f32 %v2779, %v3803
        %v3805 = vpop.f32.mrf.mxu0
        %v3806 = vadd.f32 %v2779, %v3805
        %v3807 = vpop.f32.mrf.mxu0
        %v3808 = vadd.f32 %v2784, %v3807
        %v3809 = vpop.f32.mrf.mxu0
        %v3810 = vadd.f32 %v2784, %v3809
        %3811 = vmatprep.mubr.bf16.mxu0 %v3083
        %3812 = vmatmul.mubr.bf16.gmra.mxu0 %v3082
        %v3813 = vpop.f32.mrf.mxu0
        %v3814 = vadd.f32 %v2789, %v3813
        %v3815 = vpop.f32.mrf.mxu0
        %v3816 = vadd.f32 %v2789, %v3815
        %v3817 = vpop.f32.mrf.mxu0
        %v3818 = vadd.f32 %v2794, %v3817
        %v3819 = vpop.f32.mrf.mxu0
        %v3820 = vadd.f32 %v2794, %v3819
        %3821 = vmatprep.mubr.bf16.mxu0 %v3085
        %3822 = vmatmul.mubr.bf16.gmra.mxu0 %v3084
        %v3823 = vpop.f32.mrf.mxu0
        %v3824 = vadd.f32 %v2799, %v3823
        %v3825 = vpop.f32.mrf.mxu0
        %v3826 = vadd.f32 %v2799, %v3825
        %v3827 = vpop.f32.mrf.mxu0
        %v3828 = vadd.f32 %v2804, %v3827
        %v3829 = vpop.f32.mrf.mxu0
        %v3830 = vadd.f32 %v2804, %v3829
        %3831 = vmatprep.mubr.bf16.mxu0 %v3087
        %3832 = vmatmul.mubr.bf16.gmra.mxu0 %v3086
        %v3833 = vpop.f32.mrf.mxu0
        %v3834 = vadd.f32 %v2809, %v3833
        %v3835 = vpop.f32.mrf.mxu0
        %v3836 = vadd.f32 %v2809, %v3835
        %v3837 = vpop.f32.mrf.mxu0
        %v3838 = vadd.f32 %v2814, %v3837
        %v3839 = vpop.f32.mrf.mxu0
        %v3840 = vadd.f32 %v2814, %v3839
        %3841 = vmatprep.mubr.bf16.mxu0 %v3089
        %3842 = vmatmul.mubr.bf16.gmra.mxu0 %v3088
        %v3843 = vpop.f32.mrf.mxu0
        %v3844 = vadd.f32 %v2819, %v3843
        %v3845 = vpop.f32.mrf.mxu0
        %v3846 = vadd.f32 %v2819, %v3845
        %v3847 = vpop.f32.mrf.mxu0
        %v3848 = vadd.f32 %v2824, %v3847
        %v3849 = vpop.f32.mrf.mxu0
        %v3850 = vadd.f32 %v2824, %v3849
        %3851 = vmatprep.mubr.bf16.mxu0 %v3091
        %3852 = vmatmul.mubr.bf16.gmra.mxu0 %v3090
        %v3853 = vpop.f32.mrf.mxu0
        %v3854 = vadd.f32 %v2829, %v3853
        %v3855 = vpop.f32.mrf.mxu0
        %v3856 = vadd.f32 %v2829, %v3855
        %v3857 = vpop.f32.mrf.mxu0
        %v3858 = vadd.f32 %v2834, %v3857
        %v3859 = vpop.f32.mrf.mxu0
        %v3860 = vadd.f32 %v2834, %v3859
        %3861 = vdwg.mxu0
        %v3862 = vmax.f32 %v3191, 0.0
        %v3863 = vmax.f32 %v3193, 0.0
        %v3864 = vmax.f32 %v3544, 0.0
        %v3865 = vmax.f32 %v3546, 0.0
        %v3866 = vmax.f32 %v3195, 0.0
        %v3867 = vmax.f32 %v3197, 0.0
        %v3868 = vmax.f32 %v3548, 0.0
        %v3869 = vmax.f32 %v3550, 0.0
        %v3870 = vmax.f32 %v3201, 0.0
        %v3871 = vmax.f32 %v3203, 0.0
        %v3872 = vmax.f32 %v3554, 0.0
        %v3873 = vmax.f32 %v3556, 0.0
        %v3874 = vmax.f32 %v3205, 0.0
        %v3875 = vmax.f32 %v3207, 0.0
        %v3876 = vmax.f32 %v3558, 0.0
        %v3877 = vmax.f32 %v3560, 0.0
        %v3878 = vmax.f32 %v3211, 0.0
        %v3879 = vmax.f32 %v3213, 0.0
        %v3880 = vmax.f32 %v3564, 0.0
        %v3881 = vmax.f32 %v3566, 0.0
        %v3882 = vmax.f32 %v3215, 0.0
        %v3883 = vmax.f32 %v3217, 0.0
        %v3884 = vmax.f32 %v3568, 0.0
        %v3885 = vmax.f32 %v3570, 0.0
        %v3886 = vmax.f32 %v3221, 0.0
        %v3887 = vmax.f32 %v3223, 0.0
        %v3888 = vmax.f32 %v3574, 0.0
        %v3889 = vmax.f32 %v3576, 0.0
        %v3890 = vmax.f32 %v3225, 0.0
        %v3891 = vmax.f32 %v3227, 0.0
        %v3892 = vmax.f32 %v3578, 0.0
        %v3893 = vmax.f32 %v3580, 0.0
        %v3894 = vmax.f32 %v3231, 0.0
        %v3895 = vmax.f32 %v3233, 0.0
        %v3896 = vmax.f32 %v3584, 0.0
        %v3897 = vmax.f32 %v3586, 0.0
        %v3898 = vmax.f32 %v3235, 0.0
        %v3899 = vmax.f32 %v3237, 0.0
        %v3900 = vmax.f32 %v3588, 0.0
        %v3901 = vmax.f32 %v3590, 0.0
        %v3902 = vmax.f32 %v3241, 0.0
        %v3903 = vmax.f32 %v3243, 0.0
        %v3904 = vmax.f32 %v3594, 0.0
        %v3905 = vmax.f32 %v3596, 0.0
        %v3906 = vmax.f32 %v3245, 0.0
        %v3907 = vmax.f32 %v3247, 0.0
        %v3908 = vmax.f32 %v3598, 0.0
        %v3909 = vmax.f32 %v3600, 0.0
        %v3910 = vmax.f32 %v3251, 0.0
        %v3911 = vmax.f32 %v3253, 0.0
        %v3912 = vmax.f32 %v3604, 0.0
        %v3913 = vmax.f32 %v3606, 0.0
        %v3914 = vmax.f32 %v3255, 0.0
        %v3915 = vmax.f32 %v3257, 0.0
        %v3916 = vmax.f32 %v3608, 0.0
        %v3917 = vmax.f32 %v3610, 0.0
        %v3918 = vmax.f32 %v3261, 0.0
        %v3919 = vmax.f32 %v3263, 0.0
        %v3920 = vmax.f32 %v3614, 0.0
        %v3921 = vmax.f32 %v3616, 0.0
        %v3922 = vmax.f32 %v3265, 0.0
        %v3923 = vmax.f32 %v3267, 0.0
        %v3924 = vmax.f32 %v3618, 0.0
        %v3925 = vmax.f32 %v3620, 0.0
        %v3926 = vmax.f32 %v3271, 0.0
        %v3927 = vmax.f32 %v3273, 0.0
        %v3928 = vmax.f32 %v3624, 0.0
        %v3929 = vmax.f32 %v3626, 0.0
        %v3930 = vmax.f32 %v3275, 0.0
        %v3931 = vmax.f32 %v3277, 0.0
        %v3932 = vmax.f32 %v3628, 0.0
        %v3933 = vmax.f32 %v3630, 0.0
        %v3934 = vmax.f32 %v3281, 0.0
        %v3935 = vmax.f32 %v3283, 0.0
        %v3936 = vmax.f32 %v3634, 0.0
        %v3937 = vmax.f32 %v3636, 0.0
        %v3938 = vmax.f32 %v3285, 0.0
        %v3939 = vmax.f32 %v3287, 0.0
        %v3940 = vmax.f32 %v3638, 0.0
        %v3941 = vmax.f32 %v3640, 0.0
        %v3942 = vmax.f32 %v3291, 0.0
        %v3943 = vmax.f32 %v3293, 0.0
        %v3944 = vmax.f32 %v3644, 0.0
        %v3945 = vmax.f32 %v3646, 0.0
        %v3946 = vmax.f32 %v3295, 0.0
        %v3947 = vmax.f32 %v3297, 0.0
        %v3948 = vmax.f32 %v3648, 0.0
        %v3949 = vmax.f32 %v3650, 0.0
        %v3950 = vmax.f32 %v3301, 0.0
        %v3951 = vmax.f32 %v3303, 0.0
        %v3952 = vmax.f32 %v3654, 0.0
        %v3953 = vmax.f32 %v3656, 0.0
        %v3954 = vmax.f32 %v3305, 0.0
        %v3955 = vmax.f32 %v3307, 0.0
        %v3956 = vmax.f32 %v3658, 0.0
        %v3957 = vmax.f32 %v3660, 0.0
        %v3958 = vmax.f32 %v3311, 0.0
        %v3959 = vmax.f32 %v3313, 0.0
        %v3960 = vmax.f32 %v3664, 0.0
        %v3961 = vmax.f32 %v3666, 0.0
        %v3962 = vmax.f32 %v3315, 0.0
        %v3963 = vmax.f32 %v3317, 0.0
        %v3964 = vmax.f32 %v3668, 0.0
        %v3965 = vmax.f32 %v3670, 0.0
        %v3966 = vmax.f32 %v3321, 0.0
        %v3967 = vmax.f32 %v3323, 0.0
        %v3968 = vmax.f32 %v3674, 0.0
        %v3969 = vmax.f32 %v3676, 0.0
        %v3970 = vmax.f32 %v3325, 0.0
        %v3971 = vmax.f32 %v3327, 0.0
        %v3972 = vmax.f32 %v3678, 0.0
        %v3973 = vmax.f32 %v3680, 0.0
        %v3974 = vmax.f32 %v3331, 0.0
        %v3975 = vmax.f32 %v3333, 0.0
        %v3976 = vmax.f32 %v3684, 0.0
        %v3977 = vmax.f32 %v3686, 0.0
        %v3978 = vmax.f32 %v3335, 0.0
        %v3979 = vmax.f32 %v3337, 0.0
        %v3980 = vmax.f32 %v3688, 0.0
        %v3981 = vmax.f32 %v3690, 0.0
        %v3982 = vmax.f32 %v3341, 0.0
        %v3983 = vmax.f32 %v3343, 0.0
        %v3984 = vmax.f32 %v3694, 0.0
        %v3985 = vmax.f32 %v3696, 0.0
        %v3986 = vmax.f32 %v3345, 0.0
        %v3987 = vmax.f32 %v3347, 0.0
        %v3988 = vmax.f32 %v3698, 0.0
        %v3989 = vmax.f32 %v3700, 0.0
        %v3990 = vmax.f32 %v3351, 0.0
        %v3991 = vmax.f32 %v3353, 0.0
        %v3992 = vmax.f32 %v3704, 0.0
        %v3993 = vmax.f32 %v3706, 0.0
        %v3994 = vmax.f32 %v3355, 0.0
        %v3995 = vmax.f32 %v3357, 0.0
        %v3996 = vmax.f32 %v3708, 0.0
        %v3997 = vmax.f32 %v3710, 0.0
        %v3998 = vmax.f32 %v3361, 0.0
        %v3999 = vmax.f32 %v3363, 0.0
        %v4000 = vmax.f32 %v3714, 0.0
        %v4001 = vmax.f32 %v3716, 0.0
        %v4002 = vmax.f32 %v3365, 0.0
        %v4003 = vmax.f32 %v3367, 0.0
        %v4004 = vmax.f32 %v3718, 0.0
        %v4005 = vmax.f32 %v3720, 0.0
        %v4006 = vmax.f32 %v3371, 0.0
        %v4007 = vmax.f32 %v3373, 0.0
        %v4008 = vmax.f32 %v3724, 0.0
        %v4009 = vmax.f32 %v3726, 0.0
        %v4010 = vmax.f32 %v3375, 0.0
        %v4011 = vmax.f32 %v3377, 0.0
        %v4012 = vmax.f32 %v3728, 0.0
        %v4013 = vmax.f32 %v3730, 0.0
        %v4014 = vmax.f32 %v3381, 0.0
        %v4015 = vmax.f32 %v3383, 0.0
        %v4016 = vmax.f32 %v3734, 0.0
        %v4017 = vmax.f32 %v3736, 0.0
        %v4018 = vmax.f32 %v3385, 0.0
        %v4019 = vmax.f32 %v3387, 0.0
        %v4020 = vmax.f32 %v3738, 0.0
        %v4021 = vmax.f32 %v3740, 0.0
        %v4022 = vmax.f32 %v3391, 0.0
        %v4023 = vmax.f32 %v3393, 0.0
        %v4024 = vmax.f32 %v3744, 0.0
        %v4025 = vmax.f32 %v3746, 0.0
        %v4026 = vmax.f32 %v3395, 0.0
        %v4027 = vmax.f32 %v3397, 0.0
        %v4028 = vmax.f32 %v3748, 0.0
        %v4029 = vmax.f32 %v3750, 0.0
        %v4030 = vmax.f32 %v3401, 0.0
        %v4031 = vmax.f32 %v3403, 0.0
        %v4032 = vmax.f32 %v3754, 0.0
        %v4033 = vmax.f32 %v3756, 0.0
        %v4034 = vmax.f32 %v3405, 0.0
        %v4035 = vmax.f32 %v3407, 0.0
        %v4036 = vmax.f32 %v3758, 0.0
        %v4037 = vmax.f32 %v3760, 0.0
        %v4038 = vmax.f32 %v3411, 0.0
        %v4039 = vmax.f32 %v3413, 0.0
        %v4040 = vmax.f32 %v3764, 0.0
        %v4041 = vmax.f32 %v3766, 0.0
        %v4042 = vmax.f32 %v3415, 0.0
        %v4043 = vmax.f32 %v3417, 0.0
        %v4044 = vmax.f32 %v3768, 0.0
        %v4045 = vmax.f32 %v3770, 0.0
        %v4046 = vmax.f32 %v3421, 0.0
        %v4047 = vmax.f32 %v3423, 0.0
        %v4048 = vmax.f32 %v3774, 0.0
        %v4049 = vmax.f32 %v3776, 0.0
        %v4050 = vmax.f32 %v3425, 0.0
        %v4051 = vmax.f32 %v3427, 0.0
        %v4052 = vmax.f32 %v3778, 0.0
        %v4053 = vmax.f32 %v3780, 0.0
        %v4054 = vmax.f32 %v3431, 0.0
        %v4055 = vmax.f32 %v3433, 0.0
        %v4056 = vmax.f32 %v3784, 0.0
        %v4057 = vmax.f32 %v3786, 0.0
        %v4058 = vmax.f32 %v3435, 0.0
        %v4059 = vmax.f32 %v3437, 0.0
        %v4060 = vmax.f32 %v3788, 0.0
        %v4061 = vmax.f32 %v3790, 0.0
        %v4062 = vmax.f32 %v3441, 0.0
        %v4063 = vmax.f32 %v3443, 0.0
        %v4064 = vmax.f32 %v3794, 0.0
        %v4065 = vmax.f32 %v3796, 0.0
        %v4066 = vmax.f32 %v3445, 0.0
        %v4067 = vmax.f32 %v3447, 0.0
        %v4068 = vmax.f32 %v3798, 0.0
        %v4069 = vmax.f32 %v3800, 0.0
        %v4070 = vmax.f32 %v3451, 0.0
        %v4071 = vmax.f32 %v3453, 0.0
        %v4072 = vmax.f32 %v3804, 0.0
        %v4073 = vmax.f32 %v3806, 0.0
        %v4074 = vmax.f32 %v3455, 0.0
        %v4075 = vmax.f32 %v3457, 0.0
        %v4076 = vmax.f32 %v3808, 0.0
        %v4077 = vmax.f32 %v3810, 0.0
        %v4078 = vmax.f32 %v3461, 0.0
        %v4079 = vmax.f32 %v3463, 0.0
        %v4080 = vmax.f32 %v3814, 0.0
        %v4081 = vmax.f32 %v3816, 0.0
        %v4082 = vmax.f32 %v3465, 0.0
        %v4083 = vmax.f32 %v3467, 0.0
        %v4084 = vmax.f32 %v3818, 0.0
        %v4085 = vmax.f32 %v3820, 0.0
        %v4086 = vmax.f32 %v3471, 0.0
        %v4087 = vmax.f32 %v3473, 0.0
        %v4088 = vmax.f32 %v3824, 0.0
        %v4089 = vmax.f32 %v3826, 0.0
        %v4090 = vmax.f32 %v3475, 0.0
        %v4091 = vmax.f32 %v3477, 0.0
        %v4092 = vmax.f32 %v3828, 0.0
        %v4093 = vmax.f32 %v3830, 0.0
        %v4094 = vmax.f32 %v3481, 0.0
        %v4095 = vmax.f32 %v3483, 0.0
        %v4096 = vmax.f32 %v3834, 0.0
        %v4097 = vmax.f32 %v3836, 0.0
        %v4098 = vmax.f32 %v3485, 0.0
        %v4099 = vmax.f32 %v3487, 0.0
        %v4100 = vmax.f32 %v3838, 0.0
        %v4101 = vmax.f32 %v3840, 0.0
        %v4102 = vmax.f32 %v3491, 0.0
        %v4103 = vmax.f32 %v3493, 0.0
        %v4104 = vmax.f32 %v3844, 0.0
        %v4105 = vmax.f32 %v3846, 0.0
        %v4106 = vmax.f32 %v3495, 0.0
        %v4107 = vmax.f32 %v3497, 0.0
        %v4108 = vmax.f32 %v3848, 0.0
        %v4109 = vmax.f32 %v3850, 0.0
        %v4110 = vmax.f32 %v3501, 0.0
        %v4111 = vmax.f32 %v3503, 0.0
        %v4112 = vmax.f32 %v3854, 0.0
        %v4113 = vmax.f32 %v3856, 0.0
        %v4114 = vmax.f32 %v3505, 0.0
        %v4115 = vmax.f32 %v3507, 0.0
        %v4116 = vmax.f32 %v3858, 0.0
        %v4117 = vmax.f32 %v3860, 0.0
        %v4118 = vpack.c.bf16 %v3866, %v3862
        %v4119 = vpack.c.bf16 %v3867, %v3863
        %v4120 = vpack.c.bf16 %v3868, %v3864
        %v4121 = vpack.c.bf16 %v3869, %v3865
        %v4122 = vpack.c.bf16 %v3874, %v3870
        %v4123 = vpack.c.bf16 %v3875, %v3871
        %v4124 = vpack.c.bf16 %v3876, %v3872
        %v4125 = vpack.c.bf16 %v3877, %v3873
        %v4126 = vpack.c.bf16 %v3882, %v3878
        %v4127 = vpack.c.bf16 %v3883, %v3879
        %v4128 = vpack.c.bf16 %v3884, %v3880
        %v4129 = vpack.c.bf16 %v3885, %v3881
        %v4130 = vpack.c.bf16 %v3890, %v3886
        %v4131 = vpack.c.bf16 %v3891, %v3887
        %v4132 = vpack.c.bf16 %v3892, %v3888
        %v4133 = vpack.c.bf16 %v3893, %v3889
        %v4134 = vpack.c.bf16 %v3898, %v3894
        %v4135 = vpack.c.bf16 %v3899, %v3895
        %v4136 = vpack.c.bf16 %v3900, %v3896
        %v4137 = vpack.c.bf16 %v3901, %v3897
        %v4138 = vpack.c.bf16 %v3906, %v3902
        %v4139 = vpack.c.bf16 %v3907, %v3903
        %v4140 = vpack.c.bf16 %v3908, %v3904
        %v4141 = vpack.c.bf16 %v3909, %v3905
        %v4142 = vpack.c.bf16 %v3914, %v3910
        %v4143 = vpack.c.bf16 %v3915, %v3911
        %v4144 = vpack.c.bf16 %v3916, %v3912
        %v4145 = vpack.c.bf16 %v3917, %v3913
        %v4146 = vpack.c.bf16 %v3922, %v3918
        %v4147 = vpack.c.bf16 %v3923, %v3919
        %v4148 = vpack.c.bf16 %v3924, %v3920
        %v4149 = vpack.c.bf16 %v3925, %v3921
        %v4150 = vpack.c.bf16 %v3930, %v3926
        %v4151 = vpack.c.bf16 %v3931, %v3927
        %v4152 = vpack.c.bf16 %v3932, %v3928
        %v4153 = vpack.c.bf16 %v3933, %v3929
        %v4154 = vpack.c.bf16 %v3938, %v3934
        %v4155 = vpack.c.bf16 %v3939, %v3935
        %v4156 = vpack.c.bf16 %v3940, %v3936
        %v4157 = vpack.c.bf16 %v3941, %v3937
        %v4158 = vpack.c.bf16 %v3946, %v3942
        %v4159 = vpack.c.bf16 %v3947, %v3943
        %v4160 = vpack.c.bf16 %v3948, %v3944
        %v4161 = vpack.c.bf16 %v3949, %v3945
        %v4162 = vpack.c.bf16 %v3954, %v3950
        %v4163 = vpack.c.bf16 %v3955, %v3951
        %v4164 = vpack.c.bf16 %v3956, %v3952
        %v4165 = vpack.c.bf16 %v3957, %v3953
        %v4166 = vpack.c.bf16 %v3962, %v3958
        %v4167 = vpack.c.bf16 %v3963, %v3959
        %v4168 = vpack.c.bf16 %v3964, %v3960
        %v4169 = vpack.c.bf16 %v3965, %v3961
        %v4170 = vpack.c.bf16 %v3970, %v3966
        %v4171 = vpack.c.bf16 %v3971, %v3967
        %v4172 = vpack.c.bf16 %v3972, %v3968
        %v4173 = vpack.c.bf16 %v3973, %v3969
        %v4174 = vpack.c.bf16 %v3978, %v3974
        %v4175 = vpack.c.bf16 %v3979, %v3975
        %v4176 = vpack.c.bf16 %v3980, %v3976
        %v4177 = vpack.c.bf16 %v3981, %v3977
        %v4178 = vpack.c.bf16 %v3986, %v3982
        %v4179 = vpack.c.bf16 %v3987, %v3983
        %v4180 = vpack.c.bf16 %v3988, %v3984
        %v4181 = vpack.c.bf16 %v3989, %v3985
        %v4182 = vpack.c.bf16 %v3994, %v3990
        %v4183 = vpack.c.bf16 %v3995, %v3991
        %v4184 = vpack.c.bf16 %v3996, %v3992
        %v4185 = vpack.c.bf16 %v3997, %v3993
        %v4186 = vpack.c.bf16 %v4002, %v3998
        %v4187 = vpack.c.bf16 %v4003, %v3999
        %v4188 = vpack.c.bf16 %v4004, %v4000
        %v4189 = vpack.c.bf16 %v4005, %v4001
        %v4190 = vpack.c.bf16 %v4010, %v4006
        %v4191 = vpack.c.bf16 %v4011, %v4007
        %v4192 = vpack.c.bf16 %v4012, %v4008
        %v4193 = vpack.c.bf16 %v4013, %v4009
        %v4194 = vpack.c.bf16 %v4018, %v4014
        %v4195 = vpack.c.bf16 %v4019, %v4015
        %v4196 = vpack.c.bf16 %v4020, %v4016
        %v4197 = vpack.c.bf16 %v4021, %v4017
        %v4198 = vpack.c.bf16 %v4026, %v4022
        %v4199 = vpack.c.bf16 %v4027, %v4023
        %v4200 = vpack.c.bf16 %v4028, %v4024
        %v4201 = vpack.c.bf16 %v4029, %v4025
        %v4202 = vpack.c.bf16 %v4034, %v4030
        %v4203 = vpack.c.bf16 %v4035, %v4031
        %v4204 = vpack.c.bf16 %v4036, %v4032
        %v4205 = vpack.c.bf16 %v4037, %v4033
        %v4206 = vpack.c.bf16 %v4042, %v4038
        %v4207 = vpack.c.bf16 %v4043, %v4039
        %v4208 = vpack.c.bf16 %v4044, %v4040
        %v4209 = vpack.c.bf16 %v4045, %v4041
        %v4210 = vpack.c.bf16 %v4050, %v4046
        %v4211 = vpack.c.bf16 %v4051, %v4047
        %v4212 = vpack.c.bf16 %v4052, %v4048
        %v4213 = vpack.c.bf16 %v4053, %v4049
        %v4214 = vpack.c.bf16 %v4058, %v4054
        %v4215 = vpack.c.bf16 %v4059, %v4055
        %v4216 = vpack.c.bf16 %v4060, %v4056
        %v4217 = vpack.c.bf16 %v4061, %v4057
        %v4218 = vpack.c.bf16 %v4066, %v4062
        %v4219 = vpack.c.bf16 %v4067, %v4063
        %v4220 = vpack.c.bf16 %v4068, %v4064
        %v4221 = vpack.c.bf16 %v4069, %v4065
        %v4222 = vpack.c.bf16 %v4074, %v4070
        %v4223 = vpack.c.bf16 %v4075, %v4071
        %v4224 = vpack.c.bf16 %v4076, %v4072
        %v4225 = vpack.c.bf16 %v4077, %v4073
        %v4226 = vpack.c.bf16 %v4082, %v4078
        %v4227 = vpack.c.bf16 %v4083, %v4079
        %v4228 = vpack.c.bf16 %v4084, %v4080
        %v4229 = vpack.c.bf16 %v4085, %v4081
        %v4230 = vpack.c.bf16 %v4090, %v4086
        %v4231 = vpack.c.bf16 %v4091, %v4087
        %v4232 = vpack.c.bf16 %v4092, %v4088
        %v4233 = vpack.c.bf16 %v4093, %v4089
        %v4234 = vpack.c.bf16 %v4098, %v4094
        %v4235 = vpack.c.bf16 %v4099, %v4095
        %v4236 = vpack.c.bf16 %v4100, %v4096
        %v4237 = vpack.c.bf16 %v4101, %v4097
        %v4238 = vpack.c.bf16 %v4106, %v4102
        %v4239 = vpack.c.bf16 %v4107, %v4103
        %v4240 = vpack.c.bf16 %v4108, %v4104
        %v4241 = vpack.c.bf16 %v4109, %v4105
        %v4242 = vpack.c.bf16 %v4114, %v4110
        %v4243 = vpack.c.bf16 %v4115, %v4111
        %v4244 = vpack.c.bf16 %v4116, %v4112
        %v4245 = vpack.c.bf16 %v4117, %v4113
        %v4246 = vld [vmem:[#allocation6] sm:$0xff]
        %v4247 = vld [vmem:[#allocation6 + $0x8] sm:$0xff]
        %v4248 = vld [vmem:[#allocation6 + $0x10] sm:$0xff]
        %v4249 = vld [vmem:[#allocation6 + $0x18] sm:$0xff]
        %v4250 = vld [vmem:[#allocation6 + $0x20] sm:$0xff]
        %v4251 = vld [vmem:[#allocation6 + $0x28] sm:$0xff]
        %v4252 = vld [vmem:[#allocation6 + $0x30] sm:$0xff]
        %v4253 = vld [vmem:[#allocation6 + $0x38] sm:$0xff]
        %v4254 = vld [vmem:[#allocation6 + $0x40] sm:$0xff]
        %v4255 = vld [vmem:[#allocation6 + $0x48] sm:$0xff]
        %v4256 = vld [vmem:[#allocation6 + $0x50] sm:$0xff]
        %v4257 = vld [vmem:[#allocation6 + $0x58] sm:$0xff]
        %v4258 = vld [vmem:[#allocation6 + $0x60] sm:$0xff]
        %v4259 = vld [vmem:[#allocation6 + $0x68] sm:$0xff]
        %v4260 = vld [vmem:[#allocation6 + $0x70] sm:$0xff]
        %v4261 = vld [vmem:[#allocation6 + $0x78] sm:$0xff]
        %v4262 = vld [vmem:[#allocation6 + $0x80] sm:$0xff]
        %v4263 = vld [vmem:[#allocation6 + $0x88] sm:$0xff]
        %v4264 = vld [vmem:[#allocation6 + $0x90] sm:$0xff]
        %v4265 = vld [vmem:[#allocation6 + $0x98] sm:$0xff]
        %v4266 = vld [vmem:[#allocation6 + $0xa0] sm:$0xff]
        %v4267 = vld [vmem:[#allocation6 + $0xa8] sm:$0xff]
        %v4268 = vld [vmem:[#allocation6 + $0xb0] sm:$0xff]
        %v4269 = vld [vmem:[#allocation6 + $0xb8] sm:$0xff]
        %v4270 = vld [vmem:[#allocation6 + $0xc0] sm:$0xff]
        %v4271 = vld [vmem:[#allocation6 + $0xc8] sm:$0xff]
        %v4272 = vld [vmem:[#allocation6 + $0xd0] sm:$0xff]
        %v4273 = vld [vmem:[#allocation6 + $0xd8] sm:$0xff]
        %v4274 = vld [vmem:[#allocation6 + $0xe0] sm:$0xff]
        %v4275 = vld [vmem:[#allocation6 + $0xe8] sm:$0xff]
        %v4276 = vld [vmem:[#allocation6 + $0xf0] sm:$0xff]
        %v4277 = vld [vmem:[#allocation6 + $0xf8] sm:$0xff]
        %v4278 = vld [vmem:[#allocation6 + $0x100] sm:$0xff]
        %v4279 = vld [vmem:[#allocation6 + $0x108] sm:$0xff]
        %v4280 = vld [vmem:[#allocation6 + $0x110] sm:$0xff]
        %v4281 = vld [vmem:[#allocation6 + $0x118] sm:$0xff]
        %v4282 = vld [vmem:[#allocation6 + $0x120] sm:$0xff]
        %v4283 = vld [vmem:[#allocation6 + $0x128] sm:$0xff]
        %v4284 = vld [vmem:[#allocation6 + $0x130] sm:$0xff]
        %v4285 = vld [vmem:[#allocation6 + $0x138] sm:$0xff]
        %v4286 = vld [vmem:[#allocation6 + $0x140] sm:$0xff]
        %v4287 = vld [vmem:[#allocation6 + $0x148] sm:$0xff]
        %v4288 = vld [vmem:[#allocation6 + $0x150] sm:$0xff]
        %v4289 = vld [vmem:[#allocation6 + $0x158] sm:$0xff]
        %v4290 = vld [vmem:[#allocation6 + $0x160] sm:$0xff]
        %v4291 = vld [vmem:[#allocation6 + $0x168] sm:$0xff]
        %v4292 = vld [vmem:[#allocation6 + $0x170] sm:$0xff]
        %v4293 = vld [vmem:[#allocation6 + $0x178] sm:$0xff]
        %v4294 = vld [vmem:[#allocation6 + $0x180] sm:$0xff]
        %v4295 = vld [vmem:[#allocation6 + $0x188] sm:$0xff]
        %v4296 = vld [vmem:[#allocation6 + $0x190] sm:$0xff]
        %v4297 = vld [vmem:[#allocation6 + $0x198] sm:$0xff]
        %v4298 = vld [vmem:[#allocation6 + $0x1a0] sm:$0xff]
        %v4299 = vld [vmem:[#allocation6 + $0x1a8] sm:$0xff]
        %v4300 = vld [vmem:[#allocation6 + $0x1b0] sm:$0xff]
        %v4301 = vld [vmem:[#allocation6 + $0x1b8] sm:$0xff]
        %v4302 = vld [vmem:[#allocation6 + $0x1c0] sm:$0xff]
        %v4303 = vld [vmem:[#allocation6 + $0x1c8] sm:$0xff]
        %v4304 = vld [vmem:[#allocation6 + $0x1d0] sm:$0xff]
        %v4305 = vld [vmem:[#allocation6 + $0x1d8] sm:$0xff]
        %v4306 = vld [vmem:[#allocation6 + $0x1e0] sm:$0xff]
        %v4307 = vld [vmem:[#allocation6 + $0x1e8] sm:$0xff]
        %v4308 = vld [vmem:[#allocation6 + $0x1f0] sm:$0xff]
        %v4309 = vld [vmem:[#allocation6 + $0x1f8] sm:$0xff]
        %v4310 = vld [vmem:[#allocation6 + $0x200] sm:$0xff]
        %v4311 = vld [vmem:[#allocation6 + $0x208] sm:$0xff]
        %v4312 = vld [vmem:[#allocation6 + $0x210] sm:$0xff]
        %v4313 = vld [vmem:[#allocation6 + $0x218] sm:$0xff]
        %v4314 = vld [vmem:[#allocation6 + $0x220] sm:$0xff]
        %v4315 = vld [vmem:[#allocation6 + $0x228] sm:$0xff]
        %v4316 = vld [vmem:[#allocation6 + $0x230] sm:$0xff]
        %v4317 = vld [vmem:[#allocation6 + $0x238] sm:$0xff]
        %v4318 = vld [vmem:[#allocation6 + $0x240] sm:$0xff]
        %v4319 = vld [vmem:[#allocation6 + $0x248] sm:$0xff]
        %v4320 = vld [vmem:[#allocation6 + $0x250] sm:$0xff]
        %v4321 = vld [vmem:[#allocation6 + $0x258] sm:$0xff]
        %v4322 = vld [vmem:[#allocation6 + $0x260] sm:$0xff]
        %v4323 = vld [vmem:[#allocation6 + $0x268] sm:$0xff]
        %v4324 = vld [vmem:[#allocation6 + $0x270] sm:$0xff]
        %v4325 = vld [vmem:[#allocation6 + $0x278] sm:$0xff]
        %v4326 = vld [vmem:[#allocation6 + $0x280] sm:$0xff]
        %v4327 = vld [vmem:[#allocation6 + $0x288] sm:$0xff]
        %v4328 = vld [vmem:[#allocation6 + $0x290] sm:$0xff]
        %v4329 = vld [vmem:[#allocation6 + $0x298] sm:$0xff]
        %v4330 = vld [vmem:[#allocation6 + $0x2a0] sm:$0xff]
        %v4331 = vld [vmem:[#allocation6 + $0x2a8] sm:$0xff]
        %v4332 = vld [vmem:[#allocation6 + $0x2b0] sm:$0xff]
        %v4333 = vld [vmem:[#allocation6 + $0x2b8] sm:$0xff]
        %v4334 = vld [vmem:[#allocation6 + $0x2c0] sm:$0xff]
        %v4335 = vld [vmem:[#allocation6 + $0x2c8] sm:$0xff]
        %v4336 = vld [vmem:[#allocation6 + $0x2d0] sm:$0xff]
        %v4337 = vld [vmem:[#allocation6 + $0x2d8] sm:$0xff]
        %v4338 = vld [vmem:[#allocation6 + $0x2e0] sm:$0xff]
        %v4339 = vld [vmem:[#allocation6 + $0x2e8] sm:$0xff]
        %v4340 = vld [vmem:[#allocation6 + $0x2f0] sm:$0xff]
        %v4341 = vld [vmem:[#allocation6 + $0x2f8] sm:$0xff]
        %v4342 = vld [vmem:[#allocation6 + $0x300] sm:$0xff]
        %v4343 = vld [vmem:[#allocation6 + $0x308] sm:$0xff]
        %v4344 = vld [vmem:[#allocation6 + $0x310] sm:$0xff]
        %v4345 = vld [vmem:[#allocation6 + $0x318] sm:$0xff]
        %v4346 = vld [vmem:[#allocation6 + $0x320] sm:$0xff]
        %v4347 = vld [vmem:[#allocation6 + $0x328] sm:$0xff]
        %v4348 = vld [vmem:[#allocation6 + $0x330] sm:$0xff]
        %v4349 = vld [vmem:[#allocation6 + $0x338] sm:$0xff]
        %v4350 = vld [vmem:[#allocation6 + $0x340] sm:$0xff]
        %v4351 = vld [vmem:[#allocation6 + $0x348] sm:$0xff]
        %v4352 = vld [vmem:[#allocation6 + $0x350] sm:$0xff]
        %v4353 = vld [vmem:[#allocation6 + $0x358] sm:$0xff]
        %v4354 = vld [vmem:[#allocation6 + $0x360] sm:$0xff]
        %v4355 = vld [vmem:[#allocation6 + $0x368] sm:$0xff]
        %v4356 = vld [vmem:[#allocation6 + $0x370] sm:$0xff]
        %v4357 = vld [vmem:[#allocation6 + $0x378] sm:$0xff]
        %v4358 = vld [vmem:[#allocation6 + $0x380] sm:$0xff]
        %v4359 = vld [vmem:[#allocation6 + $0x388] sm:$0xff]
        %v4360 = vld [vmem:[#allocation6 + $0x390] sm:$0xff]
        %v4361 = vld [vmem:[#allocation6 + $0x398] sm:$0xff]
        %v4362 = vld [vmem:[#allocation6 + $0x3a0] sm:$0xff]
        %v4363 = vld [vmem:[#allocation6 + $0x3a8] sm:$0xff]
        %v4364 = vld [vmem:[#allocation6 + $0x3b0] sm:$0xff]
        %v4365 = vld [vmem:[#allocation6 + $0x3b8] sm:$0xff]
        %v4366 = vld [vmem:[#allocation6 + $0x3c0] sm:$0xff]
        %v4367 = vld [vmem:[#allocation6 + $0x3c8] sm:$0xff]
        %v4368 = vld [vmem:[#allocation6 + $0x3d0] sm:$0xff]
        %v4369 = vld [vmem:[#allocation6 + $0x3d8] sm:$0xff]
        %v4370 = vld [vmem:[#allocation6 + $0x3e0] sm:$0xff]
        %v4371 = vld [vmem:[#allocation6 + $0x3e8] sm:$0xff]
        %v4372 = vld [vmem:[#allocation6 + $0x3f0] sm:$0xff]
        %v4373 = vld [vmem:[#allocation6 + $0x3f8] sm:$0xff]
        %v4374 = vld [vmem:[#allocation6 + $0x400] sm:$0xff]
        %v4375 = vld [vmem:[#allocation6 + $0x408] sm:$0xff]
        %v4376 = vld [vmem:[#allocation6 + $0x410] sm:$0xff]
        %v4377 = vld [vmem:[#allocation6 + $0x418] sm:$0xff]
        %v4378 = vld [vmem:[#allocation6 + $0x420] sm:$0xff]
        %v4379 = vld [vmem:[#allocation6 + $0x428] sm:$0xff]
        %v4380 = vld [vmem:[#allocation6 + $0x430] sm:$0xff]
        %v4381 = vld [vmem:[#allocation6 + $0x438] sm:$0xff]
        %v4382 = vld [vmem:[#allocation6 + $0x440] sm:$0xff]
        %v4383 = vld [vmem:[#allocation6 + $0x448] sm:$0xff]
        %v4384 = vld [vmem:[#allocation6 + $0x450] sm:$0xff]
        %v4385 = vld [vmem:[#allocation6 + $0x458] sm:$0xff]
        %v4386 = vld [vmem:[#allocation6 + $0x460] sm:$0xff]
        %v4387 = vld [vmem:[#allocation6 + $0x468] sm:$0xff]
        %v4388 = vld [vmem:[#allocation6 + $0x470] sm:$0xff]
        %v4389 = vld [vmem:[#allocation6 + $0x478] sm:$0xff]
        %v4390 = vld [vmem:[#allocation6 + $0x480] sm:$0xff]
        %v4391 = vld [vmem:[#allocation6 + $0x488] sm:$0xff]
        %v4392 = vld [vmem:[#allocation6 + $0x490] sm:$0xff]
        %v4393 = vld [vmem:[#allocation6 + $0x498] sm:$0xff]
        %v4394 = vld [vmem:[#allocation6 + $0x4a0] sm:$0xff]
        %v4395 = vld [vmem:[#allocation6 + $0x4a8] sm:$0xff]
        %v4396 = vld [vmem:[#allocation6 + $0x4b0] sm:$0xff]
        %v4397 = vld [vmem:[#allocation6 + $0x4b8] sm:$0xff]
        %v4398 = vld [vmem:[#allocation6 + $0x4c0] sm:$0xff]
        %v4399 = vld [vmem:[#allocation6 + $0x4c8] sm:$0xff]
        %v4400 = vld [vmem:[#allocation6 + $0x4d0] sm:$0xff]
        %v4401 = vld [vmem:[#allocation6 + $0x4d8] sm:$0xff]
        %v4402 = vld [vmem:[#allocation6 + $0x4e0] sm:$0xff]
        %v4403 = vld [vmem:[#allocation6 + $0x4e8] sm:$0xff]
        %v4404 = vld [vmem:[#allocation6 + $0x4f0] sm:$0xff]
        %v4405 = vld [vmem:[#allocation6 + $0x4f8] sm:$0xff]
        %v4406 = vld [vmem:[#allocation6 + $0x500] sm:$0xff]
        %v4407 = vld [vmem:[#allocation6 + $0x508] sm:$0xff]
        %v4408 = vld [vmem:[#allocation6 + $0x510] sm:$0xff]
        %v4409 = vld [vmem:[#allocation6 + $0x518] sm:$0xff]
        %v4410 = vld [vmem:[#allocation6 + $0x520] sm:$0xff]
        %v4411 = vld [vmem:[#allocation6 + $0x528] sm:$0xff]
        %v4412 = vld [vmem:[#allocation6 + $0x530] sm:$0xff]
        %v4413 = vld [vmem:[#allocation6 + $0x538] sm:$0xff]
        %v4414 = vld [vmem:[#allocation6 + $0x540] sm:$0xff]
        %v4415 = vld [vmem:[#allocation6 + $0x548] sm:$0xff]
        %v4416 = vld [vmem:[#allocation6 + $0x550] sm:$0xff]
        %v4417 = vld [vmem:[#allocation6 + $0x558] sm:$0xff]
        %v4418 = vld [vmem:[#allocation6 + $0x560] sm:$0xff]
        %v4419 = vld [vmem:[#allocation6 + $0x568] sm:$0xff]
        %v4420 = vld [vmem:[#allocation6 + $0x570] sm:$0xff]
        %v4421 = vld [vmem:[#allocation6 + $0x578] sm:$0xff]
        %v4422 = vld [vmem:[#allocation6 + $0x580] sm:$0xff]
        %v4423 = vld [vmem:[#allocation6 + $0x588] sm:$0xff]
        %v4424 = vld [vmem:[#allocation6 + $0x590] sm:$0xff]
        %v4425 = vld [vmem:[#allocation6 + $0x598] sm:$0xff]
        %v4426 = vld [vmem:[#allocation6 + $0x5a0] sm:$0xff]
        %v4427 = vld [vmem:[#allocation6 + $0x5a8] sm:$0xff]
        %v4428 = vld [vmem:[#allocation6 + $0x5b0] sm:$0xff]
        %v4429 = vld [vmem:[#allocation6 + $0x5b8] sm:$0xff]
        %v4430 = vld [vmem:[#allocation6 + $0x5c0] sm:$0xff]
        %v4431 = vld [vmem:[#allocation6 + $0x5c8] sm:$0xff]
        %v4432 = vld [vmem:[#allocation6 + $0x5d0] sm:$0xff]
        %v4433 = vld [vmem:[#allocation6 + $0x5d8] sm:$0xff]
        %v4434 = vld [vmem:[#allocation6 + $0x5e0] sm:$0xff]
        %v4435 = vld [vmem:[#allocation6 + $0x5e8] sm:$0xff]
        %v4436 = vld [vmem:[#allocation6 + $0x5f0] sm:$0xff]
        %v4437 = vld [vmem:[#allocation6 + $0x5f8] sm:$0xff]
        %v4438 = vld [vmem:[#allocation6 + $0x600] sm:$0xff]
        %v4439 = vld [vmem:[#allocation6 + $0x608] sm:$0xff]
        %v4440 = vld [vmem:[#allocation6 + $0x610] sm:$0xff]
        %v4441 = vld [vmem:[#allocation6 + $0x618] sm:$0xff]
        %v4442 = vld [vmem:[#allocation6 + $0x620] sm:$0xff]
        %v4443 = vld [vmem:[#allocation6 + $0x628] sm:$0xff]
        %v4444 = vld [vmem:[#allocation6 + $0x630] sm:$0xff]
        %v4445 = vld [vmem:[#allocation6 + $0x638] sm:$0xff]
        %v4446 = vld [vmem:[#allocation6 + $0x640] sm:$0xff]
        %v4447 = vld [vmem:[#allocation6 + $0x648] sm:$0xff]
        %v4448 = vld [vmem:[#allocation6 + $0x650] sm:$0xff]
        %v4449 = vld [vmem:[#allocation6 + $0x658] sm:$0xff]
        %v4450 = vld [vmem:[#allocation6 + $0x660] sm:$0xff]
        %v4451 = vld [vmem:[#allocation6 + $0x668] sm:$0xff]
        %v4452 = vld [vmem:[#allocation6 + $0x670] sm:$0xff]
        %v4453 = vld [vmem:[#allocation6 + $0x678] sm:$0xff]
        %v4454 = vld [vmem:[#allocation6 + $0x680] sm:$0xff]
        %v4455 = vld [vmem:[#allocation6 + $0x688] sm:$0xff]
        %v4456 = vld [vmem:[#allocation6 + $0x690] sm:$0xff]
        %v4457 = vld [vmem:[#allocation6 + $0x698] sm:$0xff]
        %v4458 = vld [vmem:[#allocation6 + $0x6a0] sm:$0xff]
        %v4459 = vld [vmem:[#allocation6 + $0x6a8] sm:$0xff]
        %v4460 = vld [vmem:[#allocation6 + $0x6b0] sm:$0xff]
        %v4461 = vld [vmem:[#allocation6 + $0x6b8] sm:$0xff]
        %v4462 = vld [vmem:[#allocation6 + $0x6c0] sm:$0xff]
        %v4463 = vld [vmem:[#allocation6 + $0x6c8] sm:$0xff]
        %v4464 = vld [vmem:[#allocation6 + $0x6d0] sm:$0xff]
        %v4465 = vld [vmem:[#allocation6 + $0x6d8] sm:$0xff]
        %v4466 = vld [vmem:[#allocation6 + $0x6e0] sm:$0xff]
        %v4467 = vld [vmem:[#allocation6 + $0x6e8] sm:$0xff]
        %v4468 = vld [vmem:[#allocation6 + $0x6f0] sm:$0xff]
        %v4469 = vld [vmem:[#allocation6 + $0x6f8] sm:$0xff]
        %v4470 = vld [vmem:[#allocation6 + $0x700] sm:$0xff]
        %v4471 = vld [vmem:[#allocation6 + $0x708] sm:$0xff]
        %v4472 = vld [vmem:[#allocation6 + $0x710] sm:$0xff]
        %v4473 = vld [vmem:[#allocation6 + $0x718] sm:$0xff]
        %v4474 = vld [vmem:[#allocation6 + $0x720] sm:$0xff]
        %v4475 = vld [vmem:[#allocation6 + $0x728] sm:$0xff]
        %v4476 = vld [vmem:[#allocation6 + $0x730] sm:$0xff]
        %v4477 = vld [vmem:[#allocation6 + $0x738] sm:$0xff]
        %v4478 = vld [vmem:[#allocation6 + $0x740] sm:$0xff]
        %v4479 = vld [vmem:[#allocation6 + $0x748] sm:$0xff]
        %v4480 = vld [vmem:[#allocation6 + $0x750] sm:$0xff]
        %v4481 = vld [vmem:[#allocation6 + $0x758] sm:$0xff]
        %v4482 = vld [vmem:[#allocation6 + $0x760] sm:$0xff]
        %v4483 = vld [vmem:[#allocation6 + $0x768] sm:$0xff]
        %v4484 = vld [vmem:[#allocation6 + $0x770] sm:$0xff]
        %v4485 = vld [vmem:[#allocation6 + $0x778] sm:$0xff]
        %v4486 = vld [vmem:[#allocation6 + $0x780] sm:$0xff]
        %v4487 = vld [vmem:[#allocation6 + $0x788] sm:$0xff]
        %v4488 = vld [vmem:[#allocation6 + $0x790] sm:$0xff]
        %v4489 = vld [vmem:[#allocation6 + $0x798] sm:$0xff]
        %v4490 = vld [vmem:[#allocation6 + $0x7a0] sm:$0xff]
        %v4491 = vld [vmem:[#allocation6 + $0x7a8] sm:$0xff]
        %v4492 = vld [vmem:[#allocation6 + $0x7b0] sm:$0xff]
        %v4493 = vld [vmem:[#allocation6 + $0x7b8] sm:$0xff]
        %v4494 = vld [vmem:[#allocation6 + $0x7c0] sm:$0xff]
        %v4495 = vld [vmem:[#allocation6 + $0x7c8] sm:$0xff]
        %v4496 = vld [vmem:[#allocation6 + $0x7d0] sm:$0xff]
        %v4497 = vld [vmem:[#allocation6 + $0x7d8] sm:$0xff]
        %v4498 = vld [vmem:[#allocation6 + $0x7e0] sm:$0xff]
        %v4499 = vld [vmem:[#allocation6 + $0x7e8] sm:$0xff]
        %v4500 = vld [vmem:[#allocation6 + $0x7f0] sm:$0xff]
        %v4501 = vld [vmem:[#allocation6 + $0x7f8] sm:$0xff]
        %v4502 = vld [vmem:[%s10] sm:$0xff]
        %v4503 = vld [vmem:[%s10 + $0x8] sm:$0xff]
        %v4504 = vld [vmem:[%s10 + $0x10] sm:$0xff]
        %v4505 = vld [vmem:[%s10 + $0x18] sm:$0xff]
        %v4506 = vld [vmem:[%s10 + $0x20] sm:$0xff]
        %v4507 = vld [vmem:[%s10 + $0x28] sm:$0xff]
        %v4508 = vld [vmem:[%s10 + $0x30] sm:$0xff]
        %v4509 = vld [vmem:[%s10 + $0x38] sm:$0xff]
        %v4510 = vld [vmem:[%s10 + $0x40] sm:$0xff]
        %v4511 = vld [vmem:[%s10 + $0x48] sm:$0xff]
        %v4512 = vld [vmem:[%s10 + $0x50] sm:$0xff]
        %v4513 = vld [vmem:[%s10 + $0x58] sm:$0xff]
        %v4514 = vld [vmem:[%s10 + $0x60] sm:$0xff]
        %v4515 = vld [vmem:[%s10 + $0x68] sm:$0xff]
        %v4516 = vld [vmem:[%s10 + $0x70] sm:$0xff]
        %v4517 = vld [vmem:[%s10 + $0x78] sm:$0xff]
        %v4518 = vld [vmem:[%s10 + $0x80] sm:$0xff]
        %v4519 = vld [vmem:[%s10 + $0x88] sm:$0xff]
        %v4520 = vld [vmem:[%s10 + $0x90] sm:$0xff]
        %v4521 = vld [vmem:[%s10 + $0x98] sm:$0xff]
        %v4522 = vld [vmem:[%s10 + $0xa0] sm:$0xff]
        %v4523 = vld [vmem:[%s10 + $0xa8] sm:$0xff]
        %v4524 = vld [vmem:[%s10 + $0xb0] sm:$0xff]
        %v4525 = vld [vmem:[%s10 + $0xb8] sm:$0xff]
        %v4526 = vld [vmem:[%s10 + $0xc0] sm:$0xff]
        %v4527 = vld [vmem:[%s10 + $0xc8] sm:$0xff]
        %v4528 = vld [vmem:[%s10 + $0xd0] sm:$0xff]
        %v4529 = vld [vmem:[%s10 + $0xd8] sm:$0xff]
        %v4530 = vld [vmem:[%s10 + $0xe0] sm:$0xff]
        %v4531 = vld [vmem:[%s10 + $0xe8] sm:$0xff]
        %v4532 = vld [vmem:[%s10 + $0xf0] sm:$0xff]
        %v4533 = vld [vmem:[%s10 + $0xf8] sm:$0xff]
        %v4534 = vld [vmem:[%s10 + $0x100] sm:$0xff]
        %v4535 = vld [vmem:[%s10 + $0x108] sm:$0xff]
        %v4536 = vld [vmem:[%s10 + $0x110] sm:$0xff]
        %v4537 = vld [vmem:[%s10 + $0x118] sm:$0xff]
        %v4538 = vld [vmem:[%s10 + $0x120] sm:$0xff]
        %v4539 = vld [vmem:[%s10 + $0x128] sm:$0xff]
        %v4540 = vld [vmem:[%s10 + $0x130] sm:$0xff]
        %v4541 = vld [vmem:[%s10 + $0x138] sm:$0xff]
        %v4542 = vld [vmem:[%s10 + $0x140] sm:$0xff]
        %v4543 = vld [vmem:[%s10 + $0x148] sm:$0xff]
        %v4544 = vld [vmem:[%s10 + $0x150] sm:$0xff]
        %v4545 = vld [vmem:[%s10 + $0x158] sm:$0xff]
        %v4546 = vld [vmem:[%s10 + $0x160] sm:$0xff]
        %v4547 = vld [vmem:[%s10 + $0x168] sm:$0xff]
        %v4548 = vld [vmem:[%s10 + $0x170] sm:$0xff]
        %v4549 = vld [vmem:[%s10 + $0x178] sm:$0xff]
        %v4550 = vld [vmem:[%s10 + $0x180] sm:$0xff]
        %v4551 = vld [vmem:[%s10 + $0x188] sm:$0xff]
        %v4552 = vld [vmem:[%s10 + $0x190] sm:$0xff]
        %v4553 = vld [vmem:[%s10 + $0x198] sm:$0xff]
        %v4554 = vld [vmem:[%s10 + $0x1a0] sm:$0xff]
        %v4555 = vld [vmem:[%s10 + $0x1a8] sm:$0xff]
        %v4556 = vld [vmem:[%s10 + $0x1b0] sm:$0xff]
        %v4557 = vld [vmem:[%s10 + $0x1b8] sm:$0xff]
        %v4558 = vld [vmem:[%s10 + $0x1c0] sm:$0xff]
        %v4559 = vld [vmem:[%s10 + $0x1c8] sm:$0xff]
        %v4560 = vld [vmem:[%s10 + $0x1d0] sm:$0xff]
        %v4561 = vld [vmem:[%s10 + $0x1d8] sm:$0xff]
        %v4562 = vld [vmem:[%s10 + $0x1e0] sm:$0xff]
        %v4563 = vld [vmem:[%s10 + $0x1e8] sm:$0xff]
        %v4564 = vld [vmem:[%s10 + $0x1f0] sm:$0xff]
        %v4565 = vld [vmem:[%s10 + $0x1f8] sm:$0xff]
        %v4566 = vld [vmem:[%s10 + $0x200] sm:$0xff]
        %v4567 = vld [vmem:[%s10 + $0x208] sm:$0xff]
        %v4568 = vld [vmem:[%s10 + $0x210] sm:$0xff]
        %v4569 = vld [vmem:[%s10 + $0x218] sm:$0xff]
        %v4570 = vld [vmem:[%s10 + $0x220] sm:$0xff]
        %v4571 = vld [vmem:[%s10 + $0x228] sm:$0xff]
        %v4572 = vld [vmem:[%s10 + $0x230] sm:$0xff]
        %v4573 = vld [vmem:[%s10 + $0x238] sm:$0xff]
        %v4574 = vld [vmem:[%s10 + $0x240] sm:$0xff]
        %v4575 = vld [vmem:[%s10 + $0x248] sm:$0xff]
        %v4576 = vld [vmem:[%s10 + $0x250] sm:$0xff]
        %v4577 = vld [vmem:[%s10 + $0x258] sm:$0xff]
        %v4578 = vld [vmem:[%s10 + $0x260] sm:$0xff]
        %v4579 = vld [vmem:[%s10 + $0x268] sm:$0xff]
        %v4580 = vld [vmem:[%s10 + $0x270] sm:$0xff]
        %v4581 = vld [vmem:[%s10 + $0x278] sm:$0xff]
        %v4582 = vld [vmem:[%s10 + $0x280] sm:$0xff]
        %v4583 = vld [vmem:[%s10 + $0x288] sm:$0xff]
        %v4584 = vld [vmem:[%s10 + $0x290] sm:$0xff]
        %v4585 = vld [vmem:[%s10 + $0x298] sm:$0xff]
        %v4586 = vld [vmem:[%s10 + $0x2a0] sm:$0xff]
        %v4587 = vld [vmem:[%s10 + $0x2a8] sm:$0xff]
        %v4588 = vld [vmem:[%s10 + $0x2b0] sm:$0xff]
        %v4589 = vld [vmem:[%s10 + $0x2b8] sm:$0xff]
        %v4590 = vld [vmem:[%s10 + $0x2c0] sm:$0xff]
        %v4591 = vld [vmem:[%s10 + $0x2c8] sm:$0xff]
        %v4592 = vld [vmem:[%s10 + $0x2d0] sm:$0xff]
        %v4593 = vld [vmem:[%s10 + $0x2d8] sm:$0xff]
        %v4594 = vld [vmem:[%s10 + $0x2e0] sm:$0xff]
        %v4595 = vld [vmem:[%s10 + $0x2e8] sm:$0xff]
        %v4596 = vld [vmem:[%s10 + $0x2f0] sm:$0xff]
        %v4597 = vld [vmem:[%s10 + $0x2f8] sm:$0xff]
        %v4598 = vld [vmem:[%s10 + $0x300] sm:$0xff]
        %v4599 = vld [vmem:[%s10 + $0x308] sm:$0xff]
        %v4600 = vld [vmem:[%s10 + $0x310] sm:$0xff]
        %v4601 = vld [vmem:[%s10 + $0x318] sm:$0xff]
        %v4602 = vld [vmem:[%s10 + $0x320] sm:$0xff]
        %v4603 = vld [vmem:[%s10 + $0x328] sm:$0xff]
        %v4604 = vld [vmem:[%s10 + $0x330] sm:$0xff]
        %v4605 = vld [vmem:[%s10 + $0x338] sm:$0xff]
        %v4606 = vld [vmem:[%s10 + $0x340] sm:$0xff]
        %v4607 = vld [vmem:[%s10 + $0x348] sm:$0xff]
        %v4608 = vld [vmem:[%s10 + $0x350] sm:$0xff]
        %v4609 = vld [vmem:[%s10 + $0x358] sm:$0xff]
        %v4610 = vld [vmem:[%s10 + $0x360] sm:$0xff]
        %v4611 = vld [vmem:[%s10 + $0x368] sm:$0xff]
        %v4612 = vld [vmem:[%s10 + $0x370] sm:$0xff]
        %v4613 = vld [vmem:[%s10 + $0x378] sm:$0xff]
        %v4614 = vld [vmem:[%s10 + $0x380] sm:$0xff]
        %v4615 = vld [vmem:[%s10 + $0x388] sm:$0xff]
        %v4616 = vld [vmem:[%s10 + $0x390] sm:$0xff]
        %v4617 = vld [vmem:[%s10 + $0x398] sm:$0xff]
        %v4618 = vld [vmem:[%s10 + $0x3a0] sm:$0xff]
        %v4619 = vld [vmem:[%s10 + $0x3a8] sm:$0xff]
        %v4620 = vld [vmem:[%s10 + $0x3b0] sm:$0xff]
        %v4621 = vld [vmem:[%s10 + $0x3b8] sm:$0xff]
        %v4622 = vld [vmem:[%s10 + $0x3c0] sm:$0xff]
        %v4623 = vld [vmem:[%s10 + $0x3c8] sm:$0xff]
        %v4624 = vld [vmem:[%s10 + $0x3d0] sm:$0xff]
        %v4625 = vld [vmem:[%s10 + $0x3d8] sm:$0xff]
        %v4626 = vld [vmem:[%s10 + $0x3e0] sm:$0xff]
        %v4627 = vld [vmem:[%s10 + $0x3e8] sm:$0xff]
        %v4628 = vld [vmem:[%s10 + $0x3f0] sm:$0xff]
        %v4629 = vld [vmem:[%s10 + $0x3f8] sm:$0xff]
        %4631 = vset.pattern.permute.xlu0 0
        %4632 = vperm.xlu0 %4631, %v4502
        %v4633 = vpop.permute.xlu0 %4632
        %4636 = vset.pattern.permute.xlu0 0
        %4637 = vperm.xlu0 %4636, %v4503
        %v4638 = vpop.permute.xlu0 %4637
        %4641 = vset.pattern.permute.xlu0 0
        %4642 = vperm.xlu0 %4641, %v4504
        %v4643 = vpop.permute.xlu0 %4642
        %4646 = vset.pattern.permute.xlu0 0
        %4647 = vperm.xlu0 %4646, %v4505
        %v4648 = vpop.permute.xlu0 %4647
        %4651 = vset.pattern.permute.xlu0 0
        %4652 = vperm.xlu0 %4651, %v4506
        %v4653 = vpop.permute.xlu0 %4652
        %4656 = vset.pattern.permute.xlu0 0
        %4657 = vperm.xlu0 %4656, %v4507
        %v4658 = vpop.permute.xlu0 %4657
        %4661 = vset.pattern.permute.xlu0 0
        %4662 = vperm.xlu0 %4661, %v4508
        %v4663 = vpop.permute.xlu0 %4662
        %4666 = vset.pattern.permute.xlu0 0
        %4667 = vperm.xlu0 %4666, %v4509
        %v4668 = vpop.permute.xlu0 %4667
        %4671 = vset.pattern.permute.xlu0 0
        %4672 = vperm.xlu0 %4671, %v4510
        %v4673 = vpop.permute.xlu0 %4672
        %4676 = vset.pattern.permute.xlu0 0
        %4677 = vperm.xlu0 %4676, %v4511
        %v4678 = vpop.permute.xlu0 %4677
        %4681 = vset.pattern.permute.xlu0 0
        %4682 = vperm.xlu0 %4681, %v4512
        %v4683 = vpop.permute.xlu0 %4682
        %4686 = vset.pattern.permute.xlu0 0
        %4687 = vperm.xlu0 %4686, %v4513
        %v4688 = vpop.permute.xlu0 %4687
        %4691 = vset.pattern.permute.xlu0 0
        %4692 = vperm.xlu0 %4691, %v4514
        %v4693 = vpop.permute.xlu0 %4692
        %4696 = vset.pattern.permute.xlu0 0
        %4697 = vperm.xlu0 %4696, %v4515
        %v4698 = vpop.permute.xlu0 %4697
        %4701 = vset.pattern.permute.xlu0 0
        %4702 = vperm.xlu0 %4701, %v4516
        %v4703 = vpop.permute.xlu0 %4702
        %4706 = vset.pattern.permute.xlu0 0
        %4707 = vperm.xlu0 %4706, %v4517
        %v4708 = vpop.permute.xlu0 %4707
        %4711 = vset.pattern.permute.xlu0 0
        %4712 = vperm.xlu0 %4711, %v4518
        %v4713 = vpop.permute.xlu0 %4712
        %4716 = vset.pattern.permute.xlu0 0
        %4717 = vperm.xlu0 %4716, %v4519
        %v4718 = vpop.permute.xlu0 %4717
        %4721 = vset.pattern.permute.xlu0 0
        %4722 = vperm.xlu0 %4721, %v4520
        %v4723 = vpop.permute.xlu0 %4722
        %4726 = vset.pattern.permute.xlu0 0
        %4727 = vperm.xlu0 %4726, %v4521
        %v4728 = vpop.permute.xlu0 %4727
        %4731 = vset.pattern.permute.xlu0 0
        %4732 = vperm.xlu0 %4731, %v4522
        %v4733 = vpop.permute.xlu0 %4732
        %4736 = vset.pattern.permute.xlu0 0
        %4737 = vperm.xlu0 %4736, %v4523
        %v4738 = vpop.permute.xlu0 %4737
        %4741 = vset.pattern.permute.xlu0 0
        %4742 = vperm.xlu0 %4741, %v4524
        %v4743 = vpop.permute.xlu0 %4742
        %4746 = vset.pattern.permute.xlu0 0
        %4747 = vperm.xlu0 %4746, %v4525
        %v4748 = vpop.permute.xlu0 %4747
        %4751 = vset.pattern.permute.xlu0 0
        %4752 = vperm.xlu0 %4751, %v4526
        %v4753 = vpop.permute.xlu0 %4752
        %4756 = vset.pattern.permute.xlu0 0
        %4757 = vperm.xlu0 %4756, %v4527
        %v4758 = vpop.permute.xlu0 %4757
        %4761 = vset.pattern.permute.xlu0 0
        %4762 = vperm.xlu0 %4761, %v4528
        %v4763 = vpop.permute.xlu0 %4762
        %4766 = vset.pattern.permute.xlu0 0
        %4767 = vperm.xlu0 %4766, %v4529
        %v4768 = vpop.permute.xlu0 %4767
        %4771 = vset.pattern.permute.xlu0 0
        %4772 = vperm.xlu0 %4771, %v4530
        %v4773 = vpop.permute.xlu0 %4772
        %4776 = vset.pattern.permute.xlu0 0
        %4777 = vperm.xlu0 %4776, %v4531
        %v4778 = vpop.permute.xlu0 %4777
        %4781 = vset.pattern.permute.xlu0 0
        %4782 = vperm.xlu0 %4781, %v4532
        %v4783 = vpop.permute.xlu0 %4782
        %4786 = vset.pattern.permute.xlu0 0
        %4787 = vperm.xlu0 %4786, %v4533
        %v4788 = vpop.permute.xlu0 %4787
        %4791 = vset.pattern.permute.xlu0 0
        %4792 = vperm.xlu0 %4791, %v4534
        %v4793 = vpop.permute.xlu0 %4792
        %4796 = vset.pattern.permute.xlu0 0
        %4797 = vperm.xlu0 %4796, %v4535
        %v4798 = vpop.permute.xlu0 %4797
        %4801 = vset.pattern.permute.xlu0 0
        %4802 = vperm.xlu0 %4801, %v4536
        %v4803 = vpop.permute.xlu0 %4802
        %4806 = vset.pattern.permute.xlu0 0
        %4807 = vperm.xlu0 %4806, %v4537
        %v4808 = vpop.permute.xlu0 %4807
        %4811 = vset.pattern.permute.xlu0 0
        %4812 = vperm.xlu0 %4811, %v4538
        %v4813 = vpop.permute.xlu0 %4812
        %4816 = vset.pattern.permute.xlu0 0
        %4817 = vperm.xlu0 %4816, %v4539
        %v4818 = vpop.permute.xlu0 %4817
        %4821 = vset.pattern.permute.xlu0 0
        %4822 = vperm.xlu0 %4821, %v4540
        %v4823 = vpop.permute.xlu0 %4822
        %4826 = vset.pattern.permute.xlu0 0
        %4827 = vperm.xlu0 %4826, %v4541
        %v4828 = vpop.permute.xlu0 %4827
        %4831 = vset.pattern.permute.xlu0 0
        %4832 = vperm.xlu0 %4831, %v4542
        %v4833 = vpop.permute.xlu0 %4832
        %4836 = vset.pattern.permute.xlu0 0
        %4837 = vperm.xlu0 %4836, %v4543
        %v4838 = vpop.permute.xlu0 %4837
        %4841 = vset.pattern.permute.xlu0 0
        %4842 = vperm.xlu0 %4841, %v4544
        %v4843 = vpop.permute.xlu0 %4842
        %4846 = vset.pattern.permute.xlu0 0
        %4847 = vperm.xlu0 %4846, %v4545
        %v4848 = vpop.permute.xlu0 %4847
        %4851 = vset.pattern.permute.xlu0 0
        %4852 = vperm.xlu0 %4851, %v4546
        %v4853 = vpop.permute.xlu0 %4852
        %4856 = vset.pattern.permute.xlu0 0
        %4857 = vperm.xlu0 %4856, %v4547
        %v4858 = vpop.permute.xlu0 %4857
        %4861 = vset.pattern.permute.xlu0 0
        %4862 = vperm.xlu0 %4861, %v4548
        %v4863 = vpop.permute.xlu0 %4862
        %4866 = vset.pattern.permute.xlu0 0
        %4867 = vperm.xlu0 %4866, %v4549
        %v4868 = vpop.permute.xlu0 %4867
        %4871 = vset.pattern.permute.xlu0 0
        %4872 = vperm.xlu0 %4871, %v4550
        %v4873 = vpop.permute.xlu0 %4872
        %4876 = vset.pattern.permute.xlu0 0
        %4877 = vperm.xlu0 %4876, %v4551
        %v4878 = vpop.permute.xlu0 %4877
        %4881 = vset.pattern.permute.xlu0 0
        %4882 = vperm.xlu0 %4881, %v4552
        %v4883 = vpop.permute.xlu0 %4882
        %4886 = vset.pattern.permute.xlu0 0
        %4887 = vperm.xlu0 %4886, %v4553
        %v4888 = vpop.permute.xlu0 %4887
        %4891 = vset.pattern.permute.xlu0 0
        %4892 = vperm.xlu0 %4891, %v4554
        %v4893 = vpop.permute.xlu0 %4892
        %4896 = vset.pattern.permute.xlu0 0
        %4897 = vperm.xlu0 %4896, %v4555
        %v4898 = vpop.permute.xlu0 %4897
        %4901 = vset.pattern.permute.xlu0 0
        %4902 = vperm.xlu0 %4901, %v4556
        %v4903 = vpop.permute.xlu0 %4902
        %4906 = vset.pattern.permute.xlu0 0
        %4907 = vperm.xlu0 %4906, %v4557
        %v4908 = vpop.permute.xlu0 %4907
        %4911 = vset.pattern.permute.xlu0 0
        %4912 = vperm.xlu0 %4911, %v4558
        %v4913 = vpop.permute.xlu0 %4912
        %4916 = vset.pattern.permute.xlu0 0
        %4917 = vperm.xlu0 %4916, %v4559
        %v4918 = vpop.permute.xlu0 %4917
        %4921 = vset.pattern.permute.xlu0 0
        %4922 = vperm.xlu0 %4921, %v4560
        %v4923 = vpop.permute.xlu0 %4922
        %4926 = vset.pattern.permute.xlu0 0
        %4927 = vperm.xlu0 %4926, %v4561
        %v4928 = vpop.permute.xlu0 %4927
        %4931 = vset.pattern.permute.xlu0 0
        %4932 = vperm.xlu0 %4931, %v4562
        %v4933 = vpop.permute.xlu0 %4932
        %4936 = vset.pattern.permute.xlu0 0
        %4937 = vperm.xlu0 %4936, %v4563
        %v4938 = vpop.permute.xlu0 %4937
        %4941 = vset.pattern.permute.xlu0 0
        %4942 = vperm.xlu0 %4941, %v4564
        %v4943 = vpop.permute.xlu0 %4942
        %4946 = vset.pattern.permute.xlu0 0
        %4947 = vperm.xlu0 %4946, %v4565
        %v4948 = vpop.permute.xlu0 %4947
        %4951 = vset.pattern.permute.xlu0 0
        %4952 = vperm.xlu0 %4951, %v4566
        %v4953 = vpop.permute.xlu0 %4952
        %4956 = vset.pattern.permute.xlu0 0
        %4957 = vperm.xlu0 %4956, %v4567
        %v4958 = vpop.permute.xlu0 %4957
        %4961 = vset.pattern.permute.xlu0 0
        %4962 = vperm.xlu0 %4961, %v4568
        %v4963 = vpop.permute.xlu0 %4962
        %4966 = vset.pattern.permute.xlu0 0
        %4967 = vperm.xlu0 %4966, %v4569
        %v4968 = vpop.permute.xlu0 %4967
        %4971 = vset.pattern.permute.xlu0 0
        %4972 = vperm.xlu0 %4971, %v4570
        %v4973 = vpop.permute.xlu0 %4972
        %4976 = vset.pattern.permute.xlu0 0
        %4977 = vperm.xlu0 %4976, %v4571
        %v4978 = vpop.permute.xlu0 %4977
        %4981 = vset.pattern.permute.xlu0 0
        %4982 = vperm.xlu0 %4981, %v4572
        %v4983 = vpop.permute.xlu0 %4982
        %4986 = vset.pattern.permute.xlu0 0
        %4987 = vperm.xlu0 %4986, %v4573
        %v4988 = vpop.permute.xlu0 %4987
        %4991 = vset.pattern.permute.xlu0 0
        %4992 = vperm.xlu0 %4991, %v4574
        %v4993 = vpop.permute.xlu0 %4992
        %4996 = vset.pattern.permute.xlu0 0
        %4997 = vperm.xlu0 %4996, %v4575
        %v4998 = vpop.permute.xlu0 %4997
        %5001 = vset.pattern.permute.xlu0 0
        %5002 = vperm.xlu0 %5001, %v4576
        %v5003 = vpop.permute.xlu0 %5002
        %5006 = vset.pattern.permute.xlu0 0
        %5007 = vperm.xlu0 %5006, %v4577
        %v5008 = vpop.permute.xlu0 %5007
        %5011 = vset.pattern.permute.xlu0 0
        %5012 = vperm.xlu0 %5011, %v4578
        %v5013 = vpop.permute.xlu0 %5012
        %5016 = vset.pattern.permute.xlu0 0
        %5017 = vperm.xlu0 %5016, %v4579
        %v5018 = vpop.permute.xlu0 %5017
        %5021 = vset.pattern.permute.xlu0 0
        %5022 = vperm.xlu0 %5021, %v4580
        %v5023 = vpop.permute.xlu0 %5022
        %5026 = vset.pattern.permute.xlu0 0
        %5027 = vperm.xlu0 %5026, %v4581
        %v5028 = vpop.permute.xlu0 %5027
        %5031 = vset.pattern.permute.xlu0 0
        %5032 = vperm.xlu0 %5031, %v4582
        %v5033 = vpop.permute.xlu0 %5032
        %5036 = vset.pattern.permute.xlu0 0
        %5037 = vperm.xlu0 %5036, %v4583
        %v5038 = vpop.permute.xlu0 %5037
        %5041 = vset.pattern.permute.xlu0 0
        %5042 = vperm.xlu0 %5041, %v4584
        %v5043 = vpop.permute.xlu0 %5042
        %5046 = vset.pattern.permute.xlu0 0
        %5047 = vperm.xlu0 %5046, %v4585
        %v5048 = vpop.permute.xlu0 %5047
        %5051 = vset.pattern.permute.xlu0 0
        %5052 = vperm.xlu0 %5051, %v4586
        %v5053 = vpop.permute.xlu0 %5052
        %5056 = vset.pattern.permute.xlu0 0
        %5057 = vperm.xlu0 %5056, %v4587
        %v5058 = vpop.permute.xlu0 %5057
        %5061 = vset.pattern.permute.xlu0 0
        %5062 = vperm.xlu0 %5061, %v4588
        %v5063 = vpop.permute.xlu0 %5062
        %5066 = vset.pattern.permute.xlu0 0
        %5067 = vperm.xlu0 %5066, %v4589
        %v5068 = vpop.permute.xlu0 %5067
        %5071 = vset.pattern.permute.xlu0 0
        %5072 = vperm.xlu0 %5071, %v4590
        %v5073 = vpop.permute.xlu0 %5072
        %5076 = vset.pattern.permute.xlu0 0
        %5077 = vperm.xlu0 %5076, %v4591
        %v5078 = vpop.permute.xlu0 %5077
        %5081 = vset.pattern.permute.xlu0 0
        %5082 = vperm.xlu0 %5081, %v4592
        %v5083 = vpop.permute.xlu0 %5082
        %5086 = vset.pattern.permute.xlu0 0
        %5087 = vperm.xlu0 %5086, %v4593
        %v5088 = vpop.permute.xlu0 %5087
        %5091 = vset.pattern.permute.xlu0 0
        %5092 = vperm.xlu0 %5091, %v4594
        %v5093 = vpop.permute.xlu0 %5092
        %5096 = vset.pattern.permute.xlu0 0
        %5097 = vperm.xlu0 %5096, %v4595
        %v5098 = vpop.permute.xlu0 %5097
        %5101 = vset.pattern.permute.xlu0 0
        %5102 = vperm.xlu0 %5101, %v4596
        %v5103 = vpop.permute.xlu0 %5102
        %5106 = vset.pattern.permute.xlu0 0
        %5107 = vperm.xlu0 %5106, %v4597
        %v5108 = vpop.permute.xlu0 %5107
        %5111 = vset.pattern.permute.xlu0 0
        %5112 = vperm.xlu0 %5111, %v4598
        %v5113 = vpop.permute.xlu0 %5112
        %5116 = vset.pattern.permute.xlu0 0
        %5117 = vperm.xlu0 %5116, %v4599
        %v5118 = vpop.permute.xlu0 %5117
        %5121 = vset.pattern.permute.xlu0 0
        %5122 = vperm.xlu0 %5121, %v4600
        %v5123 = vpop.permute.xlu0 %5122
        %5126 = vset.pattern.permute.xlu0 0
        %5127 = vperm.xlu0 %5126, %v4601
        %v5128 = vpop.permute.xlu0 %5127
        %5131 = vset.pattern.permute.xlu0 0
        %5132 = vperm.xlu0 %5131, %v4602
        %v5133 = vpop.permute.xlu0 %5132
        %5136 = vset.pattern.permute.xlu0 0
        %5137 = vperm.xlu0 %5136, %v4603
        %v5138 = vpop.permute.xlu0 %5137
        %5141 = vset.pattern.permute.xlu0 0
        %5142 = vperm.xlu0 %5141, %v4604
        %v5143 = vpop.permute.xlu0 %5142
        %5146 = vset.pattern.permute.xlu0 0
        %5147 = vperm.xlu0 %5146, %v4605
        %v5148 = vpop.permute.xlu0 %5147
        %5151 = vset.pattern.permute.xlu0 0
        %5152 = vperm.xlu0 %5151, %v4606
        %v5153 = vpop.permute.xlu0 %5152
        %5156 = vset.pattern.permute.xlu0 0
        %5157 = vperm.xlu0 %5156, %v4607
        %v5158 = vpop.permute.xlu0 %5157
        %5161 = vset.pattern.permute.xlu0 0
        %5162 = vperm.xlu0 %5161, %v4608
        %v5163 = vpop.permute.xlu0 %5162
        %5166 = vset.pattern.permute.xlu0 0
        %5167 = vperm.xlu0 %5166, %v4609
        %v5168 = vpop.permute.xlu0 %5167
        %5171 = vset.pattern.permute.xlu0 0
        %5172 = vperm.xlu0 %5171, %v4610
        %v5173 = vpop.permute.xlu0 %5172
        %5176 = vset.pattern.permute.xlu0 0
        %5177 = vperm.xlu0 %5176, %v4611
        %v5178 = vpop.permute.xlu0 %5177
        %5181 = vset.pattern.permute.xlu0 0
        %5182 = vperm.xlu0 %5181, %v4612
        %v5183 = vpop.permute.xlu0 %5182
        %5186 = vset.pattern.permute.xlu0 0
        %5187 = vperm.xlu0 %5186, %v4613
        %v5188 = vpop.permute.xlu0 %5187
        %5191 = vset.pattern.permute.xlu0 0
        %5192 = vperm.xlu0 %5191, %v4614
        %v5193 = vpop.permute.xlu0 %5192
        %5196 = vset.pattern.permute.xlu0 0
        %5197 = vperm.xlu0 %5196, %v4615
        %v5198 = vpop.permute.xlu0 %5197
        %5201 = vset.pattern.permute.xlu0 0
        %5202 = vperm.xlu0 %5201, %v4616
        %v5203 = vpop.permute.xlu0 %5202
        %5206 = vset.pattern.permute.xlu0 0
        %5207 = vperm.xlu0 %5206, %v4617
        %v5208 = vpop.permute.xlu0 %5207
        %5211 = vset.pattern.permute.xlu0 0
        %5212 = vperm.xlu0 %5211, %v4618
        %v5213 = vpop.permute.xlu0 %5212
        %5216 = vset.pattern.permute.xlu0 0
        %5217 = vperm.xlu0 %5216, %v4619
        %v5218 = vpop.permute.xlu0 %5217
        %5221 = vset.pattern.permute.xlu0 0
        %5222 = vperm.xlu0 %5221, %v4620
        %v5223 = vpop.permute.xlu0 %5222
        %5226 = vset.pattern.permute.xlu0 0
        %5227 = vperm.xlu0 %5226, %v4621
        %v5228 = vpop.permute.xlu0 %5227
        %5231 = vset.pattern.permute.xlu0 0
        %5232 = vperm.xlu0 %5231, %v4622
        %v5233 = vpop.permute.xlu0 %5232
        %5236 = vset.pattern.permute.xlu0 0
        %5237 = vperm.xlu0 %5236, %v4623
        %v5238 = vpop.permute.xlu0 %5237
        %5241 = vset.pattern.permute.xlu0 0
        %5242 = vperm.xlu0 %5241, %v4624
        %v5243 = vpop.permute.xlu0 %5242
        %5246 = vset.pattern.permute.xlu0 0
        %5247 = vperm.xlu0 %5246, %v4625
        %v5248 = vpop.permute.xlu0 %5247
        %5251 = vset.pattern.permute.xlu0 0
        %5252 = vperm.xlu0 %5251, %v4626
        %v5253 = vpop.permute.xlu0 %5252
        %5256 = vset.pattern.permute.xlu0 0
        %5257 = vperm.xlu0 %5256, %v4627
        %v5258 = vpop.permute.xlu0 %5257
        %5261 = vset.pattern.permute.xlu0 0
        %5262 = vperm.xlu0 %5261, %v4628
        %v5263 = vpop.permute.xlu0 %5262
        %5266 = vset.pattern.permute.xlu0 0
        %5267 = vperm.xlu0 %5266, %v4629
        %v5268 = vpop.permute.xlu0 %5267
        %v5526 = vunpack.c.l.b16 %v4246
        %v5527 = vunpack.c.h.b16 %v4246
        %v5528 = vunpack.c.l.b16 %v4247
        %v5529 = vunpack.c.h.b16 %v4247
        %v5530 = vunpack.c.l.b16 %v4248
        %v5531 = vunpack.c.h.b16 %v4248
        %v5532 = vunpack.c.l.b16 %v4249
        %v5533 = vunpack.c.h.b16 %v4249
        %v5534 = vunpack.c.l.b16 %v4250
        %v5535 = vunpack.c.h.b16 %v4250
        %v5536 = vunpack.c.l.b16 %v4251
        %v5537 = vunpack.c.h.b16 %v4251
        %v5538 = vunpack.c.l.b16 %v4252
        %v5539 = vunpack.c.h.b16 %v4252
        %v5540 = vunpack.c.l.b16 %v4253
        %v5541 = vunpack.c.h.b16 %v4253
        %v5542 = vunpack.c.l.b16 %v4254
        %v5543 = vunpack.c.h.b16 %v4254
        %v5544 = vunpack.c.l.b16 %v4255
        %v5545 = vunpack.c.h.b16 %v4255
        %v5546 = vunpack.c.l.b16 %v4256
        %v5547 = vunpack.c.h.b16 %v4256
        %v5548 = vunpack.c.l.b16 %v4257
        %v5549 = vunpack.c.h.b16 %v4257
        %v5550 = vunpack.c.l.b16 %v4258
        %v5551 = vunpack.c.h.b16 %v4258
        %v5552 = vunpack.c.l.b16 %v4259
        %v5553 = vunpack.c.h.b16 %v4259
        %v5554 = vunpack.c.l.b16 %v4260
        %v5555 = vunpack.c.h.b16 %v4260
        %v5556 = vunpack.c.l.b16 %v4261
        %v5557 = vunpack.c.h.b16 %v4261
        %v5558 = vunpack.c.l.b16 %v4262
        %v5559 = vunpack.c.h.b16 %v4262
        %v5560 = vunpack.c.l.b16 %v4263
        %v5561 = vunpack.c.h.b16 %v4263
        %v5562 = vunpack.c.l.b16 %v4264
        %v5563 = vunpack.c.h.b16 %v4264
        %v5564 = vunpack.c.l.b16 %v4265
        %v5565 = vunpack.c.h.b16 %v4265
        %v5566 = vunpack.c.l.b16 %v4266
        %v5567 = vunpack.c.h.b16 %v4266
        %v5568 = vunpack.c.l.b16 %v4267
        %v5569 = vunpack.c.h.b16 %v4267
        %v5570 = vunpack.c.l.b16 %v4268
        %v5571 = vunpack.c.h.b16 %v4268
        %v5572 = vunpack.c.l.b16 %v4269
        %v5573 = vunpack.c.h.b16 %v4269
        %v5574 = vunpack.c.l.b16 %v4270
        %v5575 = vunpack.c.h.b16 %v4270
        %v5576 = vunpack.c.l.b16 %v4271
        %v5577 = vunpack.c.h.b16 %v4271
        %v5578 = vunpack.c.l.b16 %v4272
        %v5579 = vunpack.c.h.b16 %v4272
        %v5580 = vunpack.c.l.b16 %v4273
        %v5581 = vunpack.c.h.b16 %v4273
        %v5582 = vunpack.c.l.b16 %v4274
        %v5583 = vunpack.c.h.b16 %v4274
        %v5584 = vunpack.c.l.b16 %v4275
        %v5585 = vunpack.c.h.b16 %v4275
        %v5586 = vunpack.c.l.b16 %v4276
        %v5587 = vunpack.c.h.b16 %v4276
        %v5588 = vunpack.c.l.b16 %v4277
        %v5589 = vunpack.c.h.b16 %v4277
        %v5590 = vunpack.c.l.b16 %v4278
        %v5591 = vunpack.c.h.b16 %v4278
        %v5592 = vunpack.c.l.b16 %v4279
        %v5593 = vunpack.c.h.b16 %v4279
        %v5594 = vunpack.c.l.b16 %v4280
        %v5595 = vunpack.c.h.b16 %v4280
        %v5596 = vunpack.c.l.b16 %v4281
        %v5597 = vunpack.c.h.b16 %v4281
        %v5598 = vunpack.c.l.b16 %v4282
        %v5599 = vunpack.c.h.b16 %v4282
        %v5600 = vunpack.c.l.b16 %v4283
        %v5601 = vunpack.c.h.b16 %v4283
        %v5602 = vunpack.c.l.b16 %v4284
        %v5603 = vunpack.c.h.b16 %v4284
        %v5604 = vunpack.c.l.b16 %v4285
        %v5605 = vunpack.c.h.b16 %v4285
        %v5606 = vunpack.c.l.b16 %v4286
        %v5607 = vunpack.c.h.b16 %v4286
        %v5608 = vunpack.c.l.b16 %v4287
        %v5609 = vunpack.c.h.b16 %v4287
        %v5610 = vunpack.c.l.b16 %v4288
        %v5611 = vunpack.c.h.b16 %v4288
        %v5612 = vunpack.c.l.b16 %v4289
        %v5613 = vunpack.c.h.b16 %v4289
        %v5614 = vunpack.c.l.b16 %v4290
        %v5615 = vunpack.c.h.b16 %v4290
        %v5616 = vunpack.c.l.b16 %v4291
        %v5617 = vunpack.c.h.b16 %v4291
        %v5618 = vunpack.c.l.b16 %v4292
        %v5619 = vunpack.c.h.b16 %v4292
        %v5620 = vunpack.c.l.b16 %v4293
        %v5621 = vunpack.c.h.b16 %v4293
        %v5622 = vunpack.c.l.b16 %v4294
        %v5623 = vunpack.c.h.b16 %v4294
        %v5624 = vunpack.c.l.b16 %v4295
        %v5625 = vunpack.c.h.b16 %v4295
        %v5626 = vunpack.c.l.b16 %v4296
        %v5627 = vunpack.c.h.b16 %v4296
        %v5628 = vunpack.c.l.b16 %v4297
        %v5629 = vunpack.c.h.b16 %v4297
        %v5630 = vunpack.c.l.b16 %v4298
        %v5631 = vunpack.c.h.b16 %v4298
        %v5632 = vunpack.c.l.b16 %v4299
        %v5633 = vunpack.c.h.b16 %v4299
        %v5634 = vunpack.c.l.b16 %v4300
        %v5635 = vunpack.c.h.b16 %v4300
        %v5636 = vunpack.c.l.b16 %v4301
        %v5637 = vunpack.c.h.b16 %v4301
        %v5638 = vunpack.c.l.b16 %v4302
        %v5639 = vunpack.c.h.b16 %v4302
        %v5640 = vunpack.c.l.b16 %v4303
        %v5641 = vunpack.c.h.b16 %v4303
        %v5642 = vunpack.c.l.b16 %v4304
        %v5643 = vunpack.c.h.b16 %v4304
        %v5644 = vunpack.c.l.b16 %v4305
        %v5645 = vunpack.c.h.b16 %v4305
        %v5646 = vunpack.c.l.b16 %v4306
        %v5647 = vunpack.c.h.b16 %v4306
        %v5648 = vunpack.c.l.b16 %v4307
        %v5649 = vunpack.c.h.b16 %v4307
        %v5650 = vunpack.c.l.b16 %v4308
        %v5651 = vunpack.c.h.b16 %v4308
        %v5652 = vunpack.c.l.b16 %v4309
        %v5653 = vunpack.c.h.b16 %v4309
        %v5654 = vunpack.c.l.b16 %v4310
        %v5655 = vunpack.c.h.b16 %v4310
        %v5656 = vunpack.c.l.b16 %v4311
        %v5657 = vunpack.c.h.b16 %v4311
        %v5658 = vunpack.c.l.b16 %v4312
        %v5659 = vunpack.c.h.b16 %v4312
        %v5660 = vunpack.c.l.b16 %v4313
        %v5661 = vunpack.c.h.b16 %v4313
        %v5662 = vunpack.c.l.b16 %v4314
        %v5663 = vunpack.c.h.b16 %v4314
        %v5664 = vunpack.c.l.b16 %v4315
        %v5665 = vunpack.c.h.b16 %v4315
        %v5666 = vunpack.c.l.b16 %v4316
        %v5667 = vunpack.c.h.b16 %v4316
        %v5668 = vunpack.c.l.b16 %v4317
        %v5669 = vunpack.c.h.b16 %v4317
        %v5670 = vunpack.c.l.b16 %v4318
        %v5671 = vunpack.c.h.b16 %v4318
        %v5672 = vunpack.c.l.b16 %v4319
        %v5673 = vunpack.c.h.b16 %v4319
        %v5674 = vunpack.c.l.b16 %v4320
        %v5675 = vunpack.c.h.b16 %v4320
        %v5676 = vunpack.c.l.b16 %v4321
        %v5677 = vunpack.c.h.b16 %v4321
        %v5678 = vunpack.c.l.b16 %v4322
        %v5679 = vunpack.c.h.b16 %v4322
        %v5680 = vunpack.c.l.b16 %v4323
        %v5681 = vunpack.c.h.b16 %v4323
        %v5682 = vunpack.c.l.b16 %v4324
        %v5683 = vunpack.c.h.b16 %v4324
        %v5684 = vunpack.c.l.b16 %v4325
        %v5685 = vunpack.c.h.b16 %v4325
        %v5686 = vunpack.c.l.b16 %v4326
        %v5687 = vunpack.c.h.b16 %v4326
        %v5688 = vunpack.c.l.b16 %v4327
        %v5689 = vunpack.c.h.b16 %v4327
        %v5690 = vunpack.c.l.b16 %v4328
        %v5691 = vunpack.c.h.b16 %v4328
        %v5692 = vunpack.c.l.b16 %v4329
        %v5693 = vunpack.c.h.b16 %v4329
        %v5694 = vunpack.c.l.b16 %v4330
        %v5695 = vunpack.c.h.b16 %v4330
        %v5696 = vunpack.c.l.b16 %v4331
        %v5697 = vunpack.c.h.b16 %v4331
        %v5698 = vunpack.c.l.b16 %v4332
        %v5699 = vunpack.c.h.b16 %v4332
        %v5700 = vunpack.c.l.b16 %v4333
        %v5701 = vunpack.c.h.b16 %v4333
        %v5702 = vunpack.c.l.b16 %v4334
        %v5703 = vunpack.c.h.b16 %v4334
        %v5704 = vunpack.c.l.b16 %v4335
        %v5705 = vunpack.c.h.b16 %v4335
        %v5706 = vunpack.c.l.b16 %v4336
        %v5707 = vunpack.c.h.b16 %v4336
        %v5708 = vunpack.c.l.b16 %v4337
        %v5709 = vunpack.c.h.b16 %v4337
        %v5710 = vunpack.c.l.b16 %v4338
        %v5711 = vunpack.c.h.b16 %v4338
        %v5712 = vunpack.c.l.b16 %v4339
        %v5713 = vunpack.c.h.b16 %v4339
        %v5714 = vunpack.c.l.b16 %v4340
        %v5715 = vunpack.c.h.b16 %v4340
        %v5716 = vunpack.c.l.b16 %v4341
        %v5717 = vunpack.c.h.b16 %v4341
        %v5718 = vunpack.c.l.b16 %v4342
        %v5719 = vunpack.c.h.b16 %v4342
        %v5720 = vunpack.c.l.b16 %v4343
        %v5721 = vunpack.c.h.b16 %v4343
        %v5722 = vunpack.c.l.b16 %v4344
        %v5723 = vunpack.c.h.b16 %v4344
        %v5724 = vunpack.c.l.b16 %v4345
        %v5725 = vunpack.c.h.b16 %v4345
        %v5726 = vunpack.c.l.b16 %v4346
        %v5727 = vunpack.c.h.b16 %v4346
        %v5728 = vunpack.c.l.b16 %v4347
        %v5729 = vunpack.c.h.b16 %v4347
        %v5730 = vunpack.c.l.b16 %v4348
        %v5731 = vunpack.c.h.b16 %v4348
        %v5732 = vunpack.c.l.b16 %v4349
        %v5733 = vunpack.c.h.b16 %v4349
        %v5734 = vunpack.c.l.b16 %v4350
        %v5735 = vunpack.c.h.b16 %v4350
        %v5736 = vunpack.c.l.b16 %v4351
        %v5737 = vunpack.c.h.b16 %v4351
        %v5738 = vunpack.c.l.b16 %v4352
        %v5739 = vunpack.c.h.b16 %v4352
        %v5740 = vunpack.c.l.b16 %v4353
        %v5741 = vunpack.c.h.b16 %v4353
        %v5742 = vunpack.c.l.b16 %v4354
        %v5743 = vunpack.c.h.b16 %v4354
        %v5744 = vunpack.c.l.b16 %v4355
        %v5745 = vunpack.c.h.b16 %v4355
        %v5746 = vunpack.c.l.b16 %v4356
        %v5747 = vunpack.c.h.b16 %v4356
        %v5748 = vunpack.c.l.b16 %v4357
        %v5749 = vunpack.c.h.b16 %v4357
        %v5750 = vunpack.c.l.b16 %v4358
        %v5751 = vunpack.c.h.b16 %v4358
        %v5752 = vunpack.c.l.b16 %v4359
        %v5753 = vunpack.c.h.b16 %v4359
        %v5754 = vunpack.c.l.b16 %v4360
        %v5755 = vunpack.c.h.b16 %v4360
        %v5756 = vunpack.c.l.b16 %v4361
        %v5757 = vunpack.c.h.b16 %v4361
        %v5758 = vunpack.c.l.b16 %v4362
        %v5759 = vunpack.c.h.b16 %v4362
        %v5760 = vunpack.c.l.b16 %v4363
        %v5761 = vunpack.c.h.b16 %v4363
        %v5762 = vunpack.c.l.b16 %v4364
        %v5763 = vunpack.c.h.b16 %v4364
        %v5764 = vunpack.c.l.b16 %v4365
        %v5765 = vunpack.c.h.b16 %v4365
        %v5766 = vunpack.c.l.b16 %v4366
        %v5767 = vunpack.c.h.b16 %v4366
        %v5768 = vunpack.c.l.b16 %v4367
        %v5769 = vunpack.c.h.b16 %v4367
        %v5770 = vunpack.c.l.b16 %v4368
        %v5771 = vunpack.c.h.b16 %v4368
        %v5772 = vunpack.c.l.b16 %v4369
        %v5773 = vunpack.c.h.b16 %v4369
        %v5774 = vunpack.c.l.b16 %v4370
        %v5775 = vunpack.c.h.b16 %v4370
        %v5776 = vunpack.c.l.b16 %v4371
        %v5777 = vunpack.c.h.b16 %v4371
        %v5778 = vunpack.c.l.b16 %v4372
        %v5779 = vunpack.c.h.b16 %v4372
        %v5780 = vunpack.c.l.b16 %v4373
        %v5781 = vunpack.c.h.b16 %v4373
        %v5782 = vunpack.c.l.b16 %v4374
        %v5783 = vunpack.c.h.b16 %v4374
        %v5784 = vunpack.c.l.b16 %v4375
        %v5785 = vunpack.c.h.b16 %v4375
        %v5786 = vunpack.c.l.b16 %v4376
        %v5787 = vunpack.c.h.b16 %v4376
        %v5788 = vunpack.c.l.b16 %v4377
        %v5789 = vunpack.c.h.b16 %v4377
        %v5790 = vunpack.c.l.b16 %v4378
        %v5791 = vunpack.c.h.b16 %v4378
        %v5792 = vunpack.c.l.b16 %v4379
        %v5793 = vunpack.c.h.b16 %v4379
        %v5794 = vunpack.c.l.b16 %v4380
        %v5795 = vunpack.c.h.b16 %v4380
        %v5796 = vunpack.c.l.b16 %v4381
        %v5797 = vunpack.c.h.b16 %v4381
        %v5798 = vunpack.c.l.b16 %v4382
        %v5799 = vunpack.c.h.b16 %v4382
        %v5800 = vunpack.c.l.b16 %v4383
        %v5801 = vunpack.c.h.b16 %v4383
        %v5802 = vunpack.c.l.b16 %v4384
        %v5803 = vunpack.c.h.b16 %v4384
        %v5804 = vunpack.c.l.b16 %v4385
        %v5805 = vunpack.c.h.b16 %v4385
        %v5806 = vunpack.c.l.b16 %v4386
        %v5807 = vunpack.c.h.b16 %v4386
        %v5808 = vunpack.c.l.b16 %v4387
        %v5809 = vunpack.c.h.b16 %v4387
        %v5810 = vunpack.c.l.b16 %v4388
        %v5811 = vunpack.c.h.b16 %v4388
        %v5812 = vunpack.c.l.b16 %v4389
        %v5813 = vunpack.c.h.b16 %v4389
        %v5814 = vunpack.c.l.b16 %v4390
        %v5815 = vunpack.c.h.b16 %v4390
        %v5816 = vunpack.c.l.b16 %v4391
        %v5817 = vunpack.c.h.b16 %v4391
        %v5818 = vunpack.c.l.b16 %v4392
        %v5819 = vunpack.c.h.b16 %v4392
        %v5820 = vunpack.c.l.b16 %v4393
        %v5821 = vunpack.c.h.b16 %v4393
        %v5822 = vunpack.c.l.b16 %v4394
        %v5823 = vunpack.c.h.b16 %v4394
        %v5824 = vunpack.c.l.b16 %v4395
        %v5825 = vunpack.c.h.b16 %v4395
        %v5826 = vunpack.c.l.b16 %v4396
        %v5827 = vunpack.c.h.b16 %v4396
        %v5828 = vunpack.c.l.b16 %v4397
        %v5829 = vunpack.c.h.b16 %v4397
        %v5830 = vunpack.c.l.b16 %v4398
        %v5831 = vunpack.c.h.b16 %v4398
        %v5832 = vunpack.c.l.b16 %v4399
        %v5833 = vunpack.c.h.b16 %v4399
        %v5834 = vunpack.c.l.b16 %v4400
        %v5835 = vunpack.c.h.b16 %v4400
        %v5836 = vunpack.c.l.b16 %v4401
        %v5837 = vunpack.c.h.b16 %v4401
        %v5838 = vunpack.c.l.b16 %v4402
        %v5839 = vunpack.c.h.b16 %v4402
        %v5840 = vunpack.c.l.b16 %v4403
        %v5841 = vunpack.c.h.b16 %v4403
        %v5842 = vunpack.c.l.b16 %v4404
        %v5843 = vunpack.c.h.b16 %v4404
        %v5844 = vunpack.c.l.b16 %v4405
        %v5845 = vunpack.c.h.b16 %v4405
        %v5846 = vunpack.c.l.b16 %v4406
        %v5847 = vunpack.c.h.b16 %v4406
        %v5848 = vunpack.c.l.b16 %v4407
        %v5849 = vunpack.c.h.b16 %v4407
        %v5850 = vunpack.c.l.b16 %v4408
        %v5851 = vunpack.c.h.b16 %v4408
        %v5852 = vunpack.c.l.b16 %v4409
        %v5853 = vunpack.c.h.b16 %v4409
        %v5854 = vunpack.c.l.b16 %v4410
        %v5855 = vunpack.c.h.b16 %v4410
        %v5856 = vunpack.c.l.b16 %v4411
        %v5857 = vunpack.c.h.b16 %v4411
        %v5858 = vunpack.c.l.b16 %v4412
        %v5859 = vunpack.c.h.b16 %v4412
        %v5860 = vunpack.c.l.b16 %v4413
        %v5861 = vunpack.c.h.b16 %v4413
        %v5862 = vunpack.c.l.b16 %v4414
        %v5863 = vunpack.c.h.b16 %v4414
        %v5864 = vunpack.c.l.b16 %v4415
        %v5865 = vunpack.c.h.b16 %v4415
        %v5866 = vunpack.c.l.b16 %v4416
        %v5867 = vunpack.c.h.b16 %v4416
        %v5868 = vunpack.c.l.b16 %v4417
        %v5869 = vunpack.c.h.b16 %v4417
        %v5870 = vunpack.c.l.b16 %v4418
        %v5871 = vunpack.c.h.b16 %v4418
        %v5872 = vunpack.c.l.b16 %v4419
        %v5873 = vunpack.c.h.b16 %v4419
        %v5874 = vunpack.c.l.b16 %v4420
        %v5875 = vunpack.c.h.b16 %v4420
        %v5876 = vunpack.c.l.b16 %v4421
        %v5877 = vunpack.c.h.b16 %v4421
        %v5878 = vunpack.c.l.b16 %v4422
        %v5879 = vunpack.c.h.b16 %v4422
        %v5880 = vunpack.c.l.b16 %v4423
        %v5881 = vunpack.c.h.b16 %v4423
        %v5882 = vunpack.c.l.b16 %v4424
        %v5883 = vunpack.c.h.b16 %v4424
        %v5884 = vunpack.c.l.b16 %v4425
        %v5885 = vunpack.c.h.b16 %v4425
        %v5886 = vunpack.c.l.b16 %v4426
        %v5887 = vunpack.c.h.b16 %v4426
        %v5888 = vunpack.c.l.b16 %v4427
        %v5889 = vunpack.c.h.b16 %v4427
        %v5890 = vunpack.c.l.b16 %v4428
        %v5891 = vunpack.c.h.b16 %v4428
        %v5892 = vunpack.c.l.b16 %v4429
        %v5893 = vunpack.c.h.b16 %v4429
        %v5894 = vunpack.c.l.b16 %v4430
        %v5895 = vunpack.c.h.b16 %v4430
        %v5896 = vunpack.c.l.b16 %v4431
        %v5897 = vunpack.c.h.b16 %v4431
        %v5898 = vunpack.c.l.b16 %v4432
        %v5899 = vunpack.c.h.b16 %v4432
        %v5900 = vunpack.c.l.b16 %v4433
        %v5901 = vunpack.c.h.b16 %v4433
        %v5902 = vunpack.c.l.b16 %v4434
        %v5903 = vunpack.c.h.b16 %v4434
        %v5904 = vunpack.c.l.b16 %v4435
        %v5905 = vunpack.c.h.b16 %v4435
        %v5906 = vunpack.c.l.b16 %v4436
        %v5907 = vunpack.c.h.b16 %v4436
        %v5908 = vunpack.c.l.b16 %v4437
        %v5909 = vunpack.c.h.b16 %v4437
        %v5910 = vunpack.c.l.b16 %v4438
        %v5911 = vunpack.c.h.b16 %v4438
        %v5912 = vunpack.c.l.b16 %v4439
        %v5913 = vunpack.c.h.b16 %v4439
        %v5914 = vunpack.c.l.b16 %v4440
        %v5915 = vunpack.c.h.b16 %v4440
        %v5916 = vunpack.c.l.b16 %v4441
        %v5917 = vunpack.c.h.b16 %v4441
        %v5918 = vunpack.c.l.b16 %v4442
        %v5919 = vunpack.c.h.b16 %v4442
        %v5920 = vunpack.c.l.b16 %v4443
        %v5921 = vunpack.c.h.b16 %v4443
        %v5922 = vunpack.c.l.b16 %v4444
        %v5923 = vunpack.c.h.b16 %v4444
        %v5924 = vunpack.c.l.b16 %v4445
        %v5925 = vunpack.c.h.b16 %v4445
        %v5926 = vunpack.c.l.b16 %v4446
        %v5927 = vunpack.c.h.b16 %v4446
        %v5928 = vunpack.c.l.b16 %v4447
        %v5929 = vunpack.c.h.b16 %v4447
        %v5930 = vunpack.c.l.b16 %v4448
        %v5931 = vunpack.c.h.b16 %v4448
        %v5932 = vunpack.c.l.b16 %v4449
        %v5933 = vunpack.c.h.b16 %v4449
        %v5934 = vunpack.c.l.b16 %v4450
        %v5935 = vunpack.c.h.b16 %v4450
        %v5936 = vunpack.c.l.b16 %v4451
        %v5937 = vunpack.c.h.b16 %v4451
        %v5938 = vunpack.c.l.b16 %v4452
        %v5939 = vunpack.c.h.b16 %v4452
        %v5940 = vunpack.c.l.b16 %v4453
        %v5941 = vunpack.c.h.b16 %v4453
        %v5942 = vunpack.c.l.b16 %v4454
        %v5943 = vunpack.c.h.b16 %v4454
        %v5944 = vunpack.c.l.b16 %v4455
        %v5945 = vunpack.c.h.b16 %v4455
        %v5946 = vunpack.c.l.b16 %v4456
        %v5947 = vunpack.c.h.b16 %v4456
        %v5948 = vunpack.c.l.b16 %v4457
        %v5949 = vunpack.c.h.b16 %v4457
        %v5950 = vunpack.c.l.b16 %v4458
        %v5951 = vunpack.c.h.b16 %v4458
        %v5952 = vunpack.c.l.b16 %v4459
        %v5953 = vunpack.c.h.b16 %v4459
        %v5954 = vunpack.c.l.b16 %v4460
        %v5955 = vunpack.c.h.b16 %v4460
        %v5956 = vunpack.c.l.b16 %v4461
        %v5957 = vunpack.c.h.b16 %v4461
        %v5958 = vunpack.c.l.b16 %v4462
        %v5959 = vunpack.c.h.b16 %v4462
        %v5960 = vunpack.c.l.b16 %v4463
        %v5961 = vunpack.c.h.b16 %v4463
        %v5962 = vunpack.c.l.b16 %v4464
        %v5963 = vunpack.c.h.b16 %v4464
        %v5964 = vunpack.c.l.b16 %v4465
        %v5965 = vunpack.c.h.b16 %v4465
        %v5966 = vunpack.c.l.b16 %v4466
        %v5967 = vunpack.c.h.b16 %v4466
        %v5968 = vunpack.c.l.b16 %v4467
        %v5969 = vunpack.c.h.b16 %v4467
        %v5970 = vunpack.c.l.b16 %v4468
        %v5971 = vunpack.c.h.b16 %v4468
        %v5972 = vunpack.c.l.b16 %v4469
        %v5973 = vunpack.c.h.b16 %v4469
        %v5974 = vunpack.c.l.b16 %v4470
        %v5975 = vunpack.c.h.b16 %v4470
        %v5976 = vunpack.c.l.b16 %v4471
        %v5977 = vunpack.c.h.b16 %v4471
        %v5978 = vunpack.c.l.b16 %v4472
        %v5979 = vunpack.c.h.b16 %v4472
        %v5980 = vunpack.c.l.b16 %v4473
        %v5981 = vunpack.c.h.b16 %v4473
        %v5982 = vunpack.c.l.b16 %v4474
        %v5983 = vunpack.c.h.b16 %v4474
        %v5984 = vunpack.c.l.b16 %v4475
        %v5985 = vunpack.c.h.b16 %v4475
        %v5986 = vunpack.c.l.b16 %v4476
        %v5987 = vunpack.c.h.b16 %v4476
        %v5988 = vunpack.c.l.b16 %v4477
        %v5989 = vunpack.c.h.b16 %v4477
        %v5990 = vunpack.c.l.b16 %v4478
        %v5991 = vunpack.c.h.b16 %v4478
        %v5992 = vunpack.c.l.b16 %v4479
        %v5993 = vunpack.c.h.b16 %v4479
        %v5994 = vunpack.c.l.b16 %v4480
        %v5995 = vunpack.c.h.b16 %v4480
        %v5996 = vunpack.c.l.b16 %v4481
        %v5997 = vunpack.c.h.b16 %v4481
        %v5998 = vunpack.c.l.b16 %v4482
        %v5999 = vunpack.c.h.b16 %v4482
        %v6000 = vunpack.c.l.b16 %v4483
        %v6001 = vunpack.c.h.b16 %v4483
        %v6002 = vunpack.c.l.b16 %v4484
        %v6003 = vunpack.c.h.b16 %v4484
        %v6004 = vunpack.c.l.b16 %v4485
        %v6005 = vunpack.c.h.b16 %v4485
        %v6006 = vunpack.c.l.b16 %v4486
        %v6007 = vunpack.c.h.b16 %v4486
        %v6008 = vunpack.c.l.b16 %v4487
        %v6009 = vunpack.c.h.b16 %v4487
        %v6010 = vunpack.c.l.b16 %v4488
        %v6011 = vunpack.c.h.b16 %v4488
        %v6012 = vunpack.c.l.b16 %v4489
        %v6013 = vunpack.c.h.b16 %v4489
        %v6014 = vunpack.c.l.b16 %v4490
        %v6015 = vunpack.c.h.b16 %v4490
        %v6016 = vunpack.c.l.b16 %v4491
        %v6017 = vunpack.c.h.b16 %v4491
        %v6018 = vunpack.c.l.b16 %v4492
        %v6019 = vunpack.c.h.b16 %v4492
        %v6020 = vunpack.c.l.b16 %v4493
        %v6021 = vunpack.c.h.b16 %v4493
        %v6022 = vunpack.c.l.b16 %v4494
        %v6023 = vunpack.c.h.b16 %v4494
        %v6024 = vunpack.c.l.b16 %v4495
        %v6025 = vunpack.c.h.b16 %v4495
        %v6026 = vunpack.c.l.b16 %v4496
        %v6027 = vunpack.c.h.b16 %v4496
        %v6028 = vunpack.c.l.b16 %v4497
        %v6029 = vunpack.c.h.b16 %v4497
        %v6030 = vunpack.c.l.b16 %v4498
        %v6031 = vunpack.c.h.b16 %v4498
        %v6032 = vunpack.c.l.b16 %v4499
        %v6033 = vunpack.c.h.b16 %v4499
        %v6034 = vunpack.c.l.b16 %v4500
        %v6035 = vunpack.c.h.b16 %v4500
        %v6036 = vunpack.c.l.b16 %v4501
        %v6037 = vunpack.c.h.b16 %v4501
        %v6038 = vpack.c.b16 %v5530, %v5526
        %v6039 = vpack.c.b16 %v5531, %v5527
        %v6040 = vpack.c.b16 %v5532, %v5528
        %v6041 = vpack.c.b16 %v5533, %v5529
        %v6042 = vpack.c.b16 %v5538, %v5534
        %v6043 = vpack.c.b16 %v5539, %v5535
        %v6044 = vpack.c.b16 %v5540, %v5536
        %v6045 = vpack.c.b16 %v5541, %v5537
        %v6046 = vpack.c.b16 %v5546, %v5542
        %v6047 = vpack.c.b16 %v5547, %v5543
        %v6048 = vpack.c.b16 %v5548, %v5544
        %v6049 = vpack.c.b16 %v5549, %v5545
        %v6050 = vpack.c.b16 %v5554, %v5550
        %v6051 = vpack.c.b16 %v5555, %v5551
        %v6052 = vpack.c.b16 %v5556, %v5552
        %v6053 = vpack.c.b16 %v5557, %v5553
        %v6054 = vpack.c.b16 %v5562, %v5558
        %v6055 = vpack.c.b16 %v5563, %v5559
        %v6056 = vpack.c.b16 %v5564, %v5560
        %v6057 = vpack.c.b16 %v5565, %v5561
        %v6058 = vpack.c.b16 %v5570, %v5566
        %v6059 = vpack.c.b16 %v5571, %v5567
        %v6060 = vpack.c.b16 %v5572, %v5568
        %v6061 = vpack.c.b16 %v5573, %v5569
        %v6062 = vpack.c.b16 %v5578, %v5574
        %v6063 = vpack.c.b16 %v5579, %v5575
        %v6064 = vpack.c.b16 %v5580, %v5576
        %v6065 = vpack.c.b16 %v5581, %v5577
        %v6066 = vpack.c.b16 %v5586, %v5582
        %v6067 = vpack.c.b16 %v5587, %v5583
        %v6068 = vpack.c.b16 %v5588, %v5584
        %v6069 = vpack.c.b16 %v5589, %v5585
        %v6070 = vpack.c.b16 %v5594, %v5590
        %v6071 = vpack.c.b16 %v5595, %v5591
        %v6072 = vpack.c.b16 %v5596, %v5592
        %v6073 = vpack.c.b16 %v5597, %v5593
        %v6074 = vpack.c.b16 %v5602, %v5598
        %v6075 = vpack.c.b16 %v5603, %v5599
        %v6076 = vpack.c.b16 %v5604, %v5600
        %v6077 = vpack.c.b16 %v5605, %v5601
        %v6078 = vpack.c.b16 %v5610, %v5606
        %v6079 = vpack.c.b16 %v5611, %v5607
        %v6080 = vpack.c.b16 %v5612, %v5608
        %v6081 = vpack.c.b16 %v5613, %v5609
        %v6082 = vpack.c.b16 %v5618, %v5614
        %v6083 = vpack.c.b16 %v5619, %v5615
        %v6084 = vpack.c.b16 %v5620, %v5616
        %v6085 = vpack.c.b16 %v5621, %v5617
        %v6086 = vpack.c.b16 %v5626, %v5622
        %v6087 = vpack.c.b16 %v5627, %v5623
        %v6088 = vpack.c.b16 %v5628, %v5624
        %v6089 = vpack.c.b16 %v5629, %v5625
        %v6090 = vpack.c.b16 %v5634, %v5630
        %v6091 = vpack.c.b16 %v5635, %v5631
        %v6092 = vpack.c.b16 %v5636, %v5632
        %v6093 = vpack.c.b16 %v5637, %v5633
        %v6094 = vpack.c.b16 %v5642, %v5638
        %v6095 = vpack.c.b16 %v5643, %v5639
        %v6096 = vpack.c.b16 %v5644, %v5640
        %v6097 = vpack.c.b16 %v5645, %v5641
        %v6098 = vpack.c.b16 %v5650, %v5646
        %v6099 = vpack.c.b16 %v5651, %v5647
        %v6100 = vpack.c.b16 %v5652, %v5648
        %v6101 = vpack.c.b16 %v5653, %v5649
        %v6102 = vpack.c.b16 %v5658, %v5654
        %v6103 = vpack.c.b16 %v5659, %v5655
        %v6104 = vpack.c.b16 %v5660, %v5656
        %v6105 = vpack.c.b16 %v5661, %v5657
        %v6106 = vpack.c.b16 %v5666, %v5662
        %v6107 = vpack.c.b16 %v5667, %v5663
        %v6108 = vpack.c.b16 %v5668, %v5664
        %v6109 = vpack.c.b16 %v5669, %v5665
        %v6110 = vpack.c.b16 %v5674, %v5670
        %v6111 = vpack.c.b16 %v5675, %v5671
        %v6112 = vpack.c.b16 %v5676, %v5672
        %v6113 = vpack.c.b16 %v5677, %v5673
        %v6114 = vpack.c.b16 %v5682, %v5678
        %v6115 = vpack.c.b16 %v5683, %v5679
        %v6116 = vpack.c.b16 %v5684, %v5680
        %v6117 = vpack.c.b16 %v5685, %v5681
        %v6118 = vpack.c.b16 %v5690, %v5686
        %v6119 = vpack.c.b16 %v5691, %v5687
        %v6120 = vpack.c.b16 %v5692, %v5688
        %v6121 = vpack.c.b16 %v5693, %v5689
        %v6122 = vpack.c.b16 %v5698, %v5694
        %v6123 = vpack.c.b16 %v5699, %v5695
        %v6124 = vpack.c.b16 %v5700, %v5696
        %v6125 = vpack.c.b16 %v5701, %v5697
        %v6126 = vpack.c.b16 %v5706, %v5702
        %v6127 = vpack.c.b16 %v5707, %v5703
        %v6128 = vpack.c.b16 %v5708, %v5704
        %v6129 = vpack.c.b16 %v5709, %v5705
        %v6130 = vpack.c.b16 %v5714, %v5710
        %v6131 = vpack.c.b16 %v5715, %v5711
        %v6132 = vpack.c.b16 %v5716, %v5712
        %v6133 = vpack.c.b16 %v5717, %v5713
        %v6134 = vpack.c.b16 %v5722, %v5718
        %v6135 = vpack.c.b16 %v5723, %v5719
        %v6136 = vpack.c.b16 %v5724, %v5720
        %v6137 = vpack.c.b16 %v5725, %v5721
        %v6138 = vpack.c.b16 %v5730, %v5726
        %v6139 = vpack.c.b16 %v5731, %v5727
        %v6140 = vpack.c.b16 %v5732, %v5728
        %v6141 = vpack.c.b16 %v5733, %v5729
        %v6142 = vpack.c.b16 %v5738, %v5734
        %v6143 = vpack.c.b16 %v5739, %v5735
        %v6144 = vpack.c.b16 %v5740, %v5736
        %v6145 = vpack.c.b16 %v5741, %v5737
        %v6146 = vpack.c.b16 %v5746, %v5742
        %v6147 = vpack.c.b16 %v5747, %v5743
        %v6148 = vpack.c.b16 %v5748, %v5744
        %v6149 = vpack.c.b16 %v5749, %v5745
        %v6150 = vpack.c.b16 %v5754, %v5750
        %v6151 = vpack.c.b16 %v5755, %v5751
        %v6152 = vpack.c.b16 %v5756, %v5752
        %v6153 = vpack.c.b16 %v5757, %v5753
        %v6154 = vpack.c.b16 %v5762, %v5758
        %v6155 = vpack.c.b16 %v5763, %v5759
        %v6156 = vpack.c.b16 %v5764, %v5760
        %v6157 = vpack.c.b16 %v5765, %v5761
        %v6158 = vpack.c.b16 %v5770, %v5766
        %v6159 = vpack.c.b16 %v5771, %v5767
        %v6160 = vpack.c.b16 %v5772, %v5768
        %v6161 = vpack.c.b16 %v5773, %v5769
        %v6162 = vpack.c.b16 %v5778, %v5774
        %v6163 = vpack.c.b16 %v5779, %v5775
        %v6164 = vpack.c.b16 %v5780, %v5776
        %v6165 = vpack.c.b16 %v5781, %v5777
        %v6166 = vpack.c.b16 %v5786, %v5782
        %v6167 = vpack.c.b16 %v5787, %v5783
        %v6168 = vpack.c.b16 %v5788, %v5784
        %v6169 = vpack.c.b16 %v5789, %v5785
        %v6170 = vpack.c.b16 %v5794, %v5790
        %v6171 = vpack.c.b16 %v5795, %v5791
        %v6172 = vpack.c.b16 %v5796, %v5792
        %v6173 = vpack.c.b16 %v5797, %v5793
        %v6174 = vpack.c.b16 %v5802, %v5798
        %v6175 = vpack.c.b16 %v5803, %v5799
        %v6176 = vpack.c.b16 %v5804, %v5800
        %v6177 = vpack.c.b16 %v5805, %v5801
        %v6178 = vpack.c.b16 %v5810, %v5806
        %v6179 = vpack.c.b16 %v5811, %v5807
        %v6180 = vpack.c.b16 %v5812, %v5808
        %v6181 = vpack.c.b16 %v5813, %v5809
        %v6182 = vpack.c.b16 %v5818, %v5814
        %v6183 = vpack.c.b16 %v5819, %v5815
        %v6184 = vpack.c.b16 %v5820, %v5816
        %v6185 = vpack.c.b16 %v5821, %v5817
        %v6186 = vpack.c.b16 %v5826, %v5822
        %v6187 = vpack.c.b16 %v5827, %v5823
        %v6188 = vpack.c.b16 %v5828, %v5824
        %v6189 = vpack.c.b16 %v5829, %v5825
        %v6190 = vpack.c.b16 %v5834, %v5830
        %v6191 = vpack.c.b16 %v5835, %v5831
        %v6192 = vpack.c.b16 %v5836, %v5832
        %v6193 = vpack.c.b16 %v5837, %v5833
        %v6194 = vpack.c.b16 %v5842, %v5838
        %v6195 = vpack.c.b16 %v5843, %v5839
        %v6196 = vpack.c.b16 %v5844, %v5840
        %v6197 = vpack.c.b16 %v5845, %v5841
        %v6198 = vpack.c.b16 %v5850, %v5846
        %v6199 = vpack.c.b16 %v5851, %v5847
        %v6200 = vpack.c.b16 %v5852, %v5848
        %v6201 = vpack.c.b16 %v5853, %v5849
        %v6202 = vpack.c.b16 %v5858, %v5854
        %v6203 = vpack.c.b16 %v5859, %v5855
        %v6204 = vpack.c.b16 %v5860, %v5856
        %v6205 = vpack.c.b16 %v5861, %v5857
        %v6206 = vpack.c.b16 %v5866, %v5862
        %v6207 = vpack.c.b16 %v5867, %v5863
        %v6208 = vpack.c.b16 %v5868, %v5864
        %v6209 = vpack.c.b16 %v5869, %v5865
        %v6210 = vpack.c.b16 %v5874, %v5870
        %v6211 = vpack.c.b16 %v5875, %v5871
        %v6212 = vpack.c.b16 %v5876, %v5872
        %v6213 = vpack.c.b16 %v5877, %v5873
        %v6214 = vpack.c.b16 %v5882, %v5878
        %v6215 = vpack.c.b16 %v5883, %v5879
        %v6216 = vpack.c.b16 %v5884, %v5880
        %v6217 = vpack.c.b16 %v5885, %v5881
        %v6218 = vpack.c.b16 %v5890, %v5886
        %v6219 = vpack.c.b16 %v5891, %v5887
        %v6220 = vpack.c.b16 %v5892, %v5888
        %v6221 = vpack.c.b16 %v5893, %v5889
        %v6222 = vpack.c.b16 %v5898, %v5894
        %v6223 = vpack.c.b16 %v5899, %v5895
        %v6224 = vpack.c.b16 %v5900, %v5896
        %v6225 = vpack.c.b16 %v5901, %v5897
        %v6226 = vpack.c.b16 %v5906, %v5902
        %v6227 = vpack.c.b16 %v5907, %v5903
        %v6228 = vpack.c.b16 %v5908, %v5904
        %v6229 = vpack.c.b16 %v5909, %v5905
        %v6230 = vpack.c.b16 %v5914, %v5910
        %v6231 = vpack.c.b16 %v5915, %v5911
        %v6232 = vpack.c.b16 %v5916, %v5912
        %v6233 = vpack.c.b16 %v5917, %v5913
        %v6234 = vpack.c.b16 %v5922, %v5918
        %v6235 = vpack.c.b16 %v5923, %v5919
        %v6236 = vpack.c.b16 %v5924, %v5920
        %v6237 = vpack.c.b16 %v5925, %v5921
        %v6238 = vpack.c.b16 %v5930, %v5926
        %v6239 = vpack.c.b16 %v5931, %v5927
        %v6240 = vpack.c.b16 %v5932, %v5928
        %v6241 = vpack.c.b16 %v5933, %v5929
        %v6242 = vpack.c.b16 %v5938, %v5934
        %v6243 = vpack.c.b16 %v5939, %v5935
        %v6244 = vpack.c.b16 %v5940, %v5936
        %v6245 = vpack.c.b16 %v5941, %v5937
        %v6246 = vpack.c.b16 %v5946, %v5942
        %v6247 = vpack.c.b16 %v5947, %v5943
        %v6248 = vpack.c.b16 %v5948, %v5944
        %v6249 = vpack.c.b16 %v5949, %v5945
        %v6250 = vpack.c.b16 %v5954, %v5950
        %v6251 = vpack.c.b16 %v5955, %v5951
        %v6252 = vpack.c.b16 %v5956, %v5952
        %v6253 = vpack.c.b16 %v5957, %v5953
        %v6254 = vpack.c.b16 %v5962, %v5958
        %v6255 = vpack.c.b16 %v5963, %v5959
        %v6256 = vpack.c.b16 %v5964, %v5960
        %v6257 = vpack.c.b16 %v5965, %v5961
        %v6258 = vpack.c.b16 %v5970, %v5966
        %v6259 = vpack.c.b16 %v5971, %v5967
        %v6260 = vpack.c.b16 %v5972, %v5968
        %v6261 = vpack.c.b16 %v5973, %v5969
        %v6262 = vpack.c.b16 %v5978, %v5974
        %v6263 = vpack.c.b16 %v5979, %v5975
        %v6264 = vpack.c.b16 %v5980, %v5976
        %v6265 = vpack.c.b16 %v5981, %v5977
        %v6266 = vpack.c.b16 %v5986, %v5982
        %v6267 = vpack.c.b16 %v5987, %v5983
        %v6268 = vpack.c.b16 %v5988, %v5984
        %v6269 = vpack.c.b16 %v5989, %v5985
        %v6270 = vpack.c.b16 %v5994, %v5990
        %v6271 = vpack.c.b16 %v5995, %v5991
        %v6272 = vpack.c.b16 %v5996, %v5992
        %v6273 = vpack.c.b16 %v5997, %v5993
        %v6274 = vpack.c.b16 %v6002, %v5998
        %v6275 = vpack.c.b16 %v6003, %v5999
        %v6276 = vpack.c.b16 %v6004, %v6000
        %v6277 = vpack.c.b16 %v6005, %v6001
        %v6278 = vpack.c.b16 %v6010, %v6006
        %v6279 = vpack.c.b16 %v6011, %v6007
        %v6280 = vpack.c.b16 %v6012, %v6008
        %v6281 = vpack.c.b16 %v6013, %v6009
        %v6282 = vpack.c.b16 %v6018, %v6014
        %v6283 = vpack.c.b16 %v6019, %v6015
        %v6284 = vpack.c.b16 %v6020, %v6016
        %v6285 = vpack.c.b16 %v6021, %v6017
        %v6286 = vpack.c.b16 %v6026, %v6022
        %v6287 = vpack.c.b16 %v6027, %v6023
        %v6288 = vpack.c.b16 %v6028, %v6024
        %v6289 = vpack.c.b16 %v6029, %v6025
        %v6290 = vpack.c.b16 %v6034, %v6030
        %v6291 = vpack.c.b16 %v6035, %v6031
        %v6292 = vpack.c.b16 %v6036, %v6032
        %v6293 = vpack.c.b16 %v6037, %v6033
        %6550 = vmatprep.subr.bf16.mxu0 %v4147
        %6551 = vmatpush1.bf16.msra.mxu0 %v4146
        %6552 = vmatprep.subr.bf16.mxu0 %v4143
        %6553 = vmatpush1.bf16.msra.mxu0 %v4142
        %6554 = vmatprep.subr.bf16.mxu0 %v4139
        %6555 = vmatpush1.bf16.msra.mxu0 %v4138
        %6556 = vmatprep.subr.bf16.mxu0 %v4135
        %6557 = vmatpush1.bf16.msra.mxu0 %v4134
        %6558 = vmatprep.subr.bf16.mxu0 %v4131
        %6559 = vmatpush1.bf16.msra.mxu0 %v4130
        %6560 = vmatprep.subr.bf16.mxu0 %v4127
        %6561 = vmatpush1.bf16.msra.mxu0 %v4126
        %6562 = vmatprep.subr.bf16.mxu0 %v4123
        %6563 = vmatpush1.bf16.msra.mxu0 %v4122
        %6564 = vmatprep.subr.bf16.mxu0 %v4119
        %6565 = vmatpush1.bf16.msra.mxu0 %v4118
        %6566 = vmatprep.subr.bf16.mxu0 %v4179
        %6567 = vmatpush2.bf16.msra.mxu0 %v4178
        %6568 = vmatprep.subr.bf16.mxu0 %v4175
        %6569 = vmatpush2.bf16.msra.mxu0 %v4174
        %6570 = vmatprep.subr.bf16.mxu0 %v4171
        %6571 = vmatpush2.bf16.msra.mxu0 %v4170
        %6572 = vmatprep.subr.bf16.mxu0 %v4167
        %6573 = vmatpush2.bf16.msra.mxu0 %v4166
        %6574 = vmatprep.subr.bf16.mxu0 %v4163
        %6575 = vmatpush2.bf16.msra.mxu0 %v4162
        %6576 = vmatprep.subr.bf16.mxu0 %v4159
        %6577 = vmatpush2.bf16.msra.mxu0 %v4158
        %6578 = vmatprep.subr.bf16.mxu0 %v4155
        %6579 = vmatpush2.bf16.msra.mxu0 %v4154
        %6580 = vmatprep.subr.bf16.mxu0 %v4151
        %6581 = vmatpush2.bf16.msra.mxu0 %v4150
        %6582 = vmatprep.mubr.bf16.mxu0 %v6039
        %6583 = vmatmul.mubr.bf16.gmra.mxu0 %v6038
        %v6584 = vpop.f32.mrf.mxu0
        %v6585 = vadd.f32 %v4633, %v6584
        %v6586 = vpop.f32.mrf.mxu0
        %v6587 = vadd.f32 %v4633, %v6586
        %v6588 = vpop.f32.mrf.mxu0
        %v6589 = vadd.f32 %v4638, %v6588
        %v6590 = vpop.f32.mrf.mxu0
        %v6591 = vadd.f32 %v4638, %v6590
        %6592 = vmatprep.mubr.bf16.mxu0 %v6043
        %6593 = vmatmul.mubr.bf16.gmra.mxu0 %v6042
        %v6594 = vpop.f32.mrf.mxu0
        %v6595 = vadd.f32 %v4643, %v6594
        %v6596 = vpop.f32.mrf.mxu0
        %v6597 = vadd.f32 %v4643, %v6596
        %v6598 = vpop.f32.mrf.mxu0
        %v6599 = vadd.f32 %v4648, %v6598
        %v6600 = vpop.f32.mrf.mxu0
        %v6601 = vadd.f32 %v4648, %v6600
        %6602 = vmatprep.mubr.bf16.mxu0 %v6047
        %6603 = vmatmul.mubr.bf16.gmra.mxu0 %v6046
        %v6604 = vpop.f32.mrf.mxu0
        %v6605 = vadd.f32 %v4653, %v6604
        %v6606 = vpop.f32.mrf.mxu0
        %v6607 = vadd.f32 %v4653, %v6606
        %v6608 = vpop.f32.mrf.mxu0
        %v6609 = vadd.f32 %v4658, %v6608
        %v6610 = vpop.f32.mrf.mxu0
        %v6611 = vadd.f32 %v4658, %v6610
        %6612 = vmatprep.mubr.bf16.mxu0 %v6051
        %6613 = vmatmul.mubr.bf16.gmra.mxu0 %v6050
        %v6614 = vpop.f32.mrf.mxu0
        %v6615 = vadd.f32 %v4663, %v6614
        %v6616 = vpop.f32.mrf.mxu0
        %v6617 = vadd.f32 %v4663, %v6616
        %v6618 = vpop.f32.mrf.mxu0
        %v6619 = vadd.f32 %v4668, %v6618
        %v6620 = vpop.f32.mrf.mxu0
        %v6621 = vadd.f32 %v4668, %v6620
        %6622 = vmatprep.mubr.bf16.mxu0 %v6055
        %6623 = vmatmul.mubr.bf16.gmra.mxu0 %v6054
        %v6624 = vpop.f32.mrf.mxu0
        %v6625 = vadd.f32 %v4673, %v6624
        %v6626 = vpop.f32.mrf.mxu0
        %v6627 = vadd.f32 %v4673, %v6626
        %v6628 = vpop.f32.mrf.mxu0
        %v6629 = vadd.f32 %v4678, %v6628
        %v6630 = vpop.f32.mrf.mxu0
        %v6631 = vadd.f32 %v4678, %v6630
        %6632 = vmatprep.mubr.bf16.mxu0 %v6059
        %6633 = vmatmul.mubr.bf16.gmra.mxu0 %v6058
        %v6634 = vpop.f32.mrf.mxu0
        %v6635 = vadd.f32 %v4683, %v6634
        %v6636 = vpop.f32.mrf.mxu0
        %v6637 = vadd.f32 %v4683, %v6636
        %v6638 = vpop.f32.mrf.mxu0
        %v6639 = vadd.f32 %v4688, %v6638
        %v6640 = vpop.f32.mrf.mxu0
        %v6641 = vadd.f32 %v4688, %v6640
        %6642 = vmatprep.mubr.bf16.mxu0 %v6063
        %6643 = vmatmul.mubr.bf16.gmra.mxu0 %v6062
        %v6644 = vpop.f32.mrf.mxu0
        %v6645 = vadd.f32 %v4693, %v6644
        %v6646 = vpop.f32.mrf.mxu0
        %v6647 = vadd.f32 %v4693, %v6646
        %v6648 = vpop.f32.mrf.mxu0
        %v6649 = vadd.f32 %v4698, %v6648
        %v6650 = vpop.f32.mrf.mxu0
        %v6651 = vadd.f32 %v4698, %v6650
        %6652 = vmatprep.mubr.bf16.mxu0 %v6067
        %6653 = vmatmul.mubr.bf16.gmra.mxu0 %v6066
        %v6654 = vpop.f32.mrf.mxu0
        %v6655 = vadd.f32 %v4703, %v6654
        %v6656 = vpop.f32.mrf.mxu0
        %v6657 = vadd.f32 %v4703, %v6656
        %v6658 = vpop.f32.mrf.mxu0
        %v6659 = vadd.f32 %v4708, %v6658
        %v6660 = vpop.f32.mrf.mxu0
        %v6661 = vadd.f32 %v4708, %v6660
        %6662 = vmatprep.mubr.bf16.mxu0 %v6071
        %6663 = vmatmul.mubr.bf16.gmra.mxu0 %v6070
        %v6664 = vpop.f32.mrf.mxu0
        %v6665 = vadd.f32 %v4713, %v6664
        %v6666 = vpop.f32.mrf.mxu0
        %v6667 = vadd.f32 %v4713, %v6666
        %v6668 = vpop.f32.mrf.mxu0
        %v6669 = vadd.f32 %v4718, %v6668
        %v6670 = vpop.f32.mrf.mxu0
        %v6671 = vadd.f32 %v4718, %v6670
        %6672 = vmatprep.mubr.bf16.mxu0 %v6075
        %6673 = vmatmul.mubr.bf16.gmra.mxu0 %v6074
        %v6674 = vpop.f32.mrf.mxu0
        %v6675 = vadd.f32 %v4723, %v6674
        %v6676 = vpop.f32.mrf.mxu0
        %v6677 = vadd.f32 %v4723, %v6676
        %v6678 = vpop.f32.mrf.mxu0
        %v6679 = vadd.f32 %v4728, %v6678
        %v6680 = vpop.f32.mrf.mxu0
        %v6681 = vadd.f32 %v4728, %v6680
        %6682 = vmatprep.mubr.bf16.mxu0 %v6079
        %6683 = vmatmul.mubr.bf16.gmra.mxu0 %v6078
        %v6684 = vpop.f32.mrf.mxu0
        %v6685 = vadd.f32 %v4733, %v6684
        %v6686 = vpop.f32.mrf.mxu0
        %v6687 = vadd.f32 %v4733, %v6686
        %v6688 = vpop.f32.mrf.mxu0
        %v6689 = vadd.f32 %v4738, %v6688
        %v6690 = vpop.f32.mrf.mxu0
        %v6691 = vadd.f32 %v4738, %v6690
        %6692 = vmatprep.mubr.bf16.mxu0 %v6083
        %6693 = vmatmul.mubr.bf16.gmra.mxu0 %v6082
        %v6694 = vpop.f32.mrf.mxu0
        %v6695 = vadd.f32 %v4743, %v6694
        %v6696 = vpop.f32.mrf.mxu0
        %v6697 = vadd.f32 %v4743, %v6696
        %v6698 = vpop.f32.mrf.mxu0
        %v6699 = vadd.f32 %v4748, %v6698
        %v6700 = vpop.f32.mrf.mxu0
        %v6701 = vadd.f32 %v4748, %v6700
        %6702 = vmatprep.mubr.bf16.mxu0 %v6087
        %6703 = vmatmul.mubr.bf16.gmra.mxu0 %v6086
        %v6704 = vpop.f32.mrf.mxu0
        %v6705 = vadd.f32 %v4753, %v6704
        %v6706 = vpop.f32.mrf.mxu0
        %v6707 = vadd.f32 %v4753, %v6706
        %v6708 = vpop.f32.mrf.mxu0
        %v6709 = vadd.f32 %v4758, %v6708
        %v6710 = vpop.f32.mrf.mxu0
        %v6711 = vadd.f32 %v4758, %v6710
        %6712 = vmatprep.mubr.bf16.mxu0 %v6091
        %6713 = vmatmul.mubr.bf16.gmra.mxu0 %v6090
        %v6714 = vpop.f32.mrf.mxu0
        %v6715 = vadd.f32 %v4763, %v6714
        %v6716 = vpop.f32.mrf.mxu0
        %v6717 = vadd.f32 %v4763, %v6716
        %v6718 = vpop.f32.mrf.mxu0
        %v6719 = vadd.f32 %v4768, %v6718
        %v6720 = vpop.f32.mrf.mxu0
        %v6721 = vadd.f32 %v4768, %v6720
        %6722 = vmatprep.mubr.bf16.mxu0 %v6095
        %6723 = vmatmul.mubr.bf16.gmra.mxu0 %v6094
        %v6724 = vpop.f32.mrf.mxu0
        %v6725 = vadd.f32 %v4773, %v6724
        %v6726 = vpop.f32.mrf.mxu0
        %v6727 = vadd.f32 %v4773, %v6726
        %v6728 = vpop.f32.mrf.mxu0
        %v6729 = vadd.f32 %v4778, %v6728
        %v6730 = vpop.f32.mrf.mxu0
        %v6731 = vadd.f32 %v4778, %v6730
        %6732 = vmatprep.mubr.bf16.mxu0 %v6099
        %6733 = vmatmul.mubr.bf16.gmra.mxu0 %v6098
        %v6734 = vpop.f32.mrf.mxu0
        %v6735 = vadd.f32 %v4783, %v6734
        %v6736 = vpop.f32.mrf.mxu0
        %v6737 = vadd.f32 %v4783, %v6736
        %v6738 = vpop.f32.mrf.mxu0
        %v6739 = vadd.f32 %v4788, %v6738
        %v6740 = vpop.f32.mrf.mxu0
        %v6741 = vadd.f32 %v4788, %v6740
        %6742 = vmatprep.mubr.bf16.mxu0 %v6103
        %6743 = vmatmul.mubr.bf16.gmra.mxu0 %v6102
        %v6744 = vpop.f32.mrf.mxu0
        %v6745 = vadd.f32 %v4793, %v6744
        %v6746 = vpop.f32.mrf.mxu0
        %v6747 = vadd.f32 %v4793, %v6746
        %v6748 = vpop.f32.mrf.mxu0
        %v6749 = vadd.f32 %v4798, %v6748
        %v6750 = vpop.f32.mrf.mxu0
        %v6751 = vadd.f32 %v4798, %v6750
        %6752 = vmatprep.mubr.bf16.mxu0 %v6107
        %6753 = vmatmul.mubr.bf16.gmra.mxu0 %v6106
        %v6754 = vpop.f32.mrf.mxu0
        %v6755 = vadd.f32 %v4803, %v6754
        %v6756 = vpop.f32.mrf.mxu0
        %v6757 = vadd.f32 %v4803, %v6756
        %v6758 = vpop.f32.mrf.mxu0
        %v6759 = vadd.f32 %v4808, %v6758
        %v6760 = vpop.f32.mrf.mxu0
        %v6761 = vadd.f32 %v4808, %v6760
        %6762 = vmatprep.mubr.bf16.mxu0 %v6111
        %6763 = vmatmul.mubr.bf16.gmra.mxu0 %v6110
        %v6764 = vpop.f32.mrf.mxu0
        %v6765 = vadd.f32 %v4813, %v6764
        %v6766 = vpop.f32.mrf.mxu0
        %v6767 = vadd.f32 %v4813, %v6766
        %v6768 = vpop.f32.mrf.mxu0
        %v6769 = vadd.f32 %v4818, %v6768
        %v6770 = vpop.f32.mrf.mxu0
        %v6771 = vadd.f32 %v4818, %v6770
        %6772 = vmatprep.mubr.bf16.mxu0 %v6115
        %6773 = vmatmul.mubr.bf16.gmra.mxu0 %v6114
        %v6774 = vpop.f32.mrf.mxu0
        %v6775 = vadd.f32 %v4823, %v6774
        %v6776 = vpop.f32.mrf.mxu0
        %v6777 = vadd.f32 %v4823, %v6776
        %v6778 = vpop.f32.mrf.mxu0
        %v6779 = vadd.f32 %v4828, %v6778
        %v6780 = vpop.f32.mrf.mxu0
        %v6781 = vadd.f32 %v4828, %v6780
        %6782 = vmatprep.mubr.bf16.mxu0 %v6119
        %6783 = vmatmul.mubr.bf16.gmra.mxu0 %v6118
        %v6784 = vpop.f32.mrf.mxu0
        %v6785 = vadd.f32 %v4833, %v6784
        %v6786 = vpop.f32.mrf.mxu0
        %v6787 = vadd.f32 %v4833, %v6786
        %v6788 = vpop.f32.mrf.mxu0
        %v6789 = vadd.f32 %v4838, %v6788
        %v6790 = vpop.f32.mrf.mxu0
        %v6791 = vadd.f32 %v4838, %v6790
        %6792 = vmatprep.mubr.bf16.mxu0 %v6123
        %6793 = vmatmul.mubr.bf16.gmra.mxu0 %v6122
        %v6794 = vpop.f32.mrf.mxu0
        %v6795 = vadd.f32 %v4843, %v6794
        %v6796 = vpop.f32.mrf.mxu0
        %v6797 = vadd.f32 %v4843, %v6796
        %v6798 = vpop.f32.mrf.mxu0
        %v6799 = vadd.f32 %v4848, %v6798
        %v6800 = vpop.f32.mrf.mxu0
        %v6801 = vadd.f32 %v4848, %v6800
        %6802 = vmatprep.mubr.bf16.mxu0 %v6127
        %6803 = vmatmul.mubr.bf16.gmra.mxu0 %v6126
        %v6804 = vpop.f32.mrf.mxu0
        %v6805 = vadd.f32 %v4853, %v6804
        %v6806 = vpop.f32.mrf.mxu0
        %v6807 = vadd.f32 %v4853, %v6806
        %v6808 = vpop.f32.mrf.mxu0
        %v6809 = vadd.f32 %v4858, %v6808
        %v6810 = vpop.f32.mrf.mxu0
        %v6811 = vadd.f32 %v4858, %v6810
        %6812 = vmatprep.mubr.bf16.mxu0 %v6131
        %6813 = vmatmul.mubr.bf16.gmra.mxu0 %v6130
        %v6814 = vpop.f32.mrf.mxu0
        %v6815 = vadd.f32 %v4863, %v6814
        %v6816 = vpop.f32.mrf.mxu0
        %v6817 = vadd.f32 %v4863, %v6816
        %v6818 = vpop.f32.mrf.mxu0
        %v6819 = vadd.f32 %v4868, %v6818
        %v6820 = vpop.f32.mrf.mxu0
        %v6821 = vadd.f32 %v4868, %v6820
        %6822 = vmatprep.mubr.bf16.mxu0 %v6135
        %6823 = vmatmul.mubr.bf16.gmra.mxu0 %v6134
        %v6824 = vpop.f32.mrf.mxu0
        %v6825 = vadd.f32 %v4873, %v6824
        %v6826 = vpop.f32.mrf.mxu0
        %v6827 = vadd.f32 %v4873, %v6826
        %v6828 = vpop.f32.mrf.mxu0
        %v6829 = vadd.f32 %v4878, %v6828
        %v6830 = vpop.f32.mrf.mxu0
        %v6831 = vadd.f32 %v4878, %v6830
        %6832 = vmatprep.mubr.bf16.mxu0 %v6139
        %6833 = vmatmul.mubr.bf16.gmra.mxu0 %v6138
        %v6834 = vpop.f32.mrf.mxu0
        %v6835 = vadd.f32 %v4883, %v6834
        %v6836 = vpop.f32.mrf.mxu0
        %v6837 = vadd.f32 %v4883, %v6836
        %v6838 = vpop.f32.mrf.mxu0
        %v6839 = vadd.f32 %v4888, %v6838
        %v6840 = vpop.f32.mrf.mxu0
        %v6841 = vadd.f32 %v4888, %v6840
        %6842 = vmatprep.mubr.bf16.mxu0 %v6143
        %6843 = vmatmul.mubr.bf16.gmra.mxu0 %v6142
        %v6844 = vpop.f32.mrf.mxu0
        %v6845 = vadd.f32 %v4893, %v6844
        %v6846 = vpop.f32.mrf.mxu0
        %v6847 = vadd.f32 %v4893, %v6846
        %v6848 = vpop.f32.mrf.mxu0
        %v6849 = vadd.f32 %v4898, %v6848
        %v6850 = vpop.f32.mrf.mxu0
        %v6851 = vadd.f32 %v4898, %v6850
        %6852 = vmatprep.mubr.bf16.mxu0 %v6147
        %6853 = vmatmul.mubr.bf16.gmra.mxu0 %v6146
        %v6854 = vpop.f32.mrf.mxu0
        %v6855 = vadd.f32 %v4903, %v6854
        %v6856 = vpop.f32.mrf.mxu0
        %v6857 = vadd.f32 %v4903, %v6856
        %v6858 = vpop.f32.mrf.mxu0
        %v6859 = vadd.f32 %v4908, %v6858
        %v6860 = vpop.f32.mrf.mxu0
        %v6861 = vadd.f32 %v4908, %v6860
        %6862 = vmatprep.mubr.bf16.mxu0 %v6151
        %6863 = vmatmul.mubr.bf16.gmra.mxu0 %v6150
        %v6864 = vpop.f32.mrf.mxu0
        %v6865 = vadd.f32 %v4913, %v6864
        %v6866 = vpop.f32.mrf.mxu0
        %v6867 = vadd.f32 %v4913, %v6866
        %v6868 = vpop.f32.mrf.mxu0
        %v6869 = vadd.f32 %v4918, %v6868
        %v6870 = vpop.f32.mrf.mxu0
        %v6871 = vadd.f32 %v4918, %v6870
        %6872 = vmatprep.mubr.bf16.mxu0 %v6155
        %6873 = vmatmul.mubr.bf16.gmra.mxu0 %v6154
        %v6874 = vpop.f32.mrf.mxu0
        %v6875 = vadd.f32 %v4923, %v6874
        %v6876 = vpop.f32.mrf.mxu0
        %v6877 = vadd.f32 %v4923, %v6876
        %v6878 = vpop.f32.mrf.mxu0
        %v6879 = vadd.f32 %v4928, %v6878
        %v6880 = vpop.f32.mrf.mxu0
        %v6881 = vadd.f32 %v4928, %v6880
        %6882 = vmatprep.mubr.bf16.mxu0 %v6159
        %6883 = vmatmul.mubr.bf16.gmra.mxu0 %v6158
        %v6884 = vpop.f32.mrf.mxu0
        %v6885 = vadd.f32 %v4933, %v6884
        %v6886 = vpop.f32.mrf.mxu0
        %v6887 = vadd.f32 %v4933, %v6886
        %v6888 = vpop.f32.mrf.mxu0
        %v6889 = vadd.f32 %v4938, %v6888
        %v6890 = vpop.f32.mrf.mxu0
        %v6891 = vadd.f32 %v4938, %v6890
        %6892 = vmatprep.mubr.bf16.mxu0 %v6163
        %6893 = vmatmul.mubr.bf16.gmra.mxu0 %v6162
        %v6894 = vpop.f32.mrf.mxu0
        %v6895 = vadd.f32 %v4943, %v6894
        %v6896 = vpop.f32.mrf.mxu0
        %v6897 = vadd.f32 %v4943, %v6896
        %v6898 = vpop.f32.mrf.mxu0
        %v6899 = vadd.f32 %v4948, %v6898
        %v6900 = vpop.f32.mrf.mxu0
        %v6901 = vadd.f32 %v4948, %v6900
        %6902 = vmatprep.mubr.bf16.mxu0 %v6167
        %6903 = vmatmul.mubr.bf16.gmra.mxu0 %v6166
        %v6904 = vpop.f32.mrf.mxu0
        %v6905 = vadd.f32 %v4953, %v6904
        %v6906 = vpop.f32.mrf.mxu0
        %v6907 = vadd.f32 %v4953, %v6906
        %v6908 = vpop.f32.mrf.mxu0
        %v6909 = vadd.f32 %v4958, %v6908
        %v6910 = vpop.f32.mrf.mxu0
        %v6911 = vadd.f32 %v4958, %v6910
        %6912 = vmatprep.mubr.bf16.mxu0 %v6171
        %6913 = vmatmul.mubr.bf16.gmra.mxu0 %v6170
        %v6914 = vpop.f32.mrf.mxu0
        %v6915 = vadd.f32 %v4963, %v6914
        %v6916 = vpop.f32.mrf.mxu0
        %v6917 = vadd.f32 %v4963, %v6916
        %v6918 = vpop.f32.mrf.mxu0
        %v6919 = vadd.f32 %v4968, %v6918
        %v6920 = vpop.f32.mrf.mxu0
        %v6921 = vadd.f32 %v4968, %v6920
        %6922 = vmatprep.mubr.bf16.mxu0 %v6175
        %6923 = vmatmul.mubr.bf16.gmra.mxu0 %v6174
        %v6924 = vpop.f32.mrf.mxu0
        %v6925 = vadd.f32 %v4973, %v6924
        %v6926 = vpop.f32.mrf.mxu0
        %v6927 = vadd.f32 %v4973, %v6926
        %v6928 = vpop.f32.mrf.mxu0
        %v6929 = vadd.f32 %v4978, %v6928
        %v6930 = vpop.f32.mrf.mxu0
        %v6931 = vadd.f32 %v4978, %v6930
        %6932 = vmatprep.mubr.bf16.mxu0 %v6179
        %6933 = vmatmul.mubr.bf16.gmra.mxu0 %v6178
        %v6934 = vpop.f32.mrf.mxu0
        %v6935 = vadd.f32 %v4983, %v6934
        %v6936 = vpop.f32.mrf.mxu0
        %v6937 = vadd.f32 %v4983, %v6936
        %v6938 = vpop.f32.mrf.mxu0
        %v6939 = vadd.f32 %v4988, %v6938
        %v6940 = vpop.f32.mrf.mxu0
        %v6941 = vadd.f32 %v4988, %v6940
        %6942 = vmatprep.mubr.bf16.mxu0 %v6183
        %6943 = vmatmul.mubr.bf16.gmra.mxu0 %v6182
        %v6944 = vpop.f32.mrf.mxu0
        %v6945 = vadd.f32 %v4993, %v6944
        %v6946 = vpop.f32.mrf.mxu0
        %v6947 = vadd.f32 %v4993, %v6946
        %v6948 = vpop.f32.mrf.mxu0
        %v6949 = vadd.f32 %v4998, %v6948
        %v6950 = vpop.f32.mrf.mxu0
        %v6951 = vadd.f32 %v4998, %v6950
        %6952 = vmatprep.mubr.bf16.mxu0 %v6187
        %6953 = vmatmul.mubr.bf16.gmra.mxu0 %v6186
        %v6954 = vpop.f32.mrf.mxu0
        %v6955 = vadd.f32 %v5003, %v6954
        %v6956 = vpop.f32.mrf.mxu0
        %v6957 = vadd.f32 %v5003, %v6956
        %v6958 = vpop.f32.mrf.mxu0
        %v6959 = vadd.f32 %v5008, %v6958
        %v6960 = vpop.f32.mrf.mxu0
        %v6961 = vadd.f32 %v5008, %v6960
        %6962 = vmatprep.mubr.bf16.mxu0 %v6191
        %6963 = vmatmul.mubr.bf16.gmra.mxu0 %v6190
        %v6964 = vpop.f32.mrf.mxu0
        %v6965 = vadd.f32 %v5013, %v6964
        %v6966 = vpop.f32.mrf.mxu0
        %v6967 = vadd.f32 %v5013, %v6966
        %v6968 = vpop.f32.mrf.mxu0
        %v6969 = vadd.f32 %v5018, %v6968
        %v6970 = vpop.f32.mrf.mxu0
        %v6971 = vadd.f32 %v5018, %v6970
        %6972 = vmatprep.mubr.bf16.mxu0 %v6195
        %6973 = vmatmul.mubr.bf16.gmra.mxu0 %v6194
        %v6974 = vpop.f32.mrf.mxu0
        %v6975 = vadd.f32 %v5023, %v6974
        %v6976 = vpop.f32.mrf.mxu0
        %v6977 = vadd.f32 %v5023, %v6976
        %v6978 = vpop.f32.mrf.mxu0
        %v6979 = vadd.f32 %v5028, %v6978
        %v6980 = vpop.f32.mrf.mxu0
        %v6981 = vadd.f32 %v5028, %v6980
        %6982 = vmatprep.mubr.bf16.mxu0 %v6199
        %6983 = vmatmul.mubr.bf16.gmra.mxu0 %v6198
        %v6984 = vpop.f32.mrf.mxu0
        %v6985 = vadd.f32 %v5033, %v6984
        %v6986 = vpop.f32.mrf.mxu0
        %v6987 = vadd.f32 %v5033, %v6986
        %v6988 = vpop.f32.mrf.mxu0
        %v6989 = vadd.f32 %v5038, %v6988
        %v6990 = vpop.f32.mrf.mxu0
        %v6991 = vadd.f32 %v5038, %v6990
        %6992 = vmatprep.mubr.bf16.mxu0 %v6203
        %6993 = vmatmul.mubr.bf16.gmra.mxu0 %v6202
        %v6994 = vpop.f32.mrf.mxu0
        %v6995 = vadd.f32 %v5043, %v6994
        %v6996 = vpop.f32.mrf.mxu0
        %v6997 = vadd.f32 %v5043, %v6996
        %v6998 = vpop.f32.mrf.mxu0
        %v6999 = vadd.f32 %v5048, %v6998
        %v7000 = vpop.f32.mrf.mxu0
        %v7001 = vadd.f32 %v5048, %v7000
        %7002 = vmatprep.mubr.bf16.mxu0 %v6207
        %7003 = vmatmul.mubr.bf16.gmra.mxu0 %v6206
        %v7004 = vpop.f32.mrf.mxu0
        %v7005 = vadd.f32 %v5053, %v7004
        %v7006 = vpop.f32.mrf.mxu0
        %v7007 = vadd.f32 %v5053, %v7006
        %v7008 = vpop.f32.mrf.mxu0
        %v7009 = vadd.f32 %v5058, %v7008
        %v7010 = vpop.f32.mrf.mxu0
        %v7011 = vadd.f32 %v5058, %v7010
        %7012 = vmatprep.mubr.bf16.mxu0 %v6211
        %7013 = vmatmul.mubr.bf16.gmra.mxu0 %v6210
        %v7014 = vpop.f32.mrf.mxu0
        %v7015 = vadd.f32 %v5063, %v7014
        %v7016 = vpop.f32.mrf.mxu0
        %v7017 = vadd.f32 %v5063, %v7016
        %v7018 = vpop.f32.mrf.mxu0
        %v7019 = vadd.f32 %v5068, %v7018
        %v7020 = vpop.f32.mrf.mxu0
        %v7021 = vadd.f32 %v5068, %v7020
        %7022 = vmatprep.mubr.bf16.mxu0 %v6215
        %7023 = vmatmul.mubr.bf16.gmra.mxu0 %v6214
        %v7024 = vpop.f32.mrf.mxu0
        %v7025 = vadd.f32 %v5073, %v7024
        %v7026 = vpop.f32.mrf.mxu0
        %v7027 = vadd.f32 %v5073, %v7026
        %v7028 = vpop.f32.mrf.mxu0
        %v7029 = vadd.f32 %v5078, %v7028
        %v7030 = vpop.f32.mrf.mxu0
        %v7031 = vadd.f32 %v5078, %v7030
        %7032 = vmatprep.mubr.bf16.mxu0 %v6219
        %7033 = vmatmul.mubr.bf16.gmra.mxu0 %v6218
        %v7034 = vpop.f32.mrf.mxu0
        %v7035 = vadd.f32 %v5083, %v7034
        %v7036 = vpop.f32.mrf.mxu0
        %v7037 = vadd.f32 %v5083, %v7036
        %v7038 = vpop.f32.mrf.mxu0
        %v7039 = vadd.f32 %v5088, %v7038
        %v7040 = vpop.f32.mrf.mxu0
        %v7041 = vadd.f32 %v5088, %v7040
        %7042 = vmatprep.mubr.bf16.mxu0 %v6223
        %7043 = vmatmul.mubr.bf16.gmra.mxu0 %v6222
        %v7044 = vpop.f32.mrf.mxu0
        %v7045 = vadd.f32 %v5093, %v7044
        %v7046 = vpop.f32.mrf.mxu0
        %v7047 = vadd.f32 %v5093, %v7046
        %v7048 = vpop.f32.mrf.mxu0
        %v7049 = vadd.f32 %v5098, %v7048
        %v7050 = vpop.f32.mrf.mxu0
        %v7051 = vadd.f32 %v5098, %v7050
        %7052 = vmatprep.mubr.bf16.mxu0 %v6227
        %7053 = vmatmul.mubr.bf16.gmra.mxu0 %v6226
        %v7054 = vpop.f32.mrf.mxu0
        %v7055 = vadd.f32 %v5103, %v7054
        %v7056 = vpop.f32.mrf.mxu0
        %v7057 = vadd.f32 %v5103, %v7056
        %v7058 = vpop.f32.mrf.mxu0
        %v7059 = vadd.f32 %v5108, %v7058
        %v7060 = vpop.f32.mrf.mxu0
        %v7061 = vadd.f32 %v5108, %v7060
        %7062 = vmatprep.mubr.bf16.mxu0 %v6231
        %7063 = vmatmul.mubr.bf16.gmra.mxu0 %v6230
        %v7064 = vpop.f32.mrf.mxu0
        %v7065 = vadd.f32 %v5113, %v7064
        %v7066 = vpop.f32.mrf.mxu0
        %v7067 = vadd.f32 %v5113, %v7066
        %v7068 = vpop.f32.mrf.mxu0
        %v7069 = vadd.f32 %v5118, %v7068
        %v7070 = vpop.f32.mrf.mxu0
        %v7071 = vadd.f32 %v5118, %v7070
        %7072 = vmatprep.mubr.bf16.mxu0 %v6235
        %7073 = vmatmul.mubr.bf16.gmra.mxu0 %v6234
        %v7074 = vpop.f32.mrf.mxu0
        %v7075 = vadd.f32 %v5123, %v7074
        %v7076 = vpop.f32.mrf.mxu0
        %v7077 = vadd.f32 %v5123, %v7076
        %v7078 = vpop.f32.mrf.mxu0
        %v7079 = vadd.f32 %v5128, %v7078
        %v7080 = vpop.f32.mrf.mxu0
        %v7081 = vadd.f32 %v5128, %v7080
        %7082 = vmatprep.mubr.bf16.mxu0 %v6239
        %7083 = vmatmul.mubr.bf16.gmra.mxu0 %v6238
        %v7084 = vpop.f32.mrf.mxu0
        %v7085 = vadd.f32 %v5133, %v7084
        %v7086 = vpop.f32.mrf.mxu0
        %v7087 = vadd.f32 %v5133, %v7086
        %v7088 = vpop.f32.mrf.mxu0
        %v7089 = vadd.f32 %v5138, %v7088
        %v7090 = vpop.f32.mrf.mxu0
        %v7091 = vadd.f32 %v5138, %v7090
        %7092 = vmatprep.mubr.bf16.mxu0 %v6243
        %7093 = vmatmul.mubr.bf16.gmra.mxu0 %v6242
        %v7094 = vpop.f32.mrf.mxu0
        %v7095 = vadd.f32 %v5143, %v7094
        %v7096 = vpop.f32.mrf.mxu0
        %v7097 = vadd.f32 %v5143, %v7096
        %v7098 = vpop.f32.mrf.mxu0
        %v7099 = vadd.f32 %v5148, %v7098
        %v7100 = vpop.f32.mrf.mxu0
        %v7101 = vadd.f32 %v5148, %v7100
        %7102 = vmatprep.mubr.bf16.mxu0 %v6247
        %7103 = vmatmul.mubr.bf16.gmra.mxu0 %v6246
        %v7104 = vpop.f32.mrf.mxu0
        %v7105 = vadd.f32 %v5153, %v7104
        %v7106 = vpop.f32.mrf.mxu0
        %v7107 = vadd.f32 %v5153, %v7106
        %v7108 = vpop.f32.mrf.mxu0
        %v7109 = vadd.f32 %v5158, %v7108
        %v7110 = vpop.f32.mrf.mxu0
        %v7111 = vadd.f32 %v5158, %v7110
        %7112 = vmatprep.mubr.bf16.mxu0 %v6251
        %7113 = vmatmul.mubr.bf16.gmra.mxu0 %v6250
        %v7114 = vpop.f32.mrf.mxu0
        %v7115 = vadd.f32 %v5163, %v7114
        %v7116 = vpop.f32.mrf.mxu0
        %v7117 = vadd.f32 %v5163, %v7116
        %v7118 = vpop.f32.mrf.mxu0
        %v7119 = vadd.f32 %v5168, %v7118
        %v7120 = vpop.f32.mrf.mxu0
        %v7121 = vadd.f32 %v5168, %v7120
        %7122 = vmatprep.mubr.bf16.mxu0 %v6255
        %7123 = vmatmul.mubr.bf16.gmra.mxu0 %v6254
        %v7124 = vpop.f32.mrf.mxu0
        %v7125 = vadd.f32 %v5173, %v7124
        %v7126 = vpop.f32.mrf.mxu0
        %v7127 = vadd.f32 %v5173, %v7126
        %v7128 = vpop.f32.mrf.mxu0
        %v7129 = vadd.f32 %v5178, %v7128
        %v7130 = vpop.f32.mrf.mxu0
        %v7131 = vadd.f32 %v5178, %v7130
        %7132 = vmatprep.mubr.bf16.mxu0 %v6259
        %7133 = vmatmul.mubr.bf16.gmra.mxu0 %v6258
        %v7134 = vpop.f32.mrf.mxu0
        %v7135 = vadd.f32 %v5183, %v7134
        %v7136 = vpop.f32.mrf.mxu0
        %v7137 = vadd.f32 %v5183, %v7136
        %v7138 = vpop.f32.mrf.mxu0
        %v7139 = vadd.f32 %v5188, %v7138
        %v7140 = vpop.f32.mrf.mxu0
        %v7141 = vadd.f32 %v5188, %v7140
        %7142 = vmatprep.mubr.bf16.mxu0 %v6263
        %7143 = vmatmul.mubr.bf16.gmra.mxu0 %v6262
        %v7144 = vpop.f32.mrf.mxu0
        %v7145 = vadd.f32 %v5193, %v7144
        %v7146 = vpop.f32.mrf.mxu0
        %v7147 = vadd.f32 %v5193, %v7146
        %v7148 = vpop.f32.mrf.mxu0
        %v7149 = vadd.f32 %v5198, %v7148
        %v7150 = vpop.f32.mrf.mxu0
        %v7151 = vadd.f32 %v5198, %v7150
        %7152 = vmatprep.mubr.bf16.mxu0 %v6267
        %7153 = vmatmul.mubr.bf16.gmra.mxu0 %v6266
        %v7154 = vpop.f32.mrf.mxu0
        %v7155 = vadd.f32 %v5203, %v7154
        %v7156 = vpop.f32.mrf.mxu0
        %v7157 = vadd.f32 %v5203, %v7156
        %v7158 = vpop.f32.mrf.mxu0
        %v7159 = vadd.f32 %v5208, %v7158
        %v7160 = vpop.f32.mrf.mxu0
        %v7161 = vadd.f32 %v5208, %v7160
        %7162 = vmatprep.mubr.bf16.mxu0 %v6271
        %7163 = vmatmul.mubr.bf16.gmra.mxu0 %v6270
        %v7164 = vpop.f32.mrf.mxu0
        %v7165 = vadd.f32 %v5213, %v7164
        %v7166 = vpop.f32.mrf.mxu0
        %v7167 = vadd.f32 %v5213, %v7166
        %v7168 = vpop.f32.mrf.mxu0
        %v7169 = vadd.f32 %v5218, %v7168
        %v7170 = vpop.f32.mrf.mxu0
        %v7171 = vadd.f32 %v5218, %v7170
        %7172 = vmatprep.mubr.bf16.mxu0 %v6275
        %7173 = vmatmul.mubr.bf16.gmra.mxu0 %v6274
        %v7174 = vpop.f32.mrf.mxu0
        %v7175 = vadd.f32 %v5223, %v7174
        %v7176 = vpop.f32.mrf.mxu0
        %v7177 = vadd.f32 %v5223, %v7176
        %v7178 = vpop.f32.mrf.mxu0
        %v7179 = vadd.f32 %v5228, %v7178
        %v7180 = vpop.f32.mrf.mxu0
        %v7181 = vadd.f32 %v5228, %v7180
        %7182 = vmatprep.mubr.bf16.mxu0 %v6279
        %7183 = vmatmul.mubr.bf16.gmra.mxu0 %v6278
        %v7184 = vpop.f32.mrf.mxu0
        %v7185 = vadd.f32 %v5233, %v7184
        %v7186 = vpop.f32.mrf.mxu0
        %v7187 = vadd.f32 %v5233, %v7186
        %v7188 = vpop.f32.mrf.mxu0
        %v7189 = vadd.f32 %v5238, %v7188
        %v7190 = vpop.f32.mrf.mxu0
        %v7191 = vadd.f32 %v5238, %v7190
        %7192 = vmatprep.mubr.bf16.mxu0 %v6283
        %7193 = vmatmul.mubr.bf16.gmra.mxu0 %v6282
        %v7194 = vpop.f32.mrf.mxu0
        %v7195 = vadd.f32 %v5243, %v7194
        %v7196 = vpop.f32.mrf.mxu0
        %v7197 = vadd.f32 %v5243, %v7196
        %v7198 = vpop.f32.mrf.mxu0
        %v7199 = vadd.f32 %v5248, %v7198
        %v7200 = vpop.f32.mrf.mxu0
        %v7201 = vadd.f32 %v5248, %v7200
        %7202 = vmatprep.mubr.bf16.mxu0 %v6287
        %7203 = vmatmul.mubr.bf16.gmra.mxu0 %v6286
        %v7204 = vpop.f32.mrf.mxu0
        %v7205 = vadd.f32 %v5253, %v7204
        %v7206 = vpop.f32.mrf.mxu0
        %v7207 = vadd.f32 %v5253, %v7206
        %v7208 = vpop.f32.mrf.mxu0
        %v7209 = vadd.f32 %v5258, %v7208
        %v7210 = vpop.f32.mrf.mxu0
        %v7211 = vadd.f32 %v5258, %v7210
        %7212 = vmatprep.mubr.bf16.mxu0 %v6291
        %7213 = vmatmul.mubr.bf16.gmra.mxu0 %v6290
        %v7214 = vpop.f32.mrf.mxu0
        %v7215 = vadd.f32 %v5263, %v7214
        %v7216 = vpop.f32.mrf.mxu0
        %v7217 = vadd.f32 %v5263, %v7216
        %v7218 = vpop.f32.mrf.mxu0
        %v7219 = vadd.f32 %v5268, %v7218
        %v7220 = vpop.f32.mrf.mxu0
        %v7221 = vadd.f32 %v5268, %v7220
        %7222 = vdwg.mxu0
        %7223 = vmatprep.subr.bf16.mxu0 %v4211
        %7224 = vmatpush1.bf16.msra.mxu0 %v4210
        %7225 = vmatprep.subr.bf16.mxu0 %v4207
        %7226 = vmatpush1.bf16.msra.mxu0 %v4206
        %7227 = vmatprep.subr.bf16.mxu0 %v4203
        %7228 = vmatpush1.bf16.msra.mxu0 %v4202
        %7229 = vmatprep.subr.bf16.mxu0 %v4199
        %7230 = vmatpush1.bf16.msra.mxu0 %v4198
        %7231 = vmatprep.subr.bf16.mxu0 %v4195
        %7232 = vmatpush1.bf16.msra.mxu0 %v4194
        %7233 = vmatprep.subr.bf16.mxu0 %v4191
        %7234 = vmatpush1.bf16.msra.mxu0 %v4190
        %7235 = vmatprep.subr.bf16.mxu0 %v4187
        %7236 = vmatpush1.bf16.msra.mxu0 %v4186
        %7237 = vmatprep.subr.bf16.mxu0 %v4183
        %7238 = vmatpush1.bf16.msra.mxu0 %v4182
        %7239 = vmatprep.subr.bf16.mxu0 %v4243
        %7240 = vmatpush2.bf16.msra.mxu0 %v4242
        %7241 = vmatprep.subr.bf16.mxu0 %v4239
        %7242 = vmatpush2.bf16.msra.mxu0 %v4238
        %7243 = vmatprep.subr.bf16.mxu0 %v4235
        %7244 = vmatpush2.bf16.msra.mxu0 %v4234
        %7245 = vmatprep.subr.bf16.mxu0 %v4231
        %7246 = vmatpush2.bf16.msra.mxu0 %v4230
        %7247 = vmatprep.subr.bf16.mxu0 %v4227
        %7248 = vmatpush2.bf16.msra.mxu0 %v4226
        %7249 = vmatprep.subr.bf16.mxu0 %v4223
        %7250 = vmatpush2.bf16.msra.mxu0 %v4222
        %7251 = vmatprep.subr.bf16.mxu0 %v4219
        %7252 = vmatpush2.bf16.msra.mxu0 %v4218
        %7253 = vmatprep.subr.bf16.mxu0 %v4215
        %7254 = vmatpush2.bf16.msra.mxu0 %v4214
        %7255 = vmatprep.mubr.bf16.mxu0 %v6041
        %7256 = vmatmul.mubr.bf16.gmra.mxu0 %v6040
        %v7257 = vpop.f32.mrf.mxu0
        %v7258 = vadd.f32 %v6585, %v7257
        %v7259 = vpop.f32.mrf.mxu0
        %v7260 = vadd.f32 %v6587, %v7259
        %v7261 = vpop.f32.mrf.mxu0
        %v7262 = vadd.f32 %v6589, %v7261
        %v7263 = vpop.f32.mrf.mxu0
        %v7264 = vadd.f32 %v6591, %v7263
        %7265 = vmatprep.mubr.bf16.mxu0 %v6045
        %7266 = vmatmul.mubr.bf16.gmra.mxu0 %v6044
        %v7267 = vpop.f32.mrf.mxu0
        %v7268 = vadd.f32 %v6595, %v7267
        %v7269 = vpop.f32.mrf.mxu0
        %v7270 = vadd.f32 %v6597, %v7269
        %v7271 = vpop.f32.mrf.mxu0
        %v7272 = vadd.f32 %v6599, %v7271
        %v7273 = vpop.f32.mrf.mxu0
        %v7274 = vadd.f32 %v6601, %v7273
        %7275 = vmatprep.mubr.bf16.mxu0 %v6049
        %7276 = vmatmul.mubr.bf16.gmra.mxu0 %v6048
        %v7277 = vpop.f32.mrf.mxu0
        %v7278 = vadd.f32 %v6605, %v7277
        %v7279 = vpop.f32.mrf.mxu0
        %v7280 = vadd.f32 %v6607, %v7279
        %v7281 = vpop.f32.mrf.mxu0
        %v7282 = vadd.f32 %v6609, %v7281
        %v7283 = vpop.f32.mrf.mxu0
        %v7284 = vadd.f32 %v6611, %v7283
        %7285 = vmatprep.mubr.bf16.mxu0 %v6053
        %7286 = vmatmul.mubr.bf16.gmra.mxu0 %v6052
        %v7287 = vpop.f32.mrf.mxu0
        %v7288 = vadd.f32 %v6615, %v7287
        %v7289 = vpop.f32.mrf.mxu0
        %v7290 = vadd.f32 %v6617, %v7289
        %v7291 = vpop.f32.mrf.mxu0
        %v7292 = vadd.f32 %v6619, %v7291
        %v7293 = vpop.f32.mrf.mxu0
        %v7294 = vadd.f32 %v6621, %v7293
        %7295 = vmatprep.mubr.bf16.mxu0 %v6057
        %7296 = vmatmul.mubr.bf16.gmra.mxu0 %v6056
        %v7297 = vpop.f32.mrf.mxu0
        %v7298 = vadd.f32 %v6625, %v7297
        %v7299 = vpop.f32.mrf.mxu0
        %v7300 = vadd.f32 %v6627, %v7299
        %v7301 = vpop.f32.mrf.mxu0
        %v7302 = vadd.f32 %v6629, %v7301
        %v7303 = vpop.f32.mrf.mxu0
        %v7304 = vadd.f32 %v6631, %v7303
        %7305 = vmatprep.mubr.bf16.mxu0 %v6061
        %7306 = vmatmul.mubr.bf16.gmra.mxu0 %v6060
        %v7307 = vpop.f32.mrf.mxu0
        %v7308 = vadd.f32 %v6635, %v7307
        %v7309 = vpop.f32.mrf.mxu0
        %v7310 = vadd.f32 %v6637, %v7309
        %v7311 = vpop.f32.mrf.mxu0
        %v7312 = vadd.f32 %v6639, %v7311
        %v7313 = vpop.f32.mrf.mxu0
        %v7314 = vadd.f32 %v6641, %v7313
        %7315 = vmatprep.mubr.bf16.mxu0 %v6065
        %7316 = vmatmul.mubr.bf16.gmra.mxu0 %v6064
        %v7317 = vpop.f32.mrf.mxu0
        %v7318 = vadd.f32 %v6645, %v7317
        %v7319 = vpop.f32.mrf.mxu0
        %v7320 = vadd.f32 %v6647, %v7319
        %v7321 = vpop.f32.mrf.mxu0
        %v7322 = vadd.f32 %v6649, %v7321
        %v7323 = vpop.f32.mrf.mxu0
        %v7324 = vadd.f32 %v6651, %v7323
        %7325 = vmatprep.mubr.bf16.mxu0 %v6069
        %7326 = vmatmul.mubr.bf16.gmra.mxu0 %v6068
        %v7327 = vpop.f32.mrf.mxu0
        %v7328 = vadd.f32 %v6655, %v7327
        %v7329 = vpop.f32.mrf.mxu0
        %v7330 = vadd.f32 %v6657, %v7329
        %v7331 = vpop.f32.mrf.mxu0
        %v7332 = vadd.f32 %v6659, %v7331
        %v7333 = vpop.f32.mrf.mxu0
        %v7334 = vadd.f32 %v6661, %v7333
        %7335 = vmatprep.mubr.bf16.mxu0 %v6073
        %7336 = vmatmul.mubr.bf16.gmra.mxu0 %v6072
        %v7337 = vpop.f32.mrf.mxu0
        %v7338 = vadd.f32 %v6665, %v7337
        %v7339 = vpop.f32.mrf.mxu0
        %v7340 = vadd.f32 %v6667, %v7339
        %v7341 = vpop.f32.mrf.mxu0
        %v7342 = vadd.f32 %v6669, %v7341
        %v7343 = vpop.f32.mrf.mxu0
        %v7344 = vadd.f32 %v6671, %v7343
        %7345 = vmatprep.mubr.bf16.mxu0 %v6077
        %7346 = vmatmul.mubr.bf16.gmra.mxu0 %v6076
        %v7347 = vpop.f32.mrf.mxu0
        %v7348 = vadd.f32 %v6675, %v7347
        %v7349 = vpop.f32.mrf.mxu0
        %v7350 = vadd.f32 %v6677, %v7349
        %v7351 = vpop.f32.mrf.mxu0
        %v7352 = vadd.f32 %v6679, %v7351
        %v7353 = vpop.f32.mrf.mxu0
        %v7354 = vadd.f32 %v6681, %v7353
        %7355 = vmatprep.mubr.bf16.mxu0 %v6081
        %7356 = vmatmul.mubr.bf16.gmra.mxu0 %v6080
        %v7357 = vpop.f32.mrf.mxu0
        %v7358 = vadd.f32 %v6685, %v7357
        %v7359 = vpop.f32.mrf.mxu0
        %v7360 = vadd.f32 %v6687, %v7359
        %v7361 = vpop.f32.mrf.mxu0
        %v7362 = vadd.f32 %v6689, %v7361
        %v7363 = vpop.f32.mrf.mxu0
        %v7364 = vadd.f32 %v6691, %v7363
        %7365 = vmatprep.mubr.bf16.mxu0 %v6085
        %7366 = vmatmul.mubr.bf16.gmra.mxu0 %v6084
        %v7367 = vpop.f32.mrf.mxu0
        %v7368 = vadd.f32 %v6695, %v7367
        %v7369 = vpop.f32.mrf.mxu0
        %v7370 = vadd.f32 %v6697, %v7369
        %v7371 = vpop.f32.mrf.mxu0
        %v7372 = vadd.f32 %v6699, %v7371
        %v7373 = vpop.f32.mrf.mxu0
        %v7374 = vadd.f32 %v6701, %v7373
        %7375 = vmatprep.mubr.bf16.mxu0 %v6089
        %7376 = vmatmul.mubr.bf16.gmra.mxu0 %v6088
        %v7377 = vpop.f32.mrf.mxu0
        %v7378 = vadd.f32 %v6705, %v7377
        %v7379 = vpop.f32.mrf.mxu0
        %v7380 = vadd.f32 %v6707, %v7379
        %v7381 = vpop.f32.mrf.mxu0
        %v7382 = vadd.f32 %v6709, %v7381
        %v7383 = vpop.f32.mrf.mxu0
        %v7384 = vadd.f32 %v6711, %v7383
        %7385 = vmatprep.mubr.bf16.mxu0 %v6093
        %7386 = vmatmul.mubr.bf16.gmra.mxu0 %v6092
        %v7387 = vpop.f32.mrf.mxu0
        %v7388 = vadd.f32 %v6715, %v7387
        %v7389 = vpop.f32.mrf.mxu0
        %v7390 = vadd.f32 %v6717, %v7389
        %v7391 = vpop.f32.mrf.mxu0
        %v7392 = vadd.f32 %v6719, %v7391
        %v7393 = vpop.f32.mrf.mxu0
        %v7394 = vadd.f32 %v6721, %v7393
        %7395 = vmatprep.mubr.bf16.mxu0 %v6097
        %7396 = vmatmul.mubr.bf16.gmra.mxu0 %v6096
        %v7397 = vpop.f32.mrf.mxu0
        %v7398 = vadd.f32 %v6725, %v7397
        %v7399 = vpop.f32.mrf.mxu0
        %v7400 = vadd.f32 %v6727, %v7399
        %v7401 = vpop.f32.mrf.mxu0
        %v7402 = vadd.f32 %v6729, %v7401
        %v7403 = vpop.f32.mrf.mxu0
        %v7404 = vadd.f32 %v6731, %v7403
        %7405 = vmatprep.mubr.bf16.mxu0 %v6101
        %7406 = vmatmul.mubr.bf16.gmra.mxu0 %v6100
        %v7407 = vpop.f32.mrf.mxu0
        %v7408 = vadd.f32 %v6735, %v7407
        %v7409 = vpop.f32.mrf.mxu0
        %v7410 = vadd.f32 %v6737, %v7409
        %v7411 = vpop.f32.mrf.mxu0
        %v7412 = vadd.f32 %v6739, %v7411
        %v7413 = vpop.f32.mrf.mxu0
        %v7414 = vadd.f32 %v6741, %v7413
        %7415 = vmatprep.mubr.bf16.mxu0 %v6105
        %7416 = vmatmul.mubr.bf16.gmra.mxu0 %v6104
        %v7417 = vpop.f32.mrf.mxu0
        %v7418 = vadd.f32 %v6745, %v7417
        %v7419 = vpop.f32.mrf.mxu0
        %v7420 = vadd.f32 %v6747, %v7419
        %v7421 = vpop.f32.mrf.mxu0
        %v7422 = vadd.f32 %v6749, %v7421
        %v7423 = vpop.f32.mrf.mxu0
        %v7424 = vadd.f32 %v6751, %v7423
        %7425 = vmatprep.mubr.bf16.mxu0 %v6109
        %7426 = vmatmul.mubr.bf16.gmra.mxu0 %v6108
        %v7427 = vpop.f32.mrf.mxu0
        %v7428 = vadd.f32 %v6755, %v7427
        %v7429 = vpop.f32.mrf.mxu0
        %v7430 = vadd.f32 %v6757, %v7429
        %v7431 = vpop.f32.mrf.mxu0
        %v7432 = vadd.f32 %v6759, %v7431
        %v7433 = vpop.f32.mrf.mxu0
        %v7434 = vadd.f32 %v6761, %v7433
        %7435 = vmatprep.mubr.bf16.mxu0 %v6113
        %7436 = vmatmul.mubr.bf16.gmra.mxu0 %v6112
        %v7437 = vpop.f32.mrf.mxu0
        %v7438 = vadd.f32 %v6765, %v7437
        %v7439 = vpop.f32.mrf.mxu0
        %v7440 = vadd.f32 %v6767, %v7439
        %v7441 = vpop.f32.mrf.mxu0
        %v7442 = vadd.f32 %v6769, %v7441
        %v7443 = vpop.f32.mrf.mxu0
        %v7444 = vadd.f32 %v6771, %v7443
        %7445 = vmatprep.mubr.bf16.mxu0 %v6117
        %7446 = vmatmul.mubr.bf16.gmra.mxu0 %v6116
        %v7447 = vpop.f32.mrf.mxu0
        %v7448 = vadd.f32 %v6775, %v7447
        %v7449 = vpop.f32.mrf.mxu0
        %v7450 = vadd.f32 %v6777, %v7449
        %v7451 = vpop.f32.mrf.mxu0
        %v7452 = vadd.f32 %v6779, %v7451
        %v7453 = vpop.f32.mrf.mxu0
        %v7454 = vadd.f32 %v6781, %v7453
        %7455 = vmatprep.mubr.bf16.mxu0 %v6121
        %7456 = vmatmul.mubr.bf16.gmra.mxu0 %v6120
        %v7457 = vpop.f32.mrf.mxu0
        %v7458 = vadd.f32 %v6785, %v7457
        %v7459 = vpop.f32.mrf.mxu0
        %v7460 = vadd.f32 %v6787, %v7459
        %v7461 = vpop.f32.mrf.mxu0
        %v7462 = vadd.f32 %v6789, %v7461
        %v7463 = vpop.f32.mrf.mxu0
        %v7464 = vadd.f32 %v6791, %v7463
        %7465 = vmatprep.mubr.bf16.mxu0 %v6125
        %7466 = vmatmul.mubr.bf16.gmra.mxu0 %v6124
        %v7467 = vpop.f32.mrf.mxu0
        %v7468 = vadd.f32 %v6795, %v7467
        %v7469 = vpop.f32.mrf.mxu0
        %v7470 = vadd.f32 %v6797, %v7469
        %v7471 = vpop.f32.mrf.mxu0
        %v7472 = vadd.f32 %v6799, %v7471
        %v7473 = vpop.f32.mrf.mxu0
        %v7474 = vadd.f32 %v6801, %v7473
        %7475 = vmatprep.mubr.bf16.mxu0 %v6129
        %7476 = vmatmul.mubr.bf16.gmra.mxu0 %v6128
        %v7477 = vpop.f32.mrf.mxu0
        %v7478 = vadd.f32 %v6805, %v7477
        %v7479 = vpop.f32.mrf.mxu0
        %v7480 = vadd.f32 %v6807, %v7479
        %v7481 = vpop.f32.mrf.mxu0
        %v7482 = vadd.f32 %v6809, %v7481
        %v7483 = vpop.f32.mrf.mxu0
        %v7484 = vadd.f32 %v6811, %v7483
        %7485 = vmatprep.mubr.bf16.mxu0 %v6133
        %7486 = vmatmul.mubr.bf16.gmra.mxu0 %v6132
        %v7487 = vpop.f32.mrf.mxu0
        %v7488 = vadd.f32 %v6815, %v7487
        %v7489 = vpop.f32.mrf.mxu0
        %v7490 = vadd.f32 %v6817, %v7489
        %v7491 = vpop.f32.mrf.mxu0
        %v7492 = vadd.f32 %v6819, %v7491
        %v7493 = vpop.f32.mrf.mxu0
        %v7494 = vadd.f32 %v6821, %v7493
        %7495 = vmatprep.mubr.bf16.mxu0 %v6137
        %7496 = vmatmul.mubr.bf16.gmra.mxu0 %v6136
        %v7497 = vpop.f32.mrf.mxu0
        %v7498 = vadd.f32 %v6825, %v7497
        %v7499 = vpop.f32.mrf.mxu0
        %v7500 = vadd.f32 %v6827, %v7499
        %v7501 = vpop.f32.mrf.mxu0
        %v7502 = vadd.f32 %v6829, %v7501
        %v7503 = vpop.f32.mrf.mxu0
        %v7504 = vadd.f32 %v6831, %v7503
        %7505 = vmatprep.mubr.bf16.mxu0 %v6141
        %7506 = vmatmul.mubr.bf16.gmra.mxu0 %v6140
        %v7507 = vpop.f32.mrf.mxu0
        %v7508 = vadd.f32 %v6835, %v7507
        %v7509 = vpop.f32.mrf.mxu0
        %v7510 = vadd.f32 %v6837, %v7509
        %v7511 = vpop.f32.mrf.mxu0
        %v7512 = vadd.f32 %v6839, %v7511
        %v7513 = vpop.f32.mrf.mxu0
        %v7514 = vadd.f32 %v6841, %v7513
        %7515 = vmatprep.mubr.bf16.mxu0 %v6145
        %7516 = vmatmul.mubr.bf16.gmra.mxu0 %v6144
        %v7517 = vpop.f32.mrf.mxu0
        %v7518 = vadd.f32 %v6845, %v7517
        %v7519 = vpop.f32.mrf.mxu0
        %v7520 = vadd.f32 %v6847, %v7519
        %v7521 = vpop.f32.mrf.mxu0
        %v7522 = vadd.f32 %v6849, %v7521
        %v7523 = vpop.f32.mrf.mxu0
        %v7524 = vadd.f32 %v6851, %v7523
        %7525 = vmatprep.mubr.bf16.mxu0 %v6149
        %7526 = vmatmul.mubr.bf16.gmra.mxu0 %v6148
        %v7527 = vpop.f32.mrf.mxu0
        %v7528 = vadd.f32 %v6855, %v7527
        %v7529 = vpop.f32.mrf.mxu0
        %v7530 = vadd.f32 %v6857, %v7529
        %v7531 = vpop.f32.mrf.mxu0
        %v7532 = vadd.f32 %v6859, %v7531
        %v7533 = vpop.f32.mrf.mxu0
        %v7534 = vadd.f32 %v6861, %v7533
        %7535 = vmatprep.mubr.bf16.mxu0 %v6153
        %7536 = vmatmul.mubr.bf16.gmra.mxu0 %v6152
        %v7537 = vpop.f32.mrf.mxu0
        %v7538 = vadd.f32 %v6865, %v7537
        %v7539 = vpop.f32.mrf.mxu0
        %v7540 = vadd.f32 %v6867, %v7539
        %v7541 = vpop.f32.mrf.mxu0
        %v7542 = vadd.f32 %v6869, %v7541
        %v7543 = vpop.f32.mrf.mxu0
        %v7544 = vadd.f32 %v6871, %v7543
        %7545 = vmatprep.mubr.bf16.mxu0 %v6157
        %7546 = vmatmul.mubr.bf16.gmra.mxu0 %v6156
        %v7547 = vpop.f32.mrf.mxu0
        %v7548 = vadd.f32 %v6875, %v7547
        %v7549 = vpop.f32.mrf.mxu0
        %v7550 = vadd.f32 %v6877, %v7549
        %v7551 = vpop.f32.mrf.mxu0
        %v7552 = vadd.f32 %v6879, %v7551
        %v7553 = vpop.f32.mrf.mxu0
        %v7554 = vadd.f32 %v6881, %v7553
        %7555 = vmatprep.mubr.bf16.mxu0 %v6161
        %7556 = vmatmul.mubr.bf16.gmra.mxu0 %v6160
        %v7557 = vpop.f32.mrf.mxu0
        %v7558 = vadd.f32 %v6885, %v7557
        %v7559 = vpop.f32.mrf.mxu0
        %v7560 = vadd.f32 %v6887, %v7559
        %v7561 = vpop.f32.mrf.mxu0
        %v7562 = vadd.f32 %v6889, %v7561
        %v7563 = vpop.f32.mrf.mxu0
        %v7564 = vadd.f32 %v6891, %v7563
        %7565 = vmatprep.mubr.bf16.mxu0 %v6165
        %7566 = vmatmul.mubr.bf16.gmra.mxu0 %v6164
        %v7567 = vpop.f32.mrf.mxu0
        %v7568 = vadd.f32 %v6895, %v7567
        %v7569 = vpop.f32.mrf.mxu0
        %v7570 = vadd.f32 %v6897, %v7569
        %v7571 = vpop.f32.mrf.mxu0
        %v7572 = vadd.f32 %v6899, %v7571
        %v7573 = vpop.f32.mrf.mxu0
        %v7574 = vadd.f32 %v6901, %v7573
        %7575 = vmatprep.mubr.bf16.mxu0 %v6169
        %7576 = vmatmul.mubr.bf16.gmra.mxu0 %v6168
        %v7577 = vpop.f32.mrf.mxu0
        %v7578 = vadd.f32 %v6905, %v7577
        %v7579 = vpop.f32.mrf.mxu0
        %v7580 = vadd.f32 %v6907, %v7579
        %v7581 = vpop.f32.mrf.mxu0
        %v7582 = vadd.f32 %v6909, %v7581
        %v7583 = vpop.f32.mrf.mxu0
        %v7584 = vadd.f32 %v6911, %v7583
        %7585 = vmatprep.mubr.bf16.mxu0 %v6173
        %7586 = vmatmul.mubr.bf16.gmra.mxu0 %v6172
        %v7587 = vpop.f32.mrf.mxu0
        %v7588 = vadd.f32 %v6915, %v7587
        %v7589 = vpop.f32.mrf.mxu0
        %v7590 = vadd.f32 %v6917, %v7589
        %v7591 = vpop.f32.mrf.mxu0
        %v7592 = vadd.f32 %v6919, %v7591
        %v7593 = vpop.f32.mrf.mxu0
        %v7594 = vadd.f32 %v6921, %v7593
        %7595 = vmatprep.mubr.bf16.mxu0 %v6177
        %7596 = vmatmul.mubr.bf16.gmra.mxu0 %v6176
        %v7597 = vpop.f32.mrf.mxu0
        %v7598 = vadd.f32 %v6925, %v7597
        %v7599 = vpop.f32.mrf.mxu0
        %v7600 = vadd.f32 %v6927, %v7599
        %v7601 = vpop.f32.mrf.mxu0
        %v7602 = vadd.f32 %v6929, %v7601
        %v7603 = vpop.f32.mrf.mxu0
        %v7604 = vadd.f32 %v6931, %v7603
        %7605 = vmatprep.mubr.bf16.mxu0 %v6181
        %7606 = vmatmul.mubr.bf16.gmra.mxu0 %v6180
        %v7607 = vpop.f32.mrf.mxu0
        %v7608 = vadd.f32 %v6935, %v7607
        %v7609 = vpop.f32.mrf.mxu0
        %v7610 = vadd.f32 %v6937, %v7609
        %v7611 = vpop.f32.mrf.mxu0
        %v7612 = vadd.f32 %v6939, %v7611
        %v7613 = vpop.f32.mrf.mxu0
        %v7614 = vadd.f32 %v6941, %v7613
        %7615 = vmatprep.mubr.bf16.mxu0 %v6185
        %7616 = vmatmul.mubr.bf16.gmra.mxu0 %v6184
        %v7617 = vpop.f32.mrf.mxu0
        %v7618 = vadd.f32 %v6945, %v7617
        %v7619 = vpop.f32.mrf.mxu0
        %v7620 = vadd.f32 %v6947, %v7619
        %v7621 = vpop.f32.mrf.mxu0
        %v7622 = vadd.f32 %v6949, %v7621
        %v7623 = vpop.f32.mrf.mxu0
        %v7624 = vadd.f32 %v6951, %v7623
        %7625 = vmatprep.mubr.bf16.mxu0 %v6189
        %7626 = vmatmul.mubr.bf16.gmra.mxu0 %v6188
        %v7627 = vpop.f32.mrf.mxu0
        %v7628 = vadd.f32 %v6955, %v7627
        %v7629 = vpop.f32.mrf.mxu0
        %v7630 = vadd.f32 %v6957, %v7629
        %v7631 = vpop.f32.mrf.mxu0
        %v7632 = vadd.f32 %v6959, %v7631
        %v7633 = vpop.f32.mrf.mxu0
        %v7634 = vadd.f32 %v6961, %v7633
        %7635 = vmatprep.mubr.bf16.mxu0 %v6193
        %7636 = vmatmul.mubr.bf16.gmra.mxu0 %v6192
        %v7637 = vpop.f32.mrf.mxu0
        %v7638 = vadd.f32 %v6965, %v7637
        %v7639 = vpop.f32.mrf.mxu0
        %v7640 = vadd.f32 %v6967, %v7639
        %v7641 = vpop.f32.mrf.mxu0
        %v7642 = vadd.f32 %v6969, %v7641
        %v7643 = vpop.f32.mrf.mxu0
        %v7644 = vadd.f32 %v6971, %v7643
        %7645 = vmatprep.mubr.bf16.mxu0 %v6197
        %7646 = vmatmul.mubr.bf16.gmra.mxu0 %v6196
        %v7647 = vpop.f32.mrf.mxu0
        %v7648 = vadd.f32 %v6975, %v7647
        %v7649 = vpop.f32.mrf.mxu0
        %v7650 = vadd.f32 %v6977, %v7649
        %v7651 = vpop.f32.mrf.mxu0
        %v7652 = vadd.f32 %v6979, %v7651
        %v7653 = vpop.f32.mrf.mxu0
        %v7654 = vadd.f32 %v6981, %v7653
        %7655 = vmatprep.mubr.bf16.mxu0 %v6201
        %7656 = vmatmul.mubr.bf16.gmra.mxu0 %v6200
        %v7657 = vpop.f32.mrf.mxu0
        %v7658 = vadd.f32 %v6985, %v7657
        %v7659 = vpop.f32.mrf.mxu0
        %v7660 = vadd.f32 %v6987, %v7659
        %v7661 = vpop.f32.mrf.mxu0
        %v7662 = vadd.f32 %v6989, %v7661
        %v7663 = vpop.f32.mrf.mxu0
        %v7664 = vadd.f32 %v6991, %v7663
        %7665 = vmatprep.mubr.bf16.mxu0 %v6205
        %7666 = vmatmul.mubr.bf16.gmra.mxu0 %v6204
        %v7667 = vpop.f32.mrf.mxu0
        %v7668 = vadd.f32 %v6995, %v7667
        %v7669 = vpop.f32.mrf.mxu0
        %v7670 = vadd.f32 %v6997, %v7669
        %v7671 = vpop.f32.mrf.mxu0
        %v7672 = vadd.f32 %v6999, %v7671
        %v7673 = vpop.f32.mrf.mxu0
        %v7674 = vadd.f32 %v7001, %v7673
        %7675 = vmatprep.mubr.bf16.mxu0 %v6209
        %7676 = vmatmul.mubr.bf16.gmra.mxu0 %v6208
        %v7677 = vpop.f32.mrf.mxu0
        %v7678 = vadd.f32 %v7005, %v7677
        %v7679 = vpop.f32.mrf.mxu0
        %v7680 = vadd.f32 %v7007, %v7679
        %v7681 = vpop.f32.mrf.mxu0
        %v7682 = vadd.f32 %v7009, %v7681
        %v7683 = vpop.f32.mrf.mxu0
        %v7684 = vadd.f32 %v7011, %v7683
        %7685 = vmatprep.mubr.bf16.mxu0 %v6213
        %7686 = vmatmul.mubr.bf16.gmra.mxu0 %v6212
        %v7687 = vpop.f32.mrf.mxu0
        %v7688 = vadd.f32 %v7015, %v7687
        %v7689 = vpop.f32.mrf.mxu0
        %v7690 = vadd.f32 %v7017, %v7689
        %v7691 = vpop.f32.mrf.mxu0
        %v7692 = vadd.f32 %v7019, %v7691
        %v7693 = vpop.f32.mrf.mxu0
        %v7694 = vadd.f32 %v7021, %v7693
        %7695 = vmatprep.mubr.bf16.mxu0 %v6217
        %7696 = vmatmul.mubr.bf16.gmra.mxu0 %v6216
        %v7697 = vpop.f32.mrf.mxu0
        %v7698 = vadd.f32 %v7025, %v7697
        %v7699 = vpop.f32.mrf.mxu0
        %v7700 = vadd.f32 %v7027, %v7699
        %v7701 = vpop.f32.mrf.mxu0
        %v7702 = vadd.f32 %v7029, %v7701
        %v7703 = vpop.f32.mrf.mxu0
        %v7704 = vadd.f32 %v7031, %v7703
        %7705 = vmatprep.mubr.bf16.mxu0 %v6221
        %7706 = vmatmul.mubr.bf16.gmra.mxu0 %v6220
        %v7707 = vpop.f32.mrf.mxu0
        %v7708 = vadd.f32 %v7035, %v7707
        %v7709 = vpop.f32.mrf.mxu0
        %v7710 = vadd.f32 %v7037, %v7709
        %v7711 = vpop.f32.mrf.mxu0
        %v7712 = vadd.f32 %v7039, %v7711
        %v7713 = vpop.f32.mrf.mxu0
        %v7714 = vadd.f32 %v7041, %v7713
        %7715 = vmatprep.mubr.bf16.mxu0 %v6225
        %7716 = vmatmul.mubr.bf16.gmra.mxu0 %v6224
        %v7717 = vpop.f32.mrf.mxu0
        %v7718 = vadd.f32 %v7045, %v7717
        %v7719 = vpop.f32.mrf.mxu0
        %v7720 = vadd.f32 %v7047, %v7719
        %v7721 = vpop.f32.mrf.mxu0
        %v7722 = vadd.f32 %v7049, %v7721
        %v7723 = vpop.f32.mrf.mxu0
        %v7724 = vadd.f32 %v7051, %v7723
        %7725 = vmatprep.mubr.bf16.mxu0 %v6229
        %7726 = vmatmul.mubr.bf16.gmra.mxu0 %v6228
        %v7727 = vpop.f32.mrf.mxu0
        %v7728 = vadd.f32 %v7055, %v7727
        %v7729 = vpop.f32.mrf.mxu0
        %v7730 = vadd.f32 %v7057, %v7729
        %v7731 = vpop.f32.mrf.mxu0
        %v7732 = vadd.f32 %v7059, %v7731
        %v7733 = vpop.f32.mrf.mxu0
        %v7734 = vadd.f32 %v7061, %v7733
        %7735 = vmatprep.mubr.bf16.mxu0 %v6233
        %7736 = vmatmul.mubr.bf16.gmra.mxu0 %v6232
        %v7737 = vpop.f32.mrf.mxu0
        %v7738 = vadd.f32 %v7065, %v7737
        %v7739 = vpop.f32.mrf.mxu0
        %v7740 = vadd.f32 %v7067, %v7739
        %v7741 = vpop.f32.mrf.mxu0
        %v7742 = vadd.f32 %v7069, %v7741
        %v7743 = vpop.f32.mrf.mxu0
        %v7744 = vadd.f32 %v7071, %v7743
        %7745 = vmatprep.mubr.bf16.mxu0 %v6237
        %7746 = vmatmul.mubr.bf16.gmra.mxu0 %v6236
        %v7747 = vpop.f32.mrf.mxu0
        %v7748 = vadd.f32 %v7075, %v7747
        %v7749 = vpop.f32.mrf.mxu0
        %v7750 = vadd.f32 %v7077, %v7749
        %v7751 = vpop.f32.mrf.mxu0
        %v7752 = vadd.f32 %v7079, %v7751
        %v7753 = vpop.f32.mrf.mxu0
        %v7754 = vadd.f32 %v7081, %v7753
        %7755 = vmatprep.mubr.bf16.mxu0 %v6241
        %7756 = vmatmul.mubr.bf16.gmra.mxu0 %v6240
        %v7757 = vpop.f32.mrf.mxu0
        %v7758 = vadd.f32 %v7085, %v7757
        %v7759 = vpop.f32.mrf.mxu0
        %v7760 = vadd.f32 %v7087, %v7759
        %v7761 = vpop.f32.mrf.mxu0
        %v7762 = vadd.f32 %v7089, %v7761
        %v7763 = vpop.f32.mrf.mxu0
        %v7764 = vadd.f32 %v7091, %v7763
        %7765 = vmatprep.mubr.bf16.mxu0 %v6245
        %7766 = vmatmul.mubr.bf16.gmra.mxu0 %v6244
        %v7767 = vpop.f32.mrf.mxu0
        %v7768 = vadd.f32 %v7095, %v7767
        %v7769 = vpop.f32.mrf.mxu0
        %v7770 = vadd.f32 %v7097, %v7769
        %v7771 = vpop.f32.mrf.mxu0
        %v7772 = vadd.f32 %v7099, %v7771
        %v7773 = vpop.f32.mrf.mxu0
        %v7774 = vadd.f32 %v7101, %v7773
        %7775 = vmatprep.mubr.bf16.mxu0 %v6249
        %7776 = vmatmul.mubr.bf16.gmra.mxu0 %v6248
        %v7777 = vpop.f32.mrf.mxu0
        %v7778 = vadd.f32 %v7105, %v7777
        %v7779 = vpop.f32.mrf.mxu0
        %v7780 = vadd.f32 %v7107, %v7779
        %v7781 = vpop.f32.mrf.mxu0
        %v7782 = vadd.f32 %v7109, %v7781
        %v7783 = vpop.f32.mrf.mxu0
        %v7784 = vadd.f32 %v7111, %v7783
        %7785 = vmatprep.mubr.bf16.mxu0 %v6253
        %7786 = vmatmul.mubr.bf16.gmra.mxu0 %v6252
        %v7787 = vpop.f32.mrf.mxu0
        %v7788 = vadd.f32 %v7115, %v7787
        %v7789 = vpop.f32.mrf.mxu0
        %v7790 = vadd.f32 %v7117, %v7789
        %v7791 = vpop.f32.mrf.mxu0
        %v7792 = vadd.f32 %v7119, %v7791
        %v7793 = vpop.f32.mrf.mxu0
        %v7794 = vadd.f32 %v7121, %v7793
        %7795 = vmatprep.mubr.bf16.mxu0 %v6257
        %7796 = vmatmul.mubr.bf16.gmra.mxu0 %v6256
        %v7797 = vpop.f32.mrf.mxu0
        %v7798 = vadd.f32 %v7125, %v7797
        %v7799 = vpop.f32.mrf.mxu0
        %v7800 = vadd.f32 %v7127, %v7799
        %v7801 = vpop.f32.mrf.mxu0
        %v7802 = vadd.f32 %v7129, %v7801
        %v7803 = vpop.f32.mrf.mxu0
        %v7804 = vadd.f32 %v7131, %v7803
        %7805 = vmatprep.mubr.bf16.mxu0 %v6261
        %7806 = vmatmul.mubr.bf16.gmra.mxu0 %v6260
        %v7807 = vpop.f32.mrf.mxu0
        %v7808 = vadd.f32 %v7135, %v7807
        %v7809 = vpop.f32.mrf.mxu0
        %v7810 = vadd.f32 %v7137, %v7809
        %v7811 = vpop.f32.mrf.mxu0
        %v7812 = vadd.f32 %v7139, %v7811
        %v7813 = vpop.f32.mrf.mxu0
        %v7814 = vadd.f32 %v7141, %v7813
        %7815 = vmatprep.mubr.bf16.mxu0 %v6265
        %7816 = vmatmul.mubr.bf16.gmra.mxu0 %v6264
        %v7817 = vpop.f32.mrf.mxu0
        %v7818 = vadd.f32 %v7145, %v7817
        %v7819 = vpop.f32.mrf.mxu0
        %v7820 = vadd.f32 %v7147, %v7819
        %v7821 = vpop.f32.mrf.mxu0
        %v7822 = vadd.f32 %v7149, %v7821
        %v7823 = vpop.f32.mrf.mxu0
        %v7824 = vadd.f32 %v7151, %v7823
        %7825 = vmatprep.mubr.bf16.mxu0 %v6269
        %7826 = vmatmul.mubr.bf16.gmra.mxu0 %v6268
        %v7827 = vpop.f32.mrf.mxu0
        %v7828 = vadd.f32 %v7155, %v7827
        %v7829 = vpop.f32.mrf.mxu0
        %v7830 = vadd.f32 %v7157, %v7829
        %v7831 = vpop.f32.mrf.mxu0
        %v7832 = vadd.f32 %v7159, %v7831
        %v7833 = vpop.f32.mrf.mxu0
        %v7834 = vadd.f32 %v7161, %v7833
        %7835 = vmatprep.mubr.bf16.mxu0 %v6273
        %7836 = vmatmul.mubr.bf16.gmra.mxu0 %v6272
        %v7837 = vpop.f32.mrf.mxu0
        %v7838 = vadd.f32 %v7165, %v7837
        %v7839 = vpop.f32.mrf.mxu0
        %v7840 = vadd.f32 %v7167, %v7839
        %v7841 = vpop.f32.mrf.mxu0
        %v7842 = vadd.f32 %v7169, %v7841
        %v7843 = vpop.f32.mrf.mxu0
        %v7844 = vadd.f32 %v7171, %v7843
        %7845 = vmatprep.mubr.bf16.mxu0 %v6277
        %7846 = vmatmul.mubr.bf16.gmra.mxu0 %v6276
        %v7847 = vpop.f32.mrf.mxu0
        %v7848 = vadd.f32 %v7175, %v7847
        %v7849 = vpop.f32.mrf.mxu0
        %v7850 = vadd.f32 %v7177, %v7849
        %v7851 = vpop.f32.mrf.mxu0
        %v7852 = vadd.f32 %v7179, %v7851
        %v7853 = vpop.f32.mrf.mxu0
        %v7854 = vadd.f32 %v7181, %v7853
        %7855 = vmatprep.mubr.bf16.mxu0 %v6281
        %7856 = vmatmul.mubr.bf16.gmra.mxu0 %v6280
        %v7857 = vpop.f32.mrf.mxu0
        %v7858 = vadd.f32 %v7185, %v7857
        %v7859 = vpop.f32.mrf.mxu0
        %v7860 = vadd.f32 %v7187, %v7859
        %v7861 = vpop.f32.mrf.mxu0
        %v7862 = vadd.f32 %v7189, %v7861
        %v7863 = vpop.f32.mrf.mxu0
        %v7864 = vadd.f32 %v7191, %v7863
        %7865 = vmatprep.mubr.bf16.mxu0 %v6285
        %7866 = vmatmul.mubr.bf16.gmra.mxu0 %v6284
        %v7867 = vpop.f32.mrf.mxu0
        %v7868 = vadd.f32 %v7195, %v7867
        %v7869 = vpop.f32.mrf.mxu0
        %v7870 = vadd.f32 %v7197, %v7869
        %v7871 = vpop.f32.mrf.mxu0
        %v7872 = vadd.f32 %v7199, %v7871
        %v7873 = vpop.f32.mrf.mxu0
        %v7874 = vadd.f32 %v7201, %v7873
        %7875 = vmatprep.mubr.bf16.mxu0 %v6289
        %7876 = vmatmul.mubr.bf16.gmra.mxu0 %v6288
        %v7877 = vpop.f32.mrf.mxu0
        %v7878 = vadd.f32 %v7205, %v7877
        %v7879 = vpop.f32.mrf.mxu0
        %v7880 = vadd.f32 %v7207, %v7879
        %v7881 = vpop.f32.mrf.mxu0
        %v7882 = vadd.f32 %v7209, %v7881
        %v7883 = vpop.f32.mrf.mxu0
        %v7884 = vadd.f32 %v7211, %v7883
        %7885 = vmatprep.mubr.bf16.mxu0 %v6293
        %7886 = vmatmul.mubr.bf16.gmra.mxu0 %v6292
        %v7887 = vpop.f32.mrf.mxu0
        %v7888 = vadd.f32 %v7215, %v7887
        %v7889 = vpop.f32.mrf.mxu0
        %v7890 = vadd.f32 %v7217, %v7889
        %v7891 = vpop.f32.mrf.mxu0
        %v7892 = vadd.f32 %v7219, %v7891
        %v7893 = vpop.f32.mrf.mxu0
        %v7894 = vadd.f32 %v7221, %v7893
        %7895 = vdwg.mxu0
        %7896 = vmatprep.subr.bf16.mxu0 %v4149
        %7897 = vmatpush1.bf16.msra.mxu0 %v4148
        %7898 = vmatprep.subr.bf16.mxu0 %v4145
        %7899 = vmatpush1.bf16.msra.mxu0 %v4144
        %7900 = vmatprep.subr.bf16.mxu0 %v4141
        %7901 = vmatpush1.bf16.msra.mxu0 %v4140
        %7902 = vmatprep.subr.bf16.mxu0 %v4137
        %7903 = vmatpush1.bf16.msra.mxu0 %v4136
        %7904 = vmatprep.subr.bf16.mxu0 %v4133
        %7905 = vmatpush1.bf16.msra.mxu0 %v4132
        %7906 = vmatprep.subr.bf16.mxu0 %v4129
        %7907 = vmatpush1.bf16.msra.mxu0 %v4128
        %7908 = vmatprep.subr.bf16.mxu0 %v4125
        %7909 = vmatpush1.bf16.msra.mxu0 %v4124
        %7910 = vmatprep.subr.bf16.mxu0 %v4121
        %7911 = vmatpush1.bf16.msra.mxu0 %v4120
        %7912 = vmatprep.subr.bf16.mxu0 %v4181
        %7913 = vmatpush2.bf16.msra.mxu0 %v4180
        %7914 = vmatprep.subr.bf16.mxu0 %v4177
        %7915 = vmatpush2.bf16.msra.mxu0 %v4176
        %7916 = vmatprep.subr.bf16.mxu0 %v4173
        %7917 = vmatpush2.bf16.msra.mxu0 %v4172
        %7918 = vmatprep.subr.bf16.mxu0 %v4169
        %7919 = vmatpush2.bf16.msra.mxu0 %v4168
        %7920 = vmatprep.subr.bf16.mxu0 %v4165
        %7921 = vmatpush2.bf16.msra.mxu0 %v4164
        %7922 = vmatprep.subr.bf16.mxu0 %v4161
        %7923 = vmatpush2.bf16.msra.mxu0 %v4160
        %7924 = vmatprep.subr.bf16.mxu0 %v4157
        %7925 = vmatpush2.bf16.msra.mxu0 %v4156
        %7926 = vmatprep.subr.bf16.mxu0 %v4153
        %7927 = vmatpush2.bf16.msra.mxu0 %v4152
        %7928 = vmatprep.mubr.bf16.mxu0 %v6039
        %7929 = vmatmul.mubr.bf16.gmra.mxu0 %v6038
        %v7930 = vpop.f32.mrf.mxu0
        %v7931 = vadd.f32 %v4633, %v7930
        %v7932 = vpop.f32.mrf.mxu0
        %v7933 = vadd.f32 %v4633, %v7932
        %v7934 = vpop.f32.mrf.mxu0
        %v7935 = vadd.f32 %v4638, %v7934
        %v7936 = vpop.f32.mrf.mxu0
        %v7937 = vadd.f32 %v4638, %v7936
        %7938 = vmatprep.mubr.bf16.mxu0 %v6043
        %7939 = vmatmul.mubr.bf16.gmra.mxu0 %v6042
        %v7940 = vpop.f32.mrf.mxu0
        %v7941 = vadd.f32 %v4643, %v7940
        %v7942 = vpop.f32.mrf.mxu0
        %v7943 = vadd.f32 %v4643, %v7942
        %v7944 = vpop.f32.mrf.mxu0
        %v7945 = vadd.f32 %v4648, %v7944
        %v7946 = vpop.f32.mrf.mxu0
        %v7947 = vadd.f32 %v4648, %v7946
        %7948 = vmatprep.mubr.bf16.mxu0 %v6047
        %7949 = vmatmul.mubr.bf16.gmra.mxu0 %v6046
        %v7950 = vpop.f32.mrf.mxu0
        %v7951 = vadd.f32 %v4653, %v7950
        %v7952 = vpop.f32.mrf.mxu0
        %v7953 = vadd.f32 %v4653, %v7952
        %v7954 = vpop.f32.mrf.mxu0
        %v7955 = vadd.f32 %v4658, %v7954
        %v7956 = vpop.f32.mrf.mxu0
        %v7957 = vadd.f32 %v4658, %v7956
        %7958 = vmatprep.mubr.bf16.mxu0 %v6051
        %7959 = vmatmul.mubr.bf16.gmra.mxu0 %v6050
        %v7960 = vpop.f32.mrf.mxu0
        %v7961 = vadd.f32 %v4663, %v7960
        %v7962 = vpop.f32.mrf.mxu0
        %v7963 = vadd.f32 %v4663, %v7962
        %v7964 = vpop.f32.mrf.mxu0
        %v7965 = vadd.f32 %v4668, %v7964
        %v7966 = vpop.f32.mrf.mxu0
        %v7967 = vadd.f32 %v4668, %v7966
        %7968 = vmatprep.mubr.bf16.mxu0 %v6055
        %7969 = vmatmul.mubr.bf16.gmra.mxu0 %v6054
        %v7970 = vpop.f32.mrf.mxu0
        %v7971 = vadd.f32 %v4673, %v7970
        %v7972 = vpop.f32.mrf.mxu0
        %v7973 = vadd.f32 %v4673, %v7972
        %v7974 = vpop.f32.mrf.mxu0
        %v7975 = vadd.f32 %v4678, %v7974
        %v7976 = vpop.f32.mrf.mxu0
        %v7977 = vadd.f32 %v4678, %v7976
        %7978 = vmatprep.mubr.bf16.mxu0 %v6059
        %7979 = vmatmul.mubr.bf16.gmra.mxu0 %v6058
        %v7980 = vpop.f32.mrf.mxu0
        %v7981 = vadd.f32 %v4683, %v7980
        %v7982 = vpop.f32.mrf.mxu0
        %v7983 = vadd.f32 %v4683, %v7982
        %v7984 = vpop.f32.mrf.mxu0
        %v7985 = vadd.f32 %v4688, %v7984
        %v7986 = vpop.f32.mrf.mxu0
        %v7987 = vadd.f32 %v4688, %v7986
        %7988 = vmatprep.mubr.bf16.mxu0 %v6063
        %7989 = vmatmul.mubr.bf16.gmra.mxu0 %v6062
        %v7990 = vpop.f32.mrf.mxu0
        %v7991 = vadd.f32 %v4693, %v7990
        %v7992 = vpop.f32.mrf.mxu0
        %v7993 = vadd.f32 %v4693, %v7992
        %v7994 = vpop.f32.mrf.mxu0
        %v7995 = vadd.f32 %v4698, %v7994
        %v7996 = vpop.f32.mrf.mxu0
        %v7997 = vadd.f32 %v4698, %v7996
        %7998 = vmatprep.mubr.bf16.mxu0 %v6067
        %7999 = vmatmul.mubr.bf16.gmra.mxu0 %v6066
        %v8000 = vpop.f32.mrf.mxu0
        %v8001 = vadd.f32 %v4703, %v8000
        %v8002 = vpop.f32.mrf.mxu0
        %v8003 = vadd.f32 %v4703, %v8002
        %v8004 = vpop.f32.mrf.mxu0
        %v8005 = vadd.f32 %v4708, %v8004
        %v8006 = vpop.f32.mrf.mxu0
        %v8007 = vadd.f32 %v4708, %v8006
        %8008 = vmatprep.mubr.bf16.mxu0 %v6071
        %8009 = vmatmul.mubr.bf16.gmra.mxu0 %v6070
        %v8010 = vpop.f32.mrf.mxu0
        %v8011 = vadd.f32 %v4713, %v8010
        %v8012 = vpop.f32.mrf.mxu0
        %v8013 = vadd.f32 %v4713, %v8012
        %v8014 = vpop.f32.mrf.mxu0
        %v8015 = vadd.f32 %v4718, %v8014
        %v8016 = vpop.f32.mrf.mxu0
        %v8017 = vadd.f32 %v4718, %v8016
        %8018 = vmatprep.mubr.bf16.mxu0 %v6075
        %8019 = vmatmul.mubr.bf16.gmra.mxu0 %v6074
        %v8020 = vpop.f32.mrf.mxu0
        %v8021 = vadd.f32 %v4723, %v8020
        %v8022 = vpop.f32.mrf.mxu0
        %v8023 = vadd.f32 %v4723, %v8022
        %v8024 = vpop.f32.mrf.mxu0
        %v8025 = vadd.f32 %v4728, %v8024
        %v8026 = vpop.f32.mrf.mxu0
        %v8027 = vadd.f32 %v4728, %v8026
        %8028 = vmatprep.mubr.bf16.mxu0 %v6079
        %8029 = vmatmul.mubr.bf16.gmra.mxu0 %v6078
        %v8030 = vpop.f32.mrf.mxu0
        %v8031 = vadd.f32 %v4733, %v8030
        %v8032 = vpop.f32.mrf.mxu0
        %v8033 = vadd.f32 %v4733, %v8032
        %v8034 = vpop.f32.mrf.mxu0
        %v8035 = vadd.f32 %v4738, %v8034
        %v8036 = vpop.f32.mrf.mxu0
        %v8037 = vadd.f32 %v4738, %v8036
        %8038 = vmatprep.mubr.bf16.mxu0 %v6083
        %8039 = vmatmul.mubr.bf16.gmra.mxu0 %v6082
        %v8040 = vpop.f32.mrf.mxu0
        %v8041 = vadd.f32 %v4743, %v8040
        %v8042 = vpop.f32.mrf.mxu0
        %v8043 = vadd.f32 %v4743, %v8042
        %v8044 = vpop.f32.mrf.mxu0
        %v8045 = vadd.f32 %v4748, %v8044
        %v8046 = vpop.f32.mrf.mxu0
        %v8047 = vadd.f32 %v4748, %v8046
        %8048 = vmatprep.mubr.bf16.mxu0 %v6087
        %8049 = vmatmul.mubr.bf16.gmra.mxu0 %v6086
        %v8050 = vpop.f32.mrf.mxu0
        %v8051 = vadd.f32 %v4753, %v8050
        %v8052 = vpop.f32.mrf.mxu0
        %v8053 = vadd.f32 %v4753, %v8052
        %v8054 = vpop.f32.mrf.mxu0
        %v8055 = vadd.f32 %v4758, %v8054
        %v8056 = vpop.f32.mrf.mxu0
        %v8057 = vadd.f32 %v4758, %v8056
        %8058 = vmatprep.mubr.bf16.mxu0 %v6091
        %8059 = vmatmul.mubr.bf16.gmra.mxu0 %v6090
        %v8060 = vpop.f32.mrf.mxu0
        %v8061 = vadd.f32 %v4763, %v8060
        %v8062 = vpop.f32.mrf.mxu0
        %v8063 = vadd.f32 %v4763, %v8062
        %v8064 = vpop.f32.mrf.mxu0
        %v8065 = vadd.f32 %v4768, %v8064
        %v8066 = vpop.f32.mrf.mxu0
        %v8067 = vadd.f32 %v4768, %v8066
        %8068 = vmatprep.mubr.bf16.mxu0 %v6095
        %8069 = vmatmul.mubr.bf16.gmra.mxu0 %v6094
        %v8070 = vpop.f32.mrf.mxu0
        %v8071 = vadd.f32 %v4773, %v8070
        %v8072 = vpop.f32.mrf.mxu0
        %v8073 = vadd.f32 %v4773, %v8072
        %v8074 = vpop.f32.mrf.mxu0
        %v8075 = vadd.f32 %v4778, %v8074
        %v8076 = vpop.f32.mrf.mxu0
        %v8077 = vadd.f32 %v4778, %v8076
        %8078 = vmatprep.mubr.bf16.mxu0 %v6099
        %8079 = vmatmul.mubr.bf16.gmra.mxu0 %v6098
        %v8080 = vpop.f32.mrf.mxu0
        %v8081 = vadd.f32 %v4783, %v8080
        %v8082 = vpop.f32.mrf.mxu0
        %v8083 = vadd.f32 %v4783, %v8082
        %v8084 = vpop.f32.mrf.mxu0
        %v8085 = vadd.f32 %v4788, %v8084
        %v8086 = vpop.f32.mrf.mxu0
        %v8087 = vadd.f32 %v4788, %v8086
        %8088 = vmatprep.mubr.bf16.mxu0 %v6103
        %8089 = vmatmul.mubr.bf16.gmra.mxu0 %v6102
        %v8090 = vpop.f32.mrf.mxu0
        %v8091 = vadd.f32 %v4793, %v8090
        %v8092 = vpop.f32.mrf.mxu0
        %v8093 = vadd.f32 %v4793, %v8092
        %v8094 = vpop.f32.mrf.mxu0
        %v8095 = vadd.f32 %v4798, %v8094
        %v8096 = vpop.f32.mrf.mxu0
        %v8097 = vadd.f32 %v4798, %v8096
        %8098 = vmatprep.mubr.bf16.mxu0 %v6107
        %8099 = vmatmul.mubr.bf16.gmra.mxu0 %v6106
        %v8100 = vpop.f32.mrf.mxu0
        %v8101 = vadd.f32 %v4803, %v8100
        %v8102 = vpop.f32.mrf.mxu0
        %v8103 = vadd.f32 %v4803, %v8102
        %v8104 = vpop.f32.mrf.mxu0
        %v8105 = vadd.f32 %v4808, %v8104
        %v8106 = vpop.f32.mrf.mxu0
        %v8107 = vadd.f32 %v4808, %v8106
        %8108 = vmatprep.mubr.bf16.mxu0 %v6111
        %8109 = vmatmul.mubr.bf16.gmra.mxu0 %v6110
        %v8110 = vpop.f32.mrf.mxu0
        %v8111 = vadd.f32 %v4813, %v8110
        %v8112 = vpop.f32.mrf.mxu0
        %v8113 = vadd.f32 %v4813, %v8112
        %v8114 = vpop.f32.mrf.mxu0
        %v8115 = vadd.f32 %v4818, %v8114
        %v8116 = vpop.f32.mrf.mxu0
        %v8117 = vadd.f32 %v4818, %v8116
        %8118 = vmatprep.mubr.bf16.mxu0 %v6115
        %8119 = vmatmul.mubr.bf16.gmra.mxu0 %v6114
        %v8120 = vpop.f32.mrf.mxu0
        %v8121 = vadd.f32 %v4823, %v8120
        %v8122 = vpop.f32.mrf.mxu0
        %v8123 = vadd.f32 %v4823, %v8122
        %v8124 = vpop.f32.mrf.mxu0
        %v8125 = vadd.f32 %v4828, %v8124
        %v8126 = vpop.f32.mrf.mxu0
        %v8127 = vadd.f32 %v4828, %v8126
        %8128 = vmatprep.mubr.bf16.mxu0 %v6119
        %8129 = vmatmul.mubr.bf16.gmra.mxu0 %v6118
        %v8130 = vpop.f32.mrf.mxu0
        %v8131 = vadd.f32 %v4833, %v8130
        %v8132 = vpop.f32.mrf.mxu0
        %v8133 = vadd.f32 %v4833, %v8132
        %v8134 = vpop.f32.mrf.mxu0
        %v8135 = vadd.f32 %v4838, %v8134
        %v8136 = vpop.f32.mrf.mxu0
        %v8137 = vadd.f32 %v4838, %v8136
        %8138 = vmatprep.mubr.bf16.mxu0 %v6123
        %8139 = vmatmul.mubr.bf16.gmra.mxu0 %v6122
        %v8140 = vpop.f32.mrf.mxu0
        %v8141 = vadd.f32 %v4843, %v8140
        %v8142 = vpop.f32.mrf.mxu0
        %v8143 = vadd.f32 %v4843, %v8142
        %v8144 = vpop.f32.mrf.mxu0
        %v8145 = vadd.f32 %v4848, %v8144
        %v8146 = vpop.f32.mrf.mxu0
        %v8147 = vadd.f32 %v4848, %v8146
        %8148 = vmatprep.mubr.bf16.mxu0 %v6127
        %8149 = vmatmul.mubr.bf16.gmra.mxu0 %v6126
        %v8150 = vpop.f32.mrf.mxu0
        %v8151 = vadd.f32 %v4853, %v8150
        %v8152 = vpop.f32.mrf.mxu0
        %v8153 = vadd.f32 %v4853, %v8152
        %v8154 = vpop.f32.mrf.mxu0
        %v8155 = vadd.f32 %v4858, %v8154
        %v8156 = vpop.f32.mrf.mxu0
        %v8157 = vadd.f32 %v4858, %v8156
        %8158 = vmatprep.mubr.bf16.mxu0 %v6131
        %8159 = vmatmul.mubr.bf16.gmra.mxu0 %v6130
        %v8160 = vpop.f32.mrf.mxu0
        %v8161 = vadd.f32 %v4863, %v8160
        %v8162 = vpop.f32.mrf.mxu0
        %v8163 = vadd.f32 %v4863, %v8162
        %v8164 = vpop.f32.mrf.mxu0
        %v8165 = vadd.f32 %v4868, %v8164
        %v8166 = vpop.f32.mrf.mxu0
        %v8167 = vadd.f32 %v4868, %v8166
        %8168 = vmatprep.mubr.bf16.mxu0 %v6135
        %8169 = vmatmul.mubr.bf16.gmra.mxu0 %v6134
        %v8170 = vpop.f32.mrf.mxu0
        %v8171 = vadd.f32 %v4873, %v8170
        %v8172 = vpop.f32.mrf.mxu0
        %v8173 = vadd.f32 %v4873, %v8172
        %v8174 = vpop.f32.mrf.mxu0
        %v8175 = vadd.f32 %v4878, %v8174
        %v8176 = vpop.f32.mrf.mxu0
        %v8177 = vadd.f32 %v4878, %v8176
        %8178 = vmatprep.mubr.bf16.mxu0 %v6139
        %8179 = vmatmul.mubr.bf16.gmra.mxu0 %v6138
        %v8180 = vpop.f32.mrf.mxu0
        %v8181 = vadd.f32 %v4883, %v8180
        %v8182 = vpop.f32.mrf.mxu0
        %v8183 = vadd.f32 %v4883, %v8182
        %v8184 = vpop.f32.mrf.mxu0
        %v8185 = vadd.f32 %v4888, %v8184
        %v8186 = vpop.f32.mrf.mxu0
        %v8187 = vadd.f32 %v4888, %v8186
        %8188 = vmatprep.mubr.bf16.mxu0 %v6143
        %8189 = vmatmul.mubr.bf16.gmra.mxu0 %v6142
        %v8190 = vpop.f32.mrf.mxu0
        %v8191 = vadd.f32 %v4893, %v8190
        %v8192 = vpop.f32.mrf.mxu0
        %v8193 = vadd.f32 %v4893, %v8192
        %v8194 = vpop.f32.mrf.mxu0
        %v8195 = vadd.f32 %v4898, %v8194
        %v8196 = vpop.f32.mrf.mxu0
        %v8197 = vadd.f32 %v4898, %v8196
        %8198 = vmatprep.mubr.bf16.mxu0 %v6147
        %8199 = vmatmul.mubr.bf16.gmra.mxu0 %v6146
        %v8200 = vpop.f32.mrf.mxu0
        %v8201 = vadd.f32 %v4903, %v8200
        %v8202 = vpop.f32.mrf.mxu0
        %v8203 = vadd.f32 %v4903, %v8202
        %v8204 = vpop.f32.mrf.mxu0
        %v8205 = vadd.f32 %v4908, %v8204
        %v8206 = vpop.f32.mrf.mxu0
        %v8207 = vadd.f32 %v4908, %v8206
        %8208 = vmatprep.mubr.bf16.mxu0 %v6151
        %8209 = vmatmul.mubr.bf16.gmra.mxu0 %v6150
        %v8210 = vpop.f32.mrf.mxu0
        %v8211 = vadd.f32 %v4913, %v8210
        %v8212 = vpop.f32.mrf.mxu0
        %v8213 = vadd.f32 %v4913, %v8212
        %v8214 = vpop.f32.mrf.mxu0
        %v8215 = vadd.f32 %v4918, %v8214
        %v8216 = vpop.f32.mrf.mxu0
        %v8217 = vadd.f32 %v4918, %v8216
        %8218 = vmatprep.mubr.bf16.mxu0 %v6155
        %8219 = vmatmul.mubr.bf16.gmra.mxu0 %v6154
        %v8220 = vpop.f32.mrf.mxu0
        %v8221 = vadd.f32 %v4923, %v8220
        %v8222 = vpop.f32.mrf.mxu0
        %v8223 = vadd.f32 %v4923, %v8222
        %v8224 = vpop.f32.mrf.mxu0
        %v8225 = vadd.f32 %v4928, %v8224
        %v8226 = vpop.f32.mrf.mxu0
        %v8227 = vadd.f32 %v4928, %v8226
        %8228 = vmatprep.mubr.bf16.mxu0 %v6159
        %8229 = vmatmul.mubr.bf16.gmra.mxu0 %v6158
        %v8230 = vpop.f32.mrf.mxu0
        %v8231 = vadd.f32 %v4933, %v8230
        %v8232 = vpop.f32.mrf.mxu0
        %v8233 = vadd.f32 %v4933, %v8232
        %v8234 = vpop.f32.mrf.mxu0
        %v8235 = vadd.f32 %v4938, %v8234
        %v8236 = vpop.f32.mrf.mxu0
        %v8237 = vadd.f32 %v4938, %v8236
        %8238 = vmatprep.mubr.bf16.mxu0 %v6163
        %8239 = vmatmul.mubr.bf16.gmra.mxu0 %v6162
        %v8240 = vpop.f32.mrf.mxu0
        %v8241 = vadd.f32 %v4943, %v8240
        %v8242 = vpop.f32.mrf.mxu0
        %v8243 = vadd.f32 %v4943, %v8242
        %v8244 = vpop.f32.mrf.mxu0
        %v8245 = vadd.f32 %v4948, %v8244
        %v8246 = vpop.f32.mrf.mxu0
        %v8247 = vadd.f32 %v4948, %v8246
        %8248 = vmatprep.mubr.bf16.mxu0 %v6167
        %8249 = vmatmul.mubr.bf16.gmra.mxu0 %v6166
        %v8250 = vpop.f32.mrf.mxu0
        %v8251 = vadd.f32 %v4953, %v8250
        %v8252 = vpop.f32.mrf.mxu0
        %v8253 = vadd.f32 %v4953, %v8252
        %v8254 = vpop.f32.mrf.mxu0
        %v8255 = vadd.f32 %v4958, %v8254
        %v8256 = vpop.f32.mrf.mxu0
        %v8257 = vadd.f32 %v4958, %v8256
        %8258 = vmatprep.mubr.bf16.mxu0 %v6171
        %8259 = vmatmul.mubr.bf16.gmra.mxu0 %v6170
        %v8260 = vpop.f32.mrf.mxu0
        %v8261 = vadd.f32 %v4963, %v8260
        %v8262 = vpop.f32.mrf.mxu0
        %v8263 = vadd.f32 %v4963, %v8262
        %v8264 = vpop.f32.mrf.mxu0
        %v8265 = vadd.f32 %v4968, %v8264
        %v8266 = vpop.f32.mrf.mxu0
        %v8267 = vadd.f32 %v4968, %v8266
        %8268 = vmatprep.mubr.bf16.mxu0 %v6175
        %8269 = vmatmul.mubr.bf16.gmra.mxu0 %v6174
        %v8270 = vpop.f32.mrf.mxu0
        %v8271 = vadd.f32 %v4973, %v8270
        %v8272 = vpop.f32.mrf.mxu0
        %v8273 = vadd.f32 %v4973, %v8272
        %v8274 = vpop.f32.mrf.mxu0
        %v8275 = vadd.f32 %v4978, %v8274
        %v8276 = vpop.f32.mrf.mxu0
        %v8277 = vadd.f32 %v4978, %v8276
        %8278 = vmatprep.mubr.bf16.mxu0 %v6179
        %8279 = vmatmul.mubr.bf16.gmra.mxu0 %v6178
        %v8280 = vpop.f32.mrf.mxu0
        %v8281 = vadd.f32 %v4983, %v8280
        %v8282 = vpop.f32.mrf.mxu0
        %v8283 = vadd.f32 %v4983, %v8282
        %v8284 = vpop.f32.mrf.mxu0
        %v8285 = vadd.f32 %v4988, %v8284
        %v8286 = vpop.f32.mrf.mxu0
        %v8287 = vadd.f32 %v4988, %v8286
        %8288 = vmatprep.mubr.bf16.mxu0 %v6183
        %8289 = vmatmul.mubr.bf16.gmra.mxu0 %v6182
        %v8290 = vpop.f32.mrf.mxu0
        %v8291 = vadd.f32 %v4993, %v8290
        %v8292 = vpop.f32.mrf.mxu0
        %v8293 = vadd.f32 %v4993, %v8292
        %v8294 = vpop.f32.mrf.mxu0
        %v8295 = vadd.f32 %v4998, %v8294
        %v8296 = vpop.f32.mrf.mxu0
        %v8297 = vadd.f32 %v4998, %v8296
        %8298 = vmatprep.mubr.bf16.mxu0 %v6187
        %8299 = vmatmul.mubr.bf16.gmra.mxu0 %v6186
        %v8300 = vpop.f32.mrf.mxu0
        %v8301 = vadd.f32 %v5003, %v8300
        %v8302 = vpop.f32.mrf.mxu0
        %v8303 = vadd.f32 %v5003, %v8302
        %v8304 = vpop.f32.mrf.mxu0
        %v8305 = vadd.f32 %v5008, %v8304
        %v8306 = vpop.f32.mrf.mxu0
        %v8307 = vadd.f32 %v5008, %v8306
        %8308 = vmatprep.mubr.bf16.mxu0 %v6191
        %8309 = vmatmul.mubr.bf16.gmra.mxu0 %v6190
        %v8310 = vpop.f32.mrf.mxu0
        %v8311 = vadd.f32 %v5013, %v8310
        %v8312 = vpop.f32.mrf.mxu0
        %v8313 = vadd.f32 %v5013, %v8312
        %v8314 = vpop.f32.mrf.mxu0
        %v8315 = vadd.f32 %v5018, %v8314
        %v8316 = vpop.f32.mrf.mxu0
        %v8317 = vadd.f32 %v5018, %v8316
        %8318 = vmatprep.mubr.bf16.mxu0 %v6195
        %8319 = vmatmul.mubr.bf16.gmra.mxu0 %v6194
        %v8320 = vpop.f32.mrf.mxu0
        %v8321 = vadd.f32 %v5023, %v8320
        %v8322 = vpop.f32.mrf.mxu0
        %v8323 = vadd.f32 %v5023, %v8322
        %v8324 = vpop.f32.mrf.mxu0
        %v8325 = vadd.f32 %v5028, %v8324
        %v8326 = vpop.f32.mrf.mxu0
        %v8327 = vadd.f32 %v5028, %v8326
        %8328 = vmatprep.mubr.bf16.mxu0 %v6199
        %8329 = vmatmul.mubr.bf16.gmra.mxu0 %v6198
        %v8330 = vpop.f32.mrf.mxu0
        %v8331 = vadd.f32 %v5033, %v8330
        %v8332 = vpop.f32.mrf.mxu0
        %v8333 = vadd.f32 %v5033, %v8332
        %v8334 = vpop.f32.mrf.mxu0
        %v8335 = vadd.f32 %v5038, %v8334
        %v8336 = vpop.f32.mrf.mxu0
        %v8337 = vadd.f32 %v5038, %v8336
        %8338 = vmatprep.mubr.bf16.mxu0 %v6203
        %8339 = vmatmul.mubr.bf16.gmra.mxu0 %v6202
        %v8340 = vpop.f32.mrf.mxu0
        %v8341 = vadd.f32 %v5043, %v8340
        %v8342 = vpop.f32.mrf.mxu0
        %v8343 = vadd.f32 %v5043, %v8342
        %v8344 = vpop.f32.mrf.mxu0
        %v8345 = vadd.f32 %v5048, %v8344
        %v8346 = vpop.f32.mrf.mxu0
        %v8347 = vadd.f32 %v5048, %v8346
        %8348 = vmatprep.mubr.bf16.mxu0 %v6207
        %8349 = vmatmul.mubr.bf16.gmra.mxu0 %v6206
        %v8350 = vpop.f32.mrf.mxu0
        %v8351 = vadd.f32 %v5053, %v8350
        %v8352 = vpop.f32.mrf.mxu0
        %v8353 = vadd.f32 %v5053, %v8352
        %v8354 = vpop.f32.mrf.mxu0
        %v8355 = vadd.f32 %v5058, %v8354
        %v8356 = vpop.f32.mrf.mxu0
        %v8357 = vadd.f32 %v5058, %v8356
        %8358 = vmatprep.mubr.bf16.mxu0 %v6211
        %8359 = vmatmul.mubr.bf16.gmra.mxu0 %v6210
        %v8360 = vpop.f32.mrf.mxu0
        %v8361 = vadd.f32 %v5063, %v8360
        %v8362 = vpop.f32.mrf.mxu0
        %v8363 = vadd.f32 %v5063, %v8362
        %v8364 = vpop.f32.mrf.mxu0
        %v8365 = vadd.f32 %v5068, %v8364
        %v8366 = vpop.f32.mrf.mxu0
        %v8367 = vadd.f32 %v5068, %v8366
        %8368 = vmatprep.mubr.bf16.mxu0 %v6215
        %8369 = vmatmul.mubr.bf16.gmra.mxu0 %v6214
        %v8370 = vpop.f32.mrf.mxu0
        %v8371 = vadd.f32 %v5073, %v8370
        %v8372 = vpop.f32.mrf.mxu0
        %v8373 = vadd.f32 %v5073, %v8372
        %v8374 = vpop.f32.mrf.mxu0
        %v8375 = vadd.f32 %v5078, %v8374
        %v8376 = vpop.f32.mrf.mxu0
        %v8377 = vadd.f32 %v5078, %v8376
        %8378 = vmatprep.mubr.bf16.mxu0 %v6219
        %8379 = vmatmul.mubr.bf16.gmra.mxu0 %v6218
        %v8380 = vpop.f32.mrf.mxu0
        %v8381 = vadd.f32 %v5083, %v8380
        %v8382 = vpop.f32.mrf.mxu0
        %v8383 = vadd.f32 %v5083, %v8382
        %v8384 = vpop.f32.mrf.mxu0
        %v8385 = vadd.f32 %v5088, %v8384
        %v8386 = vpop.f32.mrf.mxu0
        %v8387 = vadd.f32 %v5088, %v8386
        %8388 = vmatprep.mubr.bf16.mxu0 %v6223
        %8389 = vmatmul.mubr.bf16.gmra.mxu0 %v6222
        %v8390 = vpop.f32.mrf.mxu0
        %v8391 = vadd.f32 %v5093, %v8390
        %v8392 = vpop.f32.mrf.mxu0
        %v8393 = vadd.f32 %v5093, %v8392
        %v8394 = vpop.f32.mrf.mxu0
        %v8395 = vadd.f32 %v5098, %v8394
        %v8396 = vpop.f32.mrf.mxu0
        %v8397 = vadd.f32 %v5098, %v8396
        %8398 = vmatprep.mubr.bf16.mxu0 %v6227
        %8399 = vmatmul.mubr.bf16.gmra.mxu0 %v6226
        %v8400 = vpop.f32.mrf.mxu0
        %v8401 = vadd.f32 %v5103, %v8400
        %v8402 = vpop.f32.mrf.mxu0
        %v8403 = vadd.f32 %v5103, %v8402
        %v8404 = vpop.f32.mrf.mxu0
        %v8405 = vadd.f32 %v5108, %v8404
        %v8406 = vpop.f32.mrf.mxu0
        %v8407 = vadd.f32 %v5108, %v8406
        %8408 = vmatprep.mubr.bf16.mxu0 %v6231
        %8409 = vmatmul.mubr.bf16.gmra.mxu0 %v6230
        %v8410 = vpop.f32.mrf.mxu0
        %v8411 = vadd.f32 %v5113, %v8410
        %v8412 = vpop.f32.mrf.mxu0
        %v8413 = vadd.f32 %v5113, %v8412
        %v8414 = vpop.f32.mrf.mxu0
        %v8415 = vadd.f32 %v5118, %v8414
        %v8416 = vpop.f32.mrf.mxu0
        %v8417 = vadd.f32 %v5118, %v8416
        %8418 = vmatprep.mubr.bf16.mxu0 %v6235
        %8419 = vmatmul.mubr.bf16.gmra.mxu0 %v6234
        %v8420 = vpop.f32.mrf.mxu0
        %v8421 = vadd.f32 %v5123, %v8420
        %v8422 = vpop.f32.mrf.mxu0
        %v8423 = vadd.f32 %v5123, %v8422
        %v8424 = vpop.f32.mrf.mxu0
        %v8425 = vadd.f32 %v5128, %v8424
        %v8426 = vpop.f32.mrf.mxu0
        %v8427 = vadd.f32 %v5128, %v8426
        %8428 = vmatprep.mubr.bf16.mxu0 %v6239
        %8429 = vmatmul.mubr.bf16.gmra.mxu0 %v6238
        %v8430 = vpop.f32.mrf.mxu0
        %v8431 = vadd.f32 %v5133, %v8430
        %v8432 = vpop.f32.mrf.mxu0
        %v8433 = vadd.f32 %v5133, %v8432
        %v8434 = vpop.f32.mrf.mxu0
        %v8435 = vadd.f32 %v5138, %v8434
        %v8436 = vpop.f32.mrf.mxu0
        %v8437 = vadd.f32 %v5138, %v8436
        %8438 = vmatprep.mubr.bf16.mxu0 %v6243
        %8439 = vmatmul.mubr.bf16.gmra.mxu0 %v6242
        %v8440 = vpop.f32.mrf.mxu0
        %v8441 = vadd.f32 %v5143, %v8440
        %v8442 = vpop.f32.mrf.mxu0
        %v8443 = vadd.f32 %v5143, %v8442
        %v8444 = vpop.f32.mrf.mxu0
        %v8445 = vadd.f32 %v5148, %v8444
        %v8446 = vpop.f32.mrf.mxu0
        %v8447 = vadd.f32 %v5148, %v8446
        %8448 = vmatprep.mubr.bf16.mxu0 %v6247
        %8449 = vmatmul.mubr.bf16.gmra.mxu0 %v6246
        %v8450 = vpop.f32.mrf.mxu0
        %v8451 = vadd.f32 %v5153, %v8450
        %v8452 = vpop.f32.mrf.mxu0
        %v8453 = vadd.f32 %v5153, %v8452
        %v8454 = vpop.f32.mrf.mxu0
        %v8455 = vadd.f32 %v5158, %v8454
        %v8456 = vpop.f32.mrf.mxu0
        %v8457 = vadd.f32 %v5158, %v8456
        %8458 = vmatprep.mubr.bf16.mxu0 %v6251
        %8459 = vmatmul.mubr.bf16.gmra.mxu0 %v6250
        %v8460 = vpop.f32.mrf.mxu0
        %v8461 = vadd.f32 %v5163, %v8460
        %v8462 = vpop.f32.mrf.mxu0
        %v8463 = vadd.f32 %v5163, %v8462
        %v8464 = vpop.f32.mrf.mxu0
        %v8465 = vadd.f32 %v5168, %v8464
        %v8466 = vpop.f32.mrf.mxu0
        %v8467 = vadd.f32 %v5168, %v8466
        %8468 = vmatprep.mubr.bf16.mxu0 %v6255
        %8469 = vmatmul.mubr.bf16.gmra.mxu0 %v6254
        %v8470 = vpop.f32.mrf.mxu0
        %v8471 = vadd.f32 %v5173, %v8470
        %v8472 = vpop.f32.mrf.mxu0
        %v8473 = vadd.f32 %v5173, %v8472
        %v8474 = vpop.f32.mrf.mxu0
        %v8475 = vadd.f32 %v5178, %v8474
        %v8476 = vpop.f32.mrf.mxu0
        %v8477 = vadd.f32 %v5178, %v8476
        %8478 = vmatprep.mubr.bf16.mxu0 %v6259
        %8479 = vmatmul.mubr.bf16.gmra.mxu0 %v6258
        %v8480 = vpop.f32.mrf.mxu0
        %v8481 = vadd.f32 %v5183, %v8480
        %v8482 = vpop.f32.mrf.mxu0
        %v8483 = vadd.f32 %v5183, %v8482
        %v8484 = vpop.f32.mrf.mxu0
        %v8485 = vadd.f32 %v5188, %v8484
        %v8486 = vpop.f32.mrf.mxu0
        %v8487 = vadd.f32 %v5188, %v8486
        %8488 = vmatprep.mubr.bf16.mxu0 %v6263
        %8489 = vmatmul.mubr.bf16.gmra.mxu0 %v6262
        %v8490 = vpop.f32.mrf.mxu0
        %v8491 = vadd.f32 %v5193, %v8490
        %v8492 = vpop.f32.mrf.mxu0
        %v8493 = vadd.f32 %v5193, %v8492
        %v8494 = vpop.f32.mrf.mxu0
        %v8495 = vadd.f32 %v5198, %v8494
        %v8496 = vpop.f32.mrf.mxu0
        %v8497 = vadd.f32 %v5198, %v8496
        %8498 = vmatprep.mubr.bf16.mxu0 %v6267
        %8499 = vmatmul.mubr.bf16.gmra.mxu0 %v6266
        %v8500 = vpop.f32.mrf.mxu0
        %v8501 = vadd.f32 %v5203, %v8500
        %v8502 = vpop.f32.mrf.mxu0
        %v8503 = vadd.f32 %v5203, %v8502
        %v8504 = vpop.f32.mrf.mxu0
        %v8505 = vadd.f32 %v5208, %v8504
        %v8506 = vpop.f32.mrf.mxu0
        %v8507 = vadd.f32 %v5208, %v8506
        %8508 = vmatprep.mubr.bf16.mxu0 %v6271
        %8509 = vmatmul.mubr.bf16.gmra.mxu0 %v6270
        %v8510 = vpop.f32.mrf.mxu0
        %v8511 = vadd.f32 %v5213, %v8510
        %v8512 = vpop.f32.mrf.mxu0
        %v8513 = vadd.f32 %v5213, %v8512
        %v8514 = vpop.f32.mrf.mxu0
        %v8515 = vadd.f32 %v5218, %v8514
        %v8516 = vpop.f32.mrf.mxu0
        %v8517 = vadd.f32 %v5218, %v8516
        %8518 = vmatprep.mubr.bf16.mxu0 %v6275
        %8519 = vmatmul.mubr.bf16.gmra.mxu0 %v6274
        %v8520 = vpop.f32.mrf.mxu0
        %v8521 = vadd.f32 %v5223, %v8520
        %v8522 = vpop.f32.mrf.mxu0
        %v8523 = vadd.f32 %v5223, %v8522
        %v8524 = vpop.f32.mrf.mxu0
        %v8525 = vadd.f32 %v5228, %v8524
        %v8526 = vpop.f32.mrf.mxu0
        %v8527 = vadd.f32 %v5228, %v8526
        %8528 = vmatprep.mubr.bf16.mxu0 %v6279
        %8529 = vmatmul.mubr.bf16.gmra.mxu0 %v6278
        %v8530 = vpop.f32.mrf.mxu0
        %v8531 = vadd.f32 %v5233, %v8530
        %v8532 = vpop.f32.mrf.mxu0
        %v8533 = vadd.f32 %v5233, %v8532
        %v8534 = vpop.f32.mrf.mxu0
        %v8535 = vadd.f32 %v5238, %v8534
        %v8536 = vpop.f32.mrf.mxu0
        %v8537 = vadd.f32 %v5238, %v8536
        %8538 = vmatprep.mubr.bf16.mxu0 %v6283
        %8539 = vmatmul.mubr.bf16.gmra.mxu0 %v6282
        %v8540 = vpop.f32.mrf.mxu0
        %v8541 = vadd.f32 %v5243, %v8540
        %v8542 = vpop.f32.mrf.mxu0
        %v8543 = vadd.f32 %v5243, %v8542
        %v8544 = vpop.f32.mrf.mxu0
        %v8545 = vadd.f32 %v5248, %v8544
        %v8546 = vpop.f32.mrf.mxu0
        %v8547 = vadd.f32 %v5248, %v8546
        %8548 = vmatprep.mubr.bf16.mxu0 %v6287
        %8549 = vmatmul.mubr.bf16.gmra.mxu0 %v6286
        %v8550 = vpop.f32.mrf.mxu0
        %v8551 = vadd.f32 %v5253, %v8550
        %v8552 = vpop.f32.mrf.mxu0
        %v8553 = vadd.f32 %v5253, %v8552
        %v8554 = vpop.f32.mrf.mxu0
        %v8555 = vadd.f32 %v5258, %v8554
        %v8556 = vpop.f32.mrf.mxu0
        %v8557 = vadd.f32 %v5258, %v8556
        %8558 = vmatprep.mubr.bf16.mxu0 %v6291
        %8559 = vmatmul.mubr.bf16.gmra.mxu0 %v6290
        %v8560 = vpop.f32.mrf.mxu0
        %v8561 = vadd.f32 %v5263, %v8560
        %v8562 = vpop.f32.mrf.mxu0
        %v8563 = vadd.f32 %v5263, %v8562
        %v8564 = vpop.f32.mrf.mxu0
        %v8565 = vadd.f32 %v5268, %v8564
        %v8566 = vpop.f32.mrf.mxu0
        %v8567 = vadd.f32 %v5268, %v8566
        %8568 = vdwg.mxu0
        %8569 = vmatprep.subr.bf16.mxu0 %v4213
        %8570 = vmatpush1.bf16.msra.mxu0 %v4212
        %8571 = vmatprep.subr.bf16.mxu0 %v4209
        %8572 = vmatpush1.bf16.msra.mxu0 %v4208
        %8573 = vmatprep.subr.bf16.mxu0 %v4205
        %8574 = vmatpush1.bf16.msra.mxu0 %v4204
        %8575 = vmatprep.subr.bf16.mxu0 %v4201
        %8576 = vmatpush1.bf16.msra.mxu0 %v4200
        %8577 = vmatprep.subr.bf16.mxu0 %v4197
        %8578 = vmatpush1.bf16.msra.mxu0 %v4196
        %8579 = vmatprep.subr.bf16.mxu0 %v4193
        %8580 = vmatpush1.bf16.msra.mxu0 %v4192
        %8581 = vmatprep.subr.bf16.mxu0 %v4189
        %8582 = vmatpush1.bf16.msra.mxu0 %v4188
        %8583 = vmatprep.subr.bf16.mxu0 %v4185
        %8584 = vmatpush1.bf16.msra.mxu0 %v4184
        %8585 = vmatprep.subr.bf16.mxu0 %v4245
        %8586 = vmatpush2.bf16.msra.mxu0 %v4244
        %8587 = vmatprep.subr.bf16.mxu0 %v4241
        %8588 = vmatpush2.bf16.msra.mxu0 %v4240
        %8589 = vmatprep.subr.bf16.mxu0 %v4237
        %8590 = vmatpush2.bf16.msra.mxu0 %v4236
        %8591 = vmatprep.subr.bf16.mxu0 %v4233
        %8592 = vmatpush2.bf16.msra.mxu0 %v4232
        %8593 = vmatprep.subr.bf16.mxu0 %v4229
        %8594 = vmatpush2.bf16.msra.mxu0 %v4228
        %8595 = vmatprep.subr.bf16.mxu0 %v4225
        %8596 = vmatpush2.bf16.msra.mxu0 %v4224
        %8597 = vmatprep.subr.bf16.mxu0 %v4221
        %8598 = vmatpush2.bf16.msra.mxu0 %v4220
        %8599 = vmatprep.subr.bf16.mxu0 %v4217
        %8600 = vmatpush2.bf16.msra.mxu0 %v4216
        %8601 = vmatprep.mubr.bf16.mxu0 %v6041
        %8602 = vmatmul.mubr.bf16.gmra.mxu0 %v6040
        %v8603 = vpop.f32.mrf.mxu0
        %v8604 = vadd.f32 %v7931, %v8603
        %v8605 = vpop.f32.mrf.mxu0
        %v8606 = vadd.f32 %v7933, %v8605
        %v8607 = vpop.f32.mrf.mxu0
        %v8608 = vadd.f32 %v7935, %v8607
        %v8609 = vpop.f32.mrf.mxu0
        %v8610 = vadd.f32 %v7937, %v8609
        %8611 = vmatprep.mubr.bf16.mxu0 %v6045
        %8612 = vmatmul.mubr.bf16.gmra.mxu0 %v6044
        %v8613 = vpop.f32.mrf.mxu0
        %v8614 = vadd.f32 %v7941, %v8613
        %v8615 = vpop.f32.mrf.mxu0
        %v8616 = vadd.f32 %v7943, %v8615
        %v8617 = vpop.f32.mrf.mxu0
        %v8618 = vadd.f32 %v7945, %v8617
        %v8619 = vpop.f32.mrf.mxu0
        %v8620 = vadd.f32 %v7947, %v8619
        %8621 = vmatprep.mubr.bf16.mxu0 %v6049
        %8622 = vmatmul.mubr.bf16.gmra.mxu0 %v6048
        %v8623 = vpop.f32.mrf.mxu0
        %v8624 = vadd.f32 %v7951, %v8623
        %v8625 = vpop.f32.mrf.mxu0
        %v8626 = vadd.f32 %v7953, %v8625
        %v8627 = vpop.f32.mrf.mxu0
        %v8628 = vadd.f32 %v7955, %v8627
        %v8629 = vpop.f32.mrf.mxu0
        %v8630 = vadd.f32 %v7957, %v8629
        %8631 = vmatprep.mubr.bf16.mxu0 %v6053
        %8632 = vmatmul.mubr.bf16.gmra.mxu0 %v6052
        %v8633 = vpop.f32.mrf.mxu0
        %v8634 = vadd.f32 %v7961, %v8633
        %v8635 = vpop.f32.mrf.mxu0
        %v8636 = vadd.f32 %v7963, %v8635
        %v8637 = vpop.f32.mrf.mxu0
        %v8638 = vadd.f32 %v7965, %v8637
        %v8639 = vpop.f32.mrf.mxu0
        %v8640 = vadd.f32 %v7967, %v8639
        %8641 = vmatprep.mubr.bf16.mxu0 %v6057
        %8642 = vmatmul.mubr.bf16.gmra.mxu0 %v6056
        %v8643 = vpop.f32.mrf.mxu0
        %v8644 = vadd.f32 %v7971, %v8643
        %v8645 = vpop.f32.mrf.mxu0
        %v8646 = vadd.f32 %v7973, %v8645
        %v8647 = vpop.f32.mrf.mxu0
        %v8648 = vadd.f32 %v7975, %v8647
        %v8649 = vpop.f32.mrf.mxu0
        %v8650 = vadd.f32 %v7977, %v8649
        %8651 = vmatprep.mubr.bf16.mxu0 %v6061
        %8652 = vmatmul.mubr.bf16.gmra.mxu0 %v6060
        %v8653 = vpop.f32.mrf.mxu0
        %v8654 = vadd.f32 %v7981, %v8653
        %v8655 = vpop.f32.mrf.mxu0
        %v8656 = vadd.f32 %v7983, %v8655
        %v8657 = vpop.f32.mrf.mxu0
        %v8658 = vadd.f32 %v7985, %v8657
        %v8659 = vpop.f32.mrf.mxu0
        %v8660 = vadd.f32 %v7987, %v8659
        %8661 = vmatprep.mubr.bf16.mxu0 %v6065
        %8662 = vmatmul.mubr.bf16.gmra.mxu0 %v6064
        %v8663 = vpop.f32.mrf.mxu0
        %v8664 = vadd.f32 %v7991, %v8663
        %v8665 = vpop.f32.mrf.mxu0
        %v8666 = vadd.f32 %v7993, %v8665
        %v8667 = vpop.f32.mrf.mxu0
        %v8668 = vadd.f32 %v7995, %v8667
        %v8669 = vpop.f32.mrf.mxu0
        %v8670 = vadd.f32 %v7997, %v8669
        %8671 = vmatprep.mubr.bf16.mxu0 %v6069
        %8672 = vmatmul.mubr.bf16.gmra.mxu0 %v6068
        %v8673 = vpop.f32.mrf.mxu0
        %v8674 = vadd.f32 %v8001, %v8673
        %v8675 = vpop.f32.mrf.mxu0
        %v8676 = vadd.f32 %v8003, %v8675
        %v8677 = vpop.f32.mrf.mxu0
        %v8678 = vadd.f32 %v8005, %v8677
        %v8679 = vpop.f32.mrf.mxu0
        %v8680 = vadd.f32 %v8007, %v8679
        %8681 = vmatprep.mubr.bf16.mxu0 %v6073
        %8682 = vmatmul.mubr.bf16.gmra.mxu0 %v6072
        %v8683 = vpop.f32.mrf.mxu0
        %v8684 = vadd.f32 %v8011, %v8683
        %v8685 = vpop.f32.mrf.mxu0
        %v8686 = vadd.f32 %v8013, %v8685
        %v8687 = vpop.f32.mrf.mxu0
        %v8688 = vadd.f32 %v8015, %v8687
        %v8689 = vpop.f32.mrf.mxu0
        %v8690 = vadd.f32 %v8017, %v8689
        %8691 = vmatprep.mubr.bf16.mxu0 %v6077
        %8692 = vmatmul.mubr.bf16.gmra.mxu0 %v6076
        %v8693 = vpop.f32.mrf.mxu0
        %v8694 = vadd.f32 %v8021, %v8693
        %v8695 = vpop.f32.mrf.mxu0
        %v8696 = vadd.f32 %v8023, %v8695
        %v8697 = vpop.f32.mrf.mxu0
        %v8698 = vadd.f32 %v8025, %v8697
        %v8699 = vpop.f32.mrf.mxu0
        %v8700 = vadd.f32 %v8027, %v8699
        %8701 = vmatprep.mubr.bf16.mxu0 %v6081
        %8702 = vmatmul.mubr.bf16.gmra.mxu0 %v6080
        %v8703 = vpop.f32.mrf.mxu0
        %v8704 = vadd.f32 %v8031, %v8703
        %v8705 = vpop.f32.mrf.mxu0
        %v8706 = vadd.f32 %v8033, %v8705
        %v8707 = vpop.f32.mrf.mxu0
        %v8708 = vadd.f32 %v8035, %v8707
        %v8709 = vpop.f32.mrf.mxu0
        %v8710 = vadd.f32 %v8037, %v8709
        %8711 = vmatprep.mubr.bf16.mxu0 %v6085
        %8712 = vmatmul.mubr.bf16.gmra.mxu0 %v6084
        %v8713 = vpop.f32.mrf.mxu0
        %v8714 = vadd.f32 %v8041, %v8713
        %v8715 = vpop.f32.mrf.mxu0
        %v8716 = vadd.f32 %v8043, %v8715
        %v8717 = vpop.f32.mrf.mxu0
        %v8718 = vadd.f32 %v8045, %v8717
        %v8719 = vpop.f32.mrf.mxu0
        %v8720 = vadd.f32 %v8047, %v8719
        %8721 = vmatprep.mubr.bf16.mxu0 %v6089
        %8722 = vmatmul.mubr.bf16.gmra.mxu0 %v6088
        %v8723 = vpop.f32.mrf.mxu0
        %v8724 = vadd.f32 %v8051, %v8723
        %v8725 = vpop.f32.mrf.mxu0
        %v8726 = vadd.f32 %v8053, %v8725
        %v8727 = vpop.f32.mrf.mxu0
        %v8728 = vadd.f32 %v8055, %v8727
        %v8729 = vpop.f32.mrf.mxu0
        %v8730 = vadd.f32 %v8057, %v8729
        %8731 = vmatprep.mubr.bf16.mxu0 %v6093
        %8732 = vmatmul.mubr.bf16.gmra.mxu0 %v6092
        %v8733 = vpop.f32.mrf.mxu0
        %v8734 = vadd.f32 %v8061, %v8733
        %v8735 = vpop.f32.mrf.mxu0
        %v8736 = vadd.f32 %v8063, %v8735
        %v8737 = vpop.f32.mrf.mxu0
        %v8738 = vadd.f32 %v8065, %v8737
        %v8739 = vpop.f32.mrf.mxu0
        %v8740 = vadd.f32 %v8067, %v8739
        %8741 = vmatprep.mubr.bf16.mxu0 %v6097
        %8742 = vmatmul.mubr.bf16.gmra.mxu0 %v6096
        %v8743 = vpop.f32.mrf.mxu0
        %v8744 = vadd.f32 %v8071, %v8743
        %v8745 = vpop.f32.mrf.mxu0
        %v8746 = vadd.f32 %v8073, %v8745
        %v8747 = vpop.f32.mrf.mxu0
        %v8748 = vadd.f32 %v8075, %v8747
        %v8749 = vpop.f32.mrf.mxu0
        %v8750 = vadd.f32 %v8077, %v8749
        %8751 = vmatprep.mubr.bf16.mxu0 %v6101
        %8752 = vmatmul.mubr.bf16.gmra.mxu0 %v6100
        %v8753 = vpop.f32.mrf.mxu0
        %v8754 = vadd.f32 %v8081, %v8753
        %v8755 = vpop.f32.mrf.mxu0
        %v8756 = vadd.f32 %v8083, %v8755
        %v8757 = vpop.f32.mrf.mxu0
        %v8758 = vadd.f32 %v8085, %v8757
        %v8759 = vpop.f32.mrf.mxu0
        %v8760 = vadd.f32 %v8087, %v8759
        %8761 = vmatprep.mubr.bf16.mxu0 %v6105
        %8762 = vmatmul.mubr.bf16.gmra.mxu0 %v6104
        %v8763 = vpop.f32.mrf.mxu0
        %v8764 = vadd.f32 %v8091, %v8763
        %v8765 = vpop.f32.mrf.mxu0
        %v8766 = vadd.f32 %v8093, %v8765
        %v8767 = vpop.f32.mrf.mxu0
        %v8768 = vadd.f32 %v8095, %v8767
        %v8769 = vpop.f32.mrf.mxu0
        %v8770 = vadd.f32 %v8097, %v8769
        %8771 = vmatprep.mubr.bf16.mxu0 %v6109
        %8772 = vmatmul.mubr.bf16.gmra.mxu0 %v6108
        %v8773 = vpop.f32.mrf.mxu0
        %v8774 = vadd.f32 %v8101, %v8773
        %v8775 = vpop.f32.mrf.mxu0
        %v8776 = vadd.f32 %v8103, %v8775
        %v8777 = vpop.f32.mrf.mxu0
        %v8778 = vadd.f32 %v8105, %v8777
        %v8779 = vpop.f32.mrf.mxu0
        %v8780 = vadd.f32 %v8107, %v8779
        %8781 = vmatprep.mubr.bf16.mxu0 %v6113
        %8782 = vmatmul.mubr.bf16.gmra.mxu0 %v6112
        %v8783 = vpop.f32.mrf.mxu0
        %v8784 = vadd.f32 %v8111, %v8783
        %v8785 = vpop.f32.mrf.mxu0
        %v8786 = vadd.f32 %v8113, %v8785
        %v8787 = vpop.f32.mrf.mxu0
        %v8788 = vadd.f32 %v8115, %v8787
        %v8789 = vpop.f32.mrf.mxu0
        %v8790 = vadd.f32 %v8117, %v8789
        %8791 = vmatprep.mubr.bf16.mxu0 %v6117
        %8792 = vmatmul.mubr.bf16.gmra.mxu0 %v6116
        %v8793 = vpop.f32.mrf.mxu0
        %v8794 = vadd.f32 %v8121, %v8793
        %v8795 = vpop.f32.mrf.mxu0
        %v8796 = vadd.f32 %v8123, %v8795
        %v8797 = vpop.f32.mrf.mxu0
        %v8798 = vadd.f32 %v8125, %v8797
        %v8799 = vpop.f32.mrf.mxu0
        %v8800 = vadd.f32 %v8127, %v8799
        %8801 = vmatprep.mubr.bf16.mxu0 %v6121
        %8802 = vmatmul.mubr.bf16.gmra.mxu0 %v6120
        %v8803 = vpop.f32.mrf.mxu0
        %v8804 = vadd.f32 %v8131, %v8803
        %v8805 = vpop.f32.mrf.mxu0
        %v8806 = vadd.f32 %v8133, %v8805
        %v8807 = vpop.f32.mrf.mxu0
        %v8808 = vadd.f32 %v8135, %v8807
        %v8809 = vpop.f32.mrf.mxu0
        %v8810 = vadd.f32 %v8137, %v8809
        %8811 = vmatprep.mubr.bf16.mxu0 %v6125
        %8812 = vmatmul.mubr.bf16.gmra.mxu0 %v6124
        %v8813 = vpop.f32.mrf.mxu0
        %v8814 = vadd.f32 %v8141, %v8813
        %v8815 = vpop.f32.mrf.mxu0
        %v8816 = vadd.f32 %v8143, %v8815
        %v8817 = vpop.f32.mrf.mxu0
        %v8818 = vadd.f32 %v8145, %v8817
        %v8819 = vpop.f32.mrf.mxu0
        %v8820 = vadd.f32 %v8147, %v8819
        %8821 = vmatprep.mubr.bf16.mxu0 %v6129
        %8822 = vmatmul.mubr.bf16.gmra.mxu0 %v6128
        %v8823 = vpop.f32.mrf.mxu0
        %v8824 = vadd.f32 %v8151, %v8823
        %v8825 = vpop.f32.mrf.mxu0
        %v8826 = vadd.f32 %v8153, %v8825
        %v8827 = vpop.f32.mrf.mxu0
        %v8828 = vadd.f32 %v8155, %v8827
        %v8829 = vpop.f32.mrf.mxu0
        %v8830 = vadd.f32 %v8157, %v8829
        %8831 = vmatprep.mubr.bf16.mxu0 %v6133
        %8832 = vmatmul.mubr.bf16.gmra.mxu0 %v6132
        %v8833 = vpop.f32.mrf.mxu0
        %v8834 = vadd.f32 %v8161, %v8833
        %v8835 = vpop.f32.mrf.mxu0
        %v8836 = vadd.f32 %v8163, %v8835
        %v8837 = vpop.f32.mrf.mxu0
        %v8838 = vadd.f32 %v8165, %v8837
        %v8839 = vpop.f32.mrf.mxu0
        %v8840 = vadd.f32 %v8167, %v8839
        %8841 = vmatprep.mubr.bf16.mxu0 %v6137
        %8842 = vmatmul.mubr.bf16.gmra.mxu0 %v6136
        %v8843 = vpop.f32.mrf.mxu0
        %v8844 = vadd.f32 %v8171, %v8843
        %v8845 = vpop.f32.mrf.mxu0
        %v8846 = vadd.f32 %v8173, %v8845
        %v8847 = vpop.f32.mrf.mxu0
        %v8848 = vadd.f32 %v8175, %v8847
        %v8849 = vpop.f32.mrf.mxu0
        %v8850 = vadd.f32 %v8177, %v8849
        %8851 = vmatprep.mubr.bf16.mxu0 %v6141
        %8852 = vmatmul.mubr.bf16.gmra.mxu0 %v6140
        %v8853 = vpop.f32.mrf.mxu0
        %v8854 = vadd.f32 %v8181, %v8853
        %v8855 = vpop.f32.mrf.mxu0
        %v8856 = vadd.f32 %v8183, %v8855
        %v8857 = vpop.f32.mrf.mxu0
        %v8858 = vadd.f32 %v8185, %v8857
        %v8859 = vpop.f32.mrf.mxu0
        %v8860 = vadd.f32 %v8187, %v8859
        %8861 = vmatprep.mubr.bf16.mxu0 %v6145
        %8862 = vmatmul.mubr.bf16.gmra.mxu0 %v6144
        %v8863 = vpop.f32.mrf.mxu0
        %v8864 = vadd.f32 %v8191, %v8863
        %v8865 = vpop.f32.mrf.mxu0
        %v8866 = vadd.f32 %v8193, %v8865
        %v8867 = vpop.f32.mrf.mxu0
        %v8868 = vadd.f32 %v8195, %v8867
        %v8869 = vpop.f32.mrf.mxu0
        %v8870 = vadd.f32 %v8197, %v8869
        %8871 = vmatprep.mubr.bf16.mxu0 %v6149
        %8872 = vmatmul.mubr.bf16.gmra.mxu0 %v6148
        %v8873 = vpop.f32.mrf.mxu0
        %v8874 = vadd.f32 %v8201, %v8873
        %v8875 = vpop.f32.mrf.mxu0
        %v8876 = vadd.f32 %v8203, %v8875
        %v8877 = vpop.f32.mrf.mxu0
        %v8878 = vadd.f32 %v8205, %v8877
        %v8879 = vpop.f32.mrf.mxu0
        %v8880 = vadd.f32 %v8207, %v8879
        %8881 = vmatprep.mubr.bf16.mxu0 %v6153
        %8882 = vmatmul.mubr.bf16.gmra.mxu0 %v6152
        %v8883 = vpop.f32.mrf.mxu0
        %v8884 = vadd.f32 %v8211, %v8883
        %v8885 = vpop.f32.mrf.mxu0
        %v8886 = vadd.f32 %v8213, %v8885
        %v8887 = vpop.f32.mrf.mxu0
        %v8888 = vadd.f32 %v8215, %v8887
        %v8889 = vpop.f32.mrf.mxu0
        %v8890 = vadd.f32 %v8217, %v8889
        %8891 = vmatprep.mubr.bf16.mxu0 %v6157
        %8892 = vmatmul.mubr.bf16.gmra.mxu0 %v6156
        %v8893 = vpop.f32.mrf.mxu0
        %v8894 = vadd.f32 %v8221, %v8893
        %v8895 = vpop.f32.mrf.mxu0
        %v8896 = vadd.f32 %v8223, %v8895
        %v8897 = vpop.f32.mrf.mxu0
        %v8898 = vadd.f32 %v8225, %v8897
        %v8899 = vpop.f32.mrf.mxu0
        %v8900 = vadd.f32 %v8227, %v8899
        %8901 = vmatprep.mubr.bf16.mxu0 %v6161
        %8902 = vmatmul.mubr.bf16.gmra.mxu0 %v6160
        %v8903 = vpop.f32.mrf.mxu0
        %v8904 = vadd.f32 %v8231, %v8903
        %v8905 = vpop.f32.mrf.mxu0
        %v8906 = vadd.f32 %v8233, %v8905
        %v8907 = vpop.f32.mrf.mxu0
        %v8908 = vadd.f32 %v8235, %v8907
        %v8909 = vpop.f32.mrf.mxu0
        %v8910 = vadd.f32 %v8237, %v8909
        %8911 = vmatprep.mubr.bf16.mxu0 %v6165
        %8912 = vmatmul.mubr.bf16.gmra.mxu0 %v6164
        %v8913 = vpop.f32.mrf.mxu0
        %v8914 = vadd.f32 %v8241, %v8913
        %v8915 = vpop.f32.mrf.mxu0
        %v8916 = vadd.f32 %v8243, %v8915
        %v8917 = vpop.f32.mrf.mxu0
        %v8918 = vadd.f32 %v8245, %v8917
        %v8919 = vpop.f32.mrf.mxu0
        %v8920 = vadd.f32 %v8247, %v8919
        %8921 = vmatprep.mubr.bf16.mxu0 %v6169
        %8922 = vmatmul.mubr.bf16.gmra.mxu0 %v6168
        %v8923 = vpop.f32.mrf.mxu0
        %v8924 = vadd.f32 %v8251, %v8923
        %v8925 = vpop.f32.mrf.mxu0
        %v8926 = vadd.f32 %v8253, %v8925
        %v8927 = vpop.f32.mrf.mxu0
        %v8928 = vadd.f32 %v8255, %v8927
        %v8929 = vpop.f32.mrf.mxu0
        %v8930 = vadd.f32 %v8257, %v8929
        %8931 = vmatprep.mubr.bf16.mxu0 %v6173
        %8932 = vmatmul.mubr.bf16.gmra.mxu0 %v6172
        %v8933 = vpop.f32.mrf.mxu0
        %v8934 = vadd.f32 %v8261, %v8933
        %v8935 = vpop.f32.mrf.mxu0
        %v8936 = vadd.f32 %v8263, %v8935
        %v8937 = vpop.f32.mrf.mxu0
        %v8938 = vadd.f32 %v8265, %v8937
        %v8939 = vpop.f32.mrf.mxu0
        %v8940 = vadd.f32 %v8267, %v8939
        %8941 = vmatprep.mubr.bf16.mxu0 %v6177
        %8942 = vmatmul.mubr.bf16.gmra.mxu0 %v6176
        %v8943 = vpop.f32.mrf.mxu0
        %v8944 = vadd.f32 %v8271, %v8943
        %v8945 = vpop.f32.mrf.mxu0
        %v8946 = vadd.f32 %v8273, %v8945
        %v8947 = vpop.f32.mrf.mxu0
        %v8948 = vadd.f32 %v8275, %v8947
        %v8949 = vpop.f32.mrf.mxu0
        %v8950 = vadd.f32 %v8277, %v8949
        %8951 = vmatprep.mubr.bf16.mxu0 %v6181
        %8952 = vmatmul.mubr.bf16.gmra.mxu0 %v6180
        %v8953 = vpop.f32.mrf.mxu0
        %v8954 = vadd.f32 %v8281, %v8953
        %v8955 = vpop.f32.mrf.mxu0
        %v8956 = vadd.f32 %v8283, %v8955
        %v8957 = vpop.f32.mrf.mxu0
        %v8958 = vadd.f32 %v8285, %v8957
        %v8959 = vpop.f32.mrf.mxu0
        %v8960 = vadd.f32 %v8287, %v8959
        %8961 = vmatprep.mubr.bf16.mxu0 %v6185
        %8962 = vmatmul.mubr.bf16.gmra.mxu0 %v6184
        %v8963 = vpop.f32.mrf.mxu0
        %v8964 = vadd.f32 %v8291, %v8963
        %v8965 = vpop.f32.mrf.mxu0
        %v8966 = vadd.f32 %v8293, %v8965
        %v8967 = vpop.f32.mrf.mxu0
        %v8968 = vadd.f32 %v8295, %v8967
        %v8969 = vpop.f32.mrf.mxu0
        %v8970 = vadd.f32 %v8297, %v8969
        %8971 = vmatprep.mubr.bf16.mxu0 %v6189
        %8972 = vmatmul.mubr.bf16.gmra.mxu0 %v6188
        %v8973 = vpop.f32.mrf.mxu0
        %v8974 = vadd.f32 %v8301, %v8973
        %v8975 = vpop.f32.mrf.mxu0
        %v8976 = vadd.f32 %v8303, %v8975
        %v8977 = vpop.f32.mrf.mxu0
        %v8978 = vadd.f32 %v8305, %v8977
        %v8979 = vpop.f32.mrf.mxu0
        %v8980 = vadd.f32 %v8307, %v8979
        %8981 = vmatprep.mubr.bf16.mxu0 %v6193
        %8982 = vmatmul.mubr.bf16.gmra.mxu0 %v6192
        %v8983 = vpop.f32.mrf.mxu0
        %v8984 = vadd.f32 %v8311, %v8983
        %v8985 = vpop.f32.mrf.mxu0
        %v8986 = vadd.f32 %v8313, %v8985
        %v8987 = vpop.f32.mrf.mxu0
        %v8988 = vadd.f32 %v8315, %v8987
        %v8989 = vpop.f32.mrf.mxu0
        %v8990 = vadd.f32 %v8317, %v8989
        %8991 = vmatprep.mubr.bf16.mxu0 %v6197
        %8992 = vmatmul.mubr.bf16.gmra.mxu0 %v6196
        %v8993 = vpop.f32.mrf.mxu0
        %v8994 = vadd.f32 %v8321, %v8993
        %v8995 = vpop.f32.mrf.mxu0
        %v8996 = vadd.f32 %v8323, %v8995
        %v8997 = vpop.f32.mrf.mxu0
        %v8998 = vadd.f32 %v8325, %v8997
        %v8999 = vpop.f32.mrf.mxu0
        %v9000 = vadd.f32 %v8327, %v8999
        %9001 = vmatprep.mubr.bf16.mxu0 %v6201
        %9002 = vmatmul.mubr.bf16.gmra.mxu0 %v6200
        %v9003 = vpop.f32.mrf.mxu0
        %v9004 = vadd.f32 %v8331, %v9003
        %v9005 = vpop.f32.mrf.mxu0
        %v9006 = vadd.f32 %v8333, %v9005
        %v9007 = vpop.f32.mrf.mxu0
        %v9008 = vadd.f32 %v8335, %v9007
        %v9009 = vpop.f32.mrf.mxu0
        %v9010 = vadd.f32 %v8337, %v9009
        %9011 = vmatprep.mubr.bf16.mxu0 %v6205
        %9012 = vmatmul.mubr.bf16.gmra.mxu0 %v6204
        %v9013 = vpop.f32.mrf.mxu0
        %v9014 = vadd.f32 %v8341, %v9013
        %v9015 = vpop.f32.mrf.mxu0
        %v9016 = vadd.f32 %v8343, %v9015
        %v9017 = vpop.f32.mrf.mxu0
        %v9018 = vadd.f32 %v8345, %v9017
        %v9019 = vpop.f32.mrf.mxu0
        %v9020 = vadd.f32 %v8347, %v9019
        %9021 = vmatprep.mubr.bf16.mxu0 %v6209
        %9022 = vmatmul.mubr.bf16.gmra.mxu0 %v6208
        %v9023 = vpop.f32.mrf.mxu0
        %v9024 = vadd.f32 %v8351, %v9023
        %v9025 = vpop.f32.mrf.mxu0
        %v9026 = vadd.f32 %v8353, %v9025
        %v9027 = vpop.f32.mrf.mxu0
        %v9028 = vadd.f32 %v8355, %v9027
        %v9029 = vpop.f32.mrf.mxu0
        %v9030 = vadd.f32 %v8357, %v9029
        %9031 = vmatprep.mubr.bf16.mxu0 %v6213
        %9032 = vmatmul.mubr.bf16.gmra.mxu0 %v6212
        %v9033 = vpop.f32.mrf.mxu0
        %v9034 = vadd.f32 %v8361, %v9033
        %v9035 = vpop.f32.mrf.mxu0
        %v9036 = vadd.f32 %v8363, %v9035
        %v9037 = vpop.f32.mrf.mxu0
        %v9038 = vadd.f32 %v8365, %v9037
        %v9039 = vpop.f32.mrf.mxu0
        %v9040 = vadd.f32 %v8367, %v9039
        %9041 = vmatprep.mubr.bf16.mxu0 %v6217
        %9042 = vmatmul.mubr.bf16.gmra.mxu0 %v6216
        %v9043 = vpop.f32.mrf.mxu0
        %v9044 = vadd.f32 %v8371, %v9043
        %v9045 = vpop.f32.mrf.mxu0
        %v9046 = vadd.f32 %v8373, %v9045
        %v9047 = vpop.f32.mrf.mxu0
        %v9048 = vadd.f32 %v8375, %v9047
        %v9049 = vpop.f32.mrf.mxu0
        %v9050 = vadd.f32 %v8377, %v9049
        %9051 = vmatprep.mubr.bf16.mxu0 %v6221
        %9052 = vmatmul.mubr.bf16.gmra.mxu0 %v6220
        %v9053 = vpop.f32.mrf.mxu0
        %v9054 = vadd.f32 %v8381, %v9053
        %v9055 = vpop.f32.mrf.mxu0
        %v9056 = vadd.f32 %v8383, %v9055
        %v9057 = vpop.f32.mrf.mxu0
        %v9058 = vadd.f32 %v8385, %v9057
        %v9059 = vpop.f32.mrf.mxu0
        %v9060 = vadd.f32 %v8387, %v9059
        %9061 = vmatprep.mubr.bf16.mxu0 %v6225
        %9062 = vmatmul.mubr.bf16.gmra.mxu0 %v6224
        %v9063 = vpop.f32.mrf.mxu0
        %v9064 = vadd.f32 %v8391, %v9063
        %v9065 = vpop.f32.mrf.mxu0
        %v9066 = vadd.f32 %v8393, %v9065
        %v9067 = vpop.f32.mrf.mxu0
        %v9068 = vadd.f32 %v8395, %v9067
        %v9069 = vpop.f32.mrf.mxu0
        %v9070 = vadd.f32 %v8397, %v9069
        %9071 = vmatprep.mubr.bf16.mxu0 %v6229
        %9072 = vmatmul.mubr.bf16.gmra.mxu0 %v6228
        %v9073 = vpop.f32.mrf.mxu0
        %v9074 = vadd.f32 %v8401, %v9073
        %v9075 = vpop.f32.mrf.mxu0
        %v9076 = vadd.f32 %v8403, %v9075
        %v9077 = vpop.f32.mrf.mxu0
        %v9078 = vadd.f32 %v8405, %v9077
        %v9079 = vpop.f32.mrf.mxu0
        %v9080 = vadd.f32 %v8407, %v9079
        %9081 = vmatprep.mubr.bf16.mxu0 %v6233
        %9082 = vmatmul.mubr.bf16.gmra.mxu0 %v6232
        %v9083 = vpop.f32.mrf.mxu0
        %v9084 = vadd.f32 %v8411, %v9083
        %v9085 = vpop.f32.mrf.mxu0
        %v9086 = vadd.f32 %v8413, %v9085
        %v9087 = vpop.f32.mrf.mxu0
        %v9088 = vadd.f32 %v8415, %v9087
        %v9089 = vpop.f32.mrf.mxu0
        %v9090 = vadd.f32 %v8417, %v9089
        %9091 = vmatprep.mubr.bf16.mxu0 %v6237
        %9092 = vmatmul.mubr.bf16.gmra.mxu0 %v6236
        %v9093 = vpop.f32.mrf.mxu0
        %v9094 = vadd.f32 %v8421, %v9093
        %v9095 = vpop.f32.mrf.mxu0
        %v9096 = vadd.f32 %v8423, %v9095
        %v9097 = vpop.f32.mrf.mxu0
        %v9098 = vadd.f32 %v8425, %v9097
        %v9099 = vpop.f32.mrf.mxu0
        %v9100 = vadd.f32 %v8427, %v9099
        %9101 = vmatprep.mubr.bf16.mxu0 %v6241
        %9102 = vmatmul.mubr.bf16.gmra.mxu0 %v6240
        %v9103 = vpop.f32.mrf.mxu0
        %v9104 = vadd.f32 %v8431, %v9103
        %v9105 = vpop.f32.mrf.mxu0
        %v9106 = vadd.f32 %v8433, %v9105
        %v9107 = vpop.f32.mrf.mxu0
        %v9108 = vadd.f32 %v8435, %v9107
        %v9109 = vpop.f32.mrf.mxu0
        %v9110 = vadd.f32 %v8437, %v9109
        %9111 = vmatprep.mubr.bf16.mxu0 %v6245
        %9112 = vmatmul.mubr.bf16.gmra.mxu0 %v6244
        %v9113 = vpop.f32.mrf.mxu0
        %v9114 = vadd.f32 %v8441, %v9113
        %v9115 = vpop.f32.mrf.mxu0
        %v9116 = vadd.f32 %v8443, %v9115
        %v9117 = vpop.f32.mrf.mxu0
        %v9118 = vadd.f32 %v8445, %v9117
        %v9119 = vpop.f32.mrf.mxu0
        %v9120 = vadd.f32 %v8447, %v9119
        %9121 = vmatprep.mubr.bf16.mxu0 %v6249
        %9122 = vmatmul.mubr.bf16.gmra.mxu0 %v6248
        %v9123 = vpop.f32.mrf.mxu0
        %v9124 = vadd.f32 %v8451, %v9123
        %v9125 = vpop.f32.mrf.mxu0
        %v9126 = vadd.f32 %v8453, %v9125
        %v9127 = vpop.f32.mrf.mxu0
        %v9128 = vadd.f32 %v8455, %v9127
        %v9129 = vpop.f32.mrf.mxu0
        %v9130 = vadd.f32 %v8457, %v9129
        %9131 = vmatprep.mubr.bf16.mxu0 %v6253
        %9132 = vmatmul.mubr.bf16.gmra.mxu0 %v6252
        %v9133 = vpop.f32.mrf.mxu0
        %v9134 = vadd.f32 %v8461, %v9133
        %v9135 = vpop.f32.mrf.mxu0
        %v9136 = vadd.f32 %v8463, %v9135
        %v9137 = vpop.f32.mrf.mxu0
        %v9138 = vadd.f32 %v8465, %v9137
        %v9139 = vpop.f32.mrf.mxu0
        %v9140 = vadd.f32 %v8467, %v9139
        %9141 = vmatprep.mubr.bf16.mxu0 %v6257
        %9142 = vmatmul.mubr.bf16.gmra.mxu0 %v6256
        %v9143 = vpop.f32.mrf.mxu0
        %v9144 = vadd.f32 %v8471, %v9143
        %v9145 = vpop.f32.mrf.mxu0
        %v9146 = vadd.f32 %v8473, %v9145
        %v9147 = vpop.f32.mrf.mxu0
        %v9148 = vadd.f32 %v8475, %v9147
        %v9149 = vpop.f32.mrf.mxu0
        %v9150 = vadd.f32 %v8477, %v9149
        %9151 = vmatprep.mubr.bf16.mxu0 %v6261
        %9152 = vmatmul.mubr.bf16.gmra.mxu0 %v6260
        %v9153 = vpop.f32.mrf.mxu0
        %v9154 = vadd.f32 %v8481, %v9153
        %v9155 = vpop.f32.mrf.mxu0
        %v9156 = vadd.f32 %v8483, %v9155
        %v9157 = vpop.f32.mrf.mxu0
        %v9158 = vadd.f32 %v8485, %v9157
        %v9159 = vpop.f32.mrf.mxu0
        %v9160 = vadd.f32 %v8487, %v9159
        %9161 = vmatprep.mubr.bf16.mxu0 %v6265
        %9162 = vmatmul.mubr.bf16.gmra.mxu0 %v6264
        %v9163 = vpop.f32.mrf.mxu0
        %v9164 = vadd.f32 %v8491, %v9163
        %v9165 = vpop.f32.mrf.mxu0
        %v9166 = vadd.f32 %v8493, %v9165
        %v9167 = vpop.f32.mrf.mxu0
        %v9168 = vadd.f32 %v8495, %v9167
        %v9169 = vpop.f32.mrf.mxu0
        %v9170 = vadd.f32 %v8497, %v9169
        %9171 = vmatprep.mubr.bf16.mxu0 %v6269
        %9172 = vmatmul.mubr.bf16.gmra.mxu0 %v6268
        %v9173 = vpop.f32.mrf.mxu0
        %v9174 = vadd.f32 %v8501, %v9173
        %v9175 = vpop.f32.mrf.mxu0
        %v9176 = vadd.f32 %v8503, %v9175
        %v9177 = vpop.f32.mrf.mxu0
        %v9178 = vadd.f32 %v8505, %v9177
        %v9179 = vpop.f32.mrf.mxu0
        %v9180 = vadd.f32 %v8507, %v9179
        %9181 = vmatprep.mubr.bf16.mxu0 %v6273
        %9182 = vmatmul.mubr.bf16.gmra.mxu0 %v6272
        %v9183 = vpop.f32.mrf.mxu0
        %v9184 = vadd.f32 %v8511, %v9183
        %v9185 = vpop.f32.mrf.mxu0
        %v9186 = vadd.f32 %v8513, %v9185
        %v9187 = vpop.f32.mrf.mxu0
        %v9188 = vadd.f32 %v8515, %v9187
        %v9189 = vpop.f32.mrf.mxu0
        %v9190 = vadd.f32 %v8517, %v9189
        %9191 = vmatprep.mubr.bf16.mxu0 %v6277
        %9192 = vmatmul.mubr.bf16.gmra.mxu0 %v6276
        %v9193 = vpop.f32.mrf.mxu0
        %v9194 = vadd.f32 %v8521, %v9193
        %v9195 = vpop.f32.mrf.mxu0
        %v9196 = vadd.f32 %v8523, %v9195
        %v9197 = vpop.f32.mrf.mxu0
        %v9198 = vadd.f32 %v8525, %v9197
        %v9199 = vpop.f32.mrf.mxu0
        %v9200 = vadd.f32 %v8527, %v9199
        %9201 = vmatprep.mubr.bf16.mxu0 %v6281
        %9202 = vmatmul.mubr.bf16.gmra.mxu0 %v6280
        %v9203 = vpop.f32.mrf.mxu0
        %v9204 = vadd.f32 %v8531, %v9203
        %v9205 = vpop.f32.mrf.mxu0
        %v9206 = vadd.f32 %v8533, %v9205
        %v9207 = vpop.f32.mrf.mxu0
        %v9208 = vadd.f32 %v8535, %v9207
        %v9209 = vpop.f32.mrf.mxu0
        %v9210 = vadd.f32 %v8537, %v9209
        %9211 = vmatprep.mubr.bf16.mxu0 %v6285
        %9212 = vmatmul.mubr.bf16.gmra.mxu0 %v6284
        %v9213 = vpop.f32.mrf.mxu0
        %v9214 = vadd.f32 %v8541, %v9213
        %v9215 = vpop.f32.mrf.mxu0
        %v9216 = vadd.f32 %v8543, %v9215
        %v9217 = vpop.f32.mrf.mxu0
        %v9218 = vadd.f32 %v8545, %v9217
        %v9219 = vpop.f32.mrf.mxu0
        %v9220 = vadd.f32 %v8547, %v9219
        %9221 = vmatprep.mubr.bf16.mxu0 %v6289
        %9222 = vmatmul.mubr.bf16.gmra.mxu0 %v6288
        %v9223 = vpop.f32.mrf.mxu0
        %v9224 = vadd.f32 %v8551, %v9223
        %v9225 = vpop.f32.mrf.mxu0
        %v9226 = vadd.f32 %v8553, %v9225
        %v9227 = vpop.f32.mrf.mxu0
        %v9228 = vadd.f32 %v8555, %v9227
        %v9229 = vpop.f32.mrf.mxu0
        %v9230 = vadd.f32 %v8557, %v9229
        %9231 = vmatprep.mubr.bf16.mxu0 %v6293
        %9232 = vmatmul.mubr.bf16.gmra.mxu0 %v6292
        %v9233 = vpop.f32.mrf.mxu0
        %v9234 = vadd.f32 %v8561, %v9233
        %v9235 = vpop.f32.mrf.mxu0
        %v9236 = vadd.f32 %v8563, %v9235
        %v9237 = vpop.f32.mrf.mxu0
        %v9238 = vadd.f32 %v8565, %v9237
        %v9239 = vpop.f32.mrf.mxu0
        %v9240 = vadd.f32 %v8567, %v9239
        %9241 = vdwg.mxu0
        %v9242 = vpack.c.bf16 %v7262, %v7258
        %v9243 = vpack.c.bf16 %v7264, %v7260
        %v9244 = vpack.c.bf16 %v8608, %v8604
        %v9245 = vpack.c.bf16 %v8610, %v8606
        %v9246 = vpack.c.bf16 %v7272, %v7268
        %v9247 = vpack.c.bf16 %v7274, %v7270
        %v9248 = vpack.c.bf16 %v8618, %v8614
        %v9249 = vpack.c.bf16 %v8620, %v8616
        %v9250 = vpack.c.bf16 %v7282, %v7278
        %v9251 = vpack.c.bf16 %v7284, %v7280
        %v9252 = vpack.c.bf16 %v8628, %v8624
        %v9253 = vpack.c.bf16 %v8630, %v8626
        %v9254 = vpack.c.bf16 %v7292, %v7288
        %v9255 = vpack.c.bf16 %v7294, %v7290
        %v9256 = vpack.c.bf16 %v8638, %v8634
        %v9257 = vpack.c.bf16 %v8640, %v8636
        %v9258 = vpack.c.bf16 %v7302, %v7298
        %v9259 = vpack.c.bf16 %v7304, %v7300
        %v9260 = vpack.c.bf16 %v8648, %v8644
        %v9261 = vpack.c.bf16 %v8650, %v8646
        %v9262 = vpack.c.bf16 %v7312, %v7308
        %v9263 = vpack.c.bf16 %v7314, %v7310
        %v9264 = vpack.c.bf16 %v8658, %v8654
        %v9265 = vpack.c.bf16 %v8660, %v8656
        %v9266 = vpack.c.bf16 %v7322, %v7318
        %v9267 = vpack.c.bf16 %v7324, %v7320
        %v9268 = vpack.c.bf16 %v8668, %v8664
        %v9269 = vpack.c.bf16 %v8670, %v8666
        %v9270 = vpack.c.bf16 %v7332, %v7328
        %v9271 = vpack.c.bf16 %v7334, %v7330
        %v9272 = vpack.c.bf16 %v8678, %v8674
        %v9273 = vpack.c.bf16 %v8680, %v8676
        %v9274 = vpack.c.bf16 %v7342, %v7338
        %v9275 = vpack.c.bf16 %v7344, %v7340
        %v9276 = vpack.c.bf16 %v8688, %v8684
        %v9277 = vpack.c.bf16 %v8690, %v8686
        %v9278 = vpack.c.bf16 %v7352, %v7348
        %v9279 = vpack.c.bf16 %v7354, %v7350
        %v9280 = vpack.c.bf16 %v8698, %v8694
        %v9281 = vpack.c.bf16 %v8700, %v8696
        %v9282 = vpack.c.bf16 %v7362, %v7358
        %v9283 = vpack.c.bf16 %v7364, %v7360
        %v9284 = vpack.c.bf16 %v8708, %v8704
        %v9285 = vpack.c.bf16 %v8710, %v8706
        %v9286 = vpack.c.bf16 %v7372, %v7368
        %v9287 = vpack.c.bf16 %v7374, %v7370
        %v9288 = vpack.c.bf16 %v8718, %v8714
        %v9289 = vpack.c.bf16 %v8720, %v8716
        %v9290 = vpack.c.bf16 %v7382, %v7378
        %v9291 = vpack.c.bf16 %v7384, %v7380
        %v9292 = vpack.c.bf16 %v8728, %v8724
        %v9293 = vpack.c.bf16 %v8730, %v8726
        %v9294 = vpack.c.bf16 %v7392, %v7388
        %v9295 = vpack.c.bf16 %v7394, %v7390
        %v9296 = vpack.c.bf16 %v8738, %v8734
        %v9297 = vpack.c.bf16 %v8740, %v8736
        %v9298 = vpack.c.bf16 %v7402, %v7398
        %v9299 = vpack.c.bf16 %v7404, %v7400
        %v9300 = vpack.c.bf16 %v8748, %v8744
        %v9301 = vpack.c.bf16 %v8750, %v8746
        %v9302 = vpack.c.bf16 %v7412, %v7408
        %v9303 = vpack.c.bf16 %v7414, %v7410
        %v9304 = vpack.c.bf16 %v8758, %v8754
        %v9305 = vpack.c.bf16 %v8760, %v8756
        %v9306 = vpack.c.bf16 %v7422, %v7418
        %v9307 = vpack.c.bf16 %v7424, %v7420
        %v9308 = vpack.c.bf16 %v8768, %v8764
        %v9309 = vpack.c.bf16 %v8770, %v8766
        %v9310 = vpack.c.bf16 %v7432, %v7428
        %v9311 = vpack.c.bf16 %v7434, %v7430
        %v9312 = vpack.c.bf16 %v8778, %v8774
        %v9313 = vpack.c.bf16 %v8780, %v8776
        %v9314 = vpack.c.bf16 %v7442, %v7438
        %v9315 = vpack.c.bf16 %v7444, %v7440
        %v9316 = vpack.c.bf16 %v8788, %v8784
        %v9317 = vpack.c.bf16 %v8790, %v8786
        %v9318 = vpack.c.bf16 %v7452, %v7448
        %v9319 = vpack.c.bf16 %v7454, %v7450
        %v9320 = vpack.c.bf16 %v8798, %v8794
        %v9321 = vpack.c.bf16 %v8800, %v8796
        %v9322 = vpack.c.bf16 %v7462, %v7458
        %v9323 = vpack.c.bf16 %v7464, %v7460
        %v9324 = vpack.c.bf16 %v8808, %v8804
        %v9325 = vpack.c.bf16 %v8810, %v8806
        %v9326 = vpack.c.bf16 %v7472, %v7468
        %v9327 = vpack.c.bf16 %v7474, %v7470
        %v9328 = vpack.c.bf16 %v8818, %v8814
        %v9329 = vpack.c.bf16 %v8820, %v8816
        %v9330 = vpack.c.bf16 %v7482, %v7478
        %v9331 = vpack.c.bf16 %v7484, %v7480
        %v9332 = vpack.c.bf16 %v8828, %v8824
        %v9333 = vpack.c.bf16 %v8830, %v8826
        %v9334 = vpack.c.bf16 %v7492, %v7488
        %v9335 = vpack.c.bf16 %v7494, %v7490
        %v9336 = vpack.c.bf16 %v8838, %v8834
        %v9337 = vpack.c.bf16 %v8840, %v8836
        %v9338 = vpack.c.bf16 %v7502, %v7498
        %v9339 = vpack.c.bf16 %v7504, %v7500
        %v9340 = vpack.c.bf16 %v8848, %v8844
        %v9341 = vpack.c.bf16 %v8850, %v8846
        %v9342 = vpack.c.bf16 %v7512, %v7508
        %v9343 = vpack.c.bf16 %v7514, %v7510
        %v9344 = vpack.c.bf16 %v8858, %v8854
        %v9345 = vpack.c.bf16 %v8860, %v8856
        %v9346 = vpack.c.bf16 %v7522, %v7518
        %v9347 = vpack.c.bf16 %v7524, %v7520
        %v9348 = vpack.c.bf16 %v8868, %v8864
        %v9349 = vpack.c.bf16 %v8870, %v8866
        %v9350 = vpack.c.bf16 %v7532, %v7528
        %v9351 = vpack.c.bf16 %v7534, %v7530
        %v9352 = vpack.c.bf16 %v8878, %v8874
        %v9353 = vpack.c.bf16 %v8880, %v8876
        %v9354 = vpack.c.bf16 %v7542, %v7538
        %v9355 = vpack.c.bf16 %v7544, %v7540
        %v9356 = vpack.c.bf16 %v8888, %v8884
        %v9357 = vpack.c.bf16 %v8890, %v8886
        %v9358 = vpack.c.bf16 %v7552, %v7548
        %v9359 = vpack.c.bf16 %v7554, %v7550
        %v9360 = vpack.c.bf16 %v8898, %v8894
        %v9361 = vpack.c.bf16 %v8900, %v8896
        %v9362 = vpack.c.bf16 %v7562, %v7558
        %v9363 = vpack.c.bf16 %v7564, %v7560
        %v9364 = vpack.c.bf16 %v8908, %v8904
        %v9365 = vpack.c.bf16 %v8910, %v8906
        %v9366 = vpack.c.bf16 %v7572, %v7568
        %v9367 = vpack.c.bf16 %v7574, %v7570
        %v9368 = vpack.c.bf16 %v8918, %v8914
        %v9369 = vpack.c.bf16 %v8920, %v8916
        %v9370 = vpack.c.bf16 %v7582, %v7578
        %v9371 = vpack.c.bf16 %v7584, %v7580
        %v9372 = vpack.c.bf16 %v8928, %v8924
        %v9373 = vpack.c.bf16 %v8930, %v8926
        %v9374 = vpack.c.bf16 %v7592, %v7588
        %v9375 = vpack.c.bf16 %v7594, %v7590
        %v9376 = vpack.c.bf16 %v8938, %v8934
        %v9377 = vpack.c.bf16 %v8940, %v8936
        %v9378 = vpack.c.bf16 %v7602, %v7598
        %v9379 = vpack.c.bf16 %v7604, %v7600
        %v9380 = vpack.c.bf16 %v8948, %v8944
        %v9381 = vpack.c.bf16 %v8950, %v8946
        %v9382 = vpack.c.bf16 %v7612, %v7608
        %v9383 = vpack.c.bf16 %v7614, %v7610
        %v9384 = vpack.c.bf16 %v8958, %v8954
        %v9385 = vpack.c.bf16 %v8960, %v8956
        %v9386 = vpack.c.bf16 %v7622, %v7618
        %v9387 = vpack.c.bf16 %v7624, %v7620
        %v9388 = vpack.c.bf16 %v8968, %v8964
        %v9389 = vpack.c.bf16 %v8970, %v8966
        %v9390 = vpack.c.bf16 %v7632, %v7628
        %v9391 = vpack.c.bf16 %v7634, %v7630
        %v9392 = vpack.c.bf16 %v8978, %v8974
        %v9393 = vpack.c.bf16 %v8980, %v8976
        %v9394 = vpack.c.bf16 %v7642, %v7638
        %v9395 = vpack.c.bf16 %v7644, %v7640
        %v9396 = vpack.c.bf16 %v8988, %v8984
        %v9397 = vpack.c.bf16 %v8990, %v8986
        %v9398 = vpack.c.bf16 %v7652, %v7648
        %v9399 = vpack.c.bf16 %v7654, %v7650
        %v9400 = vpack.c.bf16 %v8998, %v8994
        %v9401 = vpack.c.bf16 %v9000, %v8996
        %v9402 = vpack.c.bf16 %v7662, %v7658
        %v9403 = vpack.c.bf16 %v7664, %v7660
        %v9404 = vpack.c.bf16 %v9008, %v9004
        %v9405 = vpack.c.bf16 %v9010, %v9006
        %v9406 = vpack.c.bf16 %v7672, %v7668
        %v9407 = vpack.c.bf16 %v7674, %v7670
        %v9408 = vpack.c.bf16 %v9018, %v9014
        %v9409 = vpack.c.bf16 %v9020, %v9016
        %v9410 = vpack.c.bf16 %v7682, %v7678
        %v9411 = vpack.c.bf16 %v7684, %v7680
        %v9412 = vpack.c.bf16 %v9028, %v9024
        %v9413 = vpack.c.bf16 %v9030, %v9026
        %v9414 = vpack.c.bf16 %v7692, %v7688
        %v9415 = vpack.c.bf16 %v7694, %v7690
        %v9416 = vpack.c.bf16 %v9038, %v9034
        %v9417 = vpack.c.bf16 %v9040, %v9036
        %v9418 = vpack.c.bf16 %v7702, %v7698
        %v9419 = vpack.c.bf16 %v7704, %v7700
        %v9420 = vpack.c.bf16 %v9048, %v9044
        %v9421 = vpack.c.bf16 %v9050, %v9046
        %v9422 = vpack.c.bf16 %v7712, %v7708
        %v9423 = vpack.c.bf16 %v7714, %v7710
        %v9424 = vpack.c.bf16 %v9058, %v9054
        %v9425 = vpack.c.bf16 %v9060, %v9056
        %v9426 = vpack.c.bf16 %v7722, %v7718
        %v9427 = vpack.c.bf16 %v7724, %v7720
        %v9428 = vpack.c.bf16 %v9068, %v9064
        %v9429 = vpack.c.bf16 %v9070, %v9066
        %v9430 = vpack.c.bf16 %v7732, %v7728
        %v9431 = vpack.c.bf16 %v7734, %v7730
        %v9432 = vpack.c.bf16 %v9078, %v9074
        %v9433 = vpack.c.bf16 %v9080, %v9076
        %v9434 = vpack.c.bf16 %v7742, %v7738
        %v9435 = vpack.c.bf16 %v7744, %v7740
        %v9436 = vpack.c.bf16 %v9088, %v9084
        %v9437 = vpack.c.bf16 %v9090, %v9086
        %v9438 = vpack.c.bf16 %v7752, %v7748
        %v9439 = vpack.c.bf16 %v7754, %v7750
        %v9440 = vpack.c.bf16 %v9098, %v9094
        %v9441 = vpack.c.bf16 %v9100, %v9096
        %v9442 = vpack.c.bf16 %v7762, %v7758
        %v9443 = vpack.c.bf16 %v7764, %v7760
        %v9444 = vpack.c.bf16 %v9108, %v9104
        %v9445 = vpack.c.bf16 %v9110, %v9106
        %v9446 = vpack.c.bf16 %v7772, %v7768
        %v9447 = vpack.c.bf16 %v7774, %v7770
        %v9448 = vpack.c.bf16 %v9118, %v9114
        %v9449 = vpack.c.bf16 %v9120, %v9116
        %v9450 = vpack.c.bf16 %v7782, %v7778
        %v9451 = vpack.c.bf16 %v7784, %v7780
        %v9452 = vpack.c.bf16 %v9128, %v9124
        %v9453 = vpack.c.bf16 %v9130, %v9126
        %v9454 = vpack.c.bf16 %v7792, %v7788
        %v9455 = vpack.c.bf16 %v7794, %v7790
        %v9456 = vpack.c.bf16 %v9138, %v9134
        %v9457 = vpack.c.bf16 %v9140, %v9136
        %v9458 = vpack.c.bf16 %v7802, %v7798
        %v9459 = vpack.c.bf16 %v7804, %v7800
        %v9460 = vpack.c.bf16 %v9148, %v9144
        %v9461 = vpack.c.bf16 %v9150, %v9146
        %v9462 = vpack.c.bf16 %v7812, %v7808
        %v9463 = vpack.c.bf16 %v7814, %v7810
        %v9464 = vpack.c.bf16 %v9158, %v9154
        %v9465 = vpack.c.bf16 %v9160, %v9156
        %v9466 = vpack.c.bf16 %v7822, %v7818
        %v9467 = vpack.c.bf16 %v7824, %v7820
        %v9468 = vpack.c.bf16 %v9168, %v9164
        %v9469 = vpack.c.bf16 %v9170, %v9166
        %v9470 = vpack.c.bf16 %v7832, %v7828
        %v9471 = vpack.c.bf16 %v7834, %v7830
        %v9472 = vpack.c.bf16 %v9178, %v9174
        %v9473 = vpack.c.bf16 %v9180, %v9176
        %v9474 = vpack.c.bf16 %v7842, %v7838
        %v9475 = vpack.c.bf16 %v7844, %v7840
        %v9476 = vpack.c.bf16 %v9188, %v9184
        %v9477 = vpack.c.bf16 %v9190, %v9186
        %v9478 = vpack.c.bf16 %v7852, %v7848
        %v9479 = vpack.c.bf16 %v7854, %v7850
        %v9480 = vpack.c.bf16 %v9198, %v9194
        %v9481 = vpack.c.bf16 %v9200, %v9196
        %v9482 = vpack.c.bf16 %v7862, %v7858
        %v9483 = vpack.c.bf16 %v7864, %v7860
        %v9484 = vpack.c.bf16 %v9208, %v9204
        %v9485 = vpack.c.bf16 %v9210, %v9206
        %v9486 = vpack.c.bf16 %v7872, %v7868
        %v9487 = vpack.c.bf16 %v7874, %v7870
        %v9488 = vpack.c.bf16 %v9218, %v9214
        %v9489 = vpack.c.bf16 %v9220, %v9216
        %v9490 = vpack.c.bf16 %v7882, %v7878
        %v9491 = vpack.c.bf16 %v7884, %v7880
        %v9492 = vpack.c.bf16 %v9228, %v9224
        %v9493 = vpack.c.bf16 %v9230, %v9226
        %v9494 = vpack.c.bf16 %v7892, %v7888
        %v9495 = vpack.c.bf16 %v7894, %v7890
        %v9496 = vpack.c.bf16 %v9238, %v9234
        %v9497 = vpack.c.bf16 %v9240, %v9236
        %v9754 = vunpack.c.l.b16 %v9242
        %v9755 = vunpack.c.l.b16 %v9243
        %v9756 = vunpack.c.l.b16 %v9244
        %v9757 = vunpack.c.l.b16 %v9245
        %v9758 = vunpack.c.h.b16 %v9242
        %v9759 = vunpack.c.h.b16 %v9243
        %v9760 = vunpack.c.h.b16 %v9244
        %v9761 = vunpack.c.h.b16 %v9245
        %v9762 = vunpack.c.l.b16 %v9246
        %v9763 = vunpack.c.l.b16 %v9247
        %v9764 = vunpack.c.l.b16 %v9248
        %v9765 = vunpack.c.l.b16 %v9249
        %v9766 = vunpack.c.h.b16 %v9246
        %v9767 = vunpack.c.h.b16 %v9247
        %v9768 = vunpack.c.h.b16 %v9248
        %v9769 = vunpack.c.h.b16 %v9249
        %v9770 = vunpack.c.l.b16 %v9250
        %v9771 = vunpack.c.l.b16 %v9251
        %v9772 = vunpack.c.l.b16 %v9252
        %v9773 = vunpack.c.l.b16 %v9253
        %v9774 = vunpack.c.h.b16 %v9250
        %v9775 = vunpack.c.h.b16 %v9251
        %v9776 = vunpack.c.h.b16 %v9252
        %v9777 = vunpack.c.h.b16 %v9253
        %v9778 = vunpack.c.l.b16 %v9254
        %v9779 = vunpack.c.l.b16 %v9255
        %v9780 = vunpack.c.l.b16 %v9256
        %v9781 = vunpack.c.l.b16 %v9257
        %v9782 = vunpack.c.h.b16 %v9254
        %v9783 = vunpack.c.h.b16 %v9255
        %v9784 = vunpack.c.h.b16 %v9256
        %v9785 = vunpack.c.h.b16 %v9257
        %v9786 = vunpack.c.l.b16 %v9258
        %v9787 = vunpack.c.l.b16 %v9259
        %v9788 = vunpack.c.l.b16 %v9260
        %v9789 = vunpack.c.l.b16 %v9261
        %v9790 = vunpack.c.h.b16 %v9258
        %v9791 = vunpack.c.h.b16 %v9259
        %v9792 = vunpack.c.h.b16 %v9260
        %v9793 = vunpack.c.h.b16 %v9261
        %v9794 = vunpack.c.l.b16 %v9262
        %v9795 = vunpack.c.l.b16 %v9263
        %v9796 = vunpack.c.l.b16 %v9264
        %v9797 = vunpack.c.l.b16 %v9265
        %v9798 = vunpack.c.h.b16 %v9262
        %v9799 = vunpack.c.h.b16 %v9263
        %v9800 = vunpack.c.h.b16 %v9264
        %v9801 = vunpack.c.h.b16 %v9265
        %v9802 = vunpack.c.l.b16 %v9266
        %v9803 = vunpack.c.l.b16 %v9267
        %v9804 = vunpack.c.l.b16 %v9268
        %v9805 = vunpack.c.l.b16 %v9269
        %v9806 = vunpack.c.h.b16 %v9266
        %v9807 = vunpack.c.h.b16 %v9267
        %v9808 = vunpack.c.h.b16 %v9268
        %v9809 = vunpack.c.h.b16 %v9269
        %v9810 = vunpack.c.l.b16 %v9270
        %v9811 = vunpack.c.l.b16 %v9271
        %v9812 = vunpack.c.l.b16 %v9272
        %v9813 = vunpack.c.l.b16 %v9273
        %v9814 = vunpack.c.h.b16 %v9270
        %v9815 = vunpack.c.h.b16 %v9271
        %v9816 = vunpack.c.h.b16 %v9272
        %v9817 = vunpack.c.h.b16 %v9273
        %v9818 = vunpack.c.l.b16 %v9274
        %v9819 = vunpack.c.l.b16 %v9275
        %v9820 = vunpack.c.l.b16 %v9276
        %v9821 = vunpack.c.l.b16 %v9277
        %v9822 = vunpack.c.h.b16 %v9274
        %v9823 = vunpack.c.h.b16 %v9275
        %v9824 = vunpack.c.h.b16 %v9276
        %v9825 = vunpack.c.h.b16 %v9277
        %v9826 = vunpack.c.l.b16 %v9278
        %v9827 = vunpack.c.l.b16 %v9279
        %v9828 = vunpack.c.l.b16 %v9280
        %v9829 = vunpack.c.l.b16 %v9281
        %v9830 = vunpack.c.h.b16 %v9278
        %v9831 = vunpack.c.h.b16 %v9279
        %v9832 = vunpack.c.h.b16 %v9280
        %v9833 = vunpack.c.h.b16 %v9281
        %v9834 = vunpack.c.l.b16 %v9282
        %v9835 = vunpack.c.l.b16 %v9283
        %v9836 = vunpack.c.l.b16 %v9284
        %v9837 = vunpack.c.l.b16 %v9285
        %v9838 = vunpack.c.h.b16 %v9282
        %v9839 = vunpack.c.h.b16 %v9283
        %v9840 = vunpack.c.h.b16 %v9284
        %v9841 = vunpack.c.h.b16 %v9285
        %v9842 = vunpack.c.l.b16 %v9286
        %v9843 = vunpack.c.l.b16 %v9287
        %v9844 = vunpack.c.l.b16 %v9288
        %v9845 = vunpack.c.l.b16 %v9289
        %v9846 = vunpack.c.h.b16 %v9286
        %v9847 = vunpack.c.h.b16 %v9287
        %v9848 = vunpack.c.h.b16 %v9288
        %v9849 = vunpack.c.h.b16 %v9289
        %v9850 = vunpack.c.l.b16 %v9290
        %v9851 = vunpack.c.l.b16 %v9291
        %v9852 = vunpack.c.l.b16 %v9292
        %v9853 = vunpack.c.l.b16 %v9293
        %v9854 = vunpack.c.h.b16 %v9290
        %v9855 = vunpack.c.h.b16 %v9291
        %v9856 = vunpack.c.h.b16 %v9292
        %v9857 = vunpack.c.h.b16 %v9293
        %v9858 = vunpack.c.l.b16 %v9294
        %v9859 = vunpack.c.l.b16 %v9295
        %v9860 = vunpack.c.l.b16 %v9296
        %v9861 = vunpack.c.l.b16 %v9297
        %v9862 = vunpack.c.h.b16 %v9294
        %v9863 = vunpack.c.h.b16 %v9295
        %v9864 = vunpack.c.h.b16 %v9296
        %v9865 = vunpack.c.h.b16 %v9297
        %v9866 = vunpack.c.l.b16 %v9298
        %v9867 = vunpack.c.l.b16 %v9299
        %v9868 = vunpack.c.l.b16 %v9300
        %v9869 = vunpack.c.l.b16 %v9301
        %v9870 = vunpack.c.h.b16 %v9298
        %v9871 = vunpack.c.h.b16 %v9299
        %v9872 = vunpack.c.h.b16 %v9300
        %v9873 = vunpack.c.h.b16 %v9301
        %v9874 = vunpack.c.l.b16 %v9302
        %v9875 = vunpack.c.l.b16 %v9303
        %v9876 = vunpack.c.l.b16 %v9304
        %v9877 = vunpack.c.l.b16 %v9305
        %v9878 = vunpack.c.h.b16 %v9302
        %v9879 = vunpack.c.h.b16 %v9303
        %v9880 = vunpack.c.h.b16 %v9304
        %v9881 = vunpack.c.h.b16 %v9305
        %v9882 = vunpack.c.l.b16 %v9306
        %v9883 = vunpack.c.l.b16 %v9307
        %v9884 = vunpack.c.l.b16 %v9308
        %v9885 = vunpack.c.l.b16 %v9309
        %v9886 = vunpack.c.h.b16 %v9306
        %v9887 = vunpack.c.h.b16 %v9307
        %v9888 = vunpack.c.h.b16 %v9308
        %v9889 = vunpack.c.h.b16 %v9309
        %v9890 = vunpack.c.l.b16 %v9310
        %v9891 = vunpack.c.l.b16 %v9311
        %v9892 = vunpack.c.l.b16 %v9312
        %v9893 = vunpack.c.l.b16 %v9313
        %v9894 = vunpack.c.h.b16 %v9310
        %v9895 = vunpack.c.h.b16 %v9311
        %v9896 = vunpack.c.h.b16 %v9312
        %v9897 = vunpack.c.h.b16 %v9313
        %v9898 = vunpack.c.l.b16 %v9314
        %v9899 = vunpack.c.l.b16 %v9315
        %v9900 = vunpack.c.l.b16 %v9316
        %v9901 = vunpack.c.l.b16 %v9317
        %v9902 = vunpack.c.h.b16 %v9314
        %v9903 = vunpack.c.h.b16 %v9315
        %v9904 = vunpack.c.h.b16 %v9316
        %v9905 = vunpack.c.h.b16 %v9317
        %v9906 = vunpack.c.l.b16 %v9318
        %v9907 = vunpack.c.l.b16 %v9319
        %v9908 = vunpack.c.l.b16 %v9320
        %v9909 = vunpack.c.l.b16 %v9321
        %v9910 = vunpack.c.h.b16 %v9318
        %v9911 = vunpack.c.h.b16 %v9319
        %v9912 = vunpack.c.h.b16 %v9320
        %v9913 = vunpack.c.h.b16 %v9321
        %v9914 = vunpack.c.l.b16 %v9322
        %v9915 = vunpack.c.l.b16 %v9323
        %v9916 = vunpack.c.l.b16 %v9324
        %v9917 = vunpack.c.l.b16 %v9325
        %v9918 = vunpack.c.h.b16 %v9322
        %v9919 = vunpack.c.h.b16 %v9323
        %v9920 = vunpack.c.h.b16 %v9324
        %v9921 = vunpack.c.h.b16 %v9325
        %v9922 = vunpack.c.l.b16 %v9326
        %v9923 = vunpack.c.l.b16 %v9327
        %v9924 = vunpack.c.l.b16 %v9328
        %v9925 = vunpack.c.l.b16 %v9329
        %v9926 = vunpack.c.h.b16 %v9326
        %v9927 = vunpack.c.h.b16 %v9327
        %v9928 = vunpack.c.h.b16 %v9328
        %v9929 = vunpack.c.h.b16 %v9329
        %v9930 = vunpack.c.l.b16 %v9330
        %v9931 = vunpack.c.l.b16 %v9331
        %v9932 = vunpack.c.l.b16 %v9332
        %v9933 = vunpack.c.l.b16 %v9333
        %v9934 = vunpack.c.h.b16 %v9330
        %v9935 = vunpack.c.h.b16 %v9331
        %v9936 = vunpack.c.h.b16 %v9332
        %v9937 = vunpack.c.h.b16 %v9333
        %v9938 = vunpack.c.l.b16 %v9334
        %v9939 = vunpack.c.l.b16 %v9335
        %v9940 = vunpack.c.l.b16 %v9336
        %v9941 = vunpack.c.l.b16 %v9337
        %v9942 = vunpack.c.h.b16 %v9334
        %v9943 = vunpack.c.h.b16 %v9335
        %v9944 = vunpack.c.h.b16 %v9336
        %v9945 = vunpack.c.h.b16 %v9337
        %v9946 = vunpack.c.l.b16 %v9338
        %v9947 = vunpack.c.l.b16 %v9339
        %v9948 = vunpack.c.l.b16 %v9340
        %v9949 = vunpack.c.l.b16 %v9341
        %v9950 = vunpack.c.h.b16 %v9338
        %v9951 = vunpack.c.h.b16 %v9339
        %v9952 = vunpack.c.h.b16 %v9340
        %v9953 = vunpack.c.h.b16 %v9341
        %v9954 = vunpack.c.l.b16 %v9342
        %v9955 = vunpack.c.l.b16 %v9343
        %v9956 = vunpack.c.l.b16 %v9344
        %v9957 = vunpack.c.l.b16 %v9345
        %v9958 = vunpack.c.h.b16 %v9342
        %v9959 = vunpack.c.h.b16 %v9343
        %v9960 = vunpack.c.h.b16 %v9344
        %v9961 = vunpack.c.h.b16 %v9345
        %v9962 = vunpack.c.l.b16 %v9346
        %v9963 = vunpack.c.l.b16 %v9347
        %v9964 = vunpack.c.l.b16 %v9348
        %v9965 = vunpack.c.l.b16 %v9349
        %v9966 = vunpack.c.h.b16 %v9346
        %v9967 = vunpack.c.h.b16 %v9347
        %v9968 = vunpack.c.h.b16 %v9348
        %v9969 = vunpack.c.h.b16 %v9349
        %v9970 = vunpack.c.l.b16 %v9350
        %v9971 = vunpack.c.l.b16 %v9351
        %v9972 = vunpack.c.l.b16 %v9352
        %v9973 = vunpack.c.l.b16 %v9353
        %v9974 = vunpack.c.h.b16 %v9350
        %v9975 = vunpack.c.h.b16 %v9351
        %v9976 = vunpack.c.h.b16 %v9352
        %v9977 = vunpack.c.h.b16 %v9353
        %v9978 = vunpack.c.l.b16 %v9354
        %v9979 = vunpack.c.l.b16 %v9355
        %v9980 = vunpack.c.l.b16 %v9356
        %v9981 = vunpack.c.l.b16 %v9357
        %v9982 = vunpack.c.h.b16 %v9354
        %v9983 = vunpack.c.h.b16 %v9355
        %v9984 = vunpack.c.h.b16 %v9356
        %v9985 = vunpack.c.h.b16 %v9357
        %v9986 = vunpack.c.l.b16 %v9358
        %v9987 = vunpack.c.l.b16 %v9359
        %v9988 = vunpack.c.l.b16 %v9360
        %v9989 = vunpack.c.l.b16 %v9361
        %v9990 = vunpack.c.h.b16 %v9358
        %v9991 = vunpack.c.h.b16 %v9359
        %v9992 = vunpack.c.h.b16 %v9360
        %v9993 = vunpack.c.h.b16 %v9361
        %v9994 = vunpack.c.l.b16 %v9362
        %v9995 = vunpack.c.l.b16 %v9363
        %v9996 = vunpack.c.l.b16 %v9364
        %v9997 = vunpack.c.l.b16 %v9365
        %v9998 = vunpack.c.h.b16 %v9362
        %v9999 = vunpack.c.h.b16 %v9363
        %v10000 = vunpack.c.h.b16 %v9364
        %v10001 = vunpack.c.h.b16 %v9365
        %v10002 = vunpack.c.l.b16 %v9366
        %v10003 = vunpack.c.l.b16 %v9367
        %v10004 = vunpack.c.l.b16 %v9368
        %v10005 = vunpack.c.l.b16 %v9369
        %v10006 = vunpack.c.h.b16 %v9366
        %v10007 = vunpack.c.h.b16 %v9367
        %v10008 = vunpack.c.h.b16 %v9368
        %v10009 = vunpack.c.h.b16 %v9369
        %v10010 = vunpack.c.l.b16 %v9370
        %v10011 = vunpack.c.l.b16 %v9371
        %v10012 = vunpack.c.l.b16 %v9372
        %v10013 = vunpack.c.l.b16 %v9373
        %v10014 = vunpack.c.h.b16 %v9370
        %v10015 = vunpack.c.h.b16 %v9371
        %v10016 = vunpack.c.h.b16 %v9372
        %v10017 = vunpack.c.h.b16 %v9373
        %v10018 = vunpack.c.l.b16 %v9374
        %v10019 = vunpack.c.l.b16 %v9375
        %v10020 = vunpack.c.l.b16 %v9376
        %v10021 = vunpack.c.l.b16 %v9377
        %v10022 = vunpack.c.h.b16 %v9374
        %v10023 = vunpack.c.h.b16 %v9375
        %v10024 = vunpack.c.h.b16 %v9376
        %v10025 = vunpack.c.h.b16 %v9377
        %v10026 = vunpack.c.l.b16 %v9378
        %v10027 = vunpack.c.l.b16 %v9379
        %v10028 = vunpack.c.l.b16 %v9380
        %v10029 = vunpack.c.l.b16 %v9381
        %v10030 = vunpack.c.h.b16 %v9378
        %v10031 = vunpack.c.h.b16 %v9379
        %v10032 = vunpack.c.h.b16 %v9380
        %v10033 = vunpack.c.h.b16 %v9381
        %v10034 = vunpack.c.l.b16 %v9382
        %v10035 = vunpack.c.l.b16 %v9383
        %v10036 = vunpack.c.l.b16 %v9384
        %v10037 = vunpack.c.l.b16 %v9385
        %v10038 = vunpack.c.h.b16 %v9382
        %v10039 = vunpack.c.h.b16 %v9383
        %v10040 = vunpack.c.h.b16 %v9384
        %v10041 = vunpack.c.h.b16 %v9385
        %v10042 = vunpack.c.l.b16 %v9386
        %v10043 = vunpack.c.l.b16 %v9387
        %v10044 = vunpack.c.l.b16 %v9388
        %v10045 = vunpack.c.l.b16 %v9389
        %v10046 = vunpack.c.h.b16 %v9386
        %v10047 = vunpack.c.h.b16 %v9387
        %v10048 = vunpack.c.h.b16 %v9388
        %v10049 = vunpack.c.h.b16 %v9389
        %v10050 = vunpack.c.l.b16 %v9390
        %v10051 = vunpack.c.l.b16 %v9391
        %v10052 = vunpack.c.l.b16 %v9392
        %v10053 = vunpack.c.l.b16 %v9393
        %v10054 = vunpack.c.h.b16 %v9390
        %v10055 = vunpack.c.h.b16 %v9391
        %v10056 = vunpack.c.h.b16 %v9392
        %v10057 = vunpack.c.h.b16 %v9393
        %v10058 = vunpack.c.l.b16 %v9394
        %v10059 = vunpack.c.l.b16 %v9395
        %v10060 = vunpack.c.l.b16 %v9396
        %v10061 = vunpack.c.l.b16 %v9397
        %v10062 = vunpack.c.h.b16 %v9394
        %v10063 = vunpack.c.h.b16 %v9395
        %v10064 = vunpack.c.h.b16 %v9396
        %v10065 = vunpack.c.h.b16 %v9397
        %v10066 = vunpack.c.l.b16 %v9398
        %v10067 = vunpack.c.l.b16 %v9399
        %v10068 = vunpack.c.l.b16 %v9400
        %v10069 = vunpack.c.l.b16 %v9401
        %v10070 = vunpack.c.h.b16 %v9398
        %v10071 = vunpack.c.h.b16 %v9399
        %v10072 = vunpack.c.h.b16 %v9400
        %v10073 = vunpack.c.h.b16 %v9401
        %v10074 = vunpack.c.l.b16 %v9402
        %v10075 = vunpack.c.l.b16 %v9403
        %v10076 = vunpack.c.l.b16 %v9404
        %v10077 = vunpack.c.l.b16 %v9405
        %v10078 = vunpack.c.h.b16 %v9402
        %v10079 = vunpack.c.h.b16 %v9403
        %v10080 = vunpack.c.h.b16 %v9404
        %v10081 = vunpack.c.h.b16 %v9405
        %v10082 = vunpack.c.l.b16 %v9406
        %v10083 = vunpack.c.l.b16 %v9407
        %v10084 = vunpack.c.l.b16 %v9408
        %v10085 = vunpack.c.l.b16 %v9409
        %v10086 = vunpack.c.h.b16 %v9406
        %v10087 = vunpack.c.h.b16 %v9407
        %v10088 = vunpack.c.h.b16 %v9408
        %v10089 = vunpack.c.h.b16 %v9409
        %v10090 = vunpack.c.l.b16 %v9410
        %v10091 = vunpack.c.l.b16 %v9411
        %v10092 = vunpack.c.l.b16 %v9412
        %v10093 = vunpack.c.l.b16 %v9413
        %v10094 = vunpack.c.h.b16 %v9410
        %v10095 = vunpack.c.h.b16 %v9411
        %v10096 = vunpack.c.h.b16 %v9412
        %v10097 = vunpack.c.h.b16 %v9413
        %v10098 = vunpack.c.l.b16 %v9414
        %v10099 = vunpack.c.l.b16 %v9415
        %v10100 = vunpack.c.l.b16 %v9416
        %v10101 = vunpack.c.l.b16 %v9417
        %v10102 = vunpack.c.h.b16 %v9414
        %v10103 = vunpack.c.h.b16 %v9415
        %v10104 = vunpack.c.h.b16 %v9416
        %v10105 = vunpack.c.h.b16 %v9417
        %v10106 = vunpack.c.l.b16 %v9418
        %v10107 = vunpack.c.l.b16 %v9419
        %v10108 = vunpack.c.l.b16 %v9420
        %v10109 = vunpack.c.l.b16 %v9421
        %v10110 = vunpack.c.h.b16 %v9418
        %v10111 = vunpack.c.h.b16 %v9419
        %v10112 = vunpack.c.h.b16 %v9420
        %v10113 = vunpack.c.h.b16 %v9421
        %v10114 = vunpack.c.l.b16 %v9422
        %v10115 = vunpack.c.l.b16 %v9423
        %v10116 = vunpack.c.l.b16 %v9424
        %v10117 = vunpack.c.l.b16 %v9425
        %v10118 = vunpack.c.h.b16 %v9422
        %v10119 = vunpack.c.h.b16 %v9423
        %v10120 = vunpack.c.h.b16 %v9424
        %v10121 = vunpack.c.h.b16 %v9425
        %v10122 = vunpack.c.l.b16 %v9426
        %v10123 = vunpack.c.l.b16 %v9427
        %v10124 = vunpack.c.l.b16 %v9428
        %v10125 = vunpack.c.l.b16 %v9429
        %v10126 = vunpack.c.h.b16 %v9426
        %v10127 = vunpack.c.h.b16 %v9427
        %v10128 = vunpack.c.h.b16 %v9428
        %v10129 = vunpack.c.h.b16 %v9429
        %v10130 = vunpack.c.l.b16 %v9430
        %v10131 = vunpack.c.l.b16 %v9431
        %v10132 = vunpack.c.l.b16 %v9432
        %v10133 = vunpack.c.l.b16 %v9433
        %v10134 = vunpack.c.h.b16 %v9430
        %v10135 = vunpack.c.h.b16 %v9431
        %v10136 = vunpack.c.h.b16 %v9432
        %v10137 = vunpack.c.h.b16 %v9433
        %v10138 = vunpack.c.l.b16 %v9434
        %v10139 = vunpack.c.l.b16 %v9435
        %v10140 = vunpack.c.l.b16 %v9436
        %v10141 = vunpack.c.l.b16 %v9437
        %v10142 = vunpack.c.h.b16 %v9434
        %v10143 = vunpack.c.h.b16 %v9435
        %v10144 = vunpack.c.h.b16 %v9436
        %v10145 = vunpack.c.h.b16 %v9437
        %v10146 = vunpack.c.l.b16 %v9438
        %v10147 = vunpack.c.l.b16 %v9439
        %v10148 = vunpack.c.l.b16 %v9440
        %v10149 = vunpack.c.l.b16 %v9441
        %v10150 = vunpack.c.h.b16 %v9438
        %v10151 = vunpack.c.h.b16 %v9439
        %v10152 = vunpack.c.h.b16 %v9440
        %v10153 = vunpack.c.h.b16 %v9441
        %v10154 = vunpack.c.l.b16 %v9442
        %v10155 = vunpack.c.l.b16 %v9443
        %v10156 = vunpack.c.l.b16 %v9444
        %v10157 = vunpack.c.l.b16 %v9445
        %v10158 = vunpack.c.h.b16 %v9442
        %v10159 = vunpack.c.h.b16 %v9443
        %v10160 = vunpack.c.h.b16 %v9444
        %v10161 = vunpack.c.h.b16 %v9445
        %v10162 = vunpack.c.l.b16 %v9446
        %v10163 = vunpack.c.l.b16 %v9447
        %v10164 = vunpack.c.l.b16 %v9448
        %v10165 = vunpack.c.l.b16 %v9449
        %v10166 = vunpack.c.h.b16 %v9446
        %v10167 = vunpack.c.h.b16 %v9447
        %v10168 = vunpack.c.h.b16 %v9448
        %v10169 = vunpack.c.h.b16 %v9449
        %v10170 = vunpack.c.l.b16 %v9450
        %v10171 = vunpack.c.l.b16 %v9451
        %v10172 = vunpack.c.l.b16 %v9452
        %v10173 = vunpack.c.l.b16 %v9453
        %v10174 = vunpack.c.h.b16 %v9450
        %v10175 = vunpack.c.h.b16 %v9451
        %v10176 = vunpack.c.h.b16 %v9452
        %v10177 = vunpack.c.h.b16 %v9453
        %v10178 = vunpack.c.l.b16 %v9454
        %v10179 = vunpack.c.l.b16 %v9455
        %v10180 = vunpack.c.l.b16 %v9456
        %v10181 = vunpack.c.l.b16 %v9457
        %v10182 = vunpack.c.h.b16 %v9454
        %v10183 = vunpack.c.h.b16 %v9455
        %v10184 = vunpack.c.h.b16 %v9456
        %v10185 = vunpack.c.h.b16 %v9457
        %v10186 = vunpack.c.l.b16 %v9458
        %v10187 = vunpack.c.l.b16 %v9459
        %v10188 = vunpack.c.l.b16 %v9460
        %v10189 = vunpack.c.l.b16 %v9461
        %v10190 = vunpack.c.h.b16 %v9458
        %v10191 = vunpack.c.h.b16 %v9459
        %v10192 = vunpack.c.h.b16 %v9460
        %v10193 = vunpack.c.h.b16 %v9461
        %v10194 = vunpack.c.l.b16 %v9462
        %v10195 = vunpack.c.l.b16 %v9463
        %v10196 = vunpack.c.l.b16 %v9464
        %v10197 = vunpack.c.l.b16 %v9465
        %v10198 = vunpack.c.h.b16 %v9462
        %v10199 = vunpack.c.h.b16 %v9463
        %v10200 = vunpack.c.h.b16 %v9464
        %v10201 = vunpack.c.h.b16 %v9465
        %v10202 = vunpack.c.l.b16 %v9466
        %v10203 = vunpack.c.l.b16 %v9467
        %v10204 = vunpack.c.l.b16 %v9468
        %v10205 = vunpack.c.l.b16 %v9469
        %v10206 = vunpack.c.h.b16 %v9466
        %v10207 = vunpack.c.h.b16 %v9467
        %v10208 = vunpack.c.h.b16 %v9468
        %v10209 = vunpack.c.h.b16 %v9469
        %v10210 = vunpack.c.l.b16 %v9470
        %v10211 = vunpack.c.l.b16 %v9471
        %v10212 = vunpack.c.l.b16 %v9472
        %v10213 = vunpack.c.l.b16 %v9473
        %v10214 = vunpack.c.h.b16 %v9470
        %v10215 = vunpack.c.h.b16 %v9471
        %v10216 = vunpack.c.h.b16 %v9472
        %v10217 = vunpack.c.h.b16 %v9473
        %v10218 = vunpack.c.l.b16 %v9474
        %v10219 = vunpack.c.l.b16 %v9475
        %v10220 = vunpack.c.l.b16 %v9476
        %v10221 = vunpack.c.l.b16 %v9477
        %v10222 = vunpack.c.h.b16 %v9474
        %v10223 = vunpack.c.h.b16 %v9475
        %v10224 = vunpack.c.h.b16 %v9476
        %v10225 = vunpack.c.h.b16 %v9477
        %v10226 = vunpack.c.l.b16 %v9478
        %v10227 = vunpack.c.l.b16 %v9479
        %v10228 = vunpack.c.l.b16 %v9480
        %v10229 = vunpack.c.l.b16 %v9481
        %v10230 = vunpack.c.h.b16 %v9478
        %v10231 = vunpack.c.h.b16 %v9479
        %v10232 = vunpack.c.h.b16 %v9480
        %v10233 = vunpack.c.h.b16 %v9481
        %v10234 = vunpack.c.l.b16 %v9482
        %v10235 = vunpack.c.l.b16 %v9483
        %v10236 = vunpack.c.l.b16 %v9484
        %v10237 = vunpack.c.l.b16 %v9485
        %v10238 = vunpack.c.h.b16 %v9482
        %v10239 = vunpack.c.h.b16 %v9483
        %v10240 = vunpack.c.h.b16 %v9484
        %v10241 = vunpack.c.h.b16 %v9485
        %v10242 = vunpack.c.l.b16 %v9486
        %v10243 = vunpack.c.l.b16 %v9487
        %v10244 = vunpack.c.l.b16 %v9488
        %v10245 = vunpack.c.l.b16 %v9489
        %v10246 = vunpack.c.h.b16 %v9486
        %v10247 = vunpack.c.h.b16 %v9487
        %v10248 = vunpack.c.h.b16 %v9488
        %v10249 = vunpack.c.h.b16 %v9489
        %v10250 = vunpack.c.l.b16 %v9490
        %v10251 = vunpack.c.l.b16 %v9491
        %v10252 = vunpack.c.l.b16 %v9492
        %v10253 = vunpack.c.l.b16 %v9493
        %v10254 = vunpack.c.h.b16 %v9490
        %v10255 = vunpack.c.h.b16 %v9491
        %v10256 = vunpack.c.h.b16 %v9492
        %v10257 = vunpack.c.h.b16 %v9493
        %v10258 = vunpack.c.l.b16 %v9494
        %v10259 = vunpack.c.l.b16 %v9495
        %v10260 = vunpack.c.l.b16 %v9496
        %v10261 = vunpack.c.l.b16 %v9497
        %v10262 = vunpack.c.h.b16 %v9494
        %v10263 = vunpack.c.h.b16 %v9495
        %v10264 = vunpack.c.h.b16 %v9496
        %v10265 = vunpack.c.h.b16 %v9497
        %v10266 = vpack.c.b16 %v9755, %v9754
        %v10267 = vpack.c.b16 %v9757, %v9756
        %v10268 = vpack.c.b16 %v9759, %v9758
        %v10269 = vpack.c.b16 %v9761, %v9760
        %v10270 = vpack.c.b16 %v9763, %v9762
        %v10271 = vpack.c.b16 %v9765, %v9764
        %v10272 = vpack.c.b16 %v9767, %v9766
        %v10273 = vpack.c.b16 %v9769, %v9768
        %v10274 = vpack.c.b16 %v9771, %v9770
        %v10275 = vpack.c.b16 %v9773, %v9772
        %v10276 = vpack.c.b16 %v9775, %v9774
        %v10277 = vpack.c.b16 %v9777, %v9776
        %v10278 = vpack.c.b16 %v9779, %v9778
        %v10279 = vpack.c.b16 %v9781, %v9780
        %v10280 = vpack.c.b16 %v9783, %v9782
        %v10281 = vpack.c.b16 %v9785, %v9784
        %v10282 = vpack.c.b16 %v9787, %v9786
        %v10283 = vpack.c.b16 %v9789, %v9788
        %v10284 = vpack.c.b16 %v9791, %v9790
        %v10285 = vpack.c.b16 %v9793, %v9792
        %v10286 = vpack.c.b16 %v9795, %v9794
        %v10287 = vpack.c.b16 %v9797, %v9796
        %v10288 = vpack.c.b16 %v9799, %v9798
        %v10289 = vpack.c.b16 %v9801, %v9800
        %v10290 = vpack.c.b16 %v9803, %v9802
        %v10291 = vpack.c.b16 %v9805, %v9804
        %v10292 = vpack.c.b16 %v9807, %v9806
        %v10293 = vpack.c.b16 %v9809, %v9808
        %v10294 = vpack.c.b16 %v9811, %v9810
        %v10295 = vpack.c.b16 %v9813, %v9812
        %v10296 = vpack.c.b16 %v9815, %v9814
        %v10297 = vpack.c.b16 %v9817, %v9816
        %v10298 = vpack.c.b16 %v9819, %v9818
        %v10299 = vpack.c.b16 %v9821, %v9820
        %v10300 = vpack.c.b16 %v9823, %v9822
        %v10301 = vpack.c.b16 %v9825, %v9824
        %v10302 = vpack.c.b16 %v9827, %v9826
        %v10303 = vpack.c.b16 %v9829, %v9828
        %v10304 = vpack.c.b16 %v9831, %v9830
        %v10305 = vpack.c.b16 %v9833, %v9832
        %v10306 = vpack.c.b16 %v9835, %v9834
        %v10307 = vpack.c.b16 %v9837, %v9836
        %v10308 = vpack.c.b16 %v9839, %v9838
        %v10309 = vpack.c.b16 %v9841, %v9840
        %v10310 = vpack.c.b16 %v9843, %v9842
        %v10311 = vpack.c.b16 %v9845, %v9844
        %v10312 = vpack.c.b16 %v9847, %v9846
        %v10313 = vpack.c.b16 %v9849, %v9848
        %v10314 = vpack.c.b16 %v9851, %v9850
        %v10315 = vpack.c.b16 %v9853, %v9852
        %v10316 = vpack.c.b16 %v9855, %v9854
        %v10317 = vpack.c.b16 %v9857, %v9856
        %v10318 = vpack.c.b16 %v9859, %v9858
        %v10319 = vpack.c.b16 %v9861, %v9860
        %v10320 = vpack.c.b16 %v9863, %v9862
        %v10321 = vpack.c.b16 %v9865, %v9864
        %v10322 = vpack.c.b16 %v9867, %v9866
        %v10323 = vpack.c.b16 %v9869, %v9868
        %v10324 = vpack.c.b16 %v9871, %v9870
        %v10325 = vpack.c.b16 %v9873, %v9872
        %v10326 = vpack.c.b16 %v9875, %v9874
        %v10327 = vpack.c.b16 %v9877, %v9876
        %v10328 = vpack.c.b16 %v9879, %v9878
        %v10329 = vpack.c.b16 %v9881, %v9880
        %v10330 = vpack.c.b16 %v9883, %v9882
        %v10331 = vpack.c.b16 %v9885, %v9884
        %v10332 = vpack.c.b16 %v9887, %v9886
        %v10333 = vpack.c.b16 %v9889, %v9888
        %v10334 = vpack.c.b16 %v9891, %v9890
        %v10335 = vpack.c.b16 %v9893, %v9892
        %v10336 = vpack.c.b16 %v9895, %v9894
        %v10337 = vpack.c.b16 %v9897, %v9896
        %v10338 = vpack.c.b16 %v9899, %v9898
        %v10339 = vpack.c.b16 %v9901, %v9900
        %v10340 = vpack.c.b16 %v9903, %v9902
        %v10341 = vpack.c.b16 %v9905, %v9904
        %v10342 = vpack.c.b16 %v9907, %v9906
        %v10343 = vpack.c.b16 %v9909, %v9908
        %v10344 = vpack.c.b16 %v9911, %v9910
        %v10345 = vpack.c.b16 %v9913, %v9912
        %v10346 = vpack.c.b16 %v9915, %v9914
        %v10347 = vpack.c.b16 %v9917, %v9916
        %v10348 = vpack.c.b16 %v9919, %v9918
        %v10349 = vpack.c.b16 %v9921, %v9920
        %v10350 = vpack.c.b16 %v9923, %v9922
        %v10351 = vpack.c.b16 %v9925, %v9924
        %v10352 = vpack.c.b16 %v9927, %v9926
        %v10353 = vpack.c.b16 %v9929, %v9928
        %v10354 = vpack.c.b16 %v9931, %v9930
        %v10355 = vpack.c.b16 %v9933, %v9932
        %v10356 = vpack.c.b16 %v9935, %v9934
        %v10357 = vpack.c.b16 %v9937, %v9936
        %v10358 = vpack.c.b16 %v9939, %v9938
        %v10359 = vpack.c.b16 %v9941, %v9940
        %v10360 = vpack.c.b16 %v9943, %v9942
        %v10361 = vpack.c.b16 %v9945, %v9944
        %v10362 = vpack.c.b16 %v9947, %v9946
        %v10363 = vpack.c.b16 %v9949, %v9948
        %v10364 = vpack.c.b16 %v9951, %v9950
        %v10365 = vpack.c.b16 %v9953, %v9952
        %v10366 = vpack.c.b16 %v9955, %v9954
        %v10367 = vpack.c.b16 %v9957, %v9956
        %v10368 = vpack.c.b16 %v9959, %v9958
        %v10369 = vpack.c.b16 %v9961, %v9960
        %v10370 = vpack.c.b16 %v9963, %v9962
        %v10371 = vpack.c.b16 %v9965, %v9964
        %v10372 = vpack.c.b16 %v9967, %v9966
        %v10373 = vpack.c.b16 %v9969, %v9968
        %v10374 = vpack.c.b16 %v9971, %v9970
        %v10375 = vpack.c.b16 %v9973, %v9972
        %v10376 = vpack.c.b16 %v9975, %v9974
        %v10377 = vpack.c.b16 %v9977, %v9976
        %v10378 = vpack.c.b16 %v9979, %v9978
        %v10379 = vpack.c.b16 %v9981, %v9980
        %v10380 = vpack.c.b16 %v9983, %v9982
        %v10381 = vpack.c.b16 %v9985, %v9984
        %v10382 = vpack.c.b16 %v9987, %v9986
        %v10383 = vpack.c.b16 %v9989, %v9988
        %v10384 = vpack.c.b16 %v9991, %v9990
        %v10385 = vpack.c.b16 %v9993, %v9992
        %v10386 = vpack.c.b16 %v9995, %v9994
        %v10387 = vpack.c.b16 %v9997, %v9996
        %v10388 = vpack.c.b16 %v9999, %v9998
        %v10389 = vpack.c.b16 %v10001, %v10000
        %v10390 = vpack.c.b16 %v10003, %v10002
        %v10391 = vpack.c.b16 %v10005, %v10004
        %v10392 = vpack.c.b16 %v10007, %v10006
        %v10393 = vpack.c.b16 %v10009, %v10008
        %v10394 = vpack.c.b16 %v10011, %v10010
        %v10395 = vpack.c.b16 %v10013, %v10012
        %v10396 = vpack.c.b16 %v10015, %v10014
        %v10397 = vpack.c.b16 %v10017, %v10016
        %v10398 = vpack.c.b16 %v10019, %v10018
        %v10399 = vpack.c.b16 %v10021, %v10020
        %v10400 = vpack.c.b16 %v10023, %v10022
        %v10401 = vpack.c.b16 %v10025, %v10024
        %v10402 = vpack.c.b16 %v10027, %v10026
        %v10403 = vpack.c.b16 %v10029, %v10028
        %v10404 = vpack.c.b16 %v10031, %v10030
        %v10405 = vpack.c.b16 %v10033, %v10032
        %v10406 = vpack.c.b16 %v10035, %v10034
        %v10407 = vpack.c.b16 %v10037, %v10036
        %v10408 = vpack.c.b16 %v10039, %v10038
        %v10409 = vpack.c.b16 %v10041, %v10040
        %v10410 = vpack.c.b16 %v10043, %v10042
        %v10411 = vpack.c.b16 %v10045, %v10044
        %v10412 = vpack.c.b16 %v10047, %v10046
        %v10413 = vpack.c.b16 %v10049, %v10048
        %v10414 = vpack.c.b16 %v10051, %v10050
        %v10415 = vpack.c.b16 %v10053, %v10052
        %v10416 = vpack.c.b16 %v10055, %v10054
        %v10417 = vpack.c.b16 %v10057, %v10056
        %v10418 = vpack.c.b16 %v10059, %v10058
        %v10419 = vpack.c.b16 %v10061, %v10060
        %v10420 = vpack.c.b16 %v10063, %v10062
        %v10421 = vpack.c.b16 %v10065, %v10064
        %v10422 = vpack.c.b16 %v10067, %v10066
        %v10423 = vpack.c.b16 %v10069, %v10068
        %v10424 = vpack.c.b16 %v10071, %v10070
        %v10425 = vpack.c.b16 %v10073, %v10072
        %v10426 = vpack.c.b16 %v10075, %v10074
        %v10427 = vpack.c.b16 %v10077, %v10076
        %v10428 = vpack.c.b16 %v10079, %v10078
        %v10429 = vpack.c.b16 %v10081, %v10080
        %v10430 = vpack.c.b16 %v10083, %v10082
        %v10431 = vpack.c.b16 %v10085, %v10084
        %v10432 = vpack.c.b16 %v10087, %v10086
        %v10433 = vpack.c.b16 %v10089, %v10088
        %v10434 = vpack.c.b16 %v10091, %v10090
        %v10435 = vpack.c.b16 %v10093, %v10092
        %v10436 = vpack.c.b16 %v10095, %v10094
        %v10437 = vpack.c.b16 %v10097, %v10096
        %v10438 = vpack.c.b16 %v10099, %v10098
        %v10439 = vpack.c.b16 %v10101, %v10100
        %v10440 = vpack.c.b16 %v10103, %v10102
        %v10441 = vpack.c.b16 %v10105, %v10104
        %v10442 = vpack.c.b16 %v10107, %v10106
        %v10443 = vpack.c.b16 %v10109, %v10108
        %v10444 = vpack.c.b16 %v10111, %v10110
        %v10445 = vpack.c.b16 %v10113, %v10112
        %v10446 = vpack.c.b16 %v10115, %v10114
        %v10447 = vpack.c.b16 %v10117, %v10116
        %v10448 = vpack.c.b16 %v10119, %v10118
        %v10449 = vpack.c.b16 %v10121, %v10120
        %v10450 = vpack.c.b16 %v10123, %v10122
        %v10451 = vpack.c.b16 %v10125, %v10124
        %v10452 = vpack.c.b16 %v10127, %v10126
        %v10453 = vpack.c.b16 %v10129, %v10128
        %v10454 = vpack.c.b16 %v10131, %v10130
        %v10455 = vpack.c.b16 %v10133, %v10132
        %v10456 = vpack.c.b16 %v10135, %v10134
        %v10457 = vpack.c.b16 %v10137, %v10136
        %v10458 = vpack.c.b16 %v10139, %v10138
        %v10459 = vpack.c.b16 %v10141, %v10140
        %v10460 = vpack.c.b16 %v10143, %v10142
        %v10461 = vpack.c.b16 %v10145, %v10144
        %v10462 = vpack.c.b16 %v10147, %v10146
        %v10463 = vpack.c.b16 %v10149, %v10148
        %v10464 = vpack.c.b16 %v10151, %v10150
        %v10465 = vpack.c.b16 %v10153, %v10152
        %v10466 = vpack.c.b16 %v10155, %v10154
        %v10467 = vpack.c.b16 %v10157, %v10156
        %v10468 = vpack.c.b16 %v10159, %v10158
        %v10469 = vpack.c.b16 %v10161, %v10160
        %v10470 = vpack.c.b16 %v10163, %v10162
        %v10471 = vpack.c.b16 %v10165, %v10164
        %v10472 = vpack.c.b16 %v10167, %v10166
        %v10473 = vpack.c.b16 %v10169, %v10168
        %v10474 = vpack.c.b16 %v10171, %v10170
        %v10475 = vpack.c.b16 %v10173, %v10172
        %v10476 = vpack.c.b16 %v10175, %v10174
        %v10477 = vpack.c.b16 %v10177, %v10176
        %v10478 = vpack.c.b16 %v10179, %v10178
        %v10479 = vpack.c.b16 %v10181, %v10180
        %v10480 = vpack.c.b16 %v10183, %v10182
        %v10481 = vpack.c.b16 %v10185, %v10184
        %v10482 = vpack.c.b16 %v10187, %v10186
        %v10483 = vpack.c.b16 %v10189, %v10188
        %v10484 = vpack.c.b16 %v10191, %v10190
        %v10485 = vpack.c.b16 %v10193, %v10192
        %v10486 = vpack.c.b16 %v10195, %v10194
        %v10487 = vpack.c.b16 %v10197, %v10196
        %v10488 = vpack.c.b16 %v10199, %v10198
        %v10489 = vpack.c.b16 %v10201, %v10200
        %v10490 = vpack.c.b16 %v10203, %v10202
        %v10491 = vpack.c.b16 %v10205, %v10204
        %v10492 = vpack.c.b16 %v10207, %v10206
        %v10493 = vpack.c.b16 %v10209, %v10208
        %v10494 = vpack.c.b16 %v10211, %v10210
        %v10495 = vpack.c.b16 %v10213, %v10212
        %v10496 = vpack.c.b16 %v10215, %v10214
        %v10497 = vpack.c.b16 %v10217, %v10216
        %v10498 = vpack.c.b16 %v10219, %v10218
        %v10499 = vpack.c.b16 %v10221, %v10220
        %v10500 = vpack.c.b16 %v10223, %v10222
        %v10501 = vpack.c.b16 %v10225, %v10224
        %v10502 = vpack.c.b16 %v10227, %v10226
        %v10503 = vpack.c.b16 %v10229, %v10228
        %v10504 = vpack.c.b16 %v10231, %v10230
        %v10505 = vpack.c.b16 %v10233, %v10232
        %v10506 = vpack.c.b16 %v10235, %v10234
        %v10507 = vpack.c.b16 %v10237, %v10236
        %v10508 = vpack.c.b16 %v10239, %v10238
        %v10509 = vpack.c.b16 %v10241, %v10240
        %v10510 = vpack.c.b16 %v10243, %v10242
        %v10511 = vpack.c.b16 %v10245, %v10244
        %v10512 = vpack.c.b16 %v10247, %v10246
        %v10513 = vpack.c.b16 %v10249, %v10248
        %v10514 = vpack.c.b16 %v10251, %v10250
        %v10515 = vpack.c.b16 %v10253, %v10252
        %v10516 = vpack.c.b16 %v10255, %v10254
        %v10517 = vpack.c.b16 %v10257, %v10256
        %v10518 = vpack.c.b16 %v10259, %v10258
        %v10519 = vpack.c.b16 %v10261, %v10260
        %v10520 = vpack.c.b16 %v10263, %v10262
        %v10521 = vpack.c.b16 %v10265, %v10264
        %10778 = vst [vmem:[%s468] sm:$0xff] %v10266
        %10779 = vst [vmem:[%s468 + $0x8] sm:$0xff] %v10267
        %10780 = vst [vmem:[%s468 + $0x10] sm:$0xff] %v10268
        %10781 = vst [vmem:[%s468 + $0x18] sm:$0xff] %v10269
        %10782 = vst [vmem:[%s468 + $0x20] sm:$0xff] %v10270
        %10783 = vst [vmem:[%s468 + $0x28] sm:$0xff] %v10271
        %10784 = vst [vmem:[%s468 + $0x30] sm:$0xff] %v10272
        %10785 = vst [vmem:[%s468 + $0x38] sm:$0xff] %v10273
        %10786 = vst [vmem:[%s468 + $0x40] sm:$0xff] %v10274
        %10787 = vst [vmem:[%s468 + $0x48] sm:$0xff] %v10275
        %10788 = vst [vmem:[%s468 + $0x50] sm:$0xff] %v10276
        %10789 = vst [vmem:[%s468 + $0x58] sm:$0xff] %v10277
        %10790 = vst [vmem:[%s468 + $0x60] sm:$0xff] %v10278
        %10791 = vst [vmem:[%s468 + $0x68] sm:$0xff] %v10279
        %10792 = vst [vmem:[%s468 + $0x70] sm:$0xff] %v10280
        %10793 = vst [vmem:[%s468 + $0x78] sm:$0xff] %v10281
        %10794 = vst [vmem:[%s468 + $0x80] sm:$0xff] %v10282
        %10795 = vst [vmem:[%s468 + $0x88] sm:$0xff] %v10283
        %10796 = vst [vmem:[%s468 + $0x90] sm:$0xff] %v10284
        %10797 = vst [vmem:[%s468 + $0x98] sm:$0xff] %v10285
        %10798 = vst [vmem:[%s468 + $0xa0] sm:$0xff] %v10286
        %10799 = vst [vmem:[%s468 + $0xa8] sm:$0xff] %v10287
        %10800 = vst [vmem:[%s468 + $0xb0] sm:$0xff] %v10288
        %10801 = vst [vmem:[%s468 + $0xb8] sm:$0xff] %v10289
        %10802 = vst [vmem:[%s468 + $0xc0] sm:$0xff] %v10290
        %10803 = vst [vmem:[%s468 + $0xc8] sm:$0xff] %v10291
        %10804 = vst [vmem:[%s468 + $0xd0] sm:$0xff] %v10292
        %10805 = vst [vmem:[%s468 + $0xd8] sm:$0xff] %v10293
        %10806 = vst [vmem:[%s468 + $0xe0] sm:$0xff] %v10294
        %10807 = vst [vmem:[%s468 + $0xe8] sm:$0xff] %v10295
        %10808 = vst [vmem:[%s468 + $0xf0] sm:$0xff] %v10296
        %10809 = vst [vmem:[%s468 + $0xf8] sm:$0xff] %v10297
        %10810 = vst [vmem:[%s468 + $0x100] sm:$0xff] %v10298
        %10811 = vst [vmem:[%s468 + $0x108] sm:$0xff] %v10299
        %10812 = vst [vmem:[%s468 + $0x110] sm:$0xff] %v10300
        %10813 = vst [vmem:[%s468 + $0x118] sm:$0xff] %v10301
        %10814 = vst [vmem:[%s468 + $0x120] sm:$0xff] %v10302
        %10815 = vst [vmem:[%s468 + $0x128] sm:$0xff] %v10303
        %10816 = vst [vmem:[%s468 + $0x130] sm:$0xff] %v10304
        %10817 = vst [vmem:[%s468 + $0x138] sm:$0xff] %v10305
        %10818 = vst [vmem:[%s468 + $0x140] sm:$0xff] %v10306
        %10819 = vst [vmem:[%s468 + $0x148] sm:$0xff] %v10307
        %10820 = vst [vmem:[%s468 + $0x150] sm:$0xff] %v10308
        %10821 = vst [vmem:[%s468 + $0x158] sm:$0xff] %v10309
        %10822 = vst [vmem:[%s468 + $0x160] sm:$0xff] %v10310
        %10823 = vst [vmem:[%s468 + $0x168] sm:$0xff] %v10311
        %10824 = vst [vmem:[%s468 + $0x170] sm:$0xff] %v10312
        %10825 = vst [vmem:[%s468 + $0x178] sm:$0xff] %v10313
        %10826 = vst [vmem:[%s468 + $0x180] sm:$0xff] %v10314
        %10827 = vst [vmem:[%s468 + $0x188] sm:$0xff] %v10315
        %10828 = vst [vmem:[%s468 + $0x190] sm:$0xff] %v10316
        %10829 = vst [vmem:[%s468 + $0x198] sm:$0xff] %v10317
        %10830 = vst [vmem:[%s468 + $0x1a0] sm:$0xff] %v10318
        %10831 = vst [vmem:[%s468 + $0x1a8] sm:$0xff] %v10319
        %10832 = vst [vmem:[%s468 + $0x1b0] sm:$0xff] %v10320
        %10833 = vst [vmem:[%s468 + $0x1b8] sm:$0xff] %v10321
        %10834 = vst [vmem:[%s468 + $0x1c0] sm:$0xff] %v10322
        %10835 = vst [vmem:[%s468 + $0x1c8] sm:$0xff] %v10323
        %10836 = vst [vmem:[%s468 + $0x1d0] sm:$0xff] %v10324
        %10837 = vst [vmem:[%s468 + $0x1d8] sm:$0xff] %v10325
        %10838 = vst [vmem:[%s468 + $0x1e0] sm:$0xff] %v10326
        %10839 = vst [vmem:[%s468 + $0x1e8] sm:$0xff] %v10327
        %10840 = vst [vmem:[%s468 + $0x1f0] sm:$0xff] %v10328
        %10841 = vst [vmem:[%s468 + $0x1f8] sm:$0xff] %v10329
        %10842 = vst [vmem:[%s468 + $0x200] sm:$0xff] %v10330
        %10843 = vst [vmem:[%s468 + $0x208] sm:$0xff] %v10331
        %10844 = vst [vmem:[%s468 + $0x210] sm:$0xff] %v10332
        %10845 = vst [vmem:[%s468 + $0x218] sm:$0xff] %v10333
        %10846 = vst [vmem:[%s468 + $0x220] sm:$0xff] %v10334
        %10847 = vst [vmem:[%s468 + $0x228] sm:$0xff] %v10335
        %10848 = vst [vmem:[%s468 + $0x230] sm:$0xff] %v10336
        %10849 = vst [vmem:[%s468 + $0x238] sm:$0xff] %v10337
        %10850 = vst [vmem:[%s468 + $0x240] sm:$0xff] %v10338
        %10851 = vst [vmem:[%s468 + $0x248] sm:$0xff] %v10339
        %10852 = vst [vmem:[%s468 + $0x250] sm:$0xff] %v10340
        %10853 = vst [vmem:[%s468 + $0x258] sm:$0xff] %v10341
        %10854 = vst [vmem:[%s468 + $0x260] sm:$0xff] %v10342
        %10855 = vst [vmem:[%s468 + $0x268] sm:$0xff] %v10343
        %10856 = vst [vmem:[%s468 + $0x270] sm:$0xff] %v10344
        %10857 = vst [vmem:[%s468 + $0x278] sm:$0xff] %v10345
        %10858 = vst [vmem:[%s468 + $0x280] sm:$0xff] %v10346
        %10859 = vst [vmem:[%s468 + $0x288] sm:$0xff] %v10347
        %10860 = vst [vmem:[%s468 + $0x290] sm:$0xff] %v10348
        %10861 = vst [vmem:[%s468 + $0x298] sm:$0xff] %v10349
        %10862 = vst [vmem:[%s468 + $0x2a0] sm:$0xff] %v10350
        %10863 = vst [vmem:[%s468 + $0x2a8] sm:$0xff] %v10351
        %10864 = vst [vmem:[%s468 + $0x2b0] sm:$0xff] %v10352
        %10865 = vst [vmem:[%s468 + $0x2b8] sm:$0xff] %v10353
        %10866 = vst [vmem:[%s468 + $0x2c0] sm:$0xff] %v10354
        %10867 = vst [vmem:[%s468 + $0x2c8] sm:$0xff] %v10355
        %10868 = vst [vmem:[%s468 + $0x2d0] sm:$0xff] %v10356
        %10869 = vst [vmem:[%s468 + $0x2d8] sm:$0xff] %v10357
        %10870 = vst [vmem:[%s468 + $0x2e0] sm:$0xff] %v10358
        %10871 = vst [vmem:[%s468 + $0x2e8] sm:$0xff] %v10359
        %10872 = vst [vmem:[%s468 + $0x2f0] sm:$0xff] %v10360
        %10873 = vst [vmem:[%s468 + $0x2f8] sm:$0xff] %v10361
        %10874 = vst [vmem:[%s468 + $0x300] sm:$0xff] %v10362
        %10875 = vst [vmem:[%s468 + $0x308] sm:$0xff] %v10363
        %10876 = vst [vmem:[%s468 + $0x310] sm:$0xff] %v10364
        %10877 = vst [vmem:[%s468 + $0x318] sm:$0xff] %v10365
        %10878 = vst [vmem:[%s468 + $0x320] sm:$0xff] %v10366
        %10879 = vst [vmem:[%s468 + $0x328] sm:$0xff] %v10367
        %10880 = vst [vmem:[%s468 + $0x330] sm:$0xff] %v10368
        %10881 = vst [vmem:[%s468 + $0x338] sm:$0xff] %v10369
        %10882 = vst [vmem:[%s468 + $0x340] sm:$0xff] %v10370
        %10883 = vst [vmem:[%s468 + $0x348] sm:$0xff] %v10371
        %10884 = vst [vmem:[%s468 + $0x350] sm:$0xff] %v10372
        %10885 = vst [vmem:[%s468 + $0x358] sm:$0xff] %v10373
        %10886 = vst [vmem:[%s468 + $0x360] sm:$0xff] %v10374
        %10887 = vst [vmem:[%s468 + $0x368] sm:$0xff] %v10375
        %10888 = vst [vmem:[%s468 + $0x370] sm:$0xff] %v10376
        %10889 = vst [vmem:[%s468 + $0x378] sm:$0xff] %v10377
        %10890 = vst [vmem:[%s468 + $0x380] sm:$0xff] %v10378
        %10891 = vst [vmem:[%s468 + $0x388] sm:$0xff] %v10379
        %10892 = vst [vmem:[%s468 + $0x390] sm:$0xff] %v10380
        %10893 = vst [vmem:[%s468 + $0x398] sm:$0xff] %v10381
        %10894 = vst [vmem:[%s468 + $0x3a0] sm:$0xff] %v10382
        %10895 = vst [vmem:[%s468 + $0x3a8] sm:$0xff] %v10383
        %10896 = vst [vmem:[%s468 + $0x3b0] sm:$0xff] %v10384
        %10897 = vst [vmem:[%s468 + $0x3b8] sm:$0xff] %v10385
        %10898 = vst [vmem:[%s468 + $0x3c0] sm:$0xff] %v10386
        %10899 = vst [vmem:[%s468 + $0x3c8] sm:$0xff] %v10387
        %10900 = vst [vmem:[%s468 + $0x3d0] sm:$0xff] %v10388
        %10901 = vst [vmem:[%s468 + $0x3d8] sm:$0xff] %v10389
        %10902 = vst [vmem:[%s468 + $0x3e0] sm:$0xff] %v10390
        %10903 = vst [vmem:[%s468 + $0x3e8] sm:$0xff] %v10391
        %10904 = vst [vmem:[%s468 + $0x3f0] sm:$0xff] %v10392
        %10905 = vst [vmem:[%s468 + $0x3f8] sm:$0xff] %v10393
        %10906 = vst [vmem:[%s468 + $0x400] sm:$0xff] %v10394
        %10907 = vst [vmem:[%s468 + $0x408] sm:$0xff] %v10395
        %10908 = vst [vmem:[%s468 + $0x410] sm:$0xff] %v10396
        %10909 = vst [vmem:[%s468 + $0x418] sm:$0xff] %v10397
        %10910 = vst [vmem:[%s468 + $0x420] sm:$0xff] %v10398
        %10911 = vst [vmem:[%s468 + $0x428] sm:$0xff] %v10399
        %10912 = vst [vmem:[%s468 + $0x430] sm:$0xff] %v10400
        %10913 = vst [vmem:[%s468 + $0x438] sm:$0xff] %v10401
        %10914 = vst [vmem:[%s468 + $0x440] sm:$0xff] %v10402
        %10915 = vst [vmem:[%s468 + $0x448] sm:$0xff] %v10403
        %10916 = vst [vmem:[%s468 + $0x450] sm:$0xff] %v10404
        %10917 = vst [vmem:[%s468 + $0x458] sm:$0xff] %v10405
        %10918 = vst [vmem:[%s468 + $0x460] sm:$0xff] %v10406
        %10919 = vst [vmem:[%s468 + $0x468] sm:$0xff] %v10407
        %10920 = vst [vmem:[%s468 + $0x470] sm:$0xff] %v10408
        %10921 = vst [vmem:[%s468 + $0x478] sm:$0xff] %v10409
        %10922 = vst [vmem:[%s468 + $0x480] sm:$0xff] %v10410
        %10923 = vst [vmem:[%s468 + $0x488] sm:$0xff] %v10411
        %10924 = vst [vmem:[%s468 + $0x490] sm:$0xff] %v10412
        %10925 = vst [vmem:[%s468 + $0x498] sm:$0xff] %v10413
        %10926 = vst [vmem:[%s468 + $0x4a0] sm:$0xff] %v10414
        %10927 = vst [vmem:[%s468 + $0x4a8] sm:$0xff] %v10415
        %10928 = vst [vmem:[%s468 + $0x4b0] sm:$0xff] %v10416
        %10929 = vst [vmem:[%s468 + $0x4b8] sm:$0xff] %v10417
        %10930 = vst [vmem:[%s468 + $0x4c0] sm:$0xff] %v10418
        %10931 = vst [vmem:[%s468 + $0x4c8] sm:$0xff] %v10419
        %10932 = vst [vmem:[%s468 + $0x4d0] sm:$0xff] %v10420
        %10933 = vst [vmem:[%s468 + $0x4d8] sm:$0xff] %v10421
        %10934 = vst [vmem:[%s468 + $0x4e0] sm:$0xff] %v10422
        %10935 = vst [vmem:[%s468 + $0x4e8] sm:$0xff] %v10423
        %10936 = vst [vmem:[%s468 + $0x4f0] sm:$0xff] %v10424
        %10937 = vst [vmem:[%s468 + $0x4f8] sm:$0xff] %v10425
        %10938 = vst [vmem:[%s468 + $0x500] sm:$0xff] %v10426
        %10939 = vst [vmem:[%s468 + $0x508] sm:$0xff] %v10427
        %10940 = vst [vmem:[%s468 + $0x510] sm:$0xff] %v10428
        %10941 = vst [vmem:[%s468 + $0x518] sm:$0xff] %v10429
        %10942 = vst [vmem:[%s468 + $0x520] sm:$0xff] %v10430
        %10943 = vst [vmem:[%s468 + $0x528] sm:$0xff] %v10431
        %10944 = vst [vmem:[%s468 + $0x530] sm:$0xff] %v10432
        %10945 = vst [vmem:[%s468 + $0x538] sm:$0xff] %v10433
        %10946 = vst [vmem:[%s468 + $0x540] sm:$0xff] %v10434
        %10947 = vst [vmem:[%s468 + $0x548] sm:$0xff] %v10435
        %10948 = vst [vmem:[%s468 + $0x550] sm:$0xff] %v10436
        %10949 = vst [vmem:[%s468 + $0x558] sm:$0xff] %v10437
        %10950 = vst [vmem:[%s468 + $0x560] sm:$0xff] %v10438
        %10951 = vst [vmem:[%s468 + $0x568] sm:$0xff] %v10439
        %10952 = vst [vmem:[%s468 + $0x570] sm:$0xff] %v10440
        %10953 = vst [vmem:[%s468 + $0x578] sm:$0xff] %v10441
        %10954 = vst [vmem:[%s468 + $0x580] sm:$0xff] %v10442
        %10955 = vst [vmem:[%s468 + $0x588] sm:$0xff] %v10443
        %10956 = vst [vmem:[%s468 + $0x590] sm:$0xff] %v10444
        %10957 = vst [vmem:[%s468 + $0x598] sm:$0xff] %v10445
        %10958 = vst [vmem:[%s468 + $0x5a0] sm:$0xff] %v10446
        %10959 = vst [vmem:[%s468 + $0x5a8] sm:$0xff] %v10447
        %10960 = vst [vmem:[%s468 + $0x5b0] sm:$0xff] %v10448
        %10961 = vst [vmem:[%s468 + $0x5b8] sm:$0xff] %v10449
        %10962 = vst [vmem:[%s468 + $0x5c0] sm:$0xff] %v10450
        %10963 = vst [vmem:[%s468 + $0x5c8] sm:$0xff] %v10451
        %10964 = vst [vmem:[%s468 + $0x5d0] sm:$0xff] %v10452
        %10965 = vst [vmem:[%s468 + $0x5d8] sm:$0xff] %v10453
        %10966 = vst [vmem:[%s468 + $0x5e0] sm:$0xff] %v10454
        %10967 = vst [vmem:[%s468 + $0x5e8] sm:$0xff] %v10455
        %10968 = vst [vmem:[%s468 + $0x5f0] sm:$0xff] %v10456
        %10969 = vst [vmem:[%s468 + $0x5f8] sm:$0xff] %v10457
        %10970 = vst [vmem:[%s468 + $0x600] sm:$0xff] %v10458
        %10971 = vst [vmem:[%s468 + $0x608] sm:$0xff] %v10459
        %10972 = vst [vmem:[%s468 + $0x610] sm:$0xff] %v10460
        %10973 = vst [vmem:[%s468 + $0x618] sm:$0xff] %v10461
        %10974 = vst [vmem:[%s468 + $0x620] sm:$0xff] %v10462
        %10975 = vst [vmem:[%s468 + $0x628] sm:$0xff] %v10463
        %10976 = vst [vmem:[%s468 + $0x630] sm:$0xff] %v10464
        %10977 = vst [vmem:[%s468 + $0x638] sm:$0xff] %v10465
        %10978 = vst [vmem:[%s468 + $0x640] sm:$0xff] %v10466
        %10979 = vst [vmem:[%s468 + $0x648] sm:$0xff] %v10467
        %10980 = vst [vmem:[%s468 + $0x650] sm:$0xff] %v10468
        %10981 = vst [vmem:[%s468 + $0x658] sm:$0xff] %v10469
        %10982 = vst [vmem:[%s468 + $0x660] sm:$0xff] %v10470
        %10983 = vst [vmem:[%s468 + $0x668] sm:$0xff] %v10471
        %10984 = vst [vmem:[%s468 + $0x670] sm:$0xff] %v10472
        %10985 = vst [vmem:[%s468 + $0x678] sm:$0xff] %v10473
        %10986 = vst [vmem:[%s468 + $0x680] sm:$0xff] %v10474
        %10987 = vst [vmem:[%s468 + $0x688] sm:$0xff] %v10475
        %10988 = vst [vmem:[%s468 + $0x690] sm:$0xff] %v10476
        %10989 = vst [vmem:[%s468 + $0x698] sm:$0xff] %v10477
        %10990 = vst [vmem:[%s468 + $0x6a0] sm:$0xff] %v10478
        %10991 = vst [vmem:[%s468 + $0x6a8] sm:$0xff] %v10479
        %10992 = vst [vmem:[%s468 + $0x6b0] sm:$0xff] %v10480
        %10993 = vst [vmem:[%s468 + $0x6b8] sm:$0xff] %v10481
        %10994 = vst [vmem:[%s468 + $0x6c0] sm:$0xff] %v10482
        %10995 = vst [vmem:[%s468 + $0x6c8] sm:$0xff] %v10483
        %10996 = vst [vmem:[%s468 + $0x6d0] sm:$0xff] %v10484
        %10997 = vst [vmem:[%s468 + $0x6d8] sm:$0xff] %v10485
        %10998 = vst [vmem:[%s468 + $0x6e0] sm:$0xff] %v10486
        %10999 = vst [vmem:[%s468 + $0x6e8] sm:$0xff] %v10487
        %11000 = vst [vmem:[%s468 + $0x6f0] sm:$0xff] %v10488
        %11001 = vst [vmem:[%s468 + $0x6f8] sm:$0xff] %v10489
        %11002 = vst [vmem:[%s468 + $0x700] sm:$0xff] %v10490
        %11003 = vst [vmem:[%s468 + $0x708] sm:$0xff] %v10491
        %11004 = vst [vmem:[%s468 + $0x710] sm:$0xff] %v10492
        %11005 = vst [vmem:[%s468 + $0x718] sm:$0xff] %v10493
        %11006 = vst [vmem:[%s468 + $0x720] sm:$0xff] %v10494
        %11007 = vst [vmem:[%s468 + $0x728] sm:$0xff] %v10495
        %11008 = vst [vmem:[%s468 + $0x730] sm:$0xff] %v10496
        %11009 = vst [vmem:[%s468 + $0x738] sm:$0xff] %v10497
        %11010 = vst [vmem:[%s468 + $0x740] sm:$0xff] %v10498
        %11011 = vst [vmem:[%s468 + $0x748] sm:$0xff] %v10499
        %11012 = vst [vmem:[%s468 + $0x750] sm:$0xff] %v10500
        %11013 = vst [vmem:[%s468 + $0x758] sm:$0xff] %v10501
        %11014 = vst [vmem:[%s468 + $0x760] sm:$0xff] %v10502
        %11015 = vst [vmem:[%s468 + $0x768] sm:$0xff] %v10503
        %11016 = vst [vmem:[%s468 + $0x770] sm:$0xff] %v10504
        %11017 = vst [vmem:[%s468 + $0x778] sm:$0xff] %v10505
        %11018 = vst [vmem:[%s468 + $0x780] sm:$0xff] %v10506
        %11019 = vst [vmem:[%s468 + $0x788] sm:$0xff] %v10507
        %11020 = vst [vmem:[%s468 + $0x790] sm:$0xff] %v10508
        %11021 = vst [vmem:[%s468 + $0x798] sm:$0xff] %v10509
        %11022 = vst [vmem:[%s468 + $0x7a0] sm:$0xff] %v10510
        %11023 = vst [vmem:[%s468 + $0x7a8] sm:$0xff] %v10511
        %11024 = vst [vmem:[%s468 + $0x7b0] sm:$0xff] %v10512
        %11025 = vst [vmem:[%s468 + $0x7b8] sm:$0xff] %v10513
        %11026 = vst [vmem:[%s468 + $0x7c0] sm:$0xff] %v10514
        %11027 = vst [vmem:[%s468 + $0x7c8] sm:$0xff] %v10515
        %11028 = vst [vmem:[%s468 + $0x7d0] sm:$0xff] %v10516
        %11029 = vst [vmem:[%s468 + $0x7d8] sm:$0xff] %v10517
        %11030 = vst [vmem:[%s468 + $0x7e0] sm:$0xff] %v10518
        %11031 = vst [vmem:[%s468 + $0x7e8] sm:$0xff] %v10519
        %11032 = vst [vmem:[%s468 + $0x7f0] sm:$0xff] %v10520
        %11033 = vst [vmem:[%s468 + $0x7f8] sm:$0xff] %v10521
        %s11034 = smul.u32 4, %s29
        %p11035 = scmp.lt.s32.totalorder %s28, 1
        %s11036 = scalar_select %p11035, %s28, 1
        %p11037 = scmp.lt.s32.totalorder %s11034, 3
        %s11038 = scalar_select %p11037, %s11034, 3
        %s11039 = smul.addr %s11036, 512
        %s11040 = sadd.s32 %s11038, %s11039
        %s11041 = smul.addr %s11040, 4
        %s11042 = scalar_lea.vmem %s11, %s11041
        // Predicated region
        $region77: #{pointnetfeat_forward.1} parent=63 // pred_check
          %p11043 = pneg %p294
        $region78: #{pointnetfeat_forward.1} parent=63 // pred_check_branch
          %11045 = sbr.rel (%p11043) target = $region80
        $region79: #{pointnetfeat_forward.1} parent=63 // pred_region
          %s11046 = smul.u32 4, %s29
        $region80: #{pointnetfeat_forward.1} parent=63 // pred_fallthru
          _
      $region64: #{pointnetfeat_forward.1} parent=5 // pred_fallthru
        _
      %p11047 = scmp.le.s32.totalorder 2, %s19
      // Predicated region
      $region81: #{pointnetfeat_forward.1} parent=5 // pred_check
        %p11048 = pneg %p11047
      $region82: #{pointnetfeat_forward.1} parent=5 // pred_check_branch
        %11050 = sbr.rel (%p11048) target = $region84
      $region83: #{pointnetfeat_forward.1} parent=5 // pred_region
        %s11051 = ssub.s32 %s19, 2
        // Predicated region
        $region85: #{pointnetfeat_forward.1} parent=83 // pred_check
          %p11052 = pneg %p300
        $region86: #{pointnetfeat_forward.1} parent=83 // pred_check_branch
          %11054 = sbr.rel (%p11052) target = $region88
        $region87: #{pointnetfeat_forward.1} parent=83 // pred_region
          %s11055 = smul.u32 4, %s31
          %p11056 = scmp.lt.s32.totalorder %s30, 1
          %s11057 = scalar_select %p11056, %s30, 1
          %p11058 = scmp.lt.s32.totalorder %s11055, 3
          %s11059 = scalar_select %p11058, %s11055, 3
          %s11060 = smul.addr %s11057, 512
          %s11061 = sadd.s32 %s11059, %s11060
          %s11062 = smul.addr %s11061, 4
          %s11063 = scalar_lea.vmem %s11, %s11062
        $region88: #{pointnetfeat_forward.1} parent=83 // pred_fallthru
          _
      $region84: #{pointnetfeat_forward.1} parent=5 // pred_fallthru
        _
    $region6: #{pointnetfeat_forward.1} parent=1 // loop_footer
      %s23 = sadd.s32 1, %s19
    $region7: #{pointnetfeat_forward.1} parent=1 // loop_footer_branch
      %18 = sbr.rel target = $region3
    $region8: #{pointnetfeat_forward.1} parent=1 // loop_exit
      _
    %11064 = vsyncpa [#allocation3], 1
    %s11065 = scalar_lea.sflag [#allocation3], 1
    %11066 = vsyncpa %s11065, 1
    %11067 = vsyncpa [#allocation5], 1

</llo_original>
